<compile_context>
chip_gen: v7x
topology: tpu7x:2x2x1
jax: 0.10.0
libtpu: 0.0.40
codegen_flags: <defaults>
</compile_context>

<pallas_src>
import functools

import numpy as np
import jax
import jax.numpy as jnp
from jax.experimental import pallas as pl
from jax.experimental.pallas import tpu as pltpu


# ----------------------------- static network config -----------------------

# (cin, cout, k, stride, pad, groups, relu, bn) -- mirrors Net.__init__ order.
CFGS = (
    (3,   16,  5, 1, 1, 1,  True,  True),   # conv1: Conv(3,16,5,1,1)   ReLU BN
    (16,  16,  3, 2, 1, 1,  True,  True),   # conv1: Conv(16,16,3,2,1)  ReLU BN
    (16,  32,  3, 1, 1, 1,  True,  True),   # conv2: Conv(16,32,3,1,1)  ReLU BN
    (32,  64,  3, 1, 1, 32, True,  True),   # conv2: Conv(32,64,3,g=32) ReLU BN
    (64,  128, 3, 2, 1, 1,  True,  True),   # conv3: Conv(64,128,3,2,1) ReLU BN
    (128, 128, 3, 1, 1, 1,  True,  True),   # conv3: Conv(128,128,3,1,1)ReLU BN
    (128, 32,  3, 2, 1, 1,  True,  True),   # conv4: Conv(128,32,3,2,1) ReLU BN
    (32,  32,  1, 1, 0, 1,  False, False),  # conv4: Conv(32,32,1)      (no act)
    (32,  32,  3, 1, 1, 1,  True,  True),   # conv4: Conv(32,32,3,1,1)  ReLU BN
)
CPAD = 128       # output-channel dims padded to 128 lanes (lane-dense stores)
BN_EPS = 1e-5
SINGLE_TILE_MAX_ROWS = 2048   # whole-layer tile below this; ~7 MB VMEM worst case


def _round_up(x, m):
    return (x + m - 1) // m * m


def choose_tiles(m):
    """Row-tile size and padded row count.

    All layers at small batch fit comfortably in VMEM as one tile, so use a
    single grid step (per-step overhead ~0.35us and tiny tiles underfill the
    MXU).  Only very large layers fall back to 1024-row tiles."""
    if m <= SINGLE_TILE_MAX_ROWS:
        mp = _round_up(m, 16)          # bf16 sublane packing
        return mp, mp
    tm = 1024
    return tm, _round_up(m, tm)


# ----------------------------- Pallas kernels ------------------------------

def conv_kernel(p_ref, w_ref, b_ref, o_ref, *, relu):
    """im2col-GEMM + bias (+ReLU); bf16 output.  Used for the BN-less layer."""
    acc = jnp.dot(p_ref[...], w_ref[...], preferred_element_type=jnp.float32)
    acc = acc + b_ref[...]
    if relu:
        acc = jnp.maximum(acc, 0.0)
    o_ref[...] = acc.astype(o_ref.dtype)


def conv_relu_bn_kernel(p_ref, w_ref, b_ref, g_ref, beta_ref, o_ref, *, rows):
    """Fully fused Conv + bias + ReLU + training-mode BatchNorm, single tile.

    p_ref: (mp, K) bf16 patches, w_ref: (K, 128) bf16, b/g/beta: (1, 128) f32.
    Batch statistics are computed over the `rows` valid rows (padded rows
    masked out), with biased variance, matching nn.BatchNorm2d training.
    """
    acc = jnp.dot(p_ref[...], w_ref[...], preferred_element_type=jnp.float32)
    acc = jnp.maximum(acc + b_ref[...], 0.0)                      # ReLU pre-BN
    row_id = jax.lax.broadcasted_iota(jnp.int32, acc.shape, 0)
    ym = jnp.where(row_id < rows, acc, 0.0)
    inv_n = 1.0 / rows
    mean = jnp.sum(ym, axis=0, keepdims=True) * inv_n             # (1, 128)
    var = jnp.maximum(
        jnp.sum(ym * ym, axis=0, keepdims=True) * inv_n - mean * mean, 0.0)
    scale = g_ref[...] * jax.lax.rsqrt(var + BN_EPS)
    shift = beta_ref[...] - mean * scale
    o_ref[...] = (acc * scale + shift).astype(o_ref.dtype)


def conv_relu_stats_kernel(p_ref, w_ref, b_ref, y_ref, stats_ref, *, rows, tm):
    """Multi-tile fallback: Conv + bias + ReLU and per-tile masked BN partial
    statistics (row 0 = sum, row 1 = sum of squares).  BN finalize + affine is
    done in fused XLA by the wrapper."""
    i = pl.program_id(0)
    acc = jnp.dot(p_ref[...], w_ref[...], preferred_element_type=jnp.float32)
    acc = jnp.maximum(acc + b_ref[...], 0.0)
    y_ref[...] = acc.astype(y_ref.dtype)
    valid = rows - i * tm
    row_id = jax.lax.broadcasted_iota(jnp.int32, acc.shape, 0)
    ym = jnp.where(row_id < valid, acc, 0.0)
    stats_ref[0] = jnp.concatenate(
        [jnp.sum(ym, axis=0, keepdims=True),
         jnp.sum(ym * ym, axis=0, keepdims=True)], axis=0)        # (2, 128)


def gap_fc_kernel(x_ref, w_ref, b_ref, o_ref):
    """Global average pool + Linear.  x_ref: (N, HW, 128) bf16."""
    pooled = jnp.mean(x_ref[...].astype(jnp.float32), axis=1)     # (N, 128)
    o_ref[...] = jnp.dot(pooled.astype(jnp.bfloat16), w_ref[...],
                         preferred_element_type=jnp.float32) + b_ref[...]


# ----------------------------- Pallas wrappers -----------------------------

def conv_layer(patches, w_mat, b, gamma=None, beta=None, *, relu, bn):
    """Tiled (patches @ W + b) [+ReLU] [+BN] on the MXU.  Returns bf16 (mp, 128)."""
    m, k = patches.shape
    c = w_mat.shape[1]
    tm, mp = choose_tiles(m)
    nm = mp // tm
    if mp != m:
        patches = jnp.pad(patches, ((0, mp - m), (0, 0)))
    b2 = b.reshape(1, c)

    in_specs = [
        pl.BlockSpec((tm, k), lambda i: (i, 0)),
        pl.BlockSpec((k, c), lambda i: (0, 0)),
        pl.BlockSpec((1, c), lambda i: (0, 0)),
    ]

    if not bn:
        return pl.pallas_call(
            functools.partial(conv_kernel, relu=relu),
            out_shape=jax.ShapeDtypeStruct((mp, c), jnp.bfloat16),
            grid=(nm,),
            in_specs=in_specs,
            out_specs=pl.BlockSpec((tm, c), lambda i: (i, 0)),
            compiler_params=pltpu.CompilerParams(
                dimension_semantics=("arbitrary",) if nm == 1 else ("parallel",)),
        )(patches, w_mat, b2)

    g2 = gamma.reshape(1, c)
    be2 = beta.reshape(1, c)

    if nm == 1:
        # Whole layer in one tile: conv + ReLU + full BN fused in-kernel.
        return pl.pallas_call(
            functools.partial(conv_relu_bn_kernel, rows=m),
            out_shape=jax.ShapeDtypeStruct((mp, c), jnp.bfloat16),
            grid=(1,),
            in_specs=in_specs + [pl.BlockSpec((1, c), lambda i: (0, 0)),
                                 pl.BlockSpec((1, c), lambda i: (0, 0))],
            out_specs=pl.BlockSpec((tm, c), lambda i: (i, 0)),
            compiler_params=pltpu.CompilerParams(
                dimension_semantics=("arbitrary",)),
        )(patches, w_mat, b2, g2, be2)

    # Multi-tile fallback (large batch): per-tile partial stats + XLA finalize.
    y, stats = pl.pallas_call(
        functools.partial(conv_relu_stats_kernel, rows=m, tm=tm),
        out_shape=(jax.ShapeDtypeStruct((mp, c), jnp.bfloat16),
                   jax.ShapeDtypeStruct((nm, 2, c), jnp.float32)),
        grid=(nm,),
        in_specs=in_specs,
        out_specs=(pl.BlockSpec((tm, c), lambda i: (i, 0)),
                   pl.BlockSpec((1, 2, c), lambda i: (i, 0, 0))),
        compiler_params=pltpu.CompilerParams(
            dimension_semantics=("parallel",)),
    )(patches, w_mat, b2)
    s = jnp.sum(stats[:, 0, :], axis=0)
    sq = jnp.sum(stats[:, 1, :], axis=0)
    mean = s / m
    var = jnp.maximum(sq / m - mean * mean, 0.0)        # biased variance
    scale = gamma * jax.lax.rsqrt(var + BN_EPS)
    shift = beta - mean * scale
    # Fuses with the downstream im2col pad/stack under jit (no extra dispatch).
    return (y.astype(jnp.float32) * scale + shift).astype(jnp.bfloat16)


def gap_fc(h_nhwc, fc_w, fc_b):
    n, hgt, wid, c = h_nhwc.shape
    x3 = h_nhwc.reshape(n, hgt * wid, c)
    return pl.pallas_call(
        gap_fc_kernel,
        out_shape=jax.ShapeDtypeStruct((n, c), jnp.float32),
    )(x3, fc_w, fc_b.reshape(1, c))


# ----------------------------- JAX glue (im2col, weights) ------------------

def im2col(x, kh, kw, stride, pad):
    """x: (N, H, W, C) -> (N*OH*OW, kh*kw*C), feature order (kh, kw, c)."""
    n, h, w, c = x.shape
    if pad:
        x = jnp.pad(x, ((0, 0), (pad, pad), (pad, pad), (0, 0)))
    oh = (h + 2 * pad - kh) // stride + 1
    ow = (w + 2 * pad - kw) // stride + 1
    cols = []
    for i in range(kh):
        for j in range(kw):
            cols.append(x[:, i:i + stride * (oh - 1) + 1:stride,
                          j:j + stride * (ow - 1) + 1:stride, :])
    patches = jnp.stack(cols, axis=3)                 # (N, OH, OW, kh*kw, C)
    return patches.reshape(n * oh * ow, kh * kw * c), oh, ow


def weight_matrix(w_np, groups, kpad, cout_pad=CPAD):
    """PyTorch (O, cin/groups, KH, KW) -> (kpad, cout_pad) bf16 GEMM matrix.

    Row order matches im2col feature order (kh, kw, cin_real); grouped convs
    become block-diagonal; rows >= kh*kw*cin and cols >= O are zero padding.
    """
    o, ipg, kh, kw = w_np.shape
    opg = o // groups
    cin = ipg * groups
    dense = np.zeros((kh, kw, cin, o), np.float32)
    for g in range(groups):
        dense[:, :, g * ipg:(g + 1) * ipg, g * opg:(g + 1) * opg] = np.transpose(
            w_np[g * opg:(g + 1) * opg], (2, 3, 1, 0))
    flat = dense.reshape(kh * kw * cin, o)
    padded = np.zeros((kpad, cout_pad), np.float32)
    padded[:kh * kw * cin, :o] = flat
    return jnp.asarray(padded, dtype=jnp.bfloat16)


def make_params(key):
    convs = []
    for (cin, cout, k, stride, pad, groups, relu, bn) in CFGS:
        key, kw_, kb_ = jax.random.split(key, 3)
        ipg = cin // groups
        fan_in = ipg * k * k
        w = jax.random.normal(kw_, (cout, ipg, k, k), jnp.float32) / np.sqrt(fan_in)
        b = jax.random.normal(kb_, (cout,), jnp.float32) * 0.01
        kpad = _round_up(k * k * cin, 128)            # real-cin K, lane aligned
        layer = dict(
            w=weight_matrix(np.asarray(w), groups, kpad),
            b=jnp.zeros((CPAD,), jnp.float32).at[:cout].set(b),
        )
        if bn:
            layer["gamma"] = jnp.zeros((CPAD,), jnp.float32).at[:cout].set(1.0)
            layer["beta"] = jnp.zeros((CPAD,), jnp.float32)
        convs.append(layer)
    key, kfw, kfb = jax.random.split(key, 3)
    fc_w = jax.random.normal(kfw, (32, 10), jnp.float32) / np.sqrt(32.0)
    fc_b = jax.random.normal(kfb, (10,), jnp.float32) * 0.01
    return dict(
        convs=convs,
        fc_w=jnp.zeros((CPAD, CPAD), jnp.float32).at[:32, :10].set(fc_w)
            .astype(jnp.bfloat16),
        fc_b=jnp.zeros((CPAD,), jnp.float32).at[:10].set(fc_b),
    )


# ----------------------------- forward pass --------------------------------

def _net_forward(x_nchw, params):
    n = x_nchw.shape[0]
    h = jnp.transpose(x_nchw, (0, 2, 3, 1)).astype(jnp.bfloat16)   # NCHW->NHWC
    for cfg, lp in zip(CFGS, params["convs"]):
        cin, _, k, stride, pad, _, relu, bn = cfg
        # im2col over the REAL input channels only; pad K to a lane multiple.
        patches, oh, ow = im2col(h[..., :cin], k, k, stride, pad)
        kreal = patches.shape[1]
        kpad = lp["w"].shape[0]
        if kpad != kreal:
            patches = jnp.pad(patches, ((0, 0), (0, kpad - kreal)))
        m = n * oh * ow
        y = conv_layer(patches, lp["w"], lp["b"],
                       lp.get("gamma"), lp.get("beta"), relu=relu, bn=bn)
        h = y[:m].reshape(n, oh, ow, CPAD)
    logits_padded = gap_fc(h, params["fc_w"], params["fc_b"])       # (N, 128)
    return logits_padded[:, :10]


net_forward = jax.jit(_net_forward)


if __name__ == "__main__":
    key = jax.random.PRNGKey(0)
    kx, kp = jax.random.split(key)
    x = jax.random.normal(kx, (2, 3, 32, 32), jnp.float32)   # NCHW like PyTorch
    params = make_params(kp)
    out = net_forward(x, params)
    out = jax.block_until_ready(out)
    assert out.shape == (2, 10) and out.dtype == jnp.float32
    assert bool(jnp.all(jnp.isfinite(out)))
    print("KERNEL_OK")
</pallas_src>

<mosaic_0001>
module attributes {stable_mosaic.version = 11 : i64} {
  func.func @conv_relu_bn_kernel(%arg0: i32, %arg1: memref<1808x128xbf16, #tpu.memory_space<vmem>>, %arg2: memref<128x128xbf16, #tpu.memory_space<vmem>>, %arg3: memref<1x128xf32, #tpu.memory_space<vmem>>, %arg4: memref<1x128xf32, #tpu.memory_space<vmem>>, %arg5: memref<1x128xf32, #tpu.memory_space<vmem>>, %arg6: memref<1808x128xbf16, #tpu.memory_space<vmem>>) attributes {dimension_semantics = [#tpu.dimension_semantics<arbitrary>], iteration_bounds = array<i64: 1>, scalar_prefetch = 0 : i64, scratch_operands = 0 : i64, tpu.core_type = #tpu.core_type<tc>, window_params = [{transform_indices = @transform_0, window_bounds = array<i64: 1808, 128>}, {pipeline_mode = #tpu.pipeline_mode<synchronous>, transform_indices = @transform_1, window_bounds = array<i64: 128, 128>}, {pipeline_mode = #tpu.pipeline_mode<synchronous>, transform_indices = @transform_2, window_bounds = array<i64: 1, 128>}, {pipeline_mode = #tpu.pipeline_mode<synchronous>, transform_indices = @transform_3, window_bounds = array<i64: 1, 128>}, {pipeline_mode = #tpu.pipeline_mode<synchronous>, transform_indices = @transform_4, window_bounds = array<i64: 1, 128>}, {transform_indices = @transform_5, window_bounds = array<i64: 1808, 128>}]} {
    %c0 = arith.constant 0 : index
    %c0_0 = arith.constant 0 : index
    %0 = vector.load %arg1[%c0, %c0_0] : memref<1808x128xbf16, #tpu.memory_space<vmem>>, vector<1808x128xbf16>
    %c0_1 = arith.constant 0 : index
    %c0_2 = arith.constant 0 : index
    %1 = vector.load %arg2[%c0_1, %c0_2] : memref<128x128xbf16, #tpu.memory_space<vmem>>, vector<128x128xbf16>
    %cst = arith.constant dense<0.000000e+00> : vector<1808x128xf32>
    %2 = tpu.matmul %0, %1, %cst {dimension_numbers = #tpu.dot_dimension_numbers<[1], [0], [0], [1], [0, 0, 1, 1], [], []>} : vector<1808x128xbf16>, vector<128x128xbf16>, vector<1808x128xf32> -> vector<1808x128xf32>
    %c0_3 = arith.constant 0 : index
    %c0_4 = arith.constant 0 : index
    %3 = vector.load %arg3[%c0_3, %c0_4] : memref<1x128xf32, #tpu.memory_space<vmem>>, vector<1x128xf32>
    %4 = vector.broadcast %3 : vector<1x128xf32> to vector<1808x128xf32>
    %5 = arith.addf %2, %4 : vector<1808x128xf32>
    %cst_5 = arith.constant 0.000000e+00 : f32
    %6 = vector.broadcast %cst_5 : f32 to vector<1808x128xf32>
    %7 = arith.maximumf %5, %6 : vector<1808x128xf32>
    %8 = tpu.iota {dimensions = array<i32: 0>} : vector<1808x128xi32>
    %c1800_i32 = arith.constant 1800 : i32
    %9 = vector.broadcast %c1800_i32 : i32 to vector<1808x128xi32>
    %10 = arith.cmpi slt, %8, %9 : vector<1808x128xi32>
    %cst_6 = arith.constant 0.000000e+00 : f32
    %11 = vector.broadcast %cst_6 : f32 to vector<1808x128xf32>
    %12 = arith.select %10, %7, %11 : vector<1808x128xi1>, vector<1808x128xf32>
    %cst_7 = arith.constant dense<0.000000e+00> : vector<128xf32>
    %13 = vector.multi_reduction <add>, %12, %cst_7 [0] : vector<1808x128xf32> to vector<128xf32>
    %14 = vector.shape_cast %13 : vector<128xf32> to vector<1x128xf32>
    %cst_8 = arith.constant 5.55555569E-4 : f32
    %15 = vector.broadcast %cst_8 : f32 to vector<1x128xf32>
    %16 = arith.mulf %14, %15 : vector<1x128xf32>
    %17 = arith.mulf %12, %12 : vector<1808x128xf32>
    %cst_9 = arith.constant dense<0.000000e+00> : vector<128xf32>
    %18 = vector.multi_reduction <add>, %17, %cst_9 [0] : vector<1808x128xf32> to vector<128xf32>
    %19 = vector.shape_cast %18 : vector<128xf32> to vector<1x128xf32>
    %cst_10 = arith.constant 5.55555569E-4 : f32
    %20 = vector.broadcast %cst_10 : f32 to vector<1x128xf32>
    %21 = arith.mulf %19, %20 : vector<1x128xf32>
    %22 = arith.mulf %16, %16 : vector<1x128xf32>
    %23 = arith.subf %21, %22 : vector<1x128xf32>
    %cst_11 = arith.constant 0.000000e+00 : f32
    %24 = vector.broadcast %cst_11 : f32 to vector<1x128xf32>
    %25 = arith.maximumf %23, %24 : vector<1x128xf32>
    %c0_12 = arith.constant 0 : index
    %c0_13 = arith.constant 0 : index
    %26 = vector.load %arg4[%c0_12, %c0_13] : memref<1x128xf32, #tpu.memory_space<vmem>>, vector<1x128xf32>
    %cst_14 = arith.constant 9.99999974E-6 : f32
    %27 = vector.broadcast %cst_14 : f32 to vector<1x128xf32>
    %28 = arith.addf %25, %27 : vector<1x128xf32>
    %29 = math.rsqrt %28 : vector<1x128xf32>
    %30 = arith.mulf %26, %29 : vector<1x128xf32>
    %c0_15 = arith.constant 0 : index
    %c0_16 = arith.constant 0 : index
    %31 = vector.load %arg5[%c0_15, %c0_16] : memref<1x128xf32, #tpu.memory_space<vmem>>, vector<1x128xf32>
    %32 = arith.mulf %16, %30 : vector<1x128xf32>
    %33 = arith.subf %31, %32 : vector<1x128xf32>
    %34 = vector.broadcast %30 : vector<1x128xf32> to vector<1808x128xf32>
    %35 = arith.mulf %7, %34 : vector<1808x128xf32>
    %36 = vector.broadcast %33 : vector<1x128xf32> to vector<1808x128xf32>
    %37 = arith.addf %35, %36 : vector<1808x128xf32>
    %38 = arith.truncf %37 : vector<1808x128xf32> to vector<1808x128xbf16>
    %c0_17 = arith.constant 0 : index
    %c0_18 = arith.constant 0 : index
    %39 = vector.load %arg6[%c0_17, %c0_18] : memref<1808x128xbf16, #tpu.memory_space<vmem>>, vector<1808x128xbf16>
    tpu.vector_store %arg6[%c0_17, %c0_18], %38 {strides = array<i32>} : memref<1808x128xbf16, #tpu.memory_space<vmem>>, vector<1808x128xbf16>,
    return
  }
  func.func @transform_0(%arg0: i32) -> (i32, i32) {
    %c0_i32 = arith.constant 0 : i32
    %c0_i32_0 = arith.constant 0 : i32
    return %arg0, %c0_i32 : i32, i32
  }
  func.func @transform_1(%arg0: i32) -> (i32, i32) {
    %c0_i32 = arith.constant 0 : i32
    %c0_i32_0 = arith.constant 0 : i32
    %c0_i32_1 = arith.constant 0 : i32
    return %c0_i32, %c0_i32_0 : i32, i32
  }
  func.func @transform_2(%arg0: i32) -> (i32, i32) {
    %c0_i32 = arith.constant 0 : i32
    %c0_i32_0 = arith.constant 0 : i32
    %c0_i32_1 = arith.constant 0 : i32
    return %c0_i32, %c0_i32_0 : i32, i32
  }
  func.func @transform_3(%arg0: i32) -> (i32, i32) {
    %c0_i32 = arith.constant 0 : i32
    %c0_i32_0 = arith.constant 0 : i32
    %c0_i32_1 = arith.constant 0 : i32
    return %c0_i32, %c0_i32_0 : i32, i32
  }
  func.func @transform_4(%arg0: i32) -> (i32, i32) {
    %c0_i32 = arith.constant 0 : i32
    %c0_i32_0 = arith.constant 0 : i32
    %c0_i32_1 = arith.constant 0 : i32
    return %c0_i32, %c0_i32_0 : i32, i32
  }
  func.func @transform_5(%arg0: i32) -> (i32, i32) {
    %c0_i32 = arith.constant 0 : i32
    %c0_i32_0 = arith.constant 0 : i32
    return %arg0, %c0_i32 : i32, i32
  }
}

module attributes {stable_mosaic.version = 11 : i64} {
  func.func @conv_relu_bn_kernel(%arg0: i32, %arg1: memref<464x256xbf16, #tpu.memory_space<vmem>>, %arg2: memref<256x128xbf16, #tpu.memory_space<vmem>>, %arg3: memref<1x128xf32, #tpu.memory_space<vmem>>, %arg4: memref<1x128xf32, #tpu.memory_space<vmem>>, %arg5: memref<1x128xf32, #tpu.memory_space<vmem>>, %arg6: memref<464x128xbf16, #tpu.memory_space<vmem>>) attributes {dimension_semantics = [#tpu.dimension_semantics<arbitrary>], iteration_bounds = array<i64: 1>, scalar_prefetch = 0 : i64, scratch_operands = 0 : i64, tpu.core_type = #tpu.core_type<tc>, window_params = [{transform_indices = @transform_0, window_bounds = array<i64: 464, 256>}, {pipeline_mode = #tpu.pipeline_mode<synchronous>, transform_indices = @transform_1, window_bounds = array<i64: 256, 128>}, {pipeline_mode = #tpu.pipeline_mode<synchronous>, transform_indices = @transform_2, window_bounds = array<i64: 1, 128>}, {pipeline_mode = #tpu.pipeline_mode<synchronous>, transform_indices = @transform_3, window_bounds = array<i64: 1, 128>}, {pipeline_mode = #tpu.pipeline_mode<synchronous>, transform_indices = @transform_4, window_bounds = array<i64: 1, 128>}, {transform_indices = @transform_5, window_bounds = array<i64: 464, 128>}]} {
    %c0 = arith.constant 0 : index
    %c0_0 = arith.constant 0 : index
    %0 = vector.load %arg1[%c0, %c0_0] : memref<464x256xbf16, #tpu.memory_space<vmem>>, vector<464x256xbf16>
    %c0_1 = arith.constant 0 : index
    %c0_2 = arith.constant 0 : index
    %1 = vector.load %arg2[%c0_1, %c0_2] : memref<256x128xbf16, #tpu.memory_space<vmem>>, vector<256x128xbf16>
    %cst = arith.constant dense<0.000000e+00> : vector<464x128xf32>
    %2 = tpu.matmul %0, %1, %cst {dimension_numbers = #tpu.dot_dimension_numbers<[1], [0], [0], [1], [0, 0, 1, 1], [], []>} : vector<464x256xbf16>, vector<256x128xbf16>, vector<464x128xf32> -> vector<464x128xf32>
    %c0_3 = arith.constant 0 : index
    %c0_4 = arith.constant 0 : index
    %3 = vector.load %arg3[%c0_3, %c0_4] : memref<1x128xf32, #tpu.memory_space<vmem>>, vector<1x128xf32>
    %4 = vector.broadcast %3 : vector<1x128xf32> to vector<464x128xf32>
    %5 = arith.addf %2, %4 : vector<464x128xf32>
    %cst_5 = arith.constant 0.000000e+00 : f32
    %6 = vector.broadcast %cst_5 : f32 to vector<464x128xf32>
    %7 = arith.maximumf %5, %6 : vector<464x128xf32>
    %8 = tpu.iota {dimensions = array<i32: 0>} : vector<464x128xi32>
    %c450_i32 = arith.constant 450 : i32
    %9 = vector.broadcast %c450_i32 : i32 to vector<464x128xi32>
    %10 = arith.cmpi slt, %8, %9 : vector<464x128xi32>
    %cst_6 = arith.constant 0.000000e+00 : f32
    %11 = vector.broadcast %cst_6 : f32 to vector<464x128xf32>
    %12 = arith.select %10, %7, %11 : vector<464x128xi1>, vector<464x128xf32>
    %cst_7 = arith.constant dense<0.000000e+00> : vector<128xf32>
    %13 = vector.multi_reduction <add>, %12, %cst_7 [0] : vector<464x128xf32> to vector<128xf32>
    %14 = vector.shape_cast %13 : vector<128xf32> to vector<1x128xf32>
    %cst_8 = arith.constant 0.00222222228 : f32
    %15 = vector.broadcast %cst_8 : f32 to vector<1x128xf32>
    %16 = arith.mulf %14, %15 : vector<1x128xf32>
    %17 = arith.mulf %12, %12 : vector<464x128xf32>
    %cst_9 = arith.constant dense<0.000000e+00> : vector<128xf32>
    %18 = vector.multi_reduction <add>, %17, %cst_9 [0] : vector<464x128xf32> to vector<128xf32>
    %19 = vector.shape_cast %18 : vector<128xf32> to vector<1x128xf32>
    %cst_10 = arith.constant 0.00222222228 : f32
    %20 = vector.broadcast %cst_10 : f32 to vector<1x128xf32>
    %21 = arith.mulf %19, %20 : vector<1x128xf32>
    %22 = arith.mulf %16, %16 : vector<1x128xf32>
    %23 = arith.subf %21, %22 : vector<1x128xf32>
    %cst_11 = arith.constant 0.000000e+00 : f32
    %24 = vector.broadcast %cst_11 : f32 to vector<1x128xf32>
    %25 = arith.maximumf %23, %24 : vector<1x128xf32>
    %c0_12 = arith.constant 0 : index
    %c0_13 = arith.constant 0 : index
    %26 = vector.load %arg4[%c0_12, %c0_13] : memref<1x128xf32, #tpu.memory_space<vmem>>, vector<1x128xf32>
    %cst_14 = arith.constant 9.99999974E-6 : f32
    %27 = vector.broadcast %cst_14 : f32 to vector<1x128xf32>
    %28 = arith.addf %25, %27 : vector<1x128xf32>
    %29 = math.rsqrt %28 : vector<1x128xf32>
    %30 = arith.mulf %26, %29 : vector<1x128xf32>
    %c0_15 = arith.constant 0 : index
    %c0_16 = arith.constant 0 : index
    %31 = vector.load %arg5[%c0_15, %c0_16] : memref<1x128xf32, #tpu.memory_space<vmem>>, vector<1x128xf32>
    %32 = arith.mulf %16, %30 : vector<1x128xf32>
    %33 = arith.subf %31, %32 : vector<1x128xf32>
    %34 = vector.broadcast %30 : vector<1x128xf32> to vector<464x128xf32>
    %35 = arith.mulf %7, %34 : vector<464x128xf32>
    %36 = vector.broadcast %33 : vector<1x128xf32> to vector<464x128xf32>
    %37 = arith.addf %35, %36 : vector<464x128xf32>
    %38 = arith.truncf %37 : vector<464x128xf32> to vector<464x128xbf16>
    %c0_17 = arith.constant 0 : index
    %c0_18 = arith.constant 0 : index
    %39 = vector.load %arg6[%c0_17, %c0_18] : memref<464x128xbf16, #tpu.memory_space<vmem>>, vector<464x128xbf16>
    tpu.vector_store %arg6[%c0_17, %c0_18], %38 {strides = array<i32>} : memref<464x128xbf16, #tpu.memory_space<vmem>>, vector<464x128xbf16>,
    return
  }
  func.func @transform_0(%arg0: i32) -> (i32, i32) {
    %c0_i32 = arith.constant 0 : i32
    %c0_i32_0 = arith.constant 0 : i32
    return %arg0, %c0_i32 : i32, i32
  }
  func.func @transform_1(%arg0: i32) -> (i32, i32) {
    %c0_i32 = arith.constant 0 : i32
    %c0_i32_0 = arith.constant 0 : i32
    %c0_i32_1 = arith.constant 0 : i32
    return %c0_i32, %c0_i32_0 : i32, i32
  }
  func.func @transform_2(%arg0: i32) -> (i32, i32) {
    %c0_i32 = arith.constant 0 : i32
    %c0_i32_0 = arith.constant 0 : i32
    %c0_i32_1 = arith.constant 0 : i32
    return %c0_i32, %c0_i32_0 : i32, i32
  }
  func.func @transform_3(%arg0: i32) -> (i32, i32) {
    %c0_i32 = arith.constant 0 : i32
    %c0_i32_0 = arith.constant 0 : i32
    %c0_i32_1 = arith.constant 0 : i32
    return %c0_i32, %c0_i32_0 : i32, i32
  }
  func.func @transform_4(%arg0: i32) -> (i32, i32) {
    %c0_i32 = arith.constant 0 : i32
    %c0_i32_0 = arith.constant 0 : i32
    %c0_i32_1 = arith.constant 0 : i32
    return %c0_i32, %c0_i32_0 : i32, i32
  }
  func.func @transform_5(%arg0: i32) -> (i32, i32) {
    %c0_i32 = arith.constant 0 : i32
    %c0_i32_0 = arith.constant 0 : i32
    return %arg0, %c0_i32 : i32, i32
  }
}

module attributes {stable_mosaic.version = 11 : i64} {
  func.func @conv_relu_bn_kernel(%arg0: i32, %arg1: memref<464x384xbf16, #tpu.memory_space<vmem>>, %arg2: memref<384x128xbf16, #tpu.memory_space<vmem>>, %arg3: memref<1x128xf32, #tpu.memory_space<vmem>>, %arg4: memref<1x128xf32, #tpu.memory_space<vmem>>, %arg5: memref<1x128xf32, #tpu.memory_space<vmem>>, %arg6: memref<464x128xbf16, #tpu.memory_space<vmem>>) attributes {dimension_semantics = [#tpu.dimension_semantics<arbitrary>], iteration_bounds = array<i64: 1>, scalar_prefetch = 0 : i64, scratch_operands = 0 : i64, tpu.core_type = #tpu.core_type<tc>, window_params = [{transform_indices = @transform_0, window_bounds = array<i64: 464, 384>}, {pipeline_mode = #tpu.pipeline_mode<synchronous>, transform_indices = @transform_1, window_bounds = array<i64: 384, 128>}, {pipeline_mode = #tpu.pipeline_mode<synchronous>, transform_indices = @transform_2, window_bounds = array<i64: 1, 128>}, {pipeline_mode = #tpu.pipeline_mode<synchronous>, transform_indices = @transform_3, window_bounds = array<i64: 1, 128>}, {pipeline_mode = #tpu.pipeline_mode<synchronous>, transform_indices = @transform_4, window_bounds = array<i64: 1, 128>}, {transform_indices = @transform_5, window_bounds = array<i64: 464, 128>}]} {
    %c0 = arith.constant 0 : index
    %c0_0 = arith.constant 0 : index
    %0 = vector.load %arg1[%c0, %c0_0] : memref<464x384xbf16, #tpu.memory_space<vmem>>, vector<464x384xbf16>
    %c0_1 = arith.constant 0 : index
    %c0_2 = arith.constant 0 : index
    %1 = vector.load %arg2[%c0_1, %c0_2] : memref<384x128xbf16, #tpu.memory_space<vmem>>, vector<384x128xbf16>
    %cst = arith.constant dense<0.000000e+00> : vector<464x128xf32>
    %2 = tpu.matmul %0, %1, %cst {dimension_numbers = #tpu.dot_dimension_numbers<[1], [0], [0], [1], [0, 0, 1, 1], [], []>} : vector<464x384xbf16>, vector<384x128xbf16>, vector<464x128xf32> -> vector<464x128xf32>
    %c0_3 = arith.constant 0 : index
    %c0_4 = arith.constant 0 : index
    %3 = vector.load %arg3[%c0_3, %c0_4] : memref<1x128xf32, #tpu.memory_space<vmem>>, vector<1x128xf32>
    %4 = vector.broadcast %3 : vector<1x128xf32> to vector<464x128xf32>
    %5 = arith.addf %2, %4 : vector<464x128xf32>
    %cst_5 = arith.constant 0.000000e+00 : f32
    %6 = vector.broadcast %cst_5 : f32 to vector<464x128xf32>
    %7 = arith.maximumf %5, %6 : vector<464x128xf32>
    %8 = tpu.iota {dimensions = array<i32: 0>} : vector<464x128xi32>
    %c450_i32 = arith.constant 450 : i32
    %9 = vector.broadcast %c450_i32 : i32 to vector<464x128xi32>
    %10 = arith.cmpi slt, %8, %9 : vector<464x128xi32>
    %cst_6 = arith.constant 0.000000e+00 : f32
    %11 = vector.broadcast %cst_6 : f32 to vector<464x128xf32>
    %12 = arith.select %10, %7, %11 : vector<464x128xi1>, vector<464x128xf32>
    %cst_7 = arith.constant dense<0.000000e+00> : vector<128xf32>
    %13 = vector.multi_reduction <add>, %12, %cst_7 [0] : vector<464x128xf32> to vector<128xf32>
    %14 = vector.shape_cast %13 : vector<128xf32> to vector<1x128xf32>
    %cst_8 = arith.constant 0.00222222228 : f32
    %15 = vector.broadcast %cst_8 : f32 to vector<1x128xf32>
    %16 = arith.mulf %14, %15 : vector<1x128xf32>
    %17 = arith.mulf %12, %12 : vector<464x128xf32>
    %cst_9 = arith.constant dense<0.000000e+00> : vector<128xf32>
    %18 = vector.multi_reduction <add>, %17, %cst_9 [0] : vector<464x128xf32> to vector<128xf32>
    %19 = vector.shape_cast %18 : vector<128xf32> to vector<1x128xf32>
    %cst_10 = arith.constant 0.00222222228 : f32
    %20 = vector.broadcast %cst_10 : f32 to vector<1x128xf32>
    %21 = arith.mulf %19, %20 : vector<1x128xf32>
    %22 = arith.mulf %16, %16 : vector<1x128xf32>
    %23 = arith.subf %21, %22 : vector<1x128xf32>
    %cst_11 = arith.constant 0.000000e+00 : f32
    %24 = vector.broadcast %cst_11 : f32 to vector<1x128xf32>
    %25 = arith.maximumf %23, %24 : vector<1x128xf32>
    %c0_12 = arith.constant 0 : index
    %c0_13 = arith.constant 0 : index
    %26 = vector.load %arg4[%c0_12, %c0_13] : memref<1x128xf32, #tpu.memory_space<vmem>>, vector<1x128xf32>
    %cst_14 = arith.constant 9.99999974E-6 : f32
    %27 = vector.broadcast %cst_14 : f32 to vector<1x128xf32>
    %28 = arith.addf %25, %27 : vector<1x128xf32>
    %29 = math.rsqrt %28 : vector<1x128xf32>
    %30 = arith.mulf %26, %29 : vector<1x128xf32>
    %c0_15 = arith.constant 0 : index
    %c0_16 = arith.constant 0 : index
    %31 = vector.load %arg5[%c0_15, %c0_16] : memref<1x128xf32, #tpu.memory_space<vmem>>, vector<1x128xf32>
    %32 = arith.mulf %16, %30 : vector<1x128xf32>
    %33 = arith.subf %31, %32 : vector<1x128xf32>
    %34 = vector.broadcast %30 : vector<1x128xf32> to vector<464x128xf32>
    %35 = arith.mulf %7, %34 : vector<464x128xf32>
    %36 = vector.broadcast %33 : vector<1x128xf32> to vector<464x128xf32>
    %37 = arith.addf %35, %36 : vector<464x128xf32>
    %38 = arith.truncf %37 : vector<464x128xf32> to vector<464x128xbf16>
    %c0_17 = arith.constant 0 : index
    %c0_18 = arith.constant 0 : index
    %39 = vector.load %arg6[%c0_17, %c0_18] : memref<464x128xbf16, #tpu.memory_space<vmem>>, vector<464x128xbf16>
    tpu.vector_store %arg6[%c0_17, %c0_18], %38 {strides = array<i32>} : memref<464x128xbf16, #tpu.memory_space<vmem>>, vector<464x128xbf16>,
    return
  }
  func.func @transform_0(%arg0: i32) -> (i32, i32) {
    %c0_i32 = arith.constant 0 : i32
    %c0_i32_0 = arith.constant 0 : i32
    return %arg0, %c0_i32 : i32, i32
  }
  func.func @transform_1(%arg0: i32) -> (i32, i32) {
    %c0_i32 = arith.constant 0 : i32
    %c0_i32_0 = arith.constant 0 : i32
    %c0_i32_1 = arith.constant 0 : i32
    return %c0_i32, %c0_i32_0 : i32, i32
  }
  func.func @transform_2(%arg0: i32) -> (i32, i32) {
    %c0_i32 = arith.constant 0 : i32
    %c0_i32_0 = arith.constant 0 : i32
    %c0_i32_1 = arith.constant 0 : i32
    return %c0_i32, %c0_i32_0 : i32, i32
  }
  func.func @transform_3(%arg0: i32) -> (i32, i32) {
    %c0_i32 = arith.constant 0 : i32
    %c0_i32_0 = arith.constant 0 : i32
    %c0_i32_1 = arith.constant 0 : i32
    return %c0_i32, %c0_i32_0 : i32, i32
  }
  func.func @transform_4(%arg0: i32) -> (i32, i32) {
    %c0_i32 = arith.constant 0 : i32
    %c0_i32_0 = arith.constant 0 : i32
    %c0_i32_1 = arith.constant 0 : i32
    return %c0_i32, %c0_i32_0 : i32, i32
  }
  func.func @transform_5(%arg0: i32) -> (i32, i32) {
    %c0_i32 = arith.constant 0 : i32
    %c0_i32_0 = arith.constant 0 : i32
    return %arg0, %c0_i32 : i32, i32
  }
}

module attributes {stable_mosaic.version = 11 : i64} {
  func.func @conv_relu_bn_kernel(%arg0: i32, %arg1: memref<128x640xbf16, #tpu.memory_space<vmem>>, %arg2: memref<640x128xbf16, #tpu.memory_space<vmem>>, %arg3: memref<1x128xf32, #tpu.memory_space<vmem>>, %arg4: memref<1x128xf32, #tpu.memory_space<vmem>>, %arg5: memref<1x128xf32, #tpu.memory_space<vmem>>, %arg6: memref<128x128xbf16, #tpu.memory_space<vmem>>) attributes {dimension_semantics = [#tpu.dimension_semantics<arbitrary>], iteration_bounds = array<i64: 1>, scalar_prefetch = 0 : i64, scratch_operands = 0 : i64, tpu.core_type = #tpu.core_type<tc>, window_params = [{transform_indices = @transform_0, window_bounds = array<i64: 128, 640>}, {pipeline_mode = #tpu.pipeline_mode<synchronous>, transform_indices = @transform_1, window_bounds = array<i64: 640, 128>}, {pipeline_mode = #tpu.pipeline_mode<synchronous>, transform_indices = @transform_2, window_bounds = array<i64: 1, 128>}, {pipeline_mode = #tpu.pipeline_mode<synchronous>, transform_indices = @transform_3, window_bounds = array<i64: 1, 128>}, {pipeline_mode = #tpu.pipeline_mode<synchronous>, transform_indices = @transform_4, window_bounds = array<i64: 1, 128>}, {transform_indices = @transform_5, window_bounds = array<i64: 128, 128>}]} {
    %c0 = arith.constant 0 : index
    %c0_0 = arith.constant 0 : index
    %0 = vector.load %arg1[%c0, %c0_0] : memref<128x640xbf16, #tpu.memory_space<vmem>>, vector<128x640xbf16>
    %c0_1 = arith.constant 0 : index
    %c0_2 = arith.constant 0 : index
    %1 = vector.load %arg2[%c0_1, %c0_2] : memref<640x128xbf16, #tpu.memory_space<vmem>>, vector<640x128xbf16>
    %cst = arith.constant dense<0.000000e+00> : vector<128x128xf32>
    %2 = tpu.matmul %0, %1, %cst {dimension_numbers = #tpu.dot_dimension_numbers<[1], [0], [0], [1], [0, 0, 1, 1], [], []>} : vector<128x640xbf16>, vector<640x128xbf16>, vector<128x128xf32> -> vector<128x128xf32>
    %c0_3 = arith.constant 0 : index
    %c0_4 = arith.constant 0 : index
    %3 = vector.load %arg3[%c0_3, %c0_4] : memref<1x128xf32, #tpu.memory_space<vmem>>, vector<1x128xf32>
    %4 = vector.broadcast %3 : vector<1x128xf32> to vector<128x128xf32>
    %5 = arith.addf %2, %4 : vector<128x128xf32>
    %cst_5 = arith.constant 0.000000e+00 : f32
    %6 = vector.broadcast %cst_5 : f32 to vector<128x128xf32>
    %7 = arith.maximumf %5, %6 : vector<128x128xf32>
    %8 = tpu.iota {dimensions = array<i32: 0>} : vector<128x128xi32>
    %c128_i32 = arith.constant 128 : i32
    %9 = vector.broadcast %c128_i32 : i32 to vector<128x128xi32>
    %10 = arith.cmpi slt, %8, %9 : vector<128x128xi32>
    %cst_6 = arith.constant 0.000000e+00 : f32
    %11 = vector.broadcast %cst_6 : f32 to vector<128x128xf32>
    %12 = arith.select %10, %7, %11 : vector<128x128xi1>, vector<128x128xf32>
    %cst_7 = arith.constant dense<0.000000e+00> : vector<128xf32>
    %13 = vector.multi_reduction <add>, %12, %cst_7 [0] : vector<128x128xf32> to vector<128xf32>
    %14 = vector.shape_cast %13 : vector<128xf32> to vector<1x128xf32>
    %cst_8 = arith.constant 7.812500e-03 : f32
    %15 = vector.broadcast %cst_8 : f32 to vector<1x128xf32>
    %16 = arith.mulf %14, %15 : vector<1x128xf32>
    %17 = arith.mulf %12, %12 : vector<128x128xf32>
    %cst_9 = arith.constant dense<0.000000e+00> : vector<128xf32>
    %18 = vector.multi_reduction <add>, %17, %cst_9 [0] : vector<128x128xf32> to vector<128xf32>
    %19 = vector.shape_cast %18 : vector<128xf32> to vector<1x128xf32>
    %cst_10 = arith.constant 7.812500e-03 : f32
    %20 = vector.broadcast %cst_10 : f32 to vector<1x128xf32>
    %21 = arith.mulf %19, %20 : vector<1x128xf32>
    %22 = arith.mulf %16, %16 : vector<1x128xf32>
    %23 = arith.subf %21, %22 : vector<1x128xf32>
    %cst_11 = arith.constant 0.000000e+00 : f32
    %24 = vector.broadcast %cst_11 : f32 to vector<1x128xf32>
    %25 = arith.maximumf %23, %24 : vector<1x128xf32>
    %c0_12 = arith.constant 0 : index
    %c0_13 = arith.constant 0 : index
    %26 = vector.load %arg4[%c0_12, %c0_13] : memref<1x128xf32, #tpu.memory_space<vmem>>, vector<1x128xf32>
    %cst_14 = arith.constant 9.99999974E-6 : f32
    %27 = vector.broadcast %cst_14 : f32 to vector<1x128xf32>
    %28 = arith.addf %25, %27 : vector<1x128xf32>
    %29 = math.rsqrt %28 : vector<1x128xf32>
    %30 = arith.mulf %26, %29 : vector<1x128xf32>
    %c0_15 = arith.constant 0 : index
    %c0_16 = arith.constant 0 : index
    %31 = vector.load %arg5[%c0_15, %c0_16] : memref<1x128xf32, #tpu.memory_space<vmem>>, vector<1x128xf32>
    %32 = arith.mulf %16, %30 : vector<1x128xf32>
    %33 = arith.subf %31, %32 : vector<1x128xf32>
    %34 = vector.broadcast %30 : vector<1x128xf32> to vector<128x128xf32>
    %35 = arith.mulf %7, %34 : vector<128x128xf32>
    %36 = vector.broadcast %33 : vector<1x128xf32> to vector<128x128xf32>
    %37 = arith.addf %35, %36 : vector<128x128xf32>
    %38 = arith.truncf %37 : vector<128x128xf32> to vector<128x128xbf16>
    %c0_17 = arith.constant 0 : index
    %c0_18 = arith.constant 0 : index
    %39 = vector.load %arg6[%c0_17, %c0_18] : memref<128x128xbf16, #tpu.memory_space<vmem>>, vector<128x128xbf16>
    tpu.vector_store %arg6[%c0_17, %c0_18], %38 {strides = array<i32>} : memref<128x128xbf16, #tpu.memory_space<vmem>>, vector<128x128xbf16>,
    return
  }
  func.func @transform_0(%arg0: i32) -> (i32, i32) {
    %c0_i32 = arith.constant 0 : i32
    %c0_i32_0 = arith.constant 0 : i32
    return %arg0, %c0_i32 : i32, i32
  }
  func.func @transform_1(%arg0: i32) -> (i32, i32) {
    %c0_i32 = arith.constant 0 : i32
    %c0_i32_0 = arith.constant 0 : i32
    %c0_i32_1 = arith.constant 0 : i32
    return %c0_i32, %c0_i32_0 : i32, i32
  }
  func.func @transform_2(%arg0: i32) -> (i32, i32) {
    %c0_i32 = arith.constant 0 : i32
    %c0_i32_0 = arith.constant 0 : i32
    %c0_i32_1 = arith.constant 0 : i32
    return %c0_i32, %c0_i32_0 : i32, i32
  }
  func.func @transform_3(%arg0: i32) -> (i32, i32) {
    %c0_i32 = arith.constant 0 : i32
    %c0_i32_0 = arith.constant 0 : i32
    %c0_i32_1 = arith.constant 0 : i32
    return %c0_i32, %c0_i32_0 : i32, i32
  }
  func.func @transform_4(%arg0: i32) -> (i32, i32) {
    %c0_i32 = arith.constant 0 : i32
    %c0_i32_0 = arith.constant 0 : i32
    %c0_i32_1 = arith.constant 0 : i32
    return %c0_i32, %c0_i32_0 : i32, i32
  }
  func.func @transform_5(%arg0: i32) -> (i32, i32) {
    %c0_i32 = arith.constant 0 : i32
    %c0_i32_0 = arith.constant 0 : i32
    return %arg0, %c0_i32 : i32, i32
  }
}

module attributes {stable_mosaic.version = 11 : i64} {
  func.func @conv_relu_bn_kernel(%arg0: i32, %arg1: memref<128x1152xbf16, #tpu.memory_space<vmem>>, %arg2: memref<1152x128xbf16, #tpu.memory_space<vmem>>, %arg3: memref<1x128xf32, #tpu.memory_space<vmem>>, %arg4: memref<1x128xf32, #tpu.memory_space<vmem>>, %arg5: memref<1x128xf32, #tpu.memory_space<vmem>>, %arg6: memref<128x128xbf16, #tpu.memory_space<vmem>>) attributes {dimension_semantics = [#tpu.dimension_semantics<arbitrary>], iteration_bounds = array<i64: 1>, scalar_prefetch = 0 : i64, scratch_operands = 0 : i64, tpu.core_type = #tpu.core_type<tc>, window_params = [{transform_indices = @transform_0, window_bounds = array<i64: 128, 1152>}, {pipeline_mode = #tpu.pipeline_mode<synchronous>, transform_indices = @transform_1, window_bounds = array<i64: 1152, 128>}, {pipeline_mode = #tpu.pipeline_mode<synchronous>, transform_indices = @transform_2, window_bounds = array<i64: 1, 128>}, {pipeline_mode = #tpu.pipeline_mode<synchronous>, transform_indices = @transform_3, window_bounds = array<i64: 1, 128>}, {pipeline_mode = #tpu.pipeline_mode<synchronous>, transform_indices = @transform_4, window_bounds = array<i64: 1, 128>}, {transform_indices = @transform_5, window_bounds = array<i64: 128, 128>}]} {
    %c0 = arith.constant 0 : index
    %c0_0 = arith.constant 0 : index
    %0 = vector.load %arg1[%c0, %c0_0] : memref<128x1152xbf16, #tpu.memory_space<vmem>>, vector<128x1152xbf16>
    %c0_1 = arith.constant 0 : index
    %c0_2 = arith.constant 0 : index
    %1 = vector.load %arg2[%c0_1, %c0_2] : memref<1152x128xbf16, #tpu.memory_space<vmem>>, vector<1152x128xbf16>
    %cst = arith.constant dense<0.000000e+00> : vector<128x128xf32>
    %2 = tpu.matmul %0, %1, %cst {dimension_numbers = #tpu.dot_dimension_numbers<[1], [0], [0], [1], [0, 0, 1, 1], [], []>} : vector<128x1152xbf16>, vector<1152x128xbf16>, vector<128x128xf32> -> vector<128x128xf32>
    %c0_3 = arith.constant 0 : index
    %c0_4 = arith.constant 0 : index
    %3 = vector.load %arg3[%c0_3, %c0_4] : memref<1x128xf32, #tpu.memory_space<vmem>>, vector<1x128xf32>
    %4 = vector.broadcast %3 : vector<1x128xf32> to vector<128x128xf32>
    %5 = arith.addf %2, %4 : vector<128x128xf32>
    %cst_5 = arith.constant 0.000000e+00 : f32
    %6 = vector.broadcast %cst_5 : f32 to vector<128x128xf32>
    %7 = arith.maximumf %5, %6 : vector<128x128xf32>
    %8 = tpu.iota {dimensions = array<i32: 0>} : vector<128x128xi32>
    %c128_i32 = arith.constant 128 : i32
    %9 = vector.broadcast %c128_i32 : i32 to vector<128x128xi32>
    %10 = arith.cmpi slt, %8, %9 : vector<128x128xi32>
    %cst_6 = arith.constant 0.000000e+00 : f32
    %11 = vector.broadcast %cst_6 : f32 to vector<128x128xf32>
    %12 = arith.select %10, %7, %11 : vector<128x128xi1>, vector<128x128xf32>
    %cst_7 = arith.constant dense<0.000000e+00> : vector<128xf32>
    %13 = vector.multi_reduction <add>, %12, %cst_7 [0] : vector<128x128xf32> to vector<128xf32>
    %14 = vector.shape_cast %13 : vector<128xf32> to vector<1x128xf32>
    %cst_8 = arith.constant 7.812500e-03 : f32
    %15 = vector.broadcast %cst_8 : f32 to vector<1x128xf32>
    %16 = arith.mulf %14, %15 : vector<1x128xf32>
    %17 = arith.mulf %12, %12 : vector<128x128xf32>
    %cst_9 = arith.constant dense<0.000000e+00> : vector<128xf32>
    %18 = vector.multi_reduction <add>, %17, %cst_9 [0] : vector<128x128xf32> to vector<128xf32>
    %19 = vector.shape_cast %18 : vector<128xf32> to vector<1x128xf32>
    %cst_10 = arith.constant 7.812500e-03 : f32
    %20 = vector.broadcast %cst_10 : f32 to vector<1x128xf32>
    %21 = arith.mulf %19, %20 : vector<1x128xf32>
    %22 = arith.mulf %16, %16 : vector<1x128xf32>
    %23 = arith.subf %21, %22 : vector<1x128xf32>
    %cst_11 = arith.constant 0.000000e+00 : f32
    %24 = vector.broadcast %cst_11 : f32 to vector<1x128xf32>
    %25 = arith.maximumf %23, %24 : vector<1x128xf32>
    %c0_12 = arith.constant 0 : index
    %c0_13 = arith.constant 0 : index
    %26 = vector.load %arg4[%c0_12, %c0_13] : memref<1x128xf32, #tpu.memory_space<vmem>>, vector<1x128xf32>
    %cst_14 = arith.constant 9.99999974E-6 : f32
    %27 = vector.broadcast %cst_14 : f32 to vector<1x128xf32>
    %28 = arith.addf %25, %27 : vector<1x128xf32>
    %29 = math.rsqrt %28 : vector<1x128xf32>
    %30 = arith.mulf %26, %29 : vector<1x128xf32>
    %c0_15 = arith.constant 0 : index
    %c0_16 = arith.constant 0 : index
    %31 = vector.load %arg5[%c0_15, %c0_16] : memref<1x128xf32, #tpu.memory_space<vmem>>, vector<1x128xf32>
    %32 = arith.mulf %16, %30 : vector<1x128xf32>
    %33 = arith.subf %31, %32 : vector<1x128xf32>
    %34 = vector.broadcast %30 : vector<1x128xf32> to vector<128x128xf32>
    %35 = arith.mulf %7, %34 : vector<128x128xf32>
    %36 = vector.broadcast %33 : vector<1x128xf32> to vector<128x128xf32>
    %37 = arith.addf %35, %36 : vector<128x128xf32>
    %38 = arith.truncf %37 : vector<128x128xf32> to vector<128x128xbf16>
    %c0_17 = arith.constant 0 : index
    %c0_18 = arith.constant 0 : index
    %39 = vector.load %arg6[%c0_17, %c0_18] : memref<128x128xbf16, #tpu.memory_space<vmem>>, vector<128x128xbf16>
    tpu.vector_store %arg6[%c0_17, %c0_18], %38 {strides = array<i32>} : memref<128x128xbf16, #tpu.memory_space<vmem>>, vector<128x128xbf16>,
    return
  }
  func.func @transform_0(%arg0: i32) -> (i32, i32) {
    %c0_i32 = arith.constant 0 : i32
    %c0_i32_0 = arith.constant 0 : i32
    return %arg0, %c0_i32 : i32, i32
  }
  func.func @transform_1(%arg0: i32) -> (i32, i32) {
    %c0_i32 = arith.constant 0 : i32
    %c0_i32_0 = arith.constant 0 : i32
    %c0_i32_1 = arith.constant 0 : i32
    return %c0_i32, %c0_i32_0 : i32, i32
  }
  func.func @transform_2(%arg0: i32) -> (i32, i32) {
    %c0_i32 = arith.constant 0 : i32
    %c0_i32_0 = arith.constant 0 : i32
    %c0_i32_1 = arith.constant 0 : i32
    return %c0_i32, %c0_i32_0 : i32, i32
  }
  func.func @transform_3(%arg0: i32) -> (i32, i32) {
    %c0_i32 = arith.constant 0 : i32
    %c0_i32_0 = arith.constant 0 : i32
    %c0_i32_1 = arith.constant 0 : i32
    return %c0_i32, %c0_i32_0 : i32, i32
  }
  func.func @transform_4(%arg0: i32) -> (i32, i32) {
    %c0_i32 = arith.constant 0 : i32
    %c0_i32_0 = arith.constant 0 : i32
    %c0_i32_1 = arith.constant 0 : i32
    return %c0_i32, %c0_i32_0 : i32, i32
  }
  func.func @transform_5(%arg0: i32) -> (i32, i32) {
    %c0_i32 = arith.constant 0 : i32
    %c0_i32_0 = arith.constant 0 : i32
    return %arg0, %c0_i32 : i32, i32
  }
}

module attributes {stable_mosaic.version = 11 : i64} {
  func.func @conv_relu_bn_kernel(%arg0: i32, %arg1: memref<32x1152xbf16, #tpu.memory_space<vmem>>, %arg2: memref<1152x128xbf16, #tpu.memory_space<vmem>>, %arg3: memref<1x128xf32, #tpu.memory_space<vmem>>, %arg4: memref<1x128xf32, #tpu.memory_space<vmem>>, %arg5: memref<1x128xf32, #tpu.memory_space<vmem>>, %arg6: memref<32x128xbf16, #tpu.memory_space<vmem>>) attributes {dimension_semantics = [#tpu.dimension_semantics<arbitrary>], iteration_bounds = array<i64: 1>, scalar_prefetch = 0 : i64, scratch_operands = 0 : i64, tpu.core_type = #tpu.core_type<tc>, window_params = [{transform_indices = @transform_0, window_bounds = array<i64: 32, 1152>}, {pipeline_mode = #tpu.pipeline_mode<synchronous>, transform_indices = @transform_1, window_bounds = array<i64: 1152, 128>}, {pipeline_mode = #tpu.pipeline_mode<synchronous>, transform_indices = @transform_2, window_bounds = array<i64: 1, 128>}, {pipeline_mode = #tpu.pipeline_mode<synchronous>, transform_indices = @transform_3, window_bounds = array<i64: 1, 128>}, {pipeline_mode = #tpu.pipeline_mode<synchronous>, transform_indices = @transform_4, window_bounds = array<i64: 1, 128>}, {transform_indices = @transform_5, window_bounds = array<i64: 32, 128>}]} {
    %c0 = arith.constant 0 : index
    %c0_0 = arith.constant 0 : index
    %0 = vector.load %arg1[%c0, %c0_0] : memref<32x1152xbf16, #tpu.memory_space<vmem>>, vector<32x1152xbf16>
    %c0_1 = arith.constant 0 : index
    %c0_2 = arith.constant 0 : index
    %1 = vector.load %arg2[%c0_1, %c0_2] : memref<1152x128xbf16, #tpu.memory_space<vmem>>, vector<1152x128xbf16>
    %cst = arith.constant dense<0.000000e+00> : vector<32x128xf32>
    %2 = tpu.matmul %0, %1, %cst {dimension_numbers = #tpu.dot_dimension_numbers<[1], [0], [0], [1], [0, 0, 1, 1], [], []>} : vector<32x1152xbf16>, vector<1152x128xbf16>, vector<32x128xf32> -> vector<32x128xf32>
    %c0_3 = arith.constant 0 : index
    %c0_4 = arith.constant 0 : index
    %3 = vector.load %arg3[%c0_3, %c0_4] : memref<1x128xf32, #tpu.memory_space<vmem>>, vector<1x128xf32>
    %4 = vector.broadcast %3 : vector<1x128xf32> to vector<32x128xf32>
    %5 = arith.addf %2, %4 : vector<32x128xf32>
    %cst_5 = arith.constant 0.000000e+00 : f32
    %6 = vector.broadcast %cst_5 : f32 to vector<32x128xf32>
    %7 = arith.maximumf %5, %6 : vector<32x128xf32>
    %8 = tpu.iota {dimensions = array<i32: 0>} : vector<32x128xi32>
    %c32_i32 = arith.constant 32 : i32
    %9 = vector.broadcast %c32_i32 : i32 to vector<32x128xi32>
    %10 = arith.cmpi slt, %8, %9 : vector<32x128xi32>
    %cst_6 = arith.constant 0.000000e+00 : f32
    %11 = vector.broadcast %cst_6 : f32 to vector<32x128xf32>
    %12 = arith.select %10, %7, %11 : vector<32x128xi1>, vector<32x128xf32>
    %cst_7 = arith.constant dense<0.000000e+00> : vector<128xf32>
    %13 = vector.multi_reduction <add>, %12, %cst_7 [0] : vector<32x128xf32> to vector<128xf32>
    %14 = vector.shape_cast %13 : vector<128xf32> to vector<1x128xf32>
    %cst_8 = arith.constant 3.125000e-02 : f32
    %15 = vector.broadcast %cst_8 : f32 to vector<1x128xf32>
    %16 = arith.mulf %14, %15 : vector<1x128xf32>
    %17 = arith.mulf %12, %12 : vector<32x128xf32>
    %cst_9 = arith.constant dense<0.000000e+00> : vector<128xf32>
    %18 = vector.multi_reduction <add>, %17, %cst_9 [0] : vector<32x128xf32> to vector<128xf32>
    %19 = vector.shape_cast %18 : vector<128xf32> to vector<1x128xf32>
    %cst_10 = arith.constant 3.125000e-02 : f32
    %20 = vector.broadcast %cst_10 : f32 to vector<1x128xf32>
    %21 = arith.mulf %19, %20 : vector<1x128xf32>
    %22 = arith.mulf %16, %16 : vector<1x128xf32>
    %23 = arith.subf %21, %22 : vector<1x128xf32>
    %cst_11 = arith.constant 0.000000e+00 : f32
    %24 = vector.broadcast %cst_11 : f32 to vector<1x128xf32>
    %25 = arith.maximumf %23, %24 : vector<1x128xf32>
    %c0_12 = arith.constant 0 : index
    %c0_13 = arith.constant 0 : index
    %26 = vector.load %arg4[%c0_12, %c0_13] : memref<1x128xf32, #tpu.memory_space<vmem>>, vector<1x128xf32>
    %cst_14 = arith.constant 9.99999974E-6 : f32
    %27 = vector.broadcast %cst_14 : f32 to vector<1x128xf32>
    %28 = arith.addf %25, %27 : vector<1x128xf32>
    %29 = math.rsqrt %28 : vector<1x128xf32>
    %30 = arith.mulf %26, %29 : vector<1x128xf32>
    %c0_15 = arith.constant 0 : index
    %c0_16 = arith.constant 0 : index
    %31 = vector.load %arg5[%c0_15, %c0_16] : memref<1x128xf32, #tpu.memory_space<vmem>>, vector<1x128xf32>
    %32 = arith.mulf %16, %30 : vector<1x128xf32>
    %33 = arith.subf %31, %32 : vector<1x128xf32>
    %34 = vector.broadcast %30 : vector<1x128xf32> to vector<32x128xf32>
    %35 = arith.mulf %7, %34 : vector<32x128xf32>
    %36 = vector.broadcast %33 : vector<1x128xf32> to vector<32x128xf32>
    %37 = arith.addf %35, %36 : vector<32x128xf32>
    %38 = arith.truncf %37 : vector<32x128xf32> to vector<32x128xbf16>
    %c0_17 = arith.constant 0 : index
    %c0_18 = arith.constant 0 : index
    %39 = vector.load %arg6[%c0_17, %c0_18] : memref<32x128xbf16, #tpu.memory_space<vmem>>, vector<32x128xbf16>
    tpu.vector_store %arg6[%c0_17, %c0_18], %38 {strides = array<i32>} : memref<32x128xbf16, #tpu.memory_space<vmem>>, vector<32x128xbf16>,
    return
  }
  func.func @transform_0(%arg0: i32) -> (i32, i32) {
    %c0_i32 = arith.constant 0 : i32
    %c0_i32_0 = arith.constant 0 : i32
    return %arg0, %c0_i32 : i32, i32
  }
  func.func @transform_1(%arg0: i32) -> (i32, i32) {
    %c0_i32 = arith.constant 0 : i32
    %c0_i32_0 = arith.constant 0 : i32
    %c0_i32_1 = arith.constant 0 : i32
    return %c0_i32, %c0_i32_0 : i32, i32
  }
  func.func @transform_2(%arg0: i32) -> (i32, i32) {
    %c0_i32 = arith.constant 0 : i32
    %c0_i32_0 = arith.constant 0 : i32
    %c0_i32_1 = arith.constant 0 : i32
    return %c0_i32, %c0_i32_0 : i32, i32
  }
  func.func @transform_3(%arg0: i32) -> (i32, i32) {
    %c0_i32 = arith.constant 0 : i32
    %c0_i32_0 = arith.constant 0 : i32
    %c0_i32_1 = arith.constant 0 : i32
    return %c0_i32, %c0_i32_0 : i32, i32
  }
  func.func @transform_4(%arg0: i32) -> (i32, i32) {
    %c0_i32 = arith.constant 0 : i32
    %c0_i32_0 = arith.constant 0 : i32
    %c0_i32_1 = arith.constant 0 : i32
    return %c0_i32, %c0_i32_0 : i32, i32
  }
  func.func @transform_5(%arg0: i32) -> (i32, i32) {
    %c0_i32 = arith.constant 0 : i32
    %c0_i32_0 = arith.constant 0 : i32
    return %arg0, %c0_i32 : i32, i32
  }
}

module attributes {stable_mosaic.version = 11 : i64} {
  func.func @conv_kernel(%arg0: i32, %arg1: memref<32x128xbf16, #tpu.memory_space<vmem>>, %arg2: memref<128x128xbf16, #tpu.memory_space<vmem>>, %arg3: memref<1x128xf32, #tpu.memory_space<vmem>>, %arg4: memref<32x128xbf16, #tpu.memory_space<vmem>>) attributes {dimension_semantics = [#tpu.dimension_semantics<arbitrary>], iteration_bounds = array<i64: 1>, scalar_prefetch = 0 : i64, scratch_operands = 0 : i64, tpu.core_type = #tpu.core_type<tc>, window_params = [{transform_indices = @transform_0, window_bounds = array<i64: 32, 128>}, {pipeline_mode = #tpu.pipeline_mode<synchronous>, transform_indices = @transform_1, window_bounds = array<i64: 128, 128>}, {pipeline_mode = #tpu.pipeline_mode<synchronous>, transform_indices = @transform_2, window_bounds = array<i64: 1, 128>}, {transform_indices = @transform_3, window_bounds = array<i64: 32, 128>}]} {
    %c0 = arith.constant 0 : index
    %c0_0 = arith.constant 0 : index
    %0 = vector.load %arg1[%c0, %c0_0] : memref<32x128xbf16, #tpu.memory_space<vmem>>, vector<32x128xbf16>
    %c0_1 = arith.constant 0 : index
    %c0_2 = arith.constant 0 : index
    %1 = vector.load %arg2[%c0_1, %c0_2] : memref<128x128xbf16, #tpu.memory_space<vmem>>, vector<128x128xbf16>
    %cst = arith.constant dense<0.000000e+00> : vector<32x128xf32>
    %2 = tpu.matmul %0, %1, %cst {dimension_numbers = #tpu.dot_dimension_numbers<[1], [0], [0], [1], [0, 0, 1, 1], [], []>} : vector<32x128xbf16>, vector<128x128xbf16>, vector<32x128xf32> -> vector<32x128xf32>
    %c0_3 = arith.constant 0 : index
    %c0_4 = arith.constant 0 : index
    %3 = vector.load %arg3[%c0_3, %c0_4] : memref<1x128xf32, #tpu.memory_space<vmem>>, vector<1x128xf32>
    %4 = vector.broadcast %3 : vector<1x128xf32> to vector<32x128xf32>
    %5 = arith.addf %2, %4 : vector<32x128xf32>
    %6 = arith.truncf %5 : vector<32x128xf32> to vector<32x128xbf16>
    %c0_5 = arith.constant 0 : index
    %c0_6 = arith.constant 0 : index
    %7 = vector.load %arg4[%c0_5, %c0_6] : memref<32x128xbf16, #tpu.memory_space<vmem>>, vector<32x128xbf16>
    tpu.vector_store %arg4[%c0_5, %c0_6], %6 {strides = array<i32>} : memref<32x128xbf16, #tpu.memory_space<vmem>>, vector<32x128xbf16>,
    return
  }
  func.func @transform_0(%arg0: i32) -> (i32, i32) {
    %c0_i32 = arith.constant 0 : i32
    %c0_i32_0 = arith.constant 0 : i32
    return %arg0, %c0_i32 : i32, i32
  }
  func.func @transform_1(%arg0: i32) -> (i32, i32) {
    %c0_i32 = arith.constant 0 : i32
    %c0_i32_0 = arith.constant 0 : i32
    %c0_i32_1 = arith.constant 0 : i32
    return %c0_i32, %c0_i32_0 : i32, i32
  }
  func.func @transform_2(%arg0: i32) -> (i32, i32) {
    %c0_i32 = arith.constant 0 : i32
    %c0_i32_0 = arith.constant 0 : i32
    %c0_i32_1 = arith.constant 0 : i32
    return %c0_i32, %c0_i32_0 : i32, i32
  }
  func.func @transform_3(%arg0: i32) -> (i32, i32) {
    %c0_i32 = arith.constant 0 : i32
    %c0_i32_0 = arith.constant 0 : i32
    return %arg0, %c0_i32 : i32, i32
  }
}

module attributes {stable_mosaic.version = 11 : i64} {
  func.func @conv_relu_bn_kernel(%arg0: i32, %arg1: memref<32x384xbf16, #tpu.memory_space<vmem>>, %arg2: memref<384x128xbf16, #tpu.memory_space<vmem>>, %arg3: memref<1x128xf32, #tpu.memory_space<vmem>>, %arg4: memref<1x128xf32, #tpu.memory_space<vmem>>, %arg5: memref<1x128xf32, #tpu.memory_space<vmem>>, %arg6: memref<32x128xbf16, #tpu.memory_space<vmem>>) attributes {dimension_semantics = [#tpu.dimension_semantics<arbitrary>], iteration_bounds = array<i64: 1>, scalar_prefetch = 0 : i64, scratch_operands = 0 : i64, tpu.core_type = #tpu.core_type<tc>, window_params = [{transform_indices = @transform_0, window_bounds = array<i64: 32, 384>}, {pipeline_mode = #tpu.pipeline_mode<synchronous>, transform_indices = @transform_1, window_bounds = array<i64: 384, 128>}, {pipeline_mode = #tpu.pipeline_mode<synchronous>, transform_indices = @transform_2, window_bounds = array<i64: 1, 128>}, {pipeline_mode = #tpu.pipeline_mode<synchronous>, transform_indices = @transform_3, window_bounds = array<i64: 1, 128>}, {pipeline_mode = #tpu.pipeline_mode<synchronous>, transform_indices = @transform_4, window_bounds = array<i64: 1, 128>}, {transform_indices = @transform_5, window_bounds = array<i64: 32, 128>}]} {
    %c0 = arith.constant 0 : index
    %c0_0 = arith.constant 0 : index
    %0 = vector.load %arg1[%c0, %c0_0] : memref<32x384xbf16, #tpu.memory_space<vmem>>, vector<32x384xbf16>
    %c0_1 = arith.constant 0 : index
    %c0_2 = arith.constant 0 : index
    %1 = vector.load %arg2[%c0_1, %c0_2] : memref<384x128xbf16, #tpu.memory_space<vmem>>, vector<384x128xbf16>
    %cst = arith.constant dense<0.000000e+00> : vector<32x128xf32>
    %2 = tpu.matmul %0, %1, %cst {dimension_numbers = #tpu.dot_dimension_numbers<[1], [0], [0], [1], [0, 0, 1, 1], [], []>} : vector<32x384xbf16>, vector<384x128xbf16>, vector<32x128xf32> -> vector<32x128xf32>
    %c0_3 = arith.constant 0 : index
    %c0_4 = arith.constant 0 : index
    %3 = vector.load %arg3[%c0_3, %c0_4] : memref<1x128xf32, #tpu.memory_space<vmem>>, vector<1x128xf32>
    %4 = vector.broadcast %3 : vector<1x128xf32> to vector<32x128xf32>
    %5 = arith.addf %2, %4 : vector<32x128xf32>
    %cst_5 = arith.constant 0.000000e+00 : f32
    %6 = vector.broadcast %cst_5 : f32 to vector<32x128xf32>
    %7 = arith.maximumf %5, %6 : vector<32x128xf32>
    %8 = tpu.iota {dimensions = array<i32: 0>} : vector<32x128xi32>
    %c32_i32 = arith.constant 32 : i32
    %9 = vector.broadcast %c32_i32 : i32 to vector<32x128xi32>
    %10 = arith.cmpi slt, %8, %9 : vector<32x128xi32>
    %cst_6 = arith.constant 0.000000e+00 : f32
    %11 = vector.broadcast %cst_6 : f32 to vector<32x128xf32>
    %12 = arith.select %10, %7, %11 : vector<32x128xi1>, vector<32x128xf32>
    %cst_7 = arith.constant dense<0.000000e+00> : vector<128xf32>
    %13 = vector.multi_reduction <add>, %12, %cst_7 [0] : vector<32x128xf32> to vector<128xf32>
    %14 = vector.shape_cast %13 : vector<128xf32> to vector<1x128xf32>
    %cst_8 = arith.constant 3.125000e-02 : f32
    %15 = vector.broadcast %cst_8 : f32 to vector<1x128xf32>
    %16 = arith.mulf %14, %15 : vector<1x128xf32>
    %17 = arith.mulf %12, %12 : vector<32x128xf32>
    %cst_9 = arith.constant dense<0.000000e+00> : vector<128xf32>
    %18 = vector.multi_reduction <add>, %17, %cst_9 [0] : vector<32x128xf32> to vector<128xf32>
    %19 = vector.shape_cast %18 : vector<128xf32> to vector<1x128xf32>
    %cst_10 = arith.constant 3.125000e-02 : f32
    %20 = vector.broadcast %cst_10 : f32 to vector<1x128xf32>
    %21 = arith.mulf %19, %20 : vector<1x128xf32>
    %22 = arith.mulf %16, %16 : vector<1x128xf32>
    %23 = arith.subf %21, %22 : vector<1x128xf32>
    %cst_11 = arith.constant 0.000000e+00 : f32
    %24 = vector.broadcast %cst_11 : f32 to vector<1x128xf32>
    %25 = arith.maximumf %23, %24 : vector<1x128xf32>
    %c0_12 = arith.constant 0 : index
    %c0_13 = arith.constant 0 : index
    %26 = vector.load %arg4[%c0_12, %c0_13] : memref<1x128xf32, #tpu.memory_space<vmem>>, vector<1x128xf32>
    %cst_14 = arith.constant 9.99999974E-6 : f32
    %27 = vector.broadcast %cst_14 : f32 to vector<1x128xf32>
    %28 = arith.addf %25, %27 : vector<1x128xf32>
    %29 = math.rsqrt %28 : vector<1x128xf32>
    %30 = arith.mulf %26, %29 : vector<1x128xf32>
    %c0_15 = arith.constant 0 : index
    %c0_16 = arith.constant 0 : index
    %31 = vector.load %arg5[%c0_15, %c0_16] : memref<1x128xf32, #tpu.memory_space<vmem>>, vector<1x128xf32>
    %32 = arith.mulf %16, %30 : vector<1x128xf32>
    %33 = arith.subf %31, %32 : vector<1x128xf32>
    %34 = vector.broadcast %30 : vector<1x128xf32> to vector<32x128xf32>
    %35 = arith.mulf %7, %34 : vector<32x128xf32>
    %36 = vector.broadcast %33 : vector<1x128xf32> to vector<32x128xf32>
    %37 = arith.addf %35, %36 : vector<32x128xf32>
    %38 = arith.truncf %37 : vector<32x128xf32> to vector<32x128xbf16>
    %c0_17 = arith.constant 0 : index
    %c0_18 = arith.constant 0 : index
    %39 = vector.load %arg6[%c0_17, %c0_18] : memref<32x128xbf16, #tpu.memory_space<vmem>>, vector<32x128xbf16>
    tpu.vector_store %arg6[%c0_17, %c0_18], %38 {strides = array<i32>} : memref<32x128xbf16, #tpu.memory_space<vmem>>, vector<32x128xbf16>,
    return
  }
  func.func @transform_0(%arg0: i32) -> (i32, i32) {
    %c0_i32 = arith.constant 0 : i32
    %c0_i32_0 = arith.constant 0 : i32
    return %arg0, %c0_i32 : i32, i32
  }
  func.func @transform_1(%arg0: i32) -> (i32, i32) {
    %c0_i32 = arith.constant 0 : i32
    %c0_i32_0 = arith.constant 0 : i32
    %c0_i32_1 = arith.constant 0 : i32
    return %c0_i32, %c0_i32_0 : i32, i32
  }
  func.func @transform_2(%arg0: i32) -> (i32, i32) {
    %c0_i32 = arith.constant 0 : i32
    %c0_i32_0 = arith.constant 0 : i32
    %c0_i32_1 = arith.constant 0 : i32
    return %c0_i32, %c0_i32_0 : i32, i32
  }
  func.func @transform_3(%arg0: i32) -> (i32, i32) {
    %c0_i32 = arith.constant 0 : i32
    %c0_i32_0 = arith.constant 0 : i32
    %c0_i32_1 = arith.constant 0 : i32
    return %c0_i32, %c0_i32_0 : i32, i32
  }
  func.func @transform_4(%arg0: i32) -> (i32, i32) {
    %c0_i32 = arith.constant 0 : i32
    %c0_i32_0 = arith.constant 0 : i32
    %c0_i32_1 = arith.constant 0 : i32
    return %c0_i32, %c0_i32_0 : i32, i32
  }
  func.func @transform_5(%arg0: i32) -> (i32, i32) {
    %c0_i32 = arith.constant 0 : i32
    %c0_i32_0 = arith.constant 0 : i32
    return %arg0, %c0_i32 : i32, i32
  }
}

module attributes {stable_mosaic.version = 11 : i64} {
  func.func @gap_fc_kernel(%arg0: memref<2x16x128xbf16, #tpu.memory_space<vmem>>, %arg1: memref<128x128xbf16, #tpu.memory_space<vmem>>, %arg2: memref<1x128xf32, #tpu.memory_space<vmem>>, %arg3: memref<2x128xf32, #tpu.memory_space<vmem>>) attributes {dimension_semantics = [], scalar_prefetch = 0 : i64, scratch_operands = 0 : i64, tpu.core_type = #tpu.core_type<tc>} {
    %c0 = arith.constant 0 : index
    %c0_0 = arith.constant 0 : index
    %c0_1 = arith.constant 0 : index
    %0 = vector.load %arg0[%c0, %c0_0, %c0_1] : memref<2x16x128xbf16, #tpu.memory_space<vmem>>, vector<2x16x128xbf16>
    %1 = arith.extf %0 : vector<2x16x128xbf16> to vector<2x16x128xf32>
    %cst = arith.constant dense<0.000000e+00> : vector<2x128xf32>
    %2 = vector.multi_reduction <add>, %1, %cst [1] : vector<2x16x128xf32> to vector<2x128xf32>
    %cst_2 = arith.constant 1.600000e+01 : f32
    %3 = vector.broadcast %cst_2 : f32 to vector<2x128xf32>
    %4 = arith.divf %2, %3 : vector<2x128xf32>
    %5 = arith.truncf %4 : vector<2x128xf32> to vector<2x128xbf16>
    %c0_3 = arith.constant 0 : index
    %c0_4 = arith.constant 0 : index
    %6 = vector.load %arg1[%c0_3, %c0_4] : memref<128x128xbf16, #tpu.memory_space<vmem>>, vector<128x128xbf16>
    %cst_5 = arith.constant dense<0.000000e+00> : vector<2x128xf32>
    %7 = tpu.matmul %5, %6, %cst_5 {dimension_numbers = #tpu.dot_dimension_numbers<[1], [0], [0], [1], [0, 0, 1, 1], [], []>} : vector<2x128xbf16>, vector<128x128xbf16>, vector<2x128xf32> -> vector<2x128xf32>
    %c0_6 = arith.constant 0 : index
    %c0_7 = arith.constant 0 : index
    %8 = vector.load %arg2[%c0_6, %c0_7] : memref<1x128xf32, #tpu.memory_space<vmem>>, vector<1x128xf32>
    %9 = vector.broadcast %8 : vector<1x128xf32> to vector<2x128xf32>
    %10 = arith.addf %7, %9 : vector<2x128xf32>
    %c0_8 = arith.constant 0 : index
    %c0_9 = arith.constant 0 : index
    %11 = vector.load %arg3[%c0_8, %c0_9] : memref<2x128xf32, #tpu.memory_space<vmem>>, vector<2x128xf32>
    tpu.vector_store %arg3[%c0_8, %c0_9], %10 {strides = array<i32>} : memref<2x128xf32, #tpu.memory_space<vmem>>, vector<2x128xf32>,
    return
  }
}

</mosaic_0001>

<llo_original>
// kernel: _net_forward.10
$region0: #{_net_forward.10}
  #allocation0 [shape = 'u32[]', space=smem, size = 0x4, offset = 0x4, fixed_abs, tag = 'smem constant byte address 0x4 - core index']
  #allocation1 [shape = 'u32[144,128]{1,0:T(1,128)}', space=vmem, size = 0x12000, scoped, tag = 'internal scratch']
  %s0 = inlined_call_operand.vmem [shape: bf16[1808,128], index: 0, kind: input, shape index: {}]
  %s1 = inlined_call_operand.vmem [shape: bf16[128,128], index: 1, kind: input, shape index: {}]
  %s2 = inlined_call_operand.vmem [shape: f32[1,128], index: 2, kind: input, shape index: {}]
  %s3 = inlined_call_operand.vmem [shape: f32[1,128], index: 3, kind: input, shape index: {}]
  %s4 = inlined_call_operand.vmem [shape: f32[1,128], index: 4, kind: input, shape index: {}]
  %s5 = inlined_call_operand.vmem [shape: bf16[1808,128], index: 5, kind: output, shape index: {}]
  %s6 = sld [smem:[#allocation0]]
  $region30: #{_net_forward.10} parent=0
    _
  %s8 = ssub.s32 1, %s6
  %s9 = scalar_select 0, %s8, %s6
  // Predicated region
  $region2: #{_net_forward.10} parent=0 // pred_check
    _
  $region3: #{_net_forward.10} parent=0 // pred_check_branch
    %11 = sbr.rel (0) target = $region5
  $region4: #{_net_forward.10} parent=0 // pred_region
    _
  $region5: #{_net_forward.10} parent=0 // pred_fallthru
    _
  // Predicated region
  $region6: #{_net_forward.10} parent=0 // pred_check
    _
  $region7: #{_net_forward.10} parent=0 // pred_check_branch
    %13 = sbr.rel (0) target = $region9
  $region8: #{_net_forward.10} parent=0 // pred_region
    _
  $region9: #{_net_forward.10} parent=0 // pred_fallthru
    _
  // Predicated region
  $region10: #{_net_forward.10} parent=0 // pred_check
    _
  $region11: #{_net_forward.10} parent=0 // pred_check_branch
    %15 = sbr.rel (0) target = $region13
  $region12: #{_net_forward.10} parent=0 // pred_region
    _
  $region13: #{_net_forward.10} parent=0 // pred_fallthru
    _
  // Predicated region
  $region14: #{_net_forward.10} parent=0 // pred_check
    _
  $region15: #{_net_forward.10} parent=0 // pred_check_branch
    %17 = sbr.rel (0) target = $region17
  $region16: #{_net_forward.10} parent=0 // pred_region
    _
  $region17: #{_net_forward.10} parent=0 // pred_fallthru
    _
  // Predicated region
  $region18: #{_net_forward.10} parent=0 // pred_check
    _
  $region19: #{_net_forward.10} parent=0 // pred_check_branch
    %19 = sbr.rel (0) target = $region21
  $region20: #{_net_forward.10} parent=0 // pred_region
    _
  $region21: #{_net_forward.10} parent=0 // pred_fallthru
    _
  %v21 = vld [vmem:[%s0] sm:$0xf]
  %v22 = vld [vmem:[%s0 + $0x4] sm:$0xf]
  %v23 = vld [vmem:[%s0 + $0x8] sm:$0xf]
  %v24 = vld [vmem:[%s0 + $0xc] sm:$0xf]
  %v25 = vld [vmem:[%s0 + $0x10] sm:$0xf]
  %v26 = vld [vmem:[%s0 + $0x14] sm:$0xf]
  %v27 = vld [vmem:[%s0 + $0x18] sm:$0xf]
  %v28 = vld [vmem:[%s0 + $0x1c] sm:$0xf]
  %v29 = vld [vmem:[%s0 + $0x20] sm:$0xf]
  %v30 = vld [vmem:[%s0 + $0x24] sm:$0xf]
  %v31 = vld [vmem:[%s0 + $0x28] sm:$0xf]
  %v32 = vld [vmem:[%s0 + $0x2c] sm:$0xf]
  %v33 = vld [vmem:[%s0 + $0x30] sm:$0xf]
  %v34 = vld [vmem:[%s0 + $0x34] sm:$0xf]
  %v35 = vld [vmem:[%s0 + $0x38] sm:$0xf]
  %v36 = vld [vmem:[%s0 + $0x3c] sm:$0xf]
  %v37 = vld [vmem:[%s0 + $0x40] sm:$0xf]
  %v38 = vld [vmem:[%s0 + $0x44] sm:$0xf]
  %v39 = vld [vmem:[%s0 + $0x48] sm:$0xf]
  %v40 = vld [vmem:[%s0 + $0x4c] sm:$0xf]
  %v41 = vld [vmem:[%s0 + $0x50] sm:$0xf]
  %v42 = vld [vmem:[%s0 + $0x54] sm:$0xf]
  %v43 = vld [vmem:[%s0 + $0x58] sm:$0xf]
  %v44 = vld [vmem:[%s0 + $0x5c] sm:$0xf]
  %v45 = vld [vmem:[%s0 + $0x60] sm:$0xf]
  %v46 = vld [vmem:[%s0 + $0x64] sm:$0xf]
  %v47 = vld [vmem:[%s0 + $0x68] sm:$0xf]
  %v48 = vld [vmem:[%s0 + $0x6c] sm:$0xf]
  %v49 = vld [vmem:[%s0 + $0x70] sm:$0xf]
  %v50 = vld [vmem:[%s0 + $0x74] sm:$0xf]
  %v51 = vld [vmem:[%s0 + $0x78] sm:$0xf]
  %v52 = vld [vmem:[%s0 + $0x7c] sm:$0xf]
  %v53 = vld [vmem:[%s0 + $0x80] sm:$0xf]
  %v54 = vld [vmem:[%s0 + $0x84] sm:$0xf]
  %v55 = vld [vmem:[%s0 + $0x88] sm:$0xf]
  %v56 = vld [vmem:[%s0 + $0x8c] sm:$0xf]
  %v57 = vld [vmem:[%s0 + $0x90] sm:$0xf]
  %v58 = vld [vmem:[%s0 + $0x94] sm:$0xf]
  %v59 = vld [vmem:[%s0 + $0x98] sm:$0xf]
  %v60 = vld [vmem:[%s0 + $0x9c] sm:$0xf]
  %v61 = vld [vmem:[%s0 + $0xa0] sm:$0xf]
  %v62 = vld [vmem:[%s0 + $0xa4] sm:$0xf]
  %v63 = vld [vmem:[%s0 + $0xa8] sm:$0xf]
  %v64 = vld [vmem:[%s0 + $0xac] sm:$0xf]
  %v65 = vld [vmem:[%s0 + $0xb0] sm:$0xf]
  %v66 = vld [vmem:[%s0 + $0xb4] sm:$0xf]
  %v67 = vld [vmem:[%s0 + $0xb8] sm:$0xf]
  %v68 = vld [vmem:[%s0 + $0xbc] sm:$0xf]
  %v69 = vld [vmem:[%s0 + $0xc0] sm:$0xf]
  %v70 = vld [vmem:[%s0 + $0xc4] sm:$0xf]
  %v71 = vld [vmem:[%s0 + $0xc8] sm:$0xf]
  %v72 = vld [vmem:[%s0 + $0xcc] sm:$0xf]
  %v73 = vld [vmem:[%s0 + $0xd0] sm:$0xf]
  %v74 = vld [vmem:[%s0 + $0xd4] sm:$0xf]
  %v75 = vld [vmem:[%s0 + $0xd8] sm:$0xf]
  %v76 = vld [vmem:[%s0 + $0xdc] sm:$0xf]
  %v77 = vld [vmem:[%s0 + $0xe0] sm:$0xf]
  %v78 = vld [vmem:[%s0 + $0xe4] sm:$0xf]
  %v79 = vld [vmem:[%s0 + $0xe8] sm:$0xf]
  %v80 = vld [vmem:[%s0 + $0xec] sm:$0xf]
  %v81 = vld [vmem:[%s0 + $0xf0] sm:$0xf]
  %v82 = vld [vmem:[%s0 + $0xf4] sm:$0xf]
  %v83 = vld [vmem:[%s0 + $0xf8] sm:$0xf]
  %v84 = vld [vmem:[%s0 + $0xfc] sm:$0xf]
  %v85 = vld [vmem:[%s0 + $0x100] sm:$0xf]
  %v86 = vld [vmem:[%s0 + $0x104] sm:$0xf]
  %v87 = vld [vmem:[%s0 + $0x108] sm:$0xf]
  %v88 = vld [vmem:[%s0 + $0x10c] sm:$0xf]
  %v89 = vld [vmem:[%s0 + $0x110] sm:$0xf]
  %v90 = vld [vmem:[%s0 + $0x114] sm:$0xf]
  %v91 = vld [vmem:[%s0 + $0x118] sm:$0xf]
  %v92 = vld [vmem:[%s0 + $0x11c] sm:$0xf]
  %v93 = vld [vmem:[%s0 + $0x120] sm:$0xf]
  %v94 = vld [vmem:[%s0 + $0x124] sm:$0xf]
  %v95 = vld [vmem:[%s0 + $0x128] sm:$0xf]
  %v96 = vld [vmem:[%s0 + $0x12c] sm:$0xf]
  %v97 = vld [vmem:[%s0 + $0x130] sm:$0xf]
  %v98 = vld [vmem:[%s0 + $0x134] sm:$0xf]
  %v99 = vld [vmem:[%s0 + $0x138] sm:$0xf]
  %v100 = vld [vmem:[%s0 + $0x13c] sm:$0xf]
  %v101 = vld [vmem:[%s0 + $0x140] sm:$0xf]
  %v102 = vld [vmem:[%s0 + $0x144] sm:$0xf]
  %v103 = vld [vmem:[%s0 + $0x148] sm:$0xf]
  %v104 = vld [vmem:[%s0 + $0x14c] sm:$0xf]
  %v105 = vld [vmem:[%s0 + $0x150] sm:$0xf]
  %v106 = vld [vmem:[%s0 + $0x154] sm:$0xf]
  %v107 = vld [vmem:[%s0 + $0x158] sm:$0xf]
  %v108 = vld [vmem:[%s0 + $0x15c] sm:$0xf]
  %v109 = vld [vmem:[%s0 + $0x160] sm:$0xf]
  %v110 = vld [vmem:[%s0 + $0x164] sm:$0xf]
  %v111 = vld [vmem:[%s0 + $0x168] sm:$0xf]
  %v112 = vld [vmem:[%s0 + $0x16c] sm:$0xf]
  %v113 = vld [vmem:[%s0 + $0x170] sm:$0xf]
  %v114 = vld [vmem:[%s0 + $0x174] sm:$0xf]
  %v115 = vld [vmem:[%s0 + $0x178] sm:$0xf]
  %v116 = vld [vmem:[%s0 + $0x17c] sm:$0xf]
  %v117 = vld [vmem:[%s0 + $0x180] sm:$0xf]
  %v118 = vld [vmem:[%s0 + $0x184] sm:$0xf]
  %v119 = vld [vmem:[%s0 + $0x188] sm:$0xf]
  %v120 = vld [vmem:[%s0 + $0x18c] sm:$0xf]
  %v121 = vld [vmem:[%s0 + $0x190] sm:$0xf]
  %v122 = vld [vmem:[%s0 + $0x194] sm:$0xf]
  %v123 = vld [vmem:[%s0 + $0x198] sm:$0xf]
  %v124 = vld [vmem:[%s0 + $0x19c] sm:$0xf]
  %v125 = vld [vmem:[%s0 + $0x1a0] sm:$0xf]
  %v126 = vld [vmem:[%s0 + $0x1a4] sm:$0xf]
  %v127 = vld [vmem:[%s0 + $0x1a8] sm:$0xf]
  %v128 = vld [vmem:[%s0 + $0x1ac] sm:$0xf]
  %v129 = vld [vmem:[%s0 + $0x1b0] sm:$0xf]
  %v130 = vld [vmem:[%s0 + $0x1b4] sm:$0xf]
  %v131 = vld [vmem:[%s0 + $0x1b8] sm:$0xf]
  %v132 = vld [vmem:[%s0 + $0x1bc] sm:$0xf]
  %v133 = vld [vmem:[%s0 + $0x1c0] sm:$0xf]
  %v134 = vld [vmem:[%s0 + $0x1c4] sm:$0xf]
  %v135 = vld [vmem:[%s0 + $0x1c8] sm:$0xf]
  %v136 = vld [vmem:[%s0 + $0x1cc] sm:$0xf]
  %v137 = vld [vmem:[%s0 + $0x1d0] sm:$0xf]
  %v138 = vld [vmem:[%s0 + $0x1d4] sm:$0xf]
  %v139 = vld [vmem:[%s0 + $0x1d8] sm:$0xf]
  %v140 = vld [vmem:[%s0 + $0x1dc] sm:$0xf]
  %v141 = vld [vmem:[%s0 + $0x1e0] sm:$0xf]
  %v142 = vld [vmem:[%s0 + $0x1e4] sm:$0xf]
  %v143 = vld [vmem:[%s0 + $0x1e8] sm:$0xf]
  %v144 = vld [vmem:[%s0 + $0x1ec] sm:$0xf]
  %v145 = vld [vmem:[%s0 + $0x1f0] sm:$0xf]
  %v146 = vld [vmem:[%s0 + $0x1f4] sm:$0xf]
  %v147 = vld [vmem:[%s0 + $0x1f8] sm:$0xf]
  %v148 = vld [vmem:[%s0 + $0x1fc] sm:$0xf]
  %v149 = vld [vmem:[%s0 + $0x200] sm:$0xf]
  %v150 = vld [vmem:[%s0 + $0x204] sm:$0xf]
  %v151 = vld [vmem:[%s0 + $0x208] sm:$0xf]
  %v152 = vld [vmem:[%s0 + $0x20c] sm:$0xf]
  %v153 = vld [vmem:[%s0 + $0x210] sm:$0xf]
  %v154 = vld [vmem:[%s0 + $0x214] sm:$0xf]
  %v155 = vld [vmem:[%s0 + $0x218] sm:$0xf]
  %v156 = vld [vmem:[%s0 + $0x21c] sm:$0xf]
  %v157 = vld [vmem:[%s0 + $0x220] sm:$0xf]
  %v158 = vld [vmem:[%s0 + $0x224] sm:$0xf]
  %v159 = vld [vmem:[%s0 + $0x228] sm:$0xf]
  %v160 = vld [vmem:[%s0 + $0x22c] sm:$0xf]
  %v161 = vld [vmem:[%s0 + $0x230] sm:$0xf]
  %v162 = vld [vmem:[%s0 + $0x234] sm:$0xf]
  %v163 = vld [vmem:[%s0 + $0x238] sm:$0xf]
  %v164 = vld [vmem:[%s0 + $0x23c] sm:$0xf]
  %v165 = vld [vmem:[%s0 + $0x240] sm:$0xf]
  %v166 = vld [vmem:[%s0 + $0x244] sm:$0xf]
  %v167 = vld [vmem:[%s0 + $0x248] sm:$0xf]
  %v168 = vld [vmem:[%s0 + $0x24c] sm:$0xf]
  %v169 = vld [vmem:[%s0 + $0x250] sm:$0xf]
  %v170 = vld [vmem:[%s0 + $0x254] sm:$0xf]
  %v171 = vld [vmem:[%s0 + $0x258] sm:$0xf]
  %v172 = vld [vmem:[%s0 + $0x25c] sm:$0xf]
  %v173 = vld [vmem:[%s0 + $0x260] sm:$0xf]
  %v174 = vld [vmem:[%s0 + $0x264] sm:$0xf]
  %v175 = vld [vmem:[%s0 + $0x268] sm:$0xf]
  %v176 = vld [vmem:[%s0 + $0x26c] sm:$0xf]
  %v177 = vld [vmem:[%s0 + $0x270] sm:$0xf]
  %v178 = vld [vmem:[%s0 + $0x274] sm:$0xf]
  %v179 = vld [vmem:[%s0 + $0x278] sm:$0xf]
  %v180 = vld [vmem:[%s0 + $0x27c] sm:$0xf]
  %v181 = vld [vmem:[%s0 + $0x280] sm:$0xf]
  %v182 = vld [vmem:[%s0 + $0x284] sm:$0xf]
  %v183 = vld [vmem:[%s0 + $0x288] sm:$0xf]
  %v184 = vld [vmem:[%s0 + $0x28c] sm:$0xf]
  %v185 = vld [vmem:[%s0 + $0x290] sm:$0xf]
  %v186 = vld [vmem:[%s0 + $0x294] sm:$0xf]
  %v187 = vld [vmem:[%s0 + $0x298] sm:$0xf]
  %v188 = vld [vmem:[%s0 + $0x29c] sm:$0xf]
  %v189 = vld [vmem:[%s0 + $0x2a0] sm:$0xf]
  %v190 = vld [vmem:[%s0 + $0x2a4] sm:$0xf]
  %v191 = vld [vmem:[%s0 + $0x2a8] sm:$0xf]
  %v192 = vld [vmem:[%s0 + $0x2ac] sm:$0xf]
  %v193 = vld [vmem:[%s0 + $0x2b0] sm:$0xf]
  %v194 = vld [vmem:[%s0 + $0x2b4] sm:$0xf]
  %v195 = vld [vmem:[%s0 + $0x2b8] sm:$0xf]
  %v196 = vld [vmem:[%s0 + $0x2bc] sm:$0xf]
  %v197 = vld [vmem:[%s0 + $0x2c0] sm:$0xf]
  %v198 = vld [vmem:[%s0 + $0x2c4] sm:$0xf]
  %v199 = vld [vmem:[%s0 + $0x2c8] sm:$0xf]
  %v200 = vld [vmem:[%s0 + $0x2cc] sm:$0xf]
  %v201 = vld [vmem:[%s0 + $0x2d0] sm:$0xf]
  %v202 = vld [vmem:[%s0 + $0x2d4] sm:$0xf]
  %v203 = vld [vmem:[%s0 + $0x2d8] sm:$0xf]
  %v204 = vld [vmem:[%s0 + $0x2dc] sm:$0xf]
  %v205 = vld [vmem:[%s0 + $0x2e0] sm:$0xf]
  %v206 = vld [vmem:[%s0 + $0x2e4] sm:$0xf]
  %v207 = vld [vmem:[%s0 + $0x2e8] sm:$0xf]
  %v208 = vld [vmem:[%s0 + $0x2ec] sm:$0xf]
  %v209 = vld [vmem:[%s0 + $0x2f0] sm:$0xf]
  %v210 = vld [vmem:[%s0 + $0x2f4] sm:$0xf]
  %v211 = vld [vmem:[%s0 + $0x2f8] sm:$0xf]
  %v212 = vld [vmem:[%s0 + $0x2fc] sm:$0xf]
  %v213 = vld [vmem:[%s0 + $0x300] sm:$0xf]
  %v214 = vld [vmem:[%s0 + $0x304] sm:$0xf]
  %v215 = vld [vmem:[%s0 + $0x308] sm:$0xf]
  %v216 = vld [vmem:[%s0 + $0x30c] sm:$0xf]
  %v217 = vld [vmem:[%s0 + $0x310] sm:$0xf]
  %v218 = vld [vmem:[%s0 + $0x314] sm:$0xf]
  %v219 = vld [vmem:[%s0 + $0x318] sm:$0xf]
  %v220 = vld [vmem:[%s0 + $0x31c] sm:$0xf]
  %v221 = vld [vmem:[%s0 + $0x320] sm:$0xf]
  %v222 = vld [vmem:[%s0 + $0x324] sm:$0xf]
  %v223 = vld [vmem:[%s0 + $0x328] sm:$0xf]
  %v224 = vld [vmem:[%s0 + $0x32c] sm:$0xf]
  %v225 = vld [vmem:[%s0 + $0x330] sm:$0xf]
  %v226 = vld [vmem:[%s0 + $0x334] sm:$0xf]
  %v227 = vld [vmem:[%s0 + $0x338] sm:$0xf]
  %v228 = vld [vmem:[%s0 + $0x33c] sm:$0xf]
  %v229 = vld [vmem:[%s0 + $0x340] sm:$0xf]
  %v230 = vld [vmem:[%s0 + $0x344] sm:$0xf]
  %v231 = vld [vmem:[%s0 + $0x348] sm:$0xf]
  %v232 = vld [vmem:[%s0 + $0x34c] sm:$0xf]
  %v233 = vld [vmem:[%s0 + $0x350] sm:$0xf]
  %v234 = vld [vmem:[%s0 + $0x354] sm:$0xf]
  %v235 = vld [vmem:[%s0 + $0x358] sm:$0xf]
  %v236 = vld [vmem:[%s0 + $0x35c] sm:$0xf]
  %v237 = vld [vmem:[%s0 + $0x360] sm:$0xf]
  %v238 = vld [vmem:[%s0 + $0x364] sm:$0xf]
  %v239 = vld [vmem:[%s0 + $0x368] sm:$0xf]
  %v240 = vld [vmem:[%s0 + $0x36c] sm:$0xf]
  %v241 = vld [vmem:[%s0 + $0x370] sm:$0xf]
  %v242 = vld [vmem:[%s0 + $0x374] sm:$0xf]
  %v243 = vld [vmem:[%s0 + $0x378] sm:$0xf]
  %v244 = vld [vmem:[%s0 + $0x37c] sm:$0xf]
  %v245 = vld [vmem:[%s0 + $0x380] sm:$0xf]
  %v246 = vld [vmem:[%s0 + $0x384] sm:$0xf]
  %v247 = vld [vmem:[%s1] sm:$0xf]
  %v248 = vld [vmem:[%s1 + $0x4] sm:$0xf]
  %v249 = vld [vmem:[%s1 + $0x8] sm:$0xf]
  %v250 = vld [vmem:[%s1 + $0xc] sm:$0xf]
  %v251 = vld [vmem:[%s1 + $0x10] sm:$0xf]
  %v252 = vld [vmem:[%s1 + $0x14] sm:$0xf]
  %v253 = vld [vmem:[%s1 + $0x18] sm:$0xf]
  %v254 = vld [vmem:[%s1 + $0x1c] sm:$0xf]
  %v255 = vld [vmem:[%s1 + $0x20] sm:$0xf]
  %v256 = vld [vmem:[%s1 + $0x24] sm:$0xf]
  %v257 = vld [vmem:[%s1 + $0x28] sm:$0xf]
  %v258 = vld [vmem:[%s1 + $0x2c] sm:$0xf]
  %v259 = vld [vmem:[%s1 + $0x30] sm:$0xf]
  %v260 = vld [vmem:[%s1 + $0x34] sm:$0xf]
  %v261 = vld [vmem:[%s1 + $0x38] sm:$0xf]
  %v262 = vld [vmem:[%s1 + $0x3c] sm:$0xf]
  %v263 = vld [vmem:[%s2] sm:$0x1]
  %v265 = vlaneseq
  %v266 = vshrl.u32 %v265, 7
  %v267 = vsub.s32 0, %v266
  %v268 = vrot.slane %v263, %v267
  %v496 = vunpack.c.l.b16 %v21
  %v497 = vunpack.c.l.b16 %v22
  %v498 = vunpack.c.l.b16 %v23
  %v499 = vunpack.c.l.b16 %v24
  %v500 = vunpack.c.l.b16 %v25
  %v501 = vunpack.c.l.b16 %v26
  %v502 = vunpack.c.l.b16 %v27
  %v503 = vunpack.c.l.b16 %v28
  %v504 = vunpack.c.l.b16 %v29
  %v505 = vunpack.c.l.b16 %v30
  %v506 = vunpack.c.l.b16 %v31
  %v507 = vunpack.c.l.b16 %v32
  %v508 = vunpack.c.l.b16 %v33
  %v509 = vunpack.c.l.b16 %v34
  %v510 = vunpack.c.l.b16 %v35
  %v511 = vunpack.c.l.b16 %v36
  %v512 = vunpack.c.l.b16 %v37
  %v513 = vunpack.c.l.b16 %v38
  %v514 = vunpack.c.l.b16 %v39
  %v515 = vunpack.c.l.b16 %v40
  %v516 = vunpack.c.l.b16 %v41
  %v517 = vunpack.c.l.b16 %v42
  %v518 = vunpack.c.l.b16 %v43
  %v519 = vunpack.c.l.b16 %v44
  %v520 = vunpack.c.l.b16 %v45
  %v521 = vunpack.c.l.b16 %v46
  %v522 = vunpack.c.l.b16 %v47
  %v523 = vunpack.c.l.b16 %v48
  %v524 = vunpack.c.l.b16 %v49
  %v525 = vunpack.c.l.b16 %v50
  %v526 = vunpack.c.l.b16 %v51
  %v527 = vunpack.c.l.b16 %v52
  %v528 = vunpack.c.l.b16 %v53
  %v529 = vunpack.c.l.b16 %v54
  %v530 = vunpack.c.l.b16 %v55
  %v531 = vunpack.c.l.b16 %v56
  %v532 = vunpack.c.l.b16 %v57
  %v533 = vunpack.c.l.b16 %v58
  %v534 = vunpack.c.l.b16 %v59
  %v535 = vunpack.c.l.b16 %v60
  %v536 = vunpack.c.l.b16 %v61
  %v537 = vunpack.c.l.b16 %v62
  %v538 = vunpack.c.l.b16 %v63
  %v539 = vunpack.c.l.b16 %v64
  %v540 = vunpack.c.l.b16 %v65
  %v541 = vunpack.c.l.b16 %v66
  %v542 = vunpack.c.l.b16 %v67
  %v543 = vunpack.c.l.b16 %v68
  %v544 = vunpack.c.l.b16 %v69
  %v545 = vunpack.c.l.b16 %v70
  %v546 = vunpack.c.l.b16 %v71
  %v547 = vunpack.c.l.b16 %v72
  %v548 = vunpack.c.l.b16 %v73
  %v549 = vunpack.c.l.b16 %v74
  %v550 = vunpack.c.l.b16 %v75
  %v551 = vunpack.c.l.b16 %v76
  %v552 = vunpack.c.l.b16 %v77
  %v553 = vunpack.c.l.b16 %v78
  %v554 = vunpack.c.l.b16 %v79
  %v555 = vunpack.c.l.b16 %v80
  %v556 = vunpack.c.l.b16 %v81
  %v557 = vunpack.c.l.b16 %v82
  %v558 = vunpack.c.l.b16 %v83
  %v559 = vunpack.c.l.b16 %v84
  %v560 = vunpack.c.l.b16 %v85
  %v561 = vunpack.c.l.b16 %v86
  %v562 = vunpack.c.l.b16 %v87
  %v563 = vunpack.c.l.b16 %v88
  %v564 = vunpack.c.l.b16 %v89
  %v565 = vunpack.c.l.b16 %v90
  %v566 = vunpack.c.l.b16 %v91
  %v567 = vunpack.c.l.b16 %v92
  %v568 = vunpack.c.l.b16 %v93
  %v569 = vunpack.c.l.b16 %v94
  %v570 = vunpack.c.l.b16 %v95
  %v571 = vunpack.c.l.b16 %v96
  %v572 = vunpack.c.l.b16 %v97
  %v573 = vunpack.c.l.b16 %v98
  %v574 = vunpack.c.l.b16 %v99
  %v575 = vunpack.c.l.b16 %v100
  %v576 = vunpack.c.l.b16 %v101
  %v577 = vunpack.c.l.b16 %v102
  %v578 = vunpack.c.l.b16 %v103
  %v579 = vunpack.c.l.b16 %v104
  %v580 = vunpack.c.l.b16 %v105
  %v581 = vunpack.c.l.b16 %v106
  %v582 = vunpack.c.l.b16 %v107
  %v583 = vunpack.c.l.b16 %v108
  %v584 = vunpack.c.l.b16 %v109
  %v585 = vunpack.c.l.b16 %v110
  %v586 = vunpack.c.l.b16 %v111
  %v587 = vunpack.c.l.b16 %v112
  %v588 = vunpack.c.l.b16 %v113
  %v589 = vunpack.c.l.b16 %v114
  %v590 = vunpack.c.l.b16 %v115
  %v591 = vunpack.c.l.b16 %v116
  %v592 = vunpack.c.l.b16 %v117
  %v593 = vunpack.c.l.b16 %v118
  %v594 = vunpack.c.l.b16 %v119
  %v595 = vunpack.c.l.b16 %v120
  %v596 = vunpack.c.l.b16 %v121
  %v597 = vunpack.c.l.b16 %v122
  %v598 = vunpack.c.l.b16 %v123
  %v599 = vunpack.c.l.b16 %v124
  %v600 = vunpack.c.l.b16 %v125
  %v601 = vunpack.c.l.b16 %v126
  %v602 = vunpack.c.l.b16 %v127
  %v603 = vunpack.c.l.b16 %v128
  %v604 = vunpack.c.l.b16 %v129
  %v605 = vunpack.c.l.b16 %v130
  %v606 = vunpack.c.l.b16 %v131
  %v607 = vunpack.c.l.b16 %v132
  %v608 = vunpack.c.l.b16 %v133
  %v609 = vunpack.c.l.b16 %v134
  %v610 = vunpack.c.l.b16 %v135
  %v611 = vunpack.c.l.b16 %v136
  %v612 = vunpack.c.l.b16 %v137
  %v613 = vunpack.c.l.b16 %v138
  %v614 = vunpack.c.l.b16 %v139
  %v615 = vunpack.c.l.b16 %v140
  %v616 = vunpack.c.l.b16 %v141
  %v617 = vunpack.c.l.b16 %v142
  %v618 = vunpack.c.l.b16 %v143
  %v619 = vunpack.c.l.b16 %v144
  %v620 = vunpack.c.l.b16 %v145
  %v621 = vunpack.c.l.b16 %v146
  %v622 = vunpack.c.l.b16 %v147
  %v623 = vunpack.c.l.b16 %v148
  %v624 = vunpack.c.l.b16 %v149
  %v625 = vunpack.c.l.b16 %v150
  %v626 = vunpack.c.l.b16 %v151
  %v627 = vunpack.c.l.b16 %v152
  %v628 = vunpack.c.l.b16 %v153
  %v629 = vunpack.c.l.b16 %v154
  %v630 = vunpack.c.l.b16 %v155
  %v631 = vunpack.c.l.b16 %v156
  %v632 = vunpack.c.l.b16 %v157
  %v633 = vunpack.c.l.b16 %v158
  %v634 = vunpack.c.l.b16 %v159
  %v635 = vunpack.c.l.b16 %v160
  %v636 = vunpack.c.l.b16 %v161
  %v637 = vunpack.c.l.b16 %v162
  %v638 = vunpack.c.l.b16 %v163
  %v639 = vunpack.c.l.b16 %v164
  %v640 = vunpack.c.l.b16 %v165
  %v641 = vunpack.c.l.b16 %v166
  %v642 = vunpack.c.l.b16 %v167
  %v643 = vunpack.c.l.b16 %v168
  %v644 = vunpack.c.l.b16 %v169
  %v645 = vunpack.c.l.b16 %v170
  %v646 = vunpack.c.l.b16 %v171
  %v647 = vunpack.c.l.b16 %v172
  %v648 = vunpack.c.l.b16 %v173
  %v649 = vunpack.c.l.b16 %v174
  %v650 = vunpack.c.l.b16 %v175
  %v651 = vunpack.c.l.b16 %v176
  %v652 = vunpack.c.l.b16 %v177
  %v653 = vunpack.c.l.b16 %v178
  %v654 = vunpack.c.l.b16 %v179
  %v655 = vunpack.c.l.b16 %v180
  %v656 = vunpack.c.l.b16 %v181
  %v657 = vunpack.c.l.b16 %v182
  %v658 = vunpack.c.l.b16 %v183
  %v659 = vunpack.c.l.b16 %v184
  %v660 = vunpack.c.l.b16 %v185
  %v661 = vunpack.c.l.b16 %v186
  %v662 = vunpack.c.l.b16 %v187
  %v663 = vunpack.c.l.b16 %v188
  %v664 = vunpack.c.l.b16 %v189
  %v665 = vunpack.c.l.b16 %v190
  %v666 = vunpack.c.l.b16 %v191
  %v667 = vunpack.c.l.b16 %v192
  %v668 = vunpack.c.l.b16 %v193
  %v669 = vunpack.c.l.b16 %v194
  %v670 = vunpack.c.l.b16 %v195
  %v671 = vunpack.c.l.b16 %v196
  %v672 = vunpack.c.l.b16 %v197
  %v673 = vunpack.c.l.b16 %v198
  %v674 = vunpack.c.l.b16 %v199
  %v675 = vunpack.c.l.b16 %v200
  %v676 = vunpack.c.l.b16 %v201
  %v677 = vunpack.c.l.b16 %v202
  %v678 = vunpack.c.l.b16 %v203
  %v679 = vunpack.c.l.b16 %v204
  %v680 = vunpack.c.l.b16 %v205
  %v681 = vunpack.c.l.b16 %v206
  %v682 = vunpack.c.l.b16 %v207
  %v683 = vunpack.c.l.b16 %v208
  %v684 = vunpack.c.l.b16 %v209
  %v685 = vunpack.c.l.b16 %v210
  %v686 = vunpack.c.l.b16 %v211
  %v687 = vunpack.c.l.b16 %v212
  %v688 = vunpack.c.l.b16 %v213
  %v689 = vunpack.c.l.b16 %v214
  %v690 = vunpack.c.l.b16 %v215
  %v691 = vunpack.c.l.b16 %v216
  %v692 = vunpack.c.l.b16 %v217
  %v693 = vunpack.c.l.b16 %v218
  %v694 = vunpack.c.l.b16 %v219
  %v695 = vunpack.c.l.b16 %v220
  %v696 = vunpack.c.l.b16 %v221
  %v697 = vunpack.c.l.b16 %v222
  %v698 = vunpack.c.l.b16 %v223
  %v699 = vunpack.c.l.b16 %v224
  %v700 = vunpack.c.l.b16 %v225
  %v701 = vunpack.c.l.b16 %v226
  %v702 = vunpack.c.l.b16 %v227
  %v703 = vunpack.c.l.b16 %v228
  %v704 = vunpack.c.l.b16 %v229
  %v705 = vunpack.c.l.b16 %v230
  %v706 = vunpack.c.l.b16 %v231
  %v707 = vunpack.c.l.b16 %v232
  %v708 = vunpack.c.l.b16 %v233
  %v709 = vunpack.c.l.b16 %v234
  %v710 = vunpack.c.l.b16 %v235
  %v711 = vunpack.c.l.b16 %v236
  %v712 = vunpack.c.l.b16 %v237
  %v713 = vunpack.c.l.b16 %v238
  %v714 = vunpack.c.l.b16 %v239
  %v715 = vunpack.c.l.b16 %v240
  %v716 = vunpack.c.l.b16 %v241
  %v717 = vunpack.c.l.b16 %v242
  %v718 = vunpack.c.l.b16 %v243
  %v719 = vunpack.c.l.b16 %v244
  %v720 = vunpack.c.l.b16 %v245
  %v721 = vunpack.c.l.b16 %v246
  %v722 = vpack.c.b16 %v497, %v496
  %v723 = vpack.c.b16 %v499, %v498
  %v724 = vpack.c.b16 %v501, %v500
  %v725 = vpack.c.b16 %v503, %v502
  %v726 = vpack.c.b16 %v505, %v504
  %v727 = vpack.c.b16 %v507, %v506
  %v728 = vpack.c.b16 %v509, %v508
  %v729 = vpack.c.b16 %v511, %v510
  %v730 = vpack.c.b16 %v513, %v512
  %v731 = vpack.c.b16 %v515, %v514
  %v732 = vpack.c.b16 %v517, %v516
  %v733 = vpack.c.b16 %v519, %v518
  %v734 = vpack.c.b16 %v521, %v520
  %v735 = vpack.c.b16 %v523, %v522
  %v736 = vpack.c.b16 %v525, %v524
  %v737 = vpack.c.b16 %v527, %v526
  %v738 = vpack.c.b16 %v529, %v528
  %v739 = vpack.c.b16 %v531, %v530
  %v740 = vpack.c.b16 %v533, %v532
  %v741 = vpack.c.b16 %v535, %v534
  %v742 = vpack.c.b16 %v537, %v536
  %v743 = vpack.c.b16 %v539, %v538
  %v744 = vpack.c.b16 %v541, %v540
  %v745 = vpack.c.b16 %v543, %v542
  %v746 = vpack.c.b16 %v545, %v544
  %v747 = vpack.c.b16 %v547, %v546
  %v748 = vpack.c.b16 %v549, %v548
  %v749 = vpack.c.b16 %v551, %v550
  %v750 = vpack.c.b16 %v553, %v552
  %v751 = vpack.c.b16 %v555, %v554
  %v752 = vpack.c.b16 %v557, %v556
  %v753 = vpack.c.b16 %v559, %v558
  %v754 = vpack.c.b16 %v561, %v560
  %v755 = vpack.c.b16 %v563, %v562
  %v756 = vpack.c.b16 %v565, %v564
  %v757 = vpack.c.b16 %v567, %v566
  %v758 = vpack.c.b16 %v569, %v568
  %v759 = vpack.c.b16 %v571, %v570
  %v760 = vpack.c.b16 %v573, %v572
  %v761 = vpack.c.b16 %v575, %v574
  %v762 = vpack.c.b16 %v577, %v576
  %v763 = vpack.c.b16 %v579, %v578
  %v764 = vpack.c.b16 %v581, %v580
  %v765 = vpack.c.b16 %v583, %v582
  %v766 = vpack.c.b16 %v585, %v584
  %v767 = vpack.c.b16 %v587, %v586
  %v768 = vpack.c.b16 %v589, %v588
  %v769 = vpack.c.b16 %v591, %v590
  %v770 = vpack.c.b16 %v593, %v592
  %v771 = vpack.c.b16 %v595, %v594
  %v772 = vpack.c.b16 %v597, %v596
  %v773 = vpack.c.b16 %v599, %v598
  %v774 = vpack.c.b16 %v601, %v600
  %v775 = vpack.c.b16 %v603, %v602
  %v776 = vpack.c.b16 %v605, %v604
  %v777 = vpack.c.b16 %v607, %v606
  %v778 = vpack.c.b16 %v609, %v608
  %v779 = vpack.c.b16 %v611, %v610
  %v780 = vpack.c.b16 %v613, %v612
  %v781 = vpack.c.b16 %v615, %v614
  %v782 = vpack.c.b16 %v617, %v616
  %v783 = vpack.c.b16 %v619, %v618
  %v784 = vpack.c.b16 %v621, %v620
  %v785 = vpack.c.b16 %v623, %v622
  %v786 = vpack.c.b16 %v625, %v624
  %v787 = vpack.c.b16 %v627, %v626
  %v788 = vpack.c.b16 %v629, %v628
  %v789 = vpack.c.b16 %v631, %v630
  %v790 = vpack.c.b16 %v633, %v632
  %v791 = vpack.c.b16 %v635, %v634
  %v792 = vpack.c.b16 %v637, %v636
  %v793 = vpack.c.b16 %v639, %v638
  %v794 = vpack.c.b16 %v641, %v640
  %v795 = vpack.c.b16 %v643, %v642
  %v796 = vpack.c.b16 %v645, %v644
  %v797 = vpack.c.b16 %v647, %v646
  %v798 = vpack.c.b16 %v649, %v648
  %v799 = vpack.c.b16 %v651, %v650
  %v800 = vpack.c.b16 %v653, %v652
  %v801 = vpack.c.b16 %v655, %v654
  %v802 = vpack.c.b16 %v657, %v656
  %v803 = vpack.c.b16 %v659, %v658
  %v804 = vpack.c.b16 %v661, %v660
  %v805 = vpack.c.b16 %v663, %v662
  %v806 = vpack.c.b16 %v665, %v664
  %v807 = vpack.c.b16 %v667, %v666
  %v808 = vpack.c.b16 %v669, %v668
  %v809 = vpack.c.b16 %v671, %v670
  %v810 = vpack.c.b16 %v673, %v672
  %v811 = vpack.c.b16 %v675, %v674
  %v812 = vpack.c.b16 %v677, %v676
  %v813 = vpack.c.b16 %v679, %v678
  %v814 = vpack.c.b16 %v681, %v680
  %v815 = vpack.c.b16 %v683, %v682
  %v816 = vpack.c.b16 %v685, %v684
  %v817 = vpack.c.b16 %v687, %v686
  %v818 = vpack.c.b16 %v689, %v688
  %v819 = vpack.c.b16 %v691, %v690
  %v820 = vpack.c.b16 %v693, %v692
  %v821 = vpack.c.b16 %v695, %v694
  %v822 = vpack.c.b16 %v697, %v696
  %v823 = vpack.c.b16 %v699, %v698
  %v824 = vpack.c.b16 %v701, %v700
  %v825 = vpack.c.b16 %v703, %v702
  %v826 = vpack.c.b16 %v705, %v704
  %v827 = vpack.c.b16 %v707, %v706
  %v828 = vpack.c.b16 %v709, %v708
  %v829 = vpack.c.b16 %v711, %v710
  %v830 = vpack.c.b16 %v713, %v712
  %v831 = vpack.c.b16 %v715, %v714
  %v832 = vpack.c.b16 %v717, %v716
  %v833 = vpack.c.b16 %v719, %v718
  %v834 = vpack.c.b16 %v721, %v720
  %v964 = vunpack.c.l.b16 %v247
  %v965 = vunpack.c.l.b16 %v248
  %v966 = vunpack.c.l.b16 %v249
  %v967 = vunpack.c.l.b16 %v250
  %v968 = vunpack.c.l.b16 %v251
  %v969 = vunpack.c.l.b16 %v252
  %v970 = vunpack.c.l.b16 %v253
  %v971 = vunpack.c.l.b16 %v254
  %v972 = vunpack.c.l.b16 %v255
  %v973 = vunpack.c.l.b16 %v256
  %v974 = vunpack.c.l.b16 %v257
  %v975 = vunpack.c.l.b16 %v258
  %v976 = vunpack.c.l.b16 %v259
  %v977 = vunpack.c.l.b16 %v260
  %v978 = vunpack.c.l.b16 %v261
  %v979 = vunpack.c.l.b16 %v262
  %v980 = vpack.c.b16 %v965, %v964
  %v981 = vpack.c.b16 %v967, %v966
  %v982 = vpack.c.b16 %v969, %v968
  %v983 = vpack.c.b16 %v971, %v970
  %v984 = vpack.c.b16 %v973, %v972
  %v985 = vpack.c.b16 %v975, %v974
  %v986 = vpack.c.b16 %v977, %v976
  %v987 = vpack.c.b16 %v979, %v978
  %996 = vmatprep.subr.bf16.mxu0 0
  %997 = vmatpush1.bf16.msra.mxu0 %v980
  %998 = vmatprep.subr.bf16.mxu0 0
  %999 = vmatpush1.bf16.msra.mxu0 %v981
  %1000 = vmatprep.subr.bf16.mxu0 0
  %1001 = vmatpush1.bf16.msra.mxu0 %v982
  %1002 = vmatprep.subr.bf16.mxu0 0
  %1003 = vmatpush1.bf16.msra.mxu0 %v983
  %1004 = vmatprep.subr.bf16.mxu0 0
  %1005 = vmatpush1.bf16.msra.mxu0 %v984
  %1006 = vmatprep.subr.bf16.mxu0 0
  %1007 = vmatpush1.bf16.msra.mxu0 %v985
  %1008 = vmatprep.subr.bf16.mxu0 0
  %1009 = vmatpush1.bf16.msra.mxu0 %v986
  %1010 = vmatprep.subr.bf16.mxu0 0
  %1011 = vmatpush1.bf16.msra.mxu0 %v987
  %1012 = vmatprep.subr.bf16.mxu0 0
  %1013 = vmatpush1.bf16.msra.mxu0 0
  %1014 = vmatprep.subr.bf16.mxu0 0
  %1015 = vmatpush1.bf16.msra.mxu0 0
  %1016 = vmatprep.subr.bf16.mxu0 0
  %1017 = vmatpush1.bf16.msra.mxu0 0
  %1018 = vmatprep.subr.bf16.mxu0 0
  %1019 = vmatpush1.bf16.msra.mxu0 0
  %1020 = vmatprep.subr.bf16.mxu0 0
  %1021 = vmatpush1.bf16.msra.mxu0 0
  %1022 = vmatprep.subr.bf16.mxu0 0
  %1023 = vmatpush1.bf16.msra.mxu0 0
  %1024 = vmatprep.subr.bf16.mxu0 0
  %1025 = vmatpush1.bf16.msra.mxu0 0
  %1026 = vmatprep.subr.bf16.mxu0 0
  %1027 = vmatpush1.bf16.msra.mxu0 0
  %1028 = vmatprep.mubr.bf16.mxu0 0
  %1029 = vmatmul.mubr.bf16.gmra.mrb[0].mxu0 %v722
  %v1030 = vpop.f32.mrb[0].mxu0
  %v1031 = vadd.f32 %v268, %v1030
  %v1032 = vpop.f32.mrb[0].mxu0
  %v1033 = vpop.f32.mrb[0].mxu0
  %v1034 = vadd.f32 %v268, %v1033
  %v1035 = vpop.f32.mrb[0].mxu0
  %1036 = vmatprep.mubr.bf16.mxu0 0
  %1037 = vmatmul.mubr.bf16.gmra.mrb[0].mxu0 %v723
  %v1038 = vpop.f32.mrb[0].mxu0
  %v1039 = vadd.f32 %v268, %v1038
  %v1040 = vpop.f32.mrb[0].mxu0
  %v1041 = vpop.f32.mrb[0].mxu0
  %v1042 = vadd.f32 %v268, %v1041
  %v1043 = vpop.f32.mrb[0].mxu0
  %1044 = vmatprep.mubr.bf16.mxu0 0
  %1045 = vmatmul.mubr.bf16.gmra.mrb[0].mxu0 %v724
  %v1046 = vpop.f32.mrb[0].mxu0
  %v1047 = vadd.f32 %v268, %v1046
  %v1048 = vpop.f32.mrb[0].mxu0
  %v1049 = vpop.f32.mrb[0].mxu0
  %v1050 = vadd.f32 %v268, %v1049
  %v1051 = vpop.f32.mrb[0].mxu0
  %1052 = vmatprep.mubr.bf16.mxu0 0
  %1053 = vmatmul.mubr.bf16.gmra.mrb[0].mxu0 %v725
  %v1054 = vpop.f32.mrb[0].mxu0
  %v1055 = vadd.f32 %v268, %v1054
  %v1056 = vpop.f32.mrb[0].mxu0
  %v1057 = vpop.f32.mrb[0].mxu0
  %v1058 = vadd.f32 %v268, %v1057
  %v1059 = vpop.f32.mrb[0].mxu0
  %1060 = vmatprep.mubr.bf16.mxu0 0
  %1061 = vmatmul.mubr.bf16.gmra.mrb[0].mxu0 %v726
  %v1062 = vpop.f32.mrb[0].mxu0
  %v1063 = vadd.f32 %v268, %v1062
  %v1064 = vpop.f32.mrb[0].mxu0
  %v1065 = vpop.f32.mrb[0].mxu0
  %v1066 = vadd.f32 %v268, %v1065
  %v1067 = vpop.f32.mrb[0].mxu0
  %1068 = vmatprep.mubr.bf16.mxu0 0
  %1069 = vmatmul.mubr.bf16.gmra.mrb[0].mxu0 %v727
  %v1070 = vpop.f32.mrb[0].mxu0
  %v1071 = vadd.f32 %v268, %v1070
  %v1072 = vpop.f32.mrb[0].mxu0
  %v1073 = vpop.f32.mrb[0].mxu0
  %v1074 = vadd.f32 %v268, %v1073
  %v1075 = vpop.f32.mrb[0].mxu0
  %1076 = vmatprep.mubr.bf16.mxu0 0
  %1077 = vmatmul.mubr.bf16.gmra.mrb[0].mxu0 %v728
  %v1078 = vpop.f32.mrb[0].mxu0
  %v1079 = vadd.f32 %v268, %v1078
  %v1080 = vpop.f32.mrb[0].mxu0
  %v1081 = vpop.f32.mrb[0].mxu0
  %v1082 = vadd.f32 %v268, %v1081
  %v1083 = vpop.f32.mrb[0].mxu0
  %1084 = vmatprep.mubr.bf16.mxu0 0
  %1085 = vmatmul.mubr.bf16.gmra.mrb[0].mxu0 %v729
  %v1086 = vpop.f32.mrb[0].mxu0
  %v1087 = vadd.f32 %v268, %v1086
  %v1088 = vpop.f32.mrb[0].mxu0
  %v1089 = vpop.f32.mrb[0].mxu0
  %v1090 = vadd.f32 %v268, %v1089
  %v1091 = vpop.f32.mrb[0].mxu0
  %1092 = vmatprep.mubr.bf16.mxu0 0
  %1093 = vmatmul.mubr.bf16.gmra.mrb[0].mxu0 %v730
  %v1094 = vpop.f32.mrb[0].mxu0
  %v1095 = vadd.f32 %v268, %v1094
  %v1096 = vpop.f32.mrb[0].mxu0
  %v1097 = vpop.f32.mrb[0].mxu0
  %v1098 = vadd.f32 %v268, %v1097
  %v1099 = vpop.f32.mrb[0].mxu0
  %1100 = vmatprep.mubr.bf16.mxu0 0
  %1101 = vmatmul.mubr.bf16.gmra.mrb[0].mxu0 %v731
  %v1102 = vpop.f32.mrb[0].mxu0
  %v1103 = vadd.f32 %v268, %v1102
  %v1104 = vpop.f32.mrb[0].mxu0
  %v1105 = vpop.f32.mrb[0].mxu0
  %v1106 = vadd.f32 %v268, %v1105
  %v1107 = vpop.f32.mrb[0].mxu0
  %1108 = vmatprep.mubr.bf16.mxu0 0
  %1109 = vmatmul.mubr.bf16.gmra.mrb[0].mxu0 %v732
  %v1110 = vpop.f32.mrb[0].mxu0
  %v1111 = vadd.f32 %v268, %v1110
  %v1112 = vpop.f32.mrb[0].mxu0
  %v1113 = vpop.f32.mrb[0].mxu0
  %v1114 = vadd.f32 %v268, %v1113
  %v1115 = vpop.f32.mrb[0].mxu0
  %1116 = vmatprep.mubr.bf16.mxu0 0
  %1117 = vmatmul.mubr.bf16.gmra.mrb[0].mxu0 %v733
  %v1118 = vpop.f32.mrb[0].mxu0
  %v1119 = vadd.f32 %v268, %v1118
  %v1120 = vpop.f32.mrb[0].mxu0
  %v1121 = vpop.f32.mrb[0].mxu0
  %v1122 = vadd.f32 %v268, %v1121
  %v1123 = vpop.f32.mrb[0].mxu0
  %1124 = vmatprep.mubr.bf16.mxu0 0
  %1125 = vmatmul.mubr.bf16.gmra.mrb[0].mxu0 %v734
  %v1126 = vpop.f32.mrb[0].mxu0
  %v1127 = vadd.f32 %v268, %v1126
  %v1128 = vpop.f32.mrb[0].mxu0
  %v1129 = vpop.f32.mrb[0].mxu0
  %v1130 = vadd.f32 %v268, %v1129
  %v1131 = vpop.f32.mrb[0].mxu0
  %1132 = vmatprep.mubr.bf16.mxu0 0
  %1133 = vmatmul.mubr.bf16.gmra.mrb[0].mxu0 %v735
  %v1134 = vpop.f32.mrb[0].mxu0
  %v1135 = vadd.f32 %v268, %v1134
  %v1136 = vpop.f32.mrb[0].mxu0
  %v1137 = vpop.f32.mrb[0].mxu0
  %v1138 = vadd.f32 %v268, %v1137
  %v1139 = vpop.f32.mrb[0].mxu0
  %1140 = vmatprep.mubr.bf16.mxu0 0
  %1141 = vmatmul.mubr.bf16.gmra.mrb[0].mxu0 %v736
  %v1142 = vpop.f32.mrb[0].mxu0
  %v1143 = vadd.f32 %v268, %v1142
  %v1144 = vpop.f32.mrb[0].mxu0
  %v1145 = vpop.f32.mrb[0].mxu0
  %v1146 = vadd.f32 %v268, %v1145
  %v1147 = vpop.f32.mrb[0].mxu0
  %1148 = vmatprep.mubr.bf16.mxu0 0
  %1149 = vmatmul.mubr.bf16.gmra.mrb[0].mxu0 %v737
  %v1150 = vpop.f32.mrb[0].mxu0
  %v1151 = vadd.f32 %v268, %v1150
  %v1152 = vpop.f32.mrb[0].mxu0
  %v1153 = vpop.f32.mrb[0].mxu0
  %v1154 = vadd.f32 %v268, %v1153
  %v1155 = vpop.f32.mrb[0].mxu0
  %1156 = vmatprep.mubr.bf16.mxu0 0
  %1157 = vmatmul.mubr.bf16.gmra.mrb[0].mxu0 %v738
  %v1158 = vpop.f32.mrb[0].mxu0
  %v1159 = vadd.f32 %v268, %v1158
  %v1160 = vpop.f32.mrb[0].mxu0
  %v1161 = vpop.f32.mrb[0].mxu0
  %v1162 = vadd.f32 %v268, %v1161
  %v1163 = vpop.f32.mrb[0].mxu0
  %1164 = vmatprep.mubr.bf16.mxu0 0
  %1165 = vmatmul.mubr.bf16.gmra.mrb[0].mxu0 %v739
  %v1166 = vpop.f32.mrb[0].mxu0
  %v1167 = vadd.f32 %v268, %v1166
  %v1168 = vpop.f32.mrb[0].mxu0
  %v1169 = vpop.f32.mrb[0].mxu0
  %v1170 = vadd.f32 %v268, %v1169
  %v1171 = vpop.f32.mrb[0].mxu0
  %1172 = vmatprep.mubr.bf16.mxu0 0
  %1173 = vmatmul.mubr.bf16.gmra.mrb[0].mxu0 %v740
  %v1174 = vpop.f32.mrb[0].mxu0
  %v1175 = vadd.f32 %v268, %v1174
  %v1176 = vpop.f32.mrb[0].mxu0
  %v1177 = vpop.f32.mrb[0].mxu0
  %v1178 = vadd.f32 %v268, %v1177
  %v1179 = vpop.f32.mrb[0].mxu0
  %1180 = vmatprep.mubr.bf16.mxu0 0
  %1181 = vmatmul.mubr.bf16.gmra.mrb[0].mxu0 %v741
  %v1182 = vpop.f32.mrb[0].mxu0
  %v1183 = vadd.f32 %v268, %v1182
  %v1184 = vpop.f32.mrb[0].mxu0
  %v1185 = vpop.f32.mrb[0].mxu0
  %v1186 = vadd.f32 %v268, %v1185
  %v1187 = vpop.f32.mrb[0].mxu0
  %1188 = vmatprep.mubr.bf16.mxu0 0
  %1189 = vmatmul.mubr.bf16.gmra.mrb[0].mxu0 %v742
  %v1190 = vpop.f32.mrb[0].mxu0
  %v1191 = vadd.f32 %v268, %v1190
  %v1192 = vpop.f32.mrb[0].mxu0
  %v1193 = vpop.f32.mrb[0].mxu0
  %v1194 = vadd.f32 %v268, %v1193
  %v1195 = vpop.f32.mrb[0].mxu0
  %1196 = vmatprep.mubr.bf16.mxu0 0
  %1197 = vmatmul.mubr.bf16.gmra.mrb[0].mxu0 %v743
  %v1198 = vpop.f32.mrb[0].mxu0
  %v1199 = vadd.f32 %v268, %v1198
  %v1200 = vpop.f32.mrb[0].mxu0
  %v1201 = vpop.f32.mrb[0].mxu0
  %v1202 = vadd.f32 %v268, %v1201
  %v1203 = vpop.f32.mrb[0].mxu0
  %1204 = vmatprep.mubr.bf16.mxu0 0
  %1205 = vmatmul.mubr.bf16.gmra.mrb[0].mxu0 %v744
  %v1206 = vpop.f32.mrb[0].mxu0
  %v1207 = vadd.f32 %v268, %v1206
  %v1208 = vpop.f32.mrb[0].mxu0
  %v1209 = vpop.f32.mrb[0].mxu0
  %v1210 = vadd.f32 %v268, %v1209
  %v1211 = vpop.f32.mrb[0].mxu0
  %1212 = vmatprep.mubr.bf16.mxu0 0
  %1213 = vmatmul.mubr.bf16.gmra.mrb[0].mxu0 %v745
  %v1214 = vpop.f32.mrb[0].mxu0
  %v1215 = vadd.f32 %v268, %v1214
  %v1216 = vpop.f32.mrb[0].mxu0
  %v1217 = vpop.f32.mrb[0].mxu0
  %v1218 = vadd.f32 %v268, %v1217
  %v1219 = vpop.f32.mrb[0].mxu0
  %1220 = vmatprep.mubr.bf16.mxu0 0
  %1221 = vmatmul.mubr.bf16.gmra.mrb[0].mxu0 %v746
  %v1222 = vpop.f32.mrb[0].mxu0
  %v1223 = vadd.f32 %v268, %v1222
  %v1224 = vpop.f32.mrb[0].mxu0
  %v1225 = vpop.f32.mrb[0].mxu0
  %v1226 = vadd.f32 %v268, %v1225
  %v1227 = vpop.f32.mrb[0].mxu0
  %1228 = vmatprep.mubr.bf16.mxu0 0
  %1229 = vmatmul.mubr.bf16.gmra.mrb[0].mxu0 %v747
  %v1230 = vpop.f32.mrb[0].mxu0
  %v1231 = vadd.f32 %v268, %v1230
  %v1232 = vpop.f32.mrb[0].mxu0
  %v1233 = vpop.f32.mrb[0].mxu0
  %v1234 = vadd.f32 %v268, %v1233
  %v1235 = vpop.f32.mrb[0].mxu0
  %1236 = vmatprep.mubr.bf16.mxu0 0
  %1237 = vmatmul.mubr.bf16.gmra.mrb[0].mxu0 %v748
  %v1238 = vpop.f32.mrb[0].mxu0
  %v1239 = vadd.f32 %v268, %v1238
  %v1240 = vpop.f32.mrb[0].mxu0
  %v1241 = vpop.f32.mrb[0].mxu0
  %v1242 = vadd.f32 %v268, %v1241
  %v1243 = vpop.f32.mrb[0].mxu0
  %1244 = vmatprep.mubr.bf16.mxu0 0
  %1245 = vmatmul.mubr.bf16.gmra.mrb[0].mxu0 %v749
  %v1246 = vpop.f32.mrb[0].mxu0
  %v1247 = vadd.f32 %v268, %v1246
  %v1248 = vpop.f32.mrb[0].mxu0
  %v1249 = vpop.f32.mrb[0].mxu0
  %v1250 = vadd.f32 %v268, %v1249
  %v1251 = vpop.f32.mrb[0].mxu0
  %1252 = vmatprep.mubr.bf16.mxu0 0
  %1253 = vmatmul.mubr.bf16.gmra.mrb[0].mxu0 %v750
  %v1254 = vpop.f32.mrb[0].mxu0
  %v1255 = vadd.f32 %v268, %v1254
  %v1256 = vpop.f32.mrb[0].mxu0
  %v1257 = vpop.f32.mrb[0].mxu0
  %v1258 = vadd.f32 %v268, %v1257
  %v1259 = vpop.f32.mrb[0].mxu0
  %1260 = vmatprep.mubr.bf16.mxu0 0
  %1261 = vmatmul.mubr.bf16.gmra.mrb[0].mxu0 %v751
  %v1262 = vpop.f32.mrb[0].mxu0
  %v1263 = vadd.f32 %v268, %v1262
  %v1264 = vpop.f32.mrb[0].mxu0
  %v1265 = vpop.f32.mrb[0].mxu0
  %v1266 = vadd.f32 %v268, %v1265
  %v1267 = vpop.f32.mrb[0].mxu0
  %1268 = vmatprep.mubr.bf16.mxu0 0
  %1269 = vmatmul.mubr.bf16.gmra.mrb[0].mxu0 %v752
  %v1270 = vpop.f32.mrb[0].mxu0
  %v1271 = vadd.f32 %v268, %v1270
  %v1272 = vpop.f32.mrb[0].mxu0
  %v1273 = vpop.f32.mrb[0].mxu0
  %v1274 = vadd.f32 %v268, %v1273
  %v1275 = vpop.f32.mrb[0].mxu0
  %1276 = vmatprep.mubr.bf16.mxu0 0
  %1277 = vmatmul.mubr.bf16.gmra.mrb[0].mxu0 %v753
  %v1278 = vpop.f32.mrb[0].mxu0
  %v1279 = vadd.f32 %v268, %v1278
  %v1280 = vpop.f32.mrb[0].mxu0
  %v1281 = vpop.f32.mrb[0].mxu0
  %v1282 = vadd.f32 %v268, %v1281
  %v1283 = vpop.f32.mrb[0].mxu0
  %1284 = vmatprep.mubr.bf16.mxu0 0
  %1285 = vmatmul.mubr.bf16.gmra.mrb[0].mxu0 %v754
  %v1286 = vpop.f32.mrb[0].mxu0
  %v1287 = vadd.f32 %v268, %v1286
  %v1288 = vpop.f32.mrb[0].mxu0
  %v1289 = vpop.f32.mrb[0].mxu0
  %v1290 = vadd.f32 %v268, %v1289
  %v1291 = vpop.f32.mrb[0].mxu0
  %1292 = vmatprep.mubr.bf16.mxu0 0
  %1293 = vmatmul.mubr.bf16.gmra.mrb[0].mxu0 %v755
  %v1294 = vpop.f32.mrb[0].mxu0
  %v1295 = vadd.f32 %v268, %v1294
  %v1296 = vpop.f32.mrb[0].mxu0
  %v1297 = vpop.f32.mrb[0].mxu0
  %v1298 = vadd.f32 %v268, %v1297
  %v1299 = vpop.f32.mrb[0].mxu0
  %1300 = vmatprep.mubr.bf16.mxu0 0
  %1301 = vmatmul.mubr.bf16.gmra.mrb[0].mxu0 %v756
  %v1302 = vpop.f32.mrb[0].mxu0
  %v1303 = vadd.f32 %v268, %v1302
  %v1304 = vpop.f32.mrb[0].mxu0
  %v1305 = vpop.f32.mrb[0].mxu0
  %v1306 = vadd.f32 %v268, %v1305
  %v1307 = vpop.f32.mrb[0].mxu0
  %1308 = vmatprep.mubr.bf16.mxu0 0
  %1309 = vmatmul.mubr.bf16.gmra.mrb[0].mxu0 %v757
  %v1310 = vpop.f32.mrb[0].mxu0
  %v1311 = vadd.f32 %v268, %v1310
  %v1312 = vpop.f32.mrb[0].mxu0
  %v1313 = vpop.f32.mrb[0].mxu0
  %v1314 = vadd.f32 %v268, %v1313
  %v1315 = vpop.f32.mrb[0].mxu0
  %1316 = vmatprep.mubr.bf16.mxu0 0
  %1317 = vmatmul.mubr.bf16.gmra.mrb[0].mxu0 %v758
  %v1318 = vpop.f32.mrb[0].mxu0
  %v1319 = vadd.f32 %v268, %v1318
  %v1320 = vpop.f32.mrb[0].mxu0
  %v1321 = vpop.f32.mrb[0].mxu0
  %v1322 = vadd.f32 %v268, %v1321
  %v1323 = vpop.f32.mrb[0].mxu0
  %1324 = vmatprep.mubr.bf16.mxu0 0
  %1325 = vmatmul.mubr.bf16.gmra.mrb[0].mxu0 %v759
  %v1326 = vpop.f32.mrb[0].mxu0
  %v1327 = vadd.f32 %v268, %v1326
  %v1328 = vpop.f32.mrb[0].mxu0
  %v1329 = vpop.f32.mrb[0].mxu0
  %v1330 = vadd.f32 %v268, %v1329
  %v1331 = vpop.f32.mrb[0].mxu0
  %1332 = vmatprep.mubr.bf16.mxu0 0
  %1333 = vmatmul.mubr.bf16.gmra.mrb[0].mxu0 %v760
  %v1334 = vpop.f32.mrb[0].mxu0
  %v1335 = vadd.f32 %v268, %v1334
  %v1336 = vpop.f32.mrb[0].mxu0
  %v1337 = vpop.f32.mrb[0].mxu0
  %v1338 = vadd.f32 %v268, %v1337
  %v1339 = vpop.f32.mrb[0].mxu0
  %1340 = vmatprep.mubr.bf16.mxu0 0
  %1341 = vmatmul.mubr.bf16.gmra.mrb[0].mxu0 %v761
  %v1342 = vpop.f32.mrb[0].mxu0
  %v1343 = vadd.f32 %v268, %v1342
  %v1344 = vpop.f32.mrb[0].mxu0
  %v1345 = vpop.f32.mrb[0].mxu0
  %v1346 = vadd.f32 %v268, %v1345
  %v1347 = vpop.f32.mrb[0].mxu0
  %1348 = vmatprep.mubr.bf16.mxu0 0
  %1349 = vmatmul.mubr.bf16.gmra.mrb[0].mxu0 %v762
  %v1350 = vpop.f32.mrb[0].mxu0
  %v1351 = vadd.f32 %v268, %v1350
  %v1352 = vpop.f32.mrb[0].mxu0
  %v1353 = vpop.f32.mrb[0].mxu0
  %v1354 = vadd.f32 %v268, %v1353
  %v1355 = vpop.f32.mrb[0].mxu0
  %1356 = vmatprep.mubr.bf16.mxu0 0
  %1357 = vmatmul.mubr.bf16.gmra.mrb[0].mxu0 %v763
  %v1358 = vpop.f32.mrb[0].mxu0
  %v1359 = vadd.f32 %v268, %v1358
  %v1360 = vpop.f32.mrb[0].mxu0
  %v1361 = vpop.f32.mrb[0].mxu0
  %v1362 = vadd.f32 %v268, %v1361
  %v1363 = vpop.f32.mrb[0].mxu0
  %1364 = vmatprep.mubr.bf16.mxu0 0
  %1365 = vmatmul.mubr.bf16.gmra.mrb[0].mxu0 %v764
  %v1366 = vpop.f32.mrb[0].mxu0
  %v1367 = vadd.f32 %v268, %v1366
  %v1368 = vpop.f32.mrb[0].mxu0
  %v1369 = vpop.f32.mrb[0].mxu0
  %v1370 = vadd.f32 %v268, %v1369
  %v1371 = vpop.f32.mrb[0].mxu0
  %1372 = vmatprep.mubr.bf16.mxu0 0
  %1373 = vmatmul.mubr.bf16.gmra.mrb[0].mxu0 %v765
  %v1374 = vpop.f32.mrb[0].mxu0
  %v1375 = vadd.f32 %v268, %v1374
  %v1376 = vpop.f32.mrb[0].mxu0
  %v1377 = vpop.f32.mrb[0].mxu0
  %v1378 = vadd.f32 %v268, %v1377
  %v1379 = vpop.f32.mrb[0].mxu0
  %1380 = vmatprep.mubr.bf16.mxu0 0
  %1381 = vmatmul.mubr.bf16.gmra.mrb[0].mxu0 %v766
  %v1382 = vpop.f32.mrb[0].mxu0
  %v1383 = vadd.f32 %v268, %v1382
  %v1384 = vpop.f32.mrb[0].mxu0
  %v1385 = vpop.f32.mrb[0].mxu0
  %v1386 = vadd.f32 %v268, %v1385
  %v1387 = vpop.f32.mrb[0].mxu0
  %1388 = vmatprep.mubr.bf16.mxu0 0
  %1389 = vmatmul.mubr.bf16.gmra.mrb[0].mxu0 %v767
  %v1390 = vpop.f32.mrb[0].mxu0
  %v1391 = vadd.f32 %v268, %v1390
  %v1392 = vpop.f32.mrb[0].mxu0
  %v1393 = vpop.f32.mrb[0].mxu0
  %v1394 = vadd.f32 %v268, %v1393
  %v1395 = vpop.f32.mrb[0].mxu0
  %1396 = vmatprep.mubr.bf16.mxu0 0
  %1397 = vmatmul.mubr.bf16.gmra.mrb[0].mxu0 %v768
  %v1398 = vpop.f32.mrb[0].mxu0
  %v1399 = vadd.f32 %v268, %v1398
  %v1400 = vpop.f32.mrb[0].mxu0
  %v1401 = vpop.f32.mrb[0].mxu0
  %v1402 = vadd.f32 %v268, %v1401
  %v1403 = vpop.f32.mrb[0].mxu0
  %1404 = vmatprep.mubr.bf16.mxu0 0
  %1405 = vmatmul.mubr.bf16.gmra.mrb[0].mxu0 %v769
  %v1406 = vpop.f32.mrb[0].mxu0
  %v1407 = vadd.f32 %v268, %v1406
  %v1408 = vpop.f32.mrb[0].mxu0
  %v1409 = vpop.f32.mrb[0].mxu0
  %v1410 = vadd.f32 %v268, %v1409
  %v1411 = vpop.f32.mrb[0].mxu0
  %1412 = vmatprep.mubr.bf16.mxu0 0
  %1413 = vmatmul.mubr.bf16.gmra.mrb[0].mxu0 %v770
  %v1414 = vpop.f32.mrb[0].mxu0
  %v1415 = vadd.f32 %v268, %v1414
  %v1416 = vpop.f32.mrb[0].mxu0
  %v1417 = vpop.f32.mrb[0].mxu0
  %v1418 = vadd.f32 %v268, %v1417
  %v1419 = vpop.f32.mrb[0].mxu0
  %1420 = vmatprep.mubr.bf16.mxu0 0
  %1421 = vmatmul.mubr.bf16.gmra.mrb[0].mxu0 %v771
  %v1422 = vpop.f32.mrb[0].mxu0
  %v1423 = vadd.f32 %v268, %v1422
  %v1424 = vpop.f32.mrb[0].mxu0
  %v1425 = vpop.f32.mrb[0].mxu0
  %v1426 = vadd.f32 %v268, %v1425
  %v1427 = vpop.f32.mrb[0].mxu0
  %1428 = vmatprep.mubr.bf16.mxu0 0
  %1429 = vmatmul.mubr.bf16.gmra.mrb[0].mxu0 %v772
  %v1430 = vpop.f32.mrb[0].mxu0
  %v1431 = vadd.f32 %v268, %v1430
  %v1432 = vpop.f32.mrb[0].mxu0
  %v1433 = vpop.f32.mrb[0].mxu0
  %v1434 = vadd.f32 %v268, %v1433
  %v1435 = vpop.f32.mrb[0].mxu0
  %1436 = vmatprep.mubr.bf16.mxu0 0
  %1437 = vmatmul.mubr.bf16.gmra.mrb[0].mxu0 %v773
  %v1438 = vpop.f32.mrb[0].mxu0
  %v1439 = vadd.f32 %v268, %v1438
  %v1440 = vpop.f32.mrb[0].mxu0
  %v1441 = vpop.f32.mrb[0].mxu0
  %v1442 = vadd.f32 %v268, %v1441
  %v1443 = vpop.f32.mrb[0].mxu0
  %1444 = vmatprep.mubr.bf16.mxu0 0
  %1445 = vmatmul.mubr.bf16.gmra.mrb[0].mxu0 %v774
  %v1446 = vpop.f32.mrb[0].mxu0
  %v1447 = vadd.f32 %v268, %v1446
  %v1448 = vpop.f32.mrb[0].mxu0
  %v1449 = vpop.f32.mrb[0].mxu0
  %v1450 = vadd.f32 %v268, %v1449
  %v1451 = vpop.f32.mrb[0].mxu0
  %1452 = vmatprep.mubr.bf16.mxu0 0
  %1453 = vmatmul.mubr.bf16.gmra.mrb[0].mxu0 %v775
  %v1454 = vpop.f32.mrb[0].mxu0
  %v1455 = vadd.f32 %v268, %v1454
  %v1456 = vpop.f32.mrb[0].mxu0
  %v1457 = vpop.f32.mrb[0].mxu0
  %v1458 = vadd.f32 %v268, %v1457
  %v1459 = vpop.f32.mrb[0].mxu0
  %1460 = vmatprep.mubr.bf16.mxu0 0
  %1461 = vmatmul.mubr.bf16.gmra.mrb[0].mxu0 %v776
  %v1462 = vpop.f32.mrb[0].mxu0
  %v1463 = vadd.f32 %v268, %v1462
  %v1464 = vpop.f32.mrb[0].mxu0
  %v1465 = vpop.f32.mrb[0].mxu0
  %v1466 = vadd.f32 %v268, %v1465
  %v1467 = vpop.f32.mrb[0].mxu0
  %1468 = vmatprep.mubr.bf16.mxu0 0
  %1469 = vmatmul.mubr.bf16.gmra.mrb[0].mxu0 %v777
  %v1470 = vpop.f32.mrb[0].mxu0
  %v1471 = vadd.f32 %v268, %v1470
  %v1472 = vpop.f32.mrb[0].mxu0
  %v1473 = vpop.f32.mrb[0].mxu0
  %v1474 = vadd.f32 %v268, %v1473
  %v1475 = vpop.f32.mrb[0].mxu0
  %1476 = vmatprep.mubr.bf16.mxu0 0
  %1477 = vmatmul.mubr.bf16.gmra.mrb[0].mxu0 %v778
  %v1478 = vpop.f32.mrb[0].mxu0
  %v1479 = vadd.f32 %v268, %v1478
  %v1480 = vpop.f32.mrb[0].mxu0
  %v1481 = vpop.f32.mrb[0].mxu0
  %v1482 = vadd.f32 %v268, %v1481
  %v1483 = vpop.f32.mrb[0].mxu0
  %1484 = vmatprep.mubr.bf16.mxu0 0
  %1485 = vmatmul.mubr.bf16.gmra.mrb[0].mxu0 %v779
  %v1486 = vpop.f32.mrb[0].mxu0
  %v1487 = vadd.f32 %v268, %v1486
  %v1488 = vpop.f32.mrb[0].mxu0
  %v1489 = vpop.f32.mrb[0].mxu0
  %v1490 = vadd.f32 %v268, %v1489
  %v1491 = vpop.f32.mrb[0].mxu0
  %1492 = vmatprep.mubr.bf16.mxu0 0
  %1493 = vmatmul.mubr.bf16.gmra.mrb[0].mxu0 %v780
  %v1494 = vpop.f32.mrb[0].mxu0
  %v1495 = vadd.f32 %v268, %v1494
  %v1496 = vpop.f32.mrb[0].mxu0
  %v1497 = vpop.f32.mrb[0].mxu0
  %v1498 = vadd.f32 %v268, %v1497
  %v1499 = vpop.f32.mrb[0].mxu0
  %1500 = vmatprep.mubr.bf16.mxu0 0
  %1501 = vmatmul.mubr.bf16.gmra.mrb[0].mxu0 %v781
  %v1502 = vpop.f32.mrb[0].mxu0
  %v1503 = vadd.f32 %v268, %v1502
  %v1504 = vpop.f32.mrb[0].mxu0
  %v1505 = vpop.f32.mrb[0].mxu0
  %v1506 = vadd.f32 %v268, %v1505
  %v1507 = vpop.f32.mrb[0].mxu0
  %1508 = vmatprep.mubr.bf16.mxu0 0
  %1509 = vmatmul.mubr.bf16.gmra.mrb[0].mxu0 %v782
  %v1510 = vpop.f32.mrb[0].mxu0
  %v1511 = vadd.f32 %v268, %v1510
  %v1512 = vpop.f32.mrb[0].mxu0
  %v1513 = vpop.f32.mrb[0].mxu0
  %v1514 = vadd.f32 %v268, %v1513
  %v1515 = vpop.f32.mrb[0].mxu0
  %1516 = vmatprep.mubr.bf16.mxu0 0
  %1517 = vmatmul.mubr.bf16.gmra.mrb[0].mxu0 %v783
  %v1518 = vpop.f32.mrb[0].mxu0
  %v1519 = vadd.f32 %v268, %v1518
  %v1520 = vpop.f32.mrb[0].mxu0
  %v1521 = vpop.f32.mrb[0].mxu0
  %v1522 = vadd.f32 %v268, %v1521
  %v1523 = vpop.f32.mrb[0].mxu0
  %1524 = vmatprep.mubr.bf16.mxu0 0
  %1525 = vmatmul.mubr.bf16.gmra.mrb[0].mxu0 %v784
  %v1526 = vpop.f32.mrb[0].mxu0
  %v1527 = vadd.f32 %v268, %v1526
  %v1528 = vpop.f32.mrb[0].mxu0
  %v1529 = vpop.f32.mrb[0].mxu0
  %v1530 = vadd.f32 %v268, %v1529
  %v1531 = vpop.f32.mrb[0].mxu0
  %1532 = vmatprep.mubr.bf16.mxu0 0
  %1533 = vmatmul.mubr.bf16.gmra.mrb[0].mxu0 %v785
  %v1534 = vpop.f32.mrb[0].mxu0
  %v1535 = vadd.f32 %v268, %v1534
  %v1536 = vpop.f32.mrb[0].mxu0
  %v1537 = vpop.f32.mrb[0].mxu0
  %v1538 = vadd.f32 %v268, %v1537
  %v1539 = vpop.f32.mrb[0].mxu0
  %1540 = vmatprep.mubr.bf16.mxu0 0
  %1541 = vmatmul.mubr.bf16.gmra.mrb[0].mxu0 %v786
  %v1542 = vpop.f32.mrb[0].mxu0
  %v1543 = vadd.f32 %v268, %v1542
  %v1544 = vpop.f32.mrb[0].mxu0
  %v1545 = vpop.f32.mrb[0].mxu0
  %v1546 = vadd.f32 %v268, %v1545
  %v1547 = vpop.f32.mrb[0].mxu0
  %1548 = vmatprep.mubr.bf16.mxu0 0
  %1549 = vmatmul.mubr.bf16.gmra.mrb[0].mxu0 %v787
  %v1550 = vpop.f32.mrb[0].mxu0
  %v1551 = vadd.f32 %v268, %v1550
  %v1552 = vpop.f32.mrb[0].mxu0
  %v1553 = vpop.f32.mrb[0].mxu0
  %v1554 = vadd.f32 %v268, %v1553
  %v1555 = vpop.f32.mrb[0].mxu0
  %1556 = vmatprep.mubr.bf16.mxu0 0
  %1557 = vmatmul.mubr.bf16.gmra.mrb[0].mxu0 %v788
  %v1558 = vpop.f32.mrb[0].mxu0
  %v1559 = vadd.f32 %v268, %v1558
  %v1560 = vpop.f32.mrb[0].mxu0
  %v1561 = vpop.f32.mrb[0].mxu0
  %v1562 = vadd.f32 %v268, %v1561
  %v1563 = vpop.f32.mrb[0].mxu0
  %1564 = vmatprep.mubr.bf16.mxu0 0
  %1565 = vmatmul.mubr.bf16.gmra.mrb[0].mxu0 %v789
  %v1566 = vpop.f32.mrb[0].mxu0
  %v1567 = vadd.f32 %v268, %v1566
  %v1568 = vpop.f32.mrb[0].mxu0
  %v1569 = vpop.f32.mrb[0].mxu0
  %v1570 = vadd.f32 %v268, %v1569
  %v1571 = vpop.f32.mrb[0].mxu0
  %1572 = vmatprep.mubr.bf16.mxu0 0
  %1573 = vmatmul.mubr.bf16.gmra.mrb[0].mxu0 %v790
  %v1574 = vpop.f32.mrb[0].mxu0
  %v1575 = vadd.f32 %v268, %v1574
  %v1576 = vpop.f32.mrb[0].mxu0
  %v1577 = vpop.f32.mrb[0].mxu0
  %v1578 = vadd.f32 %v268, %v1577
  %v1579 = vpop.f32.mrb[0].mxu0
  %1580 = vmatprep.mubr.bf16.mxu0 0
  %1581 = vmatmul.mubr.bf16.gmra.mrb[0].mxu0 %v791
  %v1582 = vpop.f32.mrb[0].mxu0
  %v1583 = vadd.f32 %v268, %v1582
  %v1584 = vpop.f32.mrb[0].mxu0
  %v1585 = vpop.f32.mrb[0].mxu0
  %v1586 = vadd.f32 %v268, %v1585
  %v1587 = vpop.f32.mrb[0].mxu0
  %1588 = vmatprep.mubr.bf16.mxu0 0
  %1589 = vmatmul.mubr.bf16.gmra.mrb[0].mxu0 %v792
  %v1590 = vpop.f32.mrb[0].mxu0
  %v1591 = vadd.f32 %v268, %v1590
  %v1592 = vpop.f32.mrb[0].mxu0
  %v1593 = vpop.f32.mrb[0].mxu0
  %v1594 = vadd.f32 %v268, %v1593
  %v1595 = vpop.f32.mrb[0].mxu0
  %1596 = vmatprep.mubr.bf16.mxu0 0
  %1597 = vmatmul.mubr.bf16.gmra.mrb[0].mxu0 %v793
  %v1598 = vpop.f32.mrb[0].mxu0
  %v1599 = vadd.f32 %v268, %v1598
  %v1600 = vpop.f32.mrb[0].mxu0
  %v1601 = vpop.f32.mrb[0].mxu0
  %v1602 = vadd.f32 %v268, %v1601
  %v1603 = vpop.f32.mrb[0].mxu0
  %1604 = vmatprep.mubr.bf16.mxu0 0
  %1605 = vmatmul.mubr.bf16.gmra.mrb[0].mxu0 %v794
  %v1606 = vpop.f32.mrb[0].mxu0
  %v1607 = vadd.f32 %v268, %v1606
  %v1608 = vpop.f32.mrb[0].mxu0
  %v1609 = vpop.f32.mrb[0].mxu0
  %v1610 = vadd.f32 %v268, %v1609
  %v1611 = vpop.f32.mrb[0].mxu0
  %1612 = vmatprep.mubr.bf16.mxu0 0
  %1613 = vmatmul.mubr.bf16.gmra.mrb[0].mxu0 %v795
  %v1614 = vpop.f32.mrb[0].mxu0
  %v1615 = vadd.f32 %v268, %v1614
  %v1616 = vpop.f32.mrb[0].mxu0
  %v1617 = vpop.f32.mrb[0].mxu0
  %v1618 = vadd.f32 %v268, %v1617
  %v1619 = vpop.f32.mrb[0].mxu0
  %1620 = vmatprep.mubr.bf16.mxu0 0
  %1621 = vmatmul.mubr.bf16.gmra.mrb[0].mxu0 %v796
  %v1622 = vpop.f32.mrb[0].mxu0
  %v1623 = vadd.f32 %v268, %v1622
  %v1624 = vpop.f32.mrb[0].mxu0
  %v1625 = vpop.f32.mrb[0].mxu0
  %v1626 = vadd.f32 %v268, %v1625
  %v1627 = vpop.f32.mrb[0].mxu0
  %1628 = vmatprep.mubr.bf16.mxu0 0
  %1629 = vmatmul.mubr.bf16.gmra.mrb[0].mxu0 %v797
  %v1630 = vpop.f32.mrb[0].mxu0
  %v1631 = vadd.f32 %v268, %v1630
  %v1632 = vpop.f32.mrb[0].mxu0
  %v1633 = vpop.f32.mrb[0].mxu0
  %v1634 = vadd.f32 %v268, %v1633
  %v1635 = vpop.f32.mrb[0].mxu0
  %1636 = vmatprep.mubr.bf16.mxu0 0
  %1637 = vmatmul.mubr.bf16.gmra.mrb[0].mxu0 %v798
  %v1638 = vpop.f32.mrb[0].mxu0
  %v1639 = vadd.f32 %v268, %v1638
  %v1640 = vpop.f32.mrb[0].mxu0
  %v1641 = vpop.f32.mrb[0].mxu0
  %v1642 = vadd.f32 %v268, %v1641
  %v1643 = vpop.f32.mrb[0].mxu0
  %1644 = vmatprep.mubr.bf16.mxu0 0
  %1645 = vmatmul.mubr.bf16.gmra.mrb[0].mxu0 %v799
  %v1646 = vpop.f32.mrb[0].mxu0
  %v1647 = vadd.f32 %v268, %v1646
  %v1648 = vpop.f32.mrb[0].mxu0
  %v1649 = vpop.f32.mrb[0].mxu0
  %v1650 = vadd.f32 %v268, %v1649
  %v1651 = vpop.f32.mrb[0].mxu0
  %1652 = vmatprep.mubr.bf16.mxu0 0
  %1653 = vmatmul.mubr.bf16.gmra.mrb[0].mxu0 %v800
  %v1654 = vpop.f32.mrb[0].mxu0
  %v1655 = vadd.f32 %v268, %v1654
  %v1656 = vpop.f32.mrb[0].mxu0
  %v1657 = vpop.f32.mrb[0].mxu0
  %v1658 = vadd.f32 %v268, %v1657
  %v1659 = vpop.f32.mrb[0].mxu0
  %1660 = vmatprep.mubr.bf16.mxu0 0
  %1661 = vmatmul.mubr.bf16.gmra.mrb[0].mxu0 %v801
  %v1662 = vpop.f32.mrb[0].mxu0
  %v1663 = vadd.f32 %v268, %v1662
  %v1664 = vpop.f32.mrb[0].mxu0
  %v1665 = vpop.f32.mrb[0].mxu0
  %v1666 = vadd.f32 %v268, %v1665
  %v1667 = vpop.f32.mrb[0].mxu0
  %1668 = vmatprep.mubr.bf16.mxu0 0
  %1669 = vmatmul.mubr.bf16.gmra.mrb[0].mxu0 %v802
  %v1670 = vpop.f32.mrb[0].mxu0
  %v1671 = vadd.f32 %v268, %v1670
  %v1672 = vpop.f32.mrb[0].mxu0
  %v1673 = vpop.f32.mrb[0].mxu0
  %v1674 = vadd.f32 %v268, %v1673
  %v1675 = vpop.f32.mrb[0].mxu0
  %1676 = vmatprep.mubr.bf16.mxu0 0
  %1677 = vmatmul.mubr.bf16.gmra.mrb[0].mxu0 %v803
  %v1678 = vpop.f32.mrb[0].mxu0
  %v1679 = vadd.f32 %v268, %v1678
  %v1680 = vpop.f32.mrb[0].mxu0
  %v1681 = vpop.f32.mrb[0].mxu0
  %v1682 = vadd.f32 %v268, %v1681
  %v1683 = vpop.f32.mrb[0].mxu0
  %1684 = vmatprep.mubr.bf16.mxu0 0
  %1685 = vmatmul.mubr.bf16.gmra.mrb[0].mxu0 %v804
  %v1686 = vpop.f32.mrb[0].mxu0
  %v1687 = vadd.f32 %v268, %v1686
  %v1688 = vpop.f32.mrb[0].mxu0
  %v1689 = vpop.f32.mrb[0].mxu0
  %v1690 = vadd.f32 %v268, %v1689
  %v1691 = vpop.f32.mrb[0].mxu0
  %1692 = vmatprep.mubr.bf16.mxu0 0
  %1693 = vmatmul.mubr.bf16.gmra.mrb[0].mxu0 %v805
  %v1694 = vpop.f32.mrb[0].mxu0
  %v1695 = vadd.f32 %v268, %v1694
  %v1696 = vpop.f32.mrb[0].mxu0
  %v1697 = vpop.f32.mrb[0].mxu0
  %v1698 = vadd.f32 %v268, %v1697
  %v1699 = vpop.f32.mrb[0].mxu0
  %1700 = vmatprep.mubr.bf16.mxu0 0
  %1701 = vmatmul.mubr.bf16.gmra.mrb[0].mxu0 %v806
  %v1702 = vpop.f32.mrb[0].mxu0
  %v1703 = vadd.f32 %v268, %v1702
  %v1704 = vpop.f32.mrb[0].mxu0
  %v1705 = vpop.f32.mrb[0].mxu0
  %v1706 = vadd.f32 %v268, %v1705
  %v1707 = vpop.f32.mrb[0].mxu0
  %1708 = vmatprep.mubr.bf16.mxu0 0
  %1709 = vmatmul.mubr.bf16.gmra.mrb[0].mxu0 %v807
  %v1710 = vpop.f32.mrb[0].mxu0
  %v1711 = vadd.f32 %v268, %v1710
  %v1712 = vpop.f32.mrb[0].mxu0
  %v1713 = vpop.f32.mrb[0].mxu0
  %v1714 = vadd.f32 %v268, %v1713
  %v1715 = vpop.f32.mrb[0].mxu0
  %1716 = vmatprep.mubr.bf16.mxu0 0
  %1717 = vmatmul.mubr.bf16.gmra.mrb[0].mxu0 %v808
  %v1718 = vpop.f32.mrb[0].mxu0
  %v1719 = vadd.f32 %v268, %v1718
  %v1720 = vpop.f32.mrb[0].mxu0
  %v1721 = vpop.f32.mrb[0].mxu0
  %v1722 = vadd.f32 %v268, %v1721
  %v1723 = vpop.f32.mrb[0].mxu0
  %1724 = vmatprep.mubr.bf16.mxu0 0
  %1725 = vmatmul.mubr.bf16.gmra.mrb[0].mxu0 %v809
  %v1726 = vpop.f32.mrb[0].mxu0
  %v1727 = vadd.f32 %v268, %v1726
  %v1728 = vpop.f32.mrb[0].mxu0
  %v1729 = vpop.f32.mrb[0].mxu0
  %v1730 = vadd.f32 %v268, %v1729
  %v1731 = vpop.f32.mrb[0].mxu0
  %1732 = vmatprep.mubr.bf16.mxu0 0
  %1733 = vmatmul.mubr.bf16.gmra.mrb[0].mxu0 %v810
  %v1734 = vpop.f32.mrb[0].mxu0
  %v1735 = vadd.f32 %v268, %v1734
  %v1736 = vpop.f32.mrb[0].mxu0
  %v1737 = vpop.f32.mrb[0].mxu0
  %v1738 = vadd.f32 %v268, %v1737
  %v1739 = vpop.f32.mrb[0].mxu0
  %1740 = vmatprep.mubr.bf16.mxu0 0
  %1741 = vmatmul.mubr.bf16.gmra.mrb[0].mxu0 %v811
  %v1742 = vpop.f32.mrb[0].mxu0
  %v1743 = vadd.f32 %v268, %v1742
  %v1744 = vpop.f32.mrb[0].mxu0
  %v1745 = vpop.f32.mrb[0].mxu0
  %v1746 = vadd.f32 %v268, %v1745
  %v1747 = vpop.f32.mrb[0].mxu0
  %1748 = vmatprep.mubr.bf16.mxu0 0
  %1749 = vmatmul.mubr.bf16.gmra.mrb[0].mxu0 %v812
  %v1750 = vpop.f32.mrb[0].mxu0
  %v1751 = vadd.f32 %v268, %v1750
  %v1752 = vpop.f32.mrb[0].mxu0
  %v1753 = vpop.f32.mrb[0].mxu0
  %v1754 = vadd.f32 %v268, %v1753
  %v1755 = vpop.f32.mrb[0].mxu0
  %1756 = vmatprep.mubr.bf16.mxu0 0
  %1757 = vmatmul.mubr.bf16.gmra.mrb[0].mxu0 %v813
  %v1758 = vpop.f32.mrb[0].mxu0
  %v1759 = vadd.f32 %v268, %v1758
  %v1760 = vpop.f32.mrb[0].mxu0
  %v1761 = vpop.f32.mrb[0].mxu0
  %v1762 = vadd.f32 %v268, %v1761
  %v1763 = vpop.f32.mrb[0].mxu0
  %1764 = vmatprep.mubr.bf16.mxu0 0
  %1765 = vmatmul.mubr.bf16.gmra.mrb[0].mxu0 %v814
  %v1766 = vpop.f32.mrb[0].mxu0
  %v1767 = vadd.f32 %v268, %v1766
  %v1768 = vpop.f32.mrb[0].mxu0
  %v1769 = vpop.f32.mrb[0].mxu0
  %v1770 = vadd.f32 %v268, %v1769
  %v1771 = vpop.f32.mrb[0].mxu0
  %1772 = vmatprep.mubr.bf16.mxu0 0
  %1773 = vmatmul.mubr.bf16.gmra.mrb[0].mxu0 %v815
  %v1774 = vpop.f32.mrb[0].mxu0
  %v1775 = vadd.f32 %v268, %v1774
  %v1776 = vpop.f32.mrb[0].mxu0
  %v1777 = vpop.f32.mrb[0].mxu0
  %v1778 = vadd.f32 %v268, %v1777
  %v1779 = vpop.f32.mrb[0].mxu0
  %1780 = vmatprep.mubr.bf16.mxu0 0
  %1781 = vmatmul.mubr.bf16.gmra.mrb[0].mxu0 %v816
  %v1782 = vpop.f32.mrb[0].mxu0
  %v1783 = vadd.f32 %v268, %v1782
  %v1784 = vpop.f32.mrb[0].mxu0
  %v1785 = vpop.f32.mrb[0].mxu0
  %v1786 = vadd.f32 %v268, %v1785
  %v1787 = vpop.f32.mrb[0].mxu0
  %1788 = vmatprep.mubr.bf16.mxu0 0
  %1789 = vmatmul.mubr.bf16.gmra.mrb[0].mxu0 %v817
  %v1790 = vpop.f32.mrb[0].mxu0
  %v1791 = vadd.f32 %v268, %v1790
  %v1792 = vpop.f32.mrb[0].mxu0
  %v1793 = vpop.f32.mrb[0].mxu0
  %v1794 = vadd.f32 %v268, %v1793
  %v1795 = vpop.f32.mrb[0].mxu0
  %1796 = vmatprep.mubr.bf16.mxu0 0
  %1797 = vmatmul.mubr.bf16.gmra.mrb[0].mxu0 %v818
  %v1798 = vpop.f32.mrb[0].mxu0
  %v1799 = vadd.f32 %v268, %v1798
  %v1800 = vpop.f32.mrb[0].mxu0
  %v1801 = vpop.f32.mrb[0].mxu0
  %v1802 = vadd.f32 %v268, %v1801
  %v1803 = vpop.f32.mrb[0].mxu0
  %1804 = vmatprep.mubr.bf16.mxu0 0
  %1805 = vmatmul.mubr.bf16.gmra.mrb[0].mxu0 %v819
  %v1806 = vpop.f32.mrb[0].mxu0
  %v1807 = vadd.f32 %v268, %v1806
  %v1808 = vpop.f32.mrb[0].mxu0
  %v1809 = vpop.f32.mrb[0].mxu0
  %v1810 = vadd.f32 %v268, %v1809
  %v1811 = vpop.f32.mrb[0].mxu0
  %1812 = vmatprep.mubr.bf16.mxu0 0
  %1813 = vmatmul.mubr.bf16.gmra.mrb[0].mxu0 %v820
  %v1814 = vpop.f32.mrb[0].mxu0
  %v1815 = vadd.f32 %v268, %v1814
  %v1816 = vpop.f32.mrb[0].mxu0
  %v1817 = vpop.f32.mrb[0].mxu0
  %v1818 = vadd.f32 %v268, %v1817
  %v1819 = vpop.f32.mrb[0].mxu0
  %1820 = vmatprep.mubr.bf16.mxu0 0
  %1821 = vmatmul.mubr.bf16.gmra.mrb[0].mxu0 %v821
  %v1822 = vpop.f32.mrb[0].mxu0
  %v1823 = vadd.f32 %v268, %v1822
  %v1824 = vpop.f32.mrb[0].mxu0
  %v1825 = vpop.f32.mrb[0].mxu0
  %v1826 = vadd.f32 %v268, %v1825
  %v1827 = vpop.f32.mrb[0].mxu0
  %1828 = vmatprep.mubr.bf16.mxu0 0
  %1829 = vmatmul.mubr.bf16.gmra.mrb[0].mxu0 %v822
  %v1830 = vpop.f32.mrb[0].mxu0
  %v1831 = vadd.f32 %v268, %v1830
  %v1832 = vpop.f32.mrb[0].mxu0
  %v1833 = vpop.f32.mrb[0].mxu0
  %v1834 = vadd.f32 %v268, %v1833
  %v1835 = vpop.f32.mrb[0].mxu0
  %1836 = vmatprep.mubr.bf16.mxu0 0
  %1837 = vmatmul.mubr.bf16.gmra.mrb[0].mxu0 %v823
  %v1838 = vpop.f32.mrb[0].mxu0
  %v1839 = vadd.f32 %v268, %v1838
  %v1840 = vpop.f32.mrb[0].mxu0
  %v1841 = vpop.f32.mrb[0].mxu0
  %v1842 = vadd.f32 %v268, %v1841
  %v1843 = vpop.f32.mrb[0].mxu0
  %1844 = vmatprep.mubr.bf16.mxu0 0
  %1845 = vmatmul.mubr.bf16.gmra.mrb[0].mxu0 %v824
  %v1846 = vpop.f32.mrb[0].mxu0
  %v1847 = vadd.f32 %v268, %v1846
  %v1848 = vpop.f32.mrb[0].mxu0
  %v1849 = vpop.f32.mrb[0].mxu0
  %v1850 = vadd.f32 %v268, %v1849
  %v1851 = vpop.f32.mrb[0].mxu0
  %1852 = vmatprep.mubr.bf16.mxu0 0
  %1853 = vmatmul.mubr.bf16.gmra.mrb[0].mxu0 %v825
  %v1854 = vpop.f32.mrb[0].mxu0
  %v1855 = vadd.f32 %v268, %v1854
  %v1856 = vpop.f32.mrb[0].mxu0
  %v1857 = vpop.f32.mrb[0].mxu0
  %v1858 = vadd.f32 %v268, %v1857
  %v1859 = vpop.f32.mrb[0].mxu0
  %1860 = vmatprep.mubr.bf16.mxu0 0
  %1861 = vmatmul.mubr.bf16.gmra.mrb[0].mxu0 %v826
  %v1862 = vpop.f32.mrb[0].mxu0
  %v1863 = vadd.f32 %v268, %v1862
  %v1864 = vpop.f32.mrb[0].mxu0
  %v1865 = vpop.f32.mrb[0].mxu0
  %v1866 = vadd.f32 %v268, %v1865
  %v1867 = vpop.f32.mrb[0].mxu0
  %1868 = vmatprep.mubr.bf16.mxu0 0
  %1869 = vmatmul.mubr.bf16.gmra.mrb[0].mxu0 %v827
  %v1870 = vpop.f32.mrb[0].mxu0
  %v1871 = vadd.f32 %v268, %v1870
  %v1872 = vpop.f32.mrb[0].mxu0
  %v1873 = vpop.f32.mrb[0].mxu0
  %v1874 = vadd.f32 %v268, %v1873
  %v1875 = vpop.f32.mrb[0].mxu0
  %1876 = vmatprep.mubr.bf16.mxu0 0
  %1877 = vmatmul.mubr.bf16.gmra.mrb[0].mxu0 %v828
  %v1878 = vpop.f32.mrb[0].mxu0
  %v1879 = vadd.f32 %v268, %v1878
  %v1880 = vpop.f32.mrb[0].mxu0
  %v1881 = vpop.f32.mrb[0].mxu0
  %v1882 = vadd.f32 %v268, %v1881
  %v1883 = vpop.f32.mrb[0].mxu0
  %1884 = vmatprep.mubr.bf16.mxu0 0
  %1885 = vmatmul.mubr.bf16.gmra.mrb[0].mxu0 %v829
  %v1886 = vpop.f32.mrb[0].mxu0
  %v1887 = vadd.f32 %v268, %v1886
  %v1888 = vpop.f32.mrb[0].mxu0
  %v1889 = vpop.f32.mrb[0].mxu0
  %v1890 = vadd.f32 %v268, %v1889
  %v1891 = vpop.f32.mrb[0].mxu0
  %1892 = vmatprep.mubr.bf16.mxu0 0
  %1893 = vmatmul.mubr.bf16.gmra.mrb[0].mxu0 %v830
  %v1894 = vpop.f32.mrb[0].mxu0
  %v1895 = vadd.f32 %v268, %v1894
  %v1896 = vpop.f32.mrb[0].mxu0
  %v1897 = vpop.f32.mrb[0].mxu0
  %v1898 = vadd.f32 %v268, %v1897
  %v1899 = vpop.f32.mrb[0].mxu0
  %1900 = vmatprep.mubr.bf16.mxu0 0
  %1901 = vmatmul.mubr.bf16.gmra.mrb[0].mxu0 %v831
  %v1902 = vpop.f32.mrb[0].mxu0
  %v1903 = vadd.f32 %v268, %v1902
  %v1904 = vpop.f32.mrb[0].mxu0
  %v1905 = vpop.f32.mrb[0].mxu0
  %v1906 = vadd.f32 %v268, %v1905
  %v1907 = vpop.f32.mrb[0].mxu0
  %1908 = vmatprep.mubr.bf16.mxu0 0
  %1909 = vmatmul.mubr.bf16.gmra.mrb[0].mxu0 %v832
  %v1910 = vpop.f32.mrb[0].mxu0
  %v1911 = vadd.f32 %v268, %v1910
  %v1912 = vpop.f32.mrb[0].mxu0
  %v1913 = vpop.f32.mrb[0].mxu0
  %v1914 = vadd.f32 %v268, %v1913
  %v1915 = vpop.f32.mrb[0].mxu0
  %1916 = vmatprep.mubr.bf16.mxu0 0
  %1917 = vmatmul.mubr.bf16.gmra.mrb[0].mxu0 %v833
  %v1918 = vpop.f32.mrb[0].mxu0
  %v1919 = vadd.f32 %v268, %v1918
  %v1920 = vpop.f32.mrb[0].mxu0
  %v1921 = vpop.f32.mrb[0].mxu0
  %v1922 = vadd.f32 %v268, %v1921
  %v1923 = vpop.f32.mrb[0].mxu0
  %1924 = vmatprep.mubr.bf16.mxu0 0
  %1925 = vmatmul.mubr.bf16.gmra.mrb[0].mxu0 %v834
  %v1926 = vpop.f32.mrb[0].mxu0
  %v1927 = vadd.f32 %v268, %v1926
  %v1928 = vpop.f32.mrb[0].mxu0
  %v1929 = vpop.f32.mrb[0].mxu0
  %v1930 = vadd.f32 %v268, %v1929
  %v1931 = vpop.f32.mrb[0].mxu0
  %1932 = vdwg.mxu0
  %v1933 = vmax.f32 %v1031, 0.0
  %v1934 = vmax.f32 %v1034, 0.0
  %v1935 = vmax.f32 %v1039, 0.0
  %v1936 = vmax.f32 %v1042, 0.0
  %v1937 = vmax.f32 %v1047, 0.0
  %v1938 = vmax.f32 %v1050, 0.0
  %v1939 = vmax.f32 %v1055, 0.0
  %v1940 = vmax.f32 %v1058, 0.0
  %v1941 = vmax.f32 %v1063, 0.0
  %v1942 = vmax.f32 %v1066, 0.0
  %v1943 = vmax.f32 %v1071, 0.0
  %v1944 = vmax.f32 %v1074, 0.0
  %v1945 = vmax.f32 %v1079, 0.0
  %v1946 = vmax.f32 %v1082, 0.0
  %v1947 = vmax.f32 %v1087, 0.0
  %v1948 = vmax.f32 %v1090, 0.0
  %v1949 = vmax.f32 %v1095, 0.0
  %v1950 = vmax.f32 %v1098, 0.0
  %v1951 = vmax.f32 %v1103, 0.0
  %v1952 = vmax.f32 %v1106, 0.0
  %v1953 = vmax.f32 %v1111, 0.0
  %v1954 = vmax.f32 %v1114, 0.0
  %v1955 = vmax.f32 %v1119, 0.0
  %v1956 = vmax.f32 %v1122, 0.0
  %v1957 = vmax.f32 %v1127, 0.0
  %v1958 = vmax.f32 %v1130, 0.0
  %v1959 = vmax.f32 %v1135, 0.0
  %v1960 = vmax.f32 %v1138, 0.0
  %v1961 = vmax.f32 %v1143, 0.0
  %v1962 = vmax.f32 %v1146, 0.0
  %v1963 = vmax.f32 %v1151, 0.0
  %v1964 = vmax.f32 %v1154, 0.0
  %v1965 = vmax.f32 %v1159, 0.0
  %v1966 = vmax.f32 %v1162, 0.0
  %v1967 = vmax.f32 %v1167, 0.0
  %v1968 = vmax.f32 %v1170, 0.0
  %v1969 = vmax.f32 %v1175, 0.0
  %v1970 = vmax.f32 %v1178, 0.0
  %v1971 = vmax.f32 %v1183, 0.0
  %v1972 = vmax.f32 %v1186, 0.0
  %v1973 = vmax.f32 %v1191, 0.0
  %v1974 = vmax.f32 %v1194, 0.0
  %v1975 = vmax.f32 %v1199, 0.0
  %v1976 = vmax.f32 %v1202, 0.0
  %v1977 = vmax.f32 %v1207, 0.0
  %v1978 = vmax.f32 %v1210, 0.0
  %v1979 = vmax.f32 %v1215, 0.0
  %v1980 = vmax.f32 %v1218, 0.0
  %v1981 = vmax.f32 %v1223, 0.0
  %v1982 = vmax.f32 %v1226, 0.0
  %v1983 = vmax.f32 %v1231, 0.0
  %v1984 = vmax.f32 %v1234, 0.0
  %v1985 = vmax.f32 %v1239, 0.0
  %v1986 = vmax.f32 %v1242, 0.0
  %v1987 = vmax.f32 %v1247, 0.0
  %v1988 = vmax.f32 %v1250, 0.0
  %v1989 = vmax.f32 %v1255, 0.0
  %v1990 = vmax.f32 %v1258, 0.0
  %v1991 = vmax.f32 %v1263, 0.0
  %v1992 = vmax.f32 %v1266, 0.0
  %v1993 = vmax.f32 %v1271, 0.0
  %v1994 = vmax.f32 %v1274, 0.0
  %v1995 = vmax.f32 %v1279, 0.0
  %v1996 = vmax.f32 %v1282, 0.0
  %v1997 = vmax.f32 %v1287, 0.0
  %v1998 = vmax.f32 %v1290, 0.0
  %v1999 = vmax.f32 %v1295, 0.0
  %v2000 = vmax.f32 %v1298, 0.0
  %v2001 = vmax.f32 %v1303, 0.0
  %v2002 = vmax.f32 %v1306, 0.0
  %v2003 = vmax.f32 %v1311, 0.0
  %v2004 = vmax.f32 %v1314, 0.0
  %v2005 = vmax.f32 %v1319, 0.0
  %v2006 = vmax.f32 %v1322, 0.0
  %v2007 = vmax.f32 %v1327, 0.0
  %v2008 = vmax.f32 %v1330, 0.0
  %v2009 = vmax.f32 %v1335, 0.0
  %v2010 = vmax.f32 %v1338, 0.0
  %v2011 = vmax.f32 %v1343, 0.0
  %v2012 = vmax.f32 %v1346, 0.0
  %v2013 = vmax.f32 %v1351, 0.0
  %v2014 = vmax.f32 %v1354, 0.0
  %v2015 = vmax.f32 %v1359, 0.0
  %v2016 = vmax.f32 %v1362, 0.0
  %v2017 = vmax.f32 %v1367, 0.0
  %v2018 = vmax.f32 %v1370, 0.0
  %v2019 = vmax.f32 %v1375, 0.0
  %v2020 = vmax.f32 %v1378, 0.0
  %v2021 = vmax.f32 %v1383, 0.0
  %v2022 = vmax.f32 %v1386, 0.0
  %v2023 = vmax.f32 %v1391, 0.0
  %v2024 = vmax.f32 %v1394, 0.0
  %v2025 = vmax.f32 %v1399, 0.0
  %v2026 = vmax.f32 %v1402, 0.0
  %v2027 = vmax.f32 %v1407, 0.0
  %v2028 = vmax.f32 %v1410, 0.0
  %v2029 = vmax.f32 %v1415, 0.0
  %v2030 = vmax.f32 %v1418, 0.0
  %v2031 = vmax.f32 %v1423, 0.0
  %v2032 = vmax.f32 %v1426, 0.0
  %v2033 = vmax.f32 %v1431, 0.0
  %v2034 = vmax.f32 %v1434, 0.0
  %v2035 = vmax.f32 %v1439, 0.0
  %v2036 = vmax.f32 %v1442, 0.0
  %v2037 = vmax.f32 %v1447, 0.0
  %v2038 = vmax.f32 %v1450, 0.0
  %v2039 = vmax.f32 %v1455, 0.0
  %v2040 = vmax.f32 %v1458, 0.0
  %v2041 = vmax.f32 %v1463, 0.0
  %v2042 = vmax.f32 %v1466, 0.0
  %v2043 = vmax.f32 %v1471, 0.0
  %v2044 = vmax.f32 %v1474, 0.0
  %v2045 = vmax.f32 %v1479, 0.0
  %v2046 = vmax.f32 %v1482, 0.0
  %v2047 = vmax.f32 %v1487, 0.0
  %v2048 = vmax.f32 %v1490, 0.0
  %v2049 = vmax.f32 %v1495, 0.0
  %v2050 = vmax.f32 %v1498, 0.0
  %v2051 = vmax.f32 %v1503, 0.0
  %v2052 = vmax.f32 %v1506, 0.0
  %v2053 = vmax.f32 %v1511, 0.0
  %v2054 = vmax.f32 %v1514, 0.0
  %v2055 = vmax.f32 %v1519, 0.0
  %v2056 = vmax.f32 %v1522, 0.0
  %v2057 = vmax.f32 %v1527, 0.0
  %v2058 = vmax.f32 %v1530, 0.0
  %v2059 = vmax.f32 %v1535, 0.0
  %v2060 = vmax.f32 %v1538, 0.0
  %v2061 = vmax.f32 %v1543, 0.0
  %v2062 = vmax.f32 %v1546, 0.0
  %v2063 = vmax.f32 %v1551, 0.0
  %v2064 = vmax.f32 %v1554, 0.0
  %v2065 = vmax.f32 %v1559, 0.0
  %v2066 = vmax.f32 %v1562, 0.0
  %v2067 = vmax.f32 %v1567, 0.0
  %v2068 = vmax.f32 %v1570, 0.0
  %v2069 = vmax.f32 %v1575, 0.0
  %v2070 = vmax.f32 %v1578, 0.0
  %v2071 = vmax.f32 %v1583, 0.0
  %v2072 = vmax.f32 %v1586, 0.0
  %v2073 = vmax.f32 %v1591, 0.0
  %v2074 = vmax.f32 %v1594, 0.0
  %v2075 = vmax.f32 %v1599, 0.0
  %v2076 = vmax.f32 %v1602, 0.0
  %v2077 = vmax.f32 %v1607, 0.0
  %v2078 = vmax.f32 %v1610, 0.0
  %v2079 = vmax.f32 %v1615, 0.0
  %v2080 = vmax.f32 %v1618, 0.0
  %v2081 = vmax.f32 %v1623, 0.0
  %v2082 = vmax.f32 %v1626, 0.0
  %v2083 = vmax.f32 %v1631, 0.0
  %v2084 = vmax.f32 %v1634, 0.0
  %v2085 = vmax.f32 %v1639, 0.0
  %v2086 = vmax.f32 %v1642, 0.0
  %v2087 = vmax.f32 %v1647, 0.0
  %v2088 = vmax.f32 %v1650, 0.0
  %v2089 = vmax.f32 %v1655, 0.0
  %v2090 = vmax.f32 %v1658, 0.0
  %v2091 = vmax.f32 %v1663, 0.0
  %v2092 = vmax.f32 %v1666, 0.0
  %v2093 = vmax.f32 %v1671, 0.0
  %v2094 = vmax.f32 %v1674, 0.0
  %v2095 = vmax.f32 %v1679, 0.0
  %v2096 = vmax.f32 %v1682, 0.0
  %v2097 = vmax.f32 %v1687, 0.0
  %v2098 = vmax.f32 %v1690, 0.0
  %v2099 = vmax.f32 %v1695, 0.0
  %v2100 = vmax.f32 %v1698, 0.0
  %v2101 = vmax.f32 %v1703, 0.0
  %v2102 = vmax.f32 %v1706, 0.0
  %v2103 = vmax.f32 %v1711, 0.0
  %v2104 = vmax.f32 %v1714, 0.0
  %v2105 = vmax.f32 %v1719, 0.0
  %v2106 = vmax.f32 %v1722, 0.0
  %v2107 = vmax.f32 %v1727, 0.0
  %v2108 = vmax.f32 %v1730, 0.0
  %v2109 = vmax.f32 %v1735, 0.0
  %v2110 = vmax.f32 %v1738, 0.0
  %v2111 = vmax.f32 %v1743, 0.0
  %v2112 = vmax.f32 %v1746, 0.0
  %v2113 = vmax.f32 %v1751, 0.0
  %v2114 = vmax.f32 %v1754, 0.0
  %v2115 = vmax.f32 %v1759, 0.0
  %v2116 = vmax.f32 %v1762, 0.0
  %v2117 = vmax.f32 %v1767, 0.0
  %v2118 = vmax.f32 %v1770, 0.0
  %v2119 = vmax.f32 %v1775, 0.0
  %v2120 = vmax.f32 %v1778, 0.0
  %v2121 = vmax.f32 %v1783, 0.0
  %v2122 = vmax.f32 %v1786, 0.0
  %v2123 = vmax.f32 %v1791, 0.0
  %v2124 = vmax.f32 %v1794, 0.0
  %v2125 = vmax.f32 %v1799, 0.0
  %v2126 = vmax.f32 %v1802, 0.0
  %v2127 = vmax.f32 %v1807, 0.0
  %v2128 = vmax.f32 %v1810, 0.0
  %v2129 = vmax.f32 %v1815, 0.0
  %v2130 = vmax.f32 %v1818, 0.0
  %v2131 = vmax.f32 %v1823, 0.0
  %v2132 = vmax.f32 %v1826, 0.0
  %v2133 = vmax.f32 %v1831, 0.0
  %v2134 = vmax.f32 %v1834, 0.0
  %v2135 = vmax.f32 %v1839, 0.0
  %v2136 = vmax.f32 %v1842, 0.0
  %v2137 = vmax.f32 %v1847, 0.0
  %v2138 = vmax.f32 %v1850, 0.0
  %v2139 = vmax.f32 %v1855, 0.0
  %v2140 = vmax.f32 %v1858, 0.0
  %v2141 = vmax.f32 %v1863, 0.0
  %v2142 = vmax.f32 %v1866, 0.0
  %v2143 = vmax.f32 %v1871, 0.0
  %v2144 = vmax.f32 %v1874, 0.0
  %v2145 = vmax.f32 %v1879, 0.0
  %v2146 = vmax.f32 %v1882, 0.0
  %v2147 = vmax.f32 %v1887, 0.0
  %v2148 = vmax.f32 %v1890, 0.0
  %v2149 = vmax.f32 %v1895, 0.0
  %v2150 = vmax.f32 %v1898, 0.0
  %v2151 = vmax.f32 %v1903, 0.0
  %v2152 = vmax.f32 %v1906, 0.0
  %v2153 = vmax.f32 %v1911, 0.0
  %v2154 = vmax.f32 %v1914, 0.0
  %v2155 = vmax.f32 %v1919, 0.0
  %v2156 = vmax.f32 %v1922, 0.0
  %v2157 = vmax.f32 %v1927, 0.0
  %v2158 = vmax.f32 %v1930, 0.0
  %v2159 = vlaneseq
  %v2160 = vshrl.u32 %v2159, 7
  %v2161 = vadd.s32 %v2160, 8
  %v2162 = vadd.s32 %v2160, 16
  %v2163 = vadd.s32 %v2160, 24
  %v2164 = vadd.s32 %v2160, 32
  %v2165 = vadd.s32 %v2160, 40
  %v2166 = vadd.s32 %v2160, 48
  %v2167 = vadd.s32 %v2160, 56
  %v2168 = vadd.s32 %v2160, 64
  %v2169 = vadd.s32 %v2160, 72
  %v2170 = vadd.s32 %v2160, 80
  %v2171 = vadd.s32 %v2160, 88
  %v2172 = vadd.s32 %v2160, 96
  %v2173 = vadd.s32 %v2160, 104
  %v2174 = vadd.s32 %v2160, 112
  %v2175 = vadd.s32 %v2160, 120
  %v2176 = vadd.s32 %v2160, 128
  %v2177 = vadd.s32 %v2160, 136
  %v2178 = vadd.s32 %v2160, 144
  %v2179 = vadd.s32 %v2160, 152
  %v2180 = vadd.s32 %v2160, 160
  %v2181 = vadd.s32 %v2160, 168
  %v2182 = vadd.s32 %v2160, 176
  %v2183 = vadd.s32 %v2160, 184
  %v2184 = vadd.s32 %v2160, 192
  %v2185 = vadd.s32 %v2160, 200
  %v2186 = vadd.s32 %v2160, 208
  %v2187 = vadd.s32 %v2160, 216
  %v2188 = vadd.s32 %v2160, 224
  %v2189 = vadd.s32 %v2160, 232
  %v2190 = vadd.s32 %v2160, 240
  %v2191 = vadd.s32 %v2160, 248
  %v2192 = vadd.s32 %v2160, 256
  %v2193 = vadd.s32 %v2160, 264
  %v2194 = vadd.s32 %v2160, 272
  %v2195 = vadd.s32 %v2160, 280
  %v2196 = vadd.s32 %v2160, 288
  %v2197 = vadd.s32 %v2160, 296
  %v2198 = vadd.s32 %v2160, 304
  %v2199 = vadd.s32 %v2160, 312
  %v2200 = vadd.s32 %v2160, 320
  %v2201 = vadd.s32 %v2160, 328
  %v2202 = vadd.s32 %v2160, 336
  %v2203 = vadd.s32 %v2160, 344
  %v2204 = vadd.s32 %v2160, 352
  %v2205 = vadd.s32 %v2160, 360
  %v2206 = vadd.s32 %v2160, 368
  %v2207 = vadd.s32 %v2160, 376
  %v2208 = vadd.s32 %v2160, 384
  %v2209 = vadd.s32 %v2160, 392
  %v2210 = vadd.s32 %v2160, 400
  %v2211 = vadd.s32 %v2160, 408
  %v2212 = vadd.s32 %v2160, 416
  %v2213 = vadd.s32 %v2160, 424
  %v2214 = vadd.s32 %v2160, 432
  %v2215 = vadd.s32 %v2160, 440
  %v2216 = vadd.s32 %v2160, 448
  %v2217 = vadd.s32 %v2160, 456
  %v2218 = vadd.s32 %v2160, 464
  %v2219 = vadd.s32 %v2160, 472
  %v2220 = vadd.s32 %v2160, 480
  %v2221 = vadd.s32 %v2160, 488
  %v2222 = vadd.s32 %v2160, 496
  %v2223 = vadd.s32 %v2160, 504
  %v2224 = vadd.s32 %v2160, 512
  %v2225 = vadd.s32 %v2160, 520
  %v2226 = vadd.s32 %v2160, 528
  %v2227 = vadd.s32 %v2160, 536
  %v2228 = vadd.s32 %v2160, 544
  %v2229 = vadd.s32 %v2160, 552
  %v2230 = vadd.s32 %v2160, 560
  %v2231 = vadd.s32 %v2160, 568
  %v2232 = vadd.s32 %v2160, 576
  %v2233 = vadd.s32 %v2160, 584
  %v2234 = vadd.s32 %v2160, 592
  %v2235 = vadd.s32 %v2160, 600
  %v2236 = vadd.s32 %v2160, 608
  %v2237 = vadd.s32 %v2160, 616
  %v2238 = vadd.s32 %v2160, 624
  %v2239 = vadd.s32 %v2160, 632
  %v2240 = vadd.s32 %v2160, 640
  %v2241 = vadd.s32 %v2160, 648
  %v2242 = vadd.s32 %v2160, 656
  %v2243 = vadd.s32 %v2160, 664
  %v2244 = vadd.s32 %v2160, 672
  %v2245 = vadd.s32 %v2160, 680
  %v2246 = vadd.s32 %v2160, 688
  %v2247 = vadd.s32 %v2160, 696
  %v2248 = vadd.s32 %v2160, 704
  %v2249 = vadd.s32 %v2160, 712
  %v2250 = vadd.s32 %v2160, 720
  %v2251 = vadd.s32 %v2160, 728
  %v2252 = vadd.s32 %v2160, 736
  %v2253 = vadd.s32 %v2160, 744
  %v2254 = vadd.s32 %v2160, 752
  %v2255 = vadd.s32 %v2160, 760
  %v2256 = vadd.s32 %v2160, 768
  %v2257 = vadd.s32 %v2160, 776
  %v2258 = vadd.s32 %v2160, 784
  %v2259 = vadd.s32 %v2160, 792
  %v2260 = vadd.s32 %v2160, 800
  %v2261 = vadd.s32 %v2160, 808
  %v2262 = vadd.s32 %v2160, 816
  %v2263 = vadd.s32 %v2160, 824
  %v2264 = vadd.s32 %v2160, 832
  %v2265 = vadd.s32 %v2160, 840
  %v2266 = vadd.s32 %v2160, 848
  %v2267 = vadd.s32 %v2160, 856
  %v2268 = vadd.s32 %v2160, 864
  %v2269 = vadd.s32 %v2160, 872
  %v2270 = vadd.s32 %v2160, 880
  %v2271 = vadd.s32 %v2160, 888
  %v2272 = vadd.s32 %v2160, 896
  %v2273 = vadd.s32 %v2160, 904
  %v2274 = vadd.s32 %v2160, 912
  %v2275 = vadd.s32 %v2160, 920
  %v2276 = vadd.s32 %v2160, 928
  %v2277 = vadd.s32 %v2160, 936
  %v2278 = vadd.s32 %v2160, 944
  %v2279 = vadd.s32 %v2160, 952
  %v2280 = vadd.s32 %v2160, 960
  %v2281 = vadd.s32 %v2160, 968
  %v2282 = vadd.s32 %v2160, 976
  %v2283 = vadd.s32 %v2160, 984
  %v2284 = vadd.s32 %v2160, 992
  %v2285 = vadd.s32 %v2160, 1000
  %v2286 = vadd.s32 %v2160, 1008
  %v2287 = vadd.s32 %v2160, 1016
  %v2288 = vadd.s32 %v2160, 1024
  %v2289 = vadd.s32 %v2160, 1032
  %v2290 = vadd.s32 %v2160, 1040
  %v2291 = vadd.s32 %v2160, 1048
  %v2292 = vadd.s32 %v2160, 1056
  %v2293 = vadd.s32 %v2160, 1064
  %v2294 = vadd.s32 %v2160, 1072
  %v2295 = vadd.s32 %v2160, 1080
  %v2296 = vadd.s32 %v2160, 1088
  %v2297 = vadd.s32 %v2160, 1096
  %v2298 = vadd.s32 %v2160, 1104
  %v2299 = vadd.s32 %v2160, 1112
  %v2300 = vadd.s32 %v2160, 1120
  %v2301 = vadd.s32 %v2160, 1128
  %v2302 = vadd.s32 %v2160, 1136
  %v2303 = vadd.s32 %v2160, 1144
  %v2304 = vadd.s32 %v2160, 1152
  %v2305 = vadd.s32 %v2160, 1160
  %v2306 = vadd.s32 %v2160, 1168
  %v2307 = vadd.s32 %v2160, 1176
  %v2308 = vadd.s32 %v2160, 1184
  %v2309 = vadd.s32 %v2160, 1192
  %v2310 = vadd.s32 %v2160, 1200
  %v2311 = vadd.s32 %v2160, 1208
  %v2312 = vadd.s32 %v2160, 1216
  %v2313 = vadd.s32 %v2160, 1224
  %v2314 = vadd.s32 %v2160, 1232
  %v2315 = vadd.s32 %v2160, 1240
  %v2316 = vadd.s32 %v2160, 1248
  %v2317 = vadd.s32 %v2160, 1256
  %v2318 = vadd.s32 %v2160, 1264
  %v2319 = vadd.s32 %v2160, 1272
  %v2320 = vadd.s32 %v2160, 1280
  %v2321 = vadd.s32 %v2160, 1288
  %v2322 = vadd.s32 %v2160, 1296
  %v2323 = vadd.s32 %v2160, 1304
  %v2324 = vadd.s32 %v2160, 1312
  %v2325 = vadd.s32 %v2160, 1320
  %v2326 = vadd.s32 %v2160, 1328
  %v2327 = vadd.s32 %v2160, 1336
  %v2328 = vadd.s32 %v2160, 1344
  %v2329 = vadd.s32 %v2160, 1352
  %v2330 = vadd.s32 %v2160, 1360
  %v2331 = vadd.s32 %v2160, 1368
  %v2332 = vadd.s32 %v2160, 1376
  %v2333 = vadd.s32 %v2160, 1384
  %v2334 = vadd.s32 %v2160, 1392
  %v2335 = vadd.s32 %v2160, 1400
  %v2336 = vadd.s32 %v2160, 1408
  %v2337 = vadd.s32 %v2160, 1416
  %v2338 = vadd.s32 %v2160, 1424
  %v2339 = vadd.s32 %v2160, 1432
  %v2340 = vadd.s32 %v2160, 1440
  %v2341 = vadd.s32 %v2160, 1448
  %v2342 = vadd.s32 %v2160, 1456
  %v2343 = vadd.s32 %v2160, 1464
  %v2344 = vadd.s32 %v2160, 1472
  %v2345 = vadd.s32 %v2160, 1480
  %v2346 = vadd.s32 %v2160, 1488
  %v2347 = vadd.s32 %v2160, 1496
  %v2348 = vadd.s32 %v2160, 1504
  %v2349 = vadd.s32 %v2160, 1512
  %v2350 = vadd.s32 %v2160, 1520
  %v2351 = vadd.s32 %v2160, 1528
  %v2352 = vadd.s32 %v2160, 1536
  %v2353 = vadd.s32 %v2160, 1544
  %v2354 = vadd.s32 %v2160, 1552
  %v2355 = vadd.s32 %v2160, 1560
  %v2356 = vadd.s32 %v2160, 1568
  %v2357 = vadd.s32 %v2160, 1576
  %v2358 = vadd.s32 %v2160, 1584
  %v2359 = vadd.s32 %v2160, 1592
  %v2360 = vadd.s32 %v2160, 1600
  %v2361 = vadd.s32 %v2160, 1608
  %v2362 = vadd.s32 %v2160, 1616
  %v2363 = vadd.s32 %v2160, 1624
  %v2364 = vadd.s32 %v2160, 1632
  %v2365 = vadd.s32 %v2160, 1640
  %v2366 = vadd.s32 %v2160, 1648
  %v2367 = vadd.s32 %v2160, 1656
  %v2368 = vadd.s32 %v2160, 1664
  %v2369 = vadd.s32 %v2160, 1672
  %v2370 = vadd.s32 %v2160, 1680
  %v2371 = vadd.s32 %v2160, 1688
  %v2372 = vadd.s32 %v2160, 1696
  %v2373 = vadd.s32 %v2160, 1704
  %v2374 = vadd.s32 %v2160, 1712
  %v2375 = vadd.s32 %v2160, 1720
  %v2376 = vadd.s32 %v2160, 1728
  %v2377 = vadd.s32 %v2160, 1736
  %v2378 = vadd.s32 %v2160, 1744
  %v2379 = vadd.s32 %v2160, 1752
  %v2380 = vadd.s32 %v2160, 1760
  %v2381 = vadd.s32 %v2160, 1768
  %v2382 = vadd.s32 %v2160, 1776
  %v2383 = vadd.s32 %v2160, 1784
  %v2384 = vadd.s32 %v2160, 1792
  %v2385 = vadd.s32 %v2160, 1800
  %vm2386 = vcmp.lt.s32.totalorder %v2160, 1800
  %vm2387 = vcmp.lt.s32.totalorder %v2161, 1800
  %vm2388 = vcmp.lt.s32.totalorder %v2162, 1800
  %vm2389 = vcmp.lt.s32.totalorder %v2163, 1800
  %vm2390 = vcmp.lt.s32.totalorder %v2164, 1800
  %vm2391 = vcmp.lt.s32.totalorder %v2165, 1800
  %vm2392 = vcmp.lt.s32.totalorder %v2166, 1800
  %vm2393 = vcmp.lt.s32.totalorder %v2167, 1800
  %vm2394 = vcmp.lt.s32.totalorder %v2168, 1800
  %vm2395 = vcmp.lt.s32.totalorder %v2169, 1800
  %vm2396 = vcmp.lt.s32.totalorder %v2170, 1800
  %vm2397 = vcmp.lt.s32.totalorder %v2171, 1800
  %vm2398 = vcmp.lt.s32.totalorder %v2172, 1800
  %vm2399 = vcmp.lt.s32.totalorder %v2173, 1800
  %vm2400 = vcmp.lt.s32.totalorder %v2174, 1800
  %vm2401 = vcmp.lt.s32.totalorder %v2175, 1800
  %vm2402 = vcmp.lt.s32.totalorder %v2176, 1800
  %vm2403 = vcmp.lt.s32.totalorder %v2177, 1800
  %vm2404 = vcmp.lt.s32.totalorder %v2178, 1800
  %vm2405 = vcmp.lt.s32.totalorder %v2179, 1800
  %vm2406 = vcmp.lt.s32.totalorder %v2180, 1800
  %vm2407 = vcmp.lt.s32.totalorder %v2181, 1800
  %vm2408 = vcmp.lt.s32.totalorder %v2182, 1800
  %vm2409 = vcmp.lt.s32.totalorder %v2183, 1800
  %vm2410 = vcmp.lt.s32.totalorder %v2184, 1800
  %vm2411 = vcmp.lt.s32.totalorder %v2185, 1800
  %vm2412 = vcmp.lt.s32.totalorder %v2186, 1800
  %vm2413 = vcmp.lt.s32.totalorder %v2187, 1800
  %vm2414 = vcmp.lt.s32.totalorder %v2188, 1800
  %vm2415 = vcmp.lt.s32.totalorder %v2189, 1800
  %vm2416 = vcmp.lt.s32.totalorder %v2190, 1800
  %vm2417 = vcmp.lt.s32.totalorder %v2191, 1800
  %vm2418 = vcmp.lt.s32.totalorder %v2192, 1800
  %vm2419 = vcmp.lt.s32.totalorder %v2193, 1800
  %vm2420 = vcmp.lt.s32.totalorder %v2194, 1800
  %vm2421 = vcmp.lt.s32.totalorder %v2195, 1800
  %vm2422 = vcmp.lt.s32.totalorder %v2196, 1800
  %vm2423 = vcmp.lt.s32.totalorder %v2197, 1800
  %vm2424 = vcmp.lt.s32.totalorder %v2198, 1800
  %vm2425 = vcmp.lt.s32.totalorder %v2199, 1800
  %vm2426 = vcmp.lt.s32.totalorder %v2200, 1800
  %vm2427 = vcmp.lt.s32.totalorder %v2201, 1800
  %vm2428 = vcmp.lt.s32.totalorder %v2202, 1800
  %vm2429 = vcmp.lt.s32.totalorder %v2203, 1800
  %vm2430 = vcmp.lt.s32.totalorder %v2204, 1800
  %vm2431 = vcmp.lt.s32.totalorder %v2205, 1800
  %vm2432 = vcmp.lt.s32.totalorder %v2206, 1800
  %vm2433 = vcmp.lt.s32.totalorder %v2207, 1800
  %vm2434 = vcmp.lt.s32.totalorder %v2208, 1800
  %vm2435 = vcmp.lt.s32.totalorder %v2209, 1800
  %vm2436 = vcmp.lt.s32.totalorder %v2210, 1800
  %vm2437 = vcmp.lt.s32.totalorder %v2211, 1800
  %vm2438 = vcmp.lt.s32.totalorder %v2212, 1800
  %vm2439 = vcmp.lt.s32.totalorder %v2213, 1800
  %vm2440 = vcmp.lt.s32.totalorder %v2214, 1800
  %vm2441 = vcmp.lt.s32.totalorder %v2215, 1800
  %vm2442 = vcmp.lt.s32.totalorder %v2216, 1800
  %vm2443 = vcmp.lt.s32.totalorder %v2217, 1800
  %vm2444 = vcmp.lt.s32.totalorder %v2218, 1800
  %vm2445 = vcmp.lt.s32.totalorder %v2219, 1800
  %vm2446 = vcmp.lt.s32.totalorder %v2220, 1800
  %vm2447 = vcmp.lt.s32.totalorder %v2221, 1800
  %vm2448 = vcmp.lt.s32.totalorder %v2222, 1800
  %vm2449 = vcmp.lt.s32.totalorder %v2223, 1800
  %vm2450 = vcmp.lt.s32.totalorder %v2224, 1800
  %vm2451 = vcmp.lt.s32.totalorder %v2225, 1800
  %vm2452 = vcmp.lt.s32.totalorder %v2226, 1800
  %vm2453 = vcmp.lt.s32.totalorder %v2227, 1800
  %vm2454 = vcmp.lt.s32.totalorder %v2228, 1800
  %vm2455 = vcmp.lt.s32.totalorder %v2229, 1800
  %vm2456 = vcmp.lt.s32.totalorder %v2230, 1800
  %vm2457 = vcmp.lt.s32.totalorder %v2231, 1800
  %vm2458 = vcmp.lt.s32.totalorder %v2232, 1800
  %vm2459 = vcmp.lt.s32.totalorder %v2233, 1800
  %vm2460 = vcmp.lt.s32.totalorder %v2234, 1800
  %vm2461 = vcmp.lt.s32.totalorder %v2235, 1800
  %vm2462 = vcmp.lt.s32.totalorder %v2236, 1800
  %vm2463 = vcmp.lt.s32.totalorder %v2237, 1800
  %vm2464 = vcmp.lt.s32.totalorder %v2238, 1800
  %vm2465 = vcmp.lt.s32.totalorder %v2239, 1800
  %vm2466 = vcmp.lt.s32.totalorder %v2240, 1800
  %vm2467 = vcmp.lt.s32.totalorder %v2241, 1800
  %vm2468 = vcmp.lt.s32.totalorder %v2242, 1800
  %vm2469 = vcmp.lt.s32.totalorder %v2243, 1800
  %vm2470 = vcmp.lt.s32.totalorder %v2244, 1800
  %vm2471 = vcmp.lt.s32.totalorder %v2245, 1800
  %vm2472 = vcmp.lt.s32.totalorder %v2246, 1800
  %vm2473 = vcmp.lt.s32.totalorder %v2247, 1800
  %vm2474 = vcmp.lt.s32.totalorder %v2248, 1800
  %vm2475 = vcmp.lt.s32.totalorder %v2249, 1800
  %vm2476 = vcmp.lt.s32.totalorder %v2250, 1800
  %vm2477 = vcmp.lt.s32.totalorder %v2251, 1800
  %vm2478 = vcmp.lt.s32.totalorder %v2252, 1800
  %vm2479 = vcmp.lt.s32.totalorder %v2253, 1800
  %vm2480 = vcmp.lt.s32.totalorder %v2254, 1800
  %vm2481 = vcmp.lt.s32.totalorder %v2255, 1800
  %vm2482 = vcmp.lt.s32.totalorder %v2256, 1800
  %vm2483 = vcmp.lt.s32.totalorder %v2257, 1800
  %vm2484 = vcmp.lt.s32.totalorder %v2258, 1800
  %vm2485 = vcmp.lt.s32.totalorder %v2259, 1800
  %vm2486 = vcmp.lt.s32.totalorder %v2260, 1800
  %vm2487 = vcmp.lt.s32.totalorder %v2261, 1800
  %vm2488 = vcmp.lt.s32.totalorder %v2262, 1800
  %vm2489 = vcmp.lt.s32.totalorder %v2263, 1800
  %vm2490 = vcmp.lt.s32.totalorder %v2264, 1800
  %vm2491 = vcmp.lt.s32.totalorder %v2265, 1800
  %vm2492 = vcmp.lt.s32.totalorder %v2266, 1800
  %vm2493 = vcmp.lt.s32.totalorder %v2267, 1800
  %vm2494 = vcmp.lt.s32.totalorder %v2268, 1800
  %vm2495 = vcmp.lt.s32.totalorder %v2269, 1800
  %vm2496 = vcmp.lt.s32.totalorder %v2270, 1800
  %vm2497 = vcmp.lt.s32.totalorder %v2271, 1800
  %vm2498 = vcmp.lt.s32.totalorder %v2272, 1800
  %vm2499 = vcmp.lt.s32.totalorder %v2273, 1800
  %vm2500 = vcmp.lt.s32.totalorder %v2274, 1800
  %vm2501 = vcmp.lt.s32.totalorder %v2275, 1800
  %vm2502 = vcmp.lt.s32.totalorder %v2276, 1800
  %vm2503 = vcmp.lt.s32.totalorder %v2277, 1800
  %vm2504 = vcmp.lt.s32.totalorder %v2278, 1800
  %vm2505 = vcmp.lt.s32.totalorder %v2279, 1800
  %vm2506 = vcmp.lt.s32.totalorder %v2280, 1800
  %vm2507 = vcmp.lt.s32.totalorder %v2281, 1800
  %vm2508 = vcmp.lt.s32.totalorder %v2282, 1800
  %vm2509 = vcmp.lt.s32.totalorder %v2283, 1800
  %vm2510 = vcmp.lt.s32.totalorder %v2284, 1800
  %vm2511 = vcmp.lt.s32.totalorder %v2285, 1800
  %vm2512 = vcmp.lt.s32.totalorder %v2286, 1800
  %vm2513 = vcmp.lt.s32.totalorder %v2287, 1800
  %vm2514 = vcmp.lt.s32.totalorder %v2288, 1800
  %vm2515 = vcmp.lt.s32.totalorder %v2289, 1800
  %vm2516 = vcmp.lt.s32.totalorder %v2290, 1800
  %vm2517 = vcmp.lt.s32.totalorder %v2291, 1800
  %vm2518 = vcmp.lt.s32.totalorder %v2292, 1800
  %vm2519 = vcmp.lt.s32.totalorder %v2293, 1800
  %vm2520 = vcmp.lt.s32.totalorder %v2294, 1800
  %vm2521 = vcmp.lt.s32.totalorder %v2295, 1800
  %vm2522 = vcmp.lt.s32.totalorder %v2296, 1800
  %vm2523 = vcmp.lt.s32.totalorder %v2297, 1800
  %vm2524 = vcmp.lt.s32.totalorder %v2298, 1800
  %vm2525 = vcmp.lt.s32.totalorder %v2299, 1800
  %vm2526 = vcmp.lt.s32.totalorder %v2300, 1800
  %vm2527 = vcmp.lt.s32.totalorder %v2301, 1800
  %vm2528 = vcmp.lt.s32.totalorder %v2302, 1800
  %vm2529 = vcmp.lt.s32.totalorder %v2303, 1800
  %vm2530 = vcmp.lt.s32.totalorder %v2304, 1800
  %vm2531 = vcmp.lt.s32.totalorder %v2305, 1800
  %vm2532 = vcmp.lt.s32.totalorder %v2306, 1800
  %vm2533 = vcmp.lt.s32.totalorder %v2307, 1800
  %vm2534 = vcmp.lt.s32.totalorder %v2308, 1800
  %vm2535 = vcmp.lt.s32.totalorder %v2309, 1800
  %vm2536 = vcmp.lt.s32.totalorder %v2310, 1800
  %vm2537 = vcmp.lt.s32.totalorder %v2311, 1800
  %vm2538 = vcmp.lt.s32.totalorder %v2312, 1800
  %vm2539 = vcmp.lt.s32.totalorder %v2313, 1800
  %vm2540 = vcmp.lt.s32.totalorder %v2314, 1800
  %vm2541 = vcmp.lt.s32.totalorder %v2315, 1800
  %vm2542 = vcmp.lt.s32.totalorder %v2316, 1800
  %vm2543 = vcmp.lt.s32.totalorder %v2317, 1800
  %vm2544 = vcmp.lt.s32.totalorder %v2318, 1800
  %vm2545 = vcmp.lt.s32.totalorder %v2319, 1800
  %vm2546 = vcmp.lt.s32.totalorder %v2320, 1800
  %vm2547 = vcmp.lt.s32.totalorder %v2321, 1800
  %vm2548 = vcmp.lt.s32.totalorder %v2322, 1800
  %vm2549 = vcmp.lt.s32.totalorder %v2323, 1800
  %vm2550 = vcmp.lt.s32.totalorder %v2324, 1800
  %vm2551 = vcmp.lt.s32.totalorder %v2325, 1800
  %vm2552 = vcmp.lt.s32.totalorder %v2326, 1800
  %vm2553 = vcmp.lt.s32.totalorder %v2327, 1800
  %vm2554 = vcmp.lt.s32.totalorder %v2328, 1800
  %vm2555 = vcmp.lt.s32.totalorder %v2329, 1800
  %vm2556 = vcmp.lt.s32.totalorder %v2330, 1800
  %vm2557 = vcmp.lt.s32.totalorder %v2331, 1800
  %vm2558 = vcmp.lt.s32.totalorder %v2332, 1800
  %vm2559 = vcmp.lt.s32.totalorder %v2333, 1800
  %vm2560 = vcmp.lt.s32.totalorder %v2334, 1800
  %vm2561 = vcmp.lt.s32.totalorder %v2335, 1800
  %vm2562 = vcmp.lt.s32.totalorder %v2336, 1800
  %vm2563 = vcmp.lt.s32.totalorder %v2337, 1800
  %vm2564 = vcmp.lt.s32.totalorder %v2338, 1800
  %vm2565 = vcmp.lt.s32.totalorder %v2339, 1800
  %vm2566 = vcmp.lt.s32.totalorder %v2340, 1800
  %vm2567 = vcmp.lt.s32.totalorder %v2341, 1800
  %vm2568 = vcmp.lt.s32.totalorder %v2342, 1800
  %vm2569 = vcmp.lt.s32.totalorder %v2343, 1800
  %vm2570 = vcmp.lt.s32.totalorder %v2344, 1800
  %vm2571 = vcmp.lt.s32.totalorder %v2345, 1800
  %vm2572 = vcmp.lt.s32.totalorder %v2346, 1800
  %vm2573 = vcmp.lt.s32.totalorder %v2347, 1800
  %vm2574 = vcmp.lt.s32.totalorder %v2348, 1800
  %vm2575 = vcmp.lt.s32.totalorder %v2349, 1800
  %vm2576 = vcmp.lt.s32.totalorder %v2350, 1800
  %vm2577 = vcmp.lt.s32.totalorder %v2351, 1800
  %vm2578 = vcmp.lt.s32.totalorder %v2352, 1800
  %vm2579 = vcmp.lt.s32.totalorder %v2353, 1800
  %vm2580 = vcmp.lt.s32.totalorder %v2354, 1800
  %vm2581 = vcmp.lt.s32.totalorder %v2355, 1800
  %vm2582 = vcmp.lt.s32.totalorder %v2356, 1800
  %vm2583 = vcmp.lt.s32.totalorder %v2357, 1800
  %vm2584 = vcmp.lt.s32.totalorder %v2358, 1800
  %vm2585 = vcmp.lt.s32.totalorder %v2359, 1800
  %vm2586 = vcmp.lt.s32.totalorder %v2360, 1800
  %vm2587 = vcmp.lt.s32.totalorder %v2361, 1800
  %vm2588 = vcmp.lt.s32.totalorder %v2362, 1800
  %vm2589 = vcmp.lt.s32.totalorder %v2363, 1800
  %vm2590 = vcmp.lt.s32.totalorder %v2364, 1800
  %vm2591 = vcmp.lt.s32.totalorder %v2365, 1800
  %vm2592 = vcmp.lt.s32.totalorder %v2366, 1800
  %vm2593 = vcmp.lt.s32.totalorder %v2367, 1800
  %vm2594 = vcmp.lt.s32.totalorder %v2368, 1800
  %vm2595 = vcmp.lt.s32.totalorder %v2369, 1800
  %vm2596 = vcmp.lt.s32.totalorder %v2370, 1800
  %vm2597 = vcmp.lt.s32.totalorder %v2371, 1800
  %vm2598 = vcmp.lt.s32.totalorder %v2372, 1800
  %vm2599 = vcmp.lt.s32.totalorder %v2373, 1800
  %vm2600 = vcmp.lt.s32.totalorder %v2374, 1800
  %vm2601 = vcmp.lt.s32.totalorder %v2375, 1800
  %vm2602 = vcmp.lt.s32.totalorder %v2376, 1800
  %vm2603 = vcmp.lt.s32.totalorder %v2377, 1800
  %vm2604 = vcmp.lt.s32.totalorder %v2378, 1800
  %vm2605 = vcmp.lt.s32.totalorder %v2379, 1800
  %vm2606 = vcmp.lt.s32.totalorder %v2380, 1800
  %vm2607 = vcmp.lt.s32.totalorder %v2381, 1800
  %vm2608 = vcmp.lt.s32.totalorder %v2382, 1800
  %vm2609 = vcmp.lt.s32.totalorder %v2383, 1800
  %vm2610 = vcmp.lt.s32.totalorder %v2384, 1800
  %vm2611 = vcmp.lt.s32.totalorder %v2385, 1800
  %v2612 = vsel %vm2386, %v1933, 0.0
  %v2613 = vsel %vm2387, %v1934, 0.0
  %v2614 = vsel %vm2388, %v1935, 0.0
  %v2615 = vsel %vm2389, %v1936, 0.0
  %v2616 = vsel %vm2390, %v1937, 0.0
  %v2617 = vsel %vm2391, %v1938, 0.0
  %v2618 = vsel %vm2392, %v1939, 0.0
  %v2619 = vsel %vm2393, %v1940, 0.0
  %v2620 = vsel %vm2394, %v1941, 0.0
  %v2621 = vsel %vm2395, %v1942, 0.0
  %v2622 = vsel %vm2396, %v1943, 0.0
  %v2623 = vsel %vm2397, %v1944, 0.0
  %v2624 = vsel %vm2398, %v1945, 0.0
  %v2625 = vsel %vm2399, %v1946, 0.0
  %v2626 = vsel %vm2400, %v1947, 0.0
  %v2627 = vsel %vm2401, %v1948, 0.0
  %v2628 = vsel %vm2402, %v1949, 0.0
  %v2629 = vsel %vm2403, %v1950, 0.0
  %v2630 = vsel %vm2404, %v1951, 0.0
  %v2631 = vsel %vm2405, %v1952, 0.0
  %v2632 = vsel %vm2406, %v1953, 0.0
  %v2633 = vsel %vm2407, %v1954, 0.0
  %v2634 = vsel %vm2408, %v1955, 0.0
  %v2635 = vsel %vm2409, %v1956, 0.0
  %v2636 = vsel %vm2410, %v1957, 0.0
  %v2637 = vsel %vm2411, %v1958, 0.0
  %v2638 = vsel %vm2412, %v1959, 0.0
  %v2639 = vsel %vm2413, %v1960, 0.0
  %v2640 = vsel %vm2414, %v1961, 0.0
  %v2641 = vsel %vm2415, %v1962, 0.0
  %v2642 = vsel %vm2416, %v1963, 0.0
  %v2643 = vsel %vm2417, %v1964, 0.0
  %v2644 = vsel %vm2418, %v1965, 0.0
  %v2645 = vsel %vm2419, %v1966, 0.0
  %v2646 = vsel %vm2420, %v1967, 0.0
  %v2647 = vsel %vm2421, %v1968, 0.0
  %v2648 = vsel %vm2422, %v1969, 0.0
  %v2649 = vsel %vm2423, %v1970, 0.0
  %v2650 = vsel %vm2424, %v1971, 0.0
  %v2651 = vsel %vm2425, %v1972, 0.0
  %v2652 = vsel %vm2426, %v1973, 0.0
  %v2653 = vsel %vm2427, %v1974, 0.0
  %v2654 = vsel %vm2428, %v1975, 0.0
  %v2655 = vsel %vm2429, %v1976, 0.0
  %v2656 = vsel %vm2430, %v1977, 0.0
  %v2657 = vsel %vm2431, %v1978, 0.0
  %v2658 = vsel %vm2432, %v1979, 0.0
  %v2659 = vsel %vm2433, %v1980, 0.0
  %v2660 = vsel %vm2434, %v1981, 0.0
  %v2661 = vsel %vm2435, %v1982, 0.0
  %v2662 = vsel %vm2436, %v1983, 0.0
  %v2663 = vsel %vm2437, %v1984, 0.0
  %v2664 = vsel %vm2438, %v1985, 0.0
  %v2665 = vsel %vm2439, %v1986, 0.0
  %v2666 = vsel %vm2440, %v1987, 0.0
  %v2667 = vsel %vm2441, %v1988, 0.0
  %v2668 = vsel %vm2442, %v1989, 0.0
  %v2669 = vsel %vm2443, %v1990, 0.0
  %v2670 = vsel %vm2444, %v1991, 0.0
  %v2671 = vsel %vm2445, %v1992, 0.0
  %v2672 = vsel %vm2446, %v1993, 0.0
  %v2673 = vsel %vm2447, %v1994, 0.0
  %v2674 = vsel %vm2448, %v1995, 0.0
  %v2675 = vsel %vm2449, %v1996, 0.0
  %v2676 = vsel %vm2450, %v1997, 0.0
  %v2677 = vsel %vm2451, %v1998, 0.0
  %v2678 = vsel %vm2452, %v1999, 0.0
  %v2679 = vsel %vm2453, %v2000, 0.0
  %v2680 = vsel %vm2454, %v2001, 0.0
  %v2681 = vsel %vm2455, %v2002, 0.0
  %v2682 = vsel %vm2456, %v2003, 0.0
  %v2683 = vsel %vm2457, %v2004, 0.0
  %v2684 = vsel %vm2458, %v2005, 0.0
  %v2685 = vsel %vm2459, %v2006, 0.0
  %v2686 = vsel %vm2460, %v2007, 0.0
  %v2687 = vsel %vm2461, %v2008, 0.0
  %v2688 = vsel %vm2462, %v2009, 0.0
  %v2689 = vsel %vm2463, %v2010, 0.0
  %v2690 = vsel %vm2464, %v2011, 0.0
  %v2691 = vsel %vm2465, %v2012, 0.0
  %v2692 = vsel %vm2466, %v2013, 0.0
  %v2693 = vsel %vm2467, %v2014, 0.0
  %v2694 = vsel %vm2468, %v2015, 0.0
  %v2695 = vsel %vm2469, %v2016, 0.0
  %v2696 = vsel %vm2470, %v2017, 0.0
  %v2697 = vsel %vm2471, %v2018, 0.0
  %v2698 = vsel %vm2472, %v2019, 0.0
  %v2699 = vsel %vm2473, %v2020, 0.0
  %v2700 = vsel %vm2474, %v2021, 0.0
  %v2701 = vsel %vm2475, %v2022, 0.0
  %v2702 = vsel %vm2476, %v2023, 0.0
  %v2703 = vsel %vm2477, %v2024, 0.0
  %v2704 = vsel %vm2478, %v2025, 0.0
  %v2705 = vsel %vm2479, %v2026, 0.0
  %v2706 = vsel %vm2480, %v2027, 0.0
  %v2707 = vsel %vm2481, %v2028, 0.0
  %v2708 = vsel %vm2482, %v2029, 0.0
  %v2709 = vsel %vm2483, %v2030, 0.0
  %v2710 = vsel %vm2484, %v2031, 0.0
  %v2711 = vsel %vm2485, %v2032, 0.0
  %v2712 = vsel %vm2486, %v2033, 0.0
  %v2713 = vsel %vm2487, %v2034, 0.0
  %v2714 = vsel %vm2488, %v2035, 0.0
  %v2715 = vsel %vm2489, %v2036, 0.0
  %v2716 = vsel %vm2490, %v2037, 0.0
  %v2717 = vsel %vm2491, %v2038, 0.0
  %v2718 = vsel %vm2492, %v2039, 0.0
  %v2719 = vsel %vm2493, %v2040, 0.0
  %v2720 = vsel %vm2494, %v2041, 0.0
  %v2721 = vsel %vm2495, %v2042, 0.0
  %v2722 = vsel %vm2496, %v2043, 0.0
  %v2723 = vsel %vm2497, %v2044, 0.0
  %v2724 = vsel %vm2498, %v2045, 0.0
  %v2725 = vsel %vm2499, %v2046, 0.0
  %v2726 = vsel %vm2500, %v2047, 0.0
  %v2727 = vsel %vm2501, %v2048, 0.0
  %v2728 = vsel %vm2502, %v2049, 0.0
  %v2729 = vsel %vm2503, %v2050, 0.0
  %v2730 = vsel %vm2504, %v2051, 0.0
  %v2731 = vsel %vm2505, %v2052, 0.0
  %v2732 = vsel %vm2506, %v2053, 0.0
  %v2733 = vsel %vm2507, %v2054, 0.0
  %v2734 = vsel %vm2508, %v2055, 0.0
  %v2735 = vsel %vm2509, %v2056, 0.0
  %v2736 = vsel %vm2510, %v2057, 0.0
  %v2737 = vsel %vm2511, %v2058, 0.0
  %v2738 = vsel %vm2512, %v2059, 0.0
  %v2739 = vsel %vm2513, %v2060, 0.0
  %v2740 = vsel %vm2514, %v2061, 0.0
  %v2741 = vsel %vm2515, %v2062, 0.0
  %v2742 = vsel %vm2516, %v2063, 0.0
  %v2743 = vsel %vm2517, %v2064, 0.0
  %v2744 = vsel %vm2518, %v2065, 0.0
  %v2745 = vsel %vm2519, %v2066, 0.0
  %v2746 = vsel %vm2520, %v2067, 0.0
  %v2747 = vsel %vm2521, %v2068, 0.0
  %v2748 = vsel %vm2522, %v2069, 0.0
  %v2749 = vsel %vm2523, %v2070, 0.0
  %v2750 = vsel %vm2524, %v2071, 0.0
  %v2751 = vsel %vm2525, %v2072, 0.0
  %v2752 = vsel %vm2526, %v2073, 0.0
  %v2753 = vsel %vm2527, %v2074, 0.0
  %v2754 = vsel %vm2528, %v2075, 0.0
  %v2755 = vsel %vm2529, %v2076, 0.0
  %v2756 = vsel %vm2530, %v2077, 0.0
  %v2757 = vsel %vm2531, %v2078, 0.0
  %v2758 = vsel %vm2532, %v2079, 0.0
  %v2759 = vsel %vm2533, %v2080, 0.0
  %v2760 = vsel %vm2534, %v2081, 0.0
  %v2761 = vsel %vm2535, %v2082, 0.0
  %v2762 = vsel %vm2536, %v2083, 0.0
  %v2763 = vsel %vm2537, %v2084, 0.0
  %v2764 = vsel %vm2538, %v2085, 0.0
  %v2765 = vsel %vm2539, %v2086, 0.0
  %v2766 = vsel %vm2540, %v2087, 0.0
  %v2767 = vsel %vm2541, %v2088, 0.0
  %v2768 = vsel %vm2542, %v2089, 0.0
  %v2769 = vsel %vm2543, %v2090, 0.0
  %v2770 = vsel %vm2544, %v2091, 0.0
  %v2771 = vsel %vm2545, %v2092, 0.0
  %v2772 = vsel %vm2546, %v2093, 0.0
  %v2773 = vsel %vm2547, %v2094, 0.0
  %v2774 = vsel %vm2548, %v2095, 0.0
  %v2775 = vsel %vm2549, %v2096, 0.0
  %v2776 = vsel %vm2550, %v2097, 0.0
  %v2777 = vsel %vm2551, %v2098, 0.0
  %v2778 = vsel %vm2552, %v2099, 0.0
  %v2779 = vsel %vm2553, %v2100, 0.0
  %v2780 = vsel %vm2554, %v2101, 0.0
  %v2781 = vsel %vm2555, %v2102, 0.0
  %v2782 = vsel %vm2556, %v2103, 0.0
  %v2783 = vsel %vm2557, %v2104, 0.0
  %v2784 = vsel %vm2558, %v2105, 0.0
  %v2785 = vsel %vm2559, %v2106, 0.0
  %v2786 = vsel %vm2560, %v2107, 0.0
  %v2787 = vsel %vm2561, %v2108, 0.0
  %v2788 = vsel %vm2562, %v2109, 0.0
  %v2789 = vsel %vm2563, %v2110, 0.0
  %v2790 = vsel %vm2564, %v2111, 0.0
  %v2791 = vsel %vm2565, %v2112, 0.0
  %v2792 = vsel %vm2566, %v2113, 0.0
  %v2793 = vsel %vm2567, %v2114, 0.0
  %v2794 = vsel %vm2568, %v2115, 0.0
  %v2795 = vsel %vm2569, %v2116, 0.0
  %v2796 = vsel %vm2570, %v2117, 0.0
  %v2797 = vsel %vm2571, %v2118, 0.0
  %v2798 = vsel %vm2572, %v2119, 0.0
  %v2799 = vsel %vm2573, %v2120, 0.0
  %v2800 = vsel %vm2574, %v2121, 0.0
  %v2801 = vsel %vm2575, %v2122, 0.0
  %v2802 = vsel %vm2576, %v2123, 0.0
  %v2803 = vsel %vm2577, %v2124, 0.0
  %v2804 = vsel %vm2578, %v2125, 0.0
  %v2805 = vsel %vm2579, %v2126, 0.0
  %v2806 = vsel %vm2580, %v2127, 0.0
  %v2807 = vsel %vm2581, %v2128, 0.0
  %v2808 = vsel %vm2582, %v2129, 0.0
  %v2809 = vsel %vm2583, %v2130, 0.0
  %v2810 = vsel %vm2584, %v2131, 0.0
  %v2811 = vsel %vm2585, %v2132, 0.0
  %v2812 = vsel %vm2586, %v2133, 0.0
  %v2813 = vsel %vm2587, %v2134, 0.0
  %v2814 = vsel %vm2588, %v2135, 0.0
  %v2815 = vsel %vm2589, %v2136, 0.0
  %v2816 = vsel %vm2590, %v2137, 0.0
  %v2817 = vsel %vm2591, %v2138, 0.0
  %v2818 = vsel %vm2592, %v2139, 0.0
  %v2819 = vsel %vm2593, %v2140, 0.0
  %v2820 = vsel %vm2594, %v2141, 0.0
  %v2821 = vsel %vm2595, %v2142, 0.0
  %v2822 = vsel %vm2596, %v2143, 0.0
  %v2823 = vsel %vm2597, %v2144, 0.0
  %v2824 = vsel %vm2598, %v2145, 0.0
  %v2825 = vsel %vm2599, %v2146, 0.0
  %v2826 = vsel %vm2600, %v2147, 0.0
  %v2827 = vsel %vm2601, %v2148, 0.0
  %v2828 = vsel %vm2602, %v2149, 0.0
  %v2829 = vsel %vm2603, %v2150, 0.0
  %v2830 = vsel %vm2604, %v2151, 0.0
  %v2831 = vsel %vm2605, %v2152, 0.0
  %v2832 = vsel %vm2606, %v2153, 0.0
  %v2833 = vsel %vm2607, %v2154, 0.0
  %v2834 = vsel %vm2608, %v2155, 0.0
  %v2835 = vsel %vm2609, %v2156, 0.0
  %v2836 = vsel %vm2610, %v2157, 0.0
  %v2837 = vsel %vm2611, %v2158, 0.0
  %v2838 = vadd.f32 %v2612, %v2613
  %v2839 = vadd.f32 %v2838, %v2614
  %v2840 = vadd.f32 %v2839, %v2615
  %v2841 = vadd.f32 %v2840, %v2616
  %v2842 = vadd.f32 %v2841, %v2617
  %v2843 = vadd.f32 %v2842, %v2618
  %v2844 = vadd.f32 %v2843, %v2619
  %v2845 = vadd.f32 %v2844, %v2620
  %v2846 = vadd.f32 %v2845, %v2621
  %v2847 = vadd.f32 %v2846, %v2622
  %v2848 = vadd.f32 %v2847, %v2623
  %v2849 = vadd.f32 %v2848, %v2624
  %v2850 = vadd.f32 %v2849, %v2625
  %v2851 = vadd.f32 %v2850, %v2626
  %v2852 = vadd.f32 %v2851, %v2627
  %v2853 = vadd.f32 %v2852, %v2628
  %v2854 = vadd.f32 %v2853, %v2629
  %v2855 = vadd.f32 %v2854, %v2630
  %v2856 = vadd.f32 %v2855, %v2631
  %v2857 = vadd.f32 %v2856, %v2632
  %v2858 = vadd.f32 %v2857, %v2633
  %v2859 = vadd.f32 %v2858, %v2634
  %v2860 = vadd.f32 %v2859, %v2635
  %v2861 = vadd.f32 %v2860, %v2636
  %v2862 = vadd.f32 %v2861, %v2637
  %v2863 = vadd.f32 %v2862, %v2638
  %v2864 = vadd.f32 %v2863, %v2639
  %v2865 = vadd.f32 %v2864, %v2640
  %v2866 = vadd.f32 %v2865, %v2641
  %v2867 = vadd.f32 %v2866, %v2642
  %v2868 = vadd.f32 %v2867, %v2643
  %v2869 = vadd.f32 %v2868, %v2644
  %v2870 = vadd.f32 %v2869, %v2645
  %v2871 = vadd.f32 %v2870, %v2646
  %v2872 = vadd.f32 %v2871, %v2647
  %v2873 = vadd.f32 %v2872, %v2648
  %v2874 = vadd.f32 %v2873, %v2649
  %v2875 = vadd.f32 %v2874, %v2650
  %v2876 = vadd.f32 %v2875, %v2651
  %v2877 = vadd.f32 %v2876, %v2652
  %v2878 = vadd.f32 %v2877, %v2653
  %v2879 = vadd.f32 %v2878, %v2654
  %v2880 = vadd.f32 %v2879, %v2655
  %v2881 = vadd.f32 %v2880, %v2656
  %v2882 = vadd.f32 %v2881, %v2657
  %v2883 = vadd.f32 %v2882, %v2658
  %v2884 = vadd.f32 %v2883, %v2659
  %v2885 = vadd.f32 %v2884, %v2660
  %v2886 = vadd.f32 %v2885, %v2661
  %v2887 = vadd.f32 %v2886, %v2662
  %v2888 = vadd.f32 %v2887, %v2663
  %v2889 = vadd.f32 %v2888, %v2664
  %v2890 = vadd.f32 %v2889, %v2665
  %v2891 = vadd.f32 %v2890, %v2666
  %v2892 = vadd.f32 %v2891, %v2667
  %v2893 = vadd.f32 %v2892, %v2668
  %v2894 = vadd.f32 %v2893, %v2669
  %v2895 = vadd.f32 %v2894, %v2670
  %v2896 = vadd.f32 %v2895, %v2671
  %v2897 = vadd.f32 %v2896, %v2672
  %v2898 = vadd.f32 %v2897, %v2673
  %v2899 = vadd.f32 %v2898, %v2674
  %v2900 = vadd.f32 %v2899, %v2675
  %v2901 = vadd.f32 %v2900, %v2676
  %v2902 = vadd.f32 %v2901, %v2677
  %v2903 = vadd.f32 %v2902, %v2678
  %v2904 = vadd.f32 %v2903, %v2679
  %v2905 = vadd.f32 %v2904, %v2680
  %v2906 = vadd.f32 %v2905, %v2681
  %v2907 = vadd.f32 %v2906, %v2682
  %v2908 = vadd.f32 %v2907, %v2683
  %v2909 = vadd.f32 %v2908, %v2684
  %v2910 = vadd.f32 %v2909, %v2685
  %v2911 = vadd.f32 %v2910, %v2686
  %v2912 = vadd.f32 %v2911, %v2687
  %v2913 = vadd.f32 %v2912, %v2688
  %v2914 = vadd.f32 %v2913, %v2689
  %v2915 = vadd.f32 %v2914, %v2690
  %v2916 = vadd.f32 %v2915, %v2691
  %v2917 = vadd.f32 %v2916, %v2692
  %v2918 = vadd.f32 %v2917, %v2693
  %v2919 = vadd.f32 %v2918, %v2694
  %v2920 = vadd.f32 %v2919, %v2695
  %v2921 = vadd.f32 %v2920, %v2696
  %v2922 = vadd.f32 %v2921, %v2697
  %v2923 = vadd.f32 %v2922, %v2698
  %v2924 = vadd.f32 %v2923, %v2699
  %v2925 = vadd.f32 %v2924, %v2700
  %v2926 = vadd.f32 %v2925, %v2701
  %v2927 = vadd.f32 %v2926, %v2702
  %v2928 = vadd.f32 %v2927, %v2703
  %v2929 = vadd.f32 %v2928, %v2704
  %v2930 = vadd.f32 %v2929, %v2705
  %v2931 = vadd.f32 %v2930, %v2706
  %v2932 = vadd.f32 %v2931, %v2707
  %v2933 = vadd.f32 %v2932, %v2708
  %v2934 = vadd.f32 %v2933, %v2709
  %v2935 = vadd.f32 %v2934, %v2710
  %v2936 = vadd.f32 %v2935, %v2711
  %v2937 = vadd.f32 %v2936, %v2712
  %v2938 = vadd.f32 %v2937, %v2713
  %v2939 = vadd.f32 %v2938, %v2714
  %v2940 = vadd.f32 %v2939, %v2715
  %v2941 = vadd.f32 %v2940, %v2716
  %v2942 = vadd.f32 %v2941, %v2717
  %v2943 = vadd.f32 %v2942, %v2718
  %v2944 = vadd.f32 %v2943, %v2719
  %v2945 = vadd.f32 %v2944, %v2720
  %v2946 = vadd.f32 %v2945, %v2721
  %v2947 = vadd.f32 %v2946, %v2722
  %v2948 = vadd.f32 %v2947, %v2723
  %v2949 = vadd.f32 %v2948, %v2724
  %v2950 = vadd.f32 %v2949, %v2725
  %v2951 = vadd.f32 %v2950, %v2726
  %v2952 = vadd.f32 %v2951, %v2727
  %v2953 = vadd.f32 %v2952, %v2728
  %v2954 = vadd.f32 %v2953, %v2729
  %v2955 = vadd.f32 %v2954, %v2730
  %v2956 = vadd.f32 %v2955, %v2731
  %v2957 = vadd.f32 %v2956, %v2732
  %v2958 = vadd.f32 %v2957, %v2733
  %v2959 = vadd.f32 %v2958, %v2734
  %v2960 = vadd.f32 %v2959, %v2735
  %v2961 = vadd.f32 %v2960, %v2736
  %v2962 = vadd.f32 %v2961, %v2737
  %v2963 = vadd.f32 %v2962, %v2738
  %v2964 = vadd.f32 %v2963, %v2739
  %v2965 = vadd.f32 %v2964, %v2740
  %v2966 = vadd.f32 %v2965, %v2741
  %v2967 = vadd.f32 %v2966, %v2742
  %v2968 = vadd.f32 %v2967, %v2743
  %v2969 = vadd.f32 %v2968, %v2744
  %v2970 = vadd.f32 %v2969, %v2745
  %v2971 = vadd.f32 %v2970, %v2746
  %v2972 = vadd.f32 %v2971, %v2747
  %v2973 = vadd.f32 %v2972, %v2748
  %v2974 = vadd.f32 %v2973, %v2749
  %v2975 = vadd.f32 %v2974, %v2750
  %v2976 = vadd.f32 %v2975, %v2751
  %v2977 = vadd.f32 %v2976, %v2752
  %v2978 = vadd.f32 %v2977, %v2753
  %v2979 = vadd.f32 %v2978, %v2754
  %v2980 = vadd.f32 %v2979, %v2755
  %v2981 = vadd.f32 %v2980, %v2756
  %v2982 = vadd.f32 %v2981, %v2757
  %v2983 = vadd.f32 %v2982, %v2758
  %v2984 = vadd.f32 %v2983, %v2759
  %v2985 = vadd.f32 %v2984, %v2760
  %v2986 = vadd.f32 %v2985, %v2761
  %v2987 = vadd.f32 %v2986, %v2762
  %v2988 = vadd.f32 %v2987, %v2763
  %v2989 = vadd.f32 %v2988, %v2764
  %v2990 = vadd.f32 %v2989, %v2765
  %v2991 = vadd.f32 %v2990, %v2766
  %v2992 = vadd.f32 %v2991, %v2767
  %v2993 = vadd.f32 %v2992, %v2768
  %v2994 = vadd.f32 %v2993, %v2769
  %v2995 = vadd.f32 %v2994, %v2770
  %v2996 = vadd.f32 %v2995, %v2771
  %v2997 = vadd.f32 %v2996, %v2772
  %v2998 = vadd.f32 %v2997, %v2773
  %v2999 = vadd.f32 %v2998, %v2774
  %v3000 = vadd.f32 %v2999, %v2775
  %v3001 = vadd.f32 %v3000, %v2776
  %v3002 = vadd.f32 %v3001, %v2777
  %v3003 = vadd.f32 %v3002, %v2778
  %v3004 = vadd.f32 %v3003, %v2779
  %v3005 = vadd.f32 %v3004, %v2780
  %v3006 = vadd.f32 %v3005, %v2781
  %v3007 = vadd.f32 %v3006, %v2782
  %v3008 = vadd.f32 %v3007, %v2783
  %v3009 = vadd.f32 %v3008, %v2784
  %v3010 = vadd.f32 %v3009, %v2785
  %v3011 = vadd.f32 %v3010, %v2786
  %v3012 = vadd.f32 %v3011, %v2787
  %v3013 = vadd.f32 %v3012, %v2788
  %v3014 = vadd.f32 %v3013, %v2789
  %v3015 = vadd.f32 %v3014, %v2790
  %v3016 = vadd.f32 %v3015, %v2791
  %v3017 = vadd.f32 %v3016, %v2792
  %v3018 = vadd.f32 %v3017, %v2793
  %v3019 = vadd.f32 %v3018, %v2794
  %v3020 = vadd.f32 %v3019, %v2795
  %v3021 = vadd.f32 %v3020, %v2796
  %v3022 = vadd.f32 %v3021, %v2797
  %v3023 = vadd.f32 %v3022, %v2798
  %v3024 = vadd.f32 %v3023, %v2799
  %v3025 = vadd.f32 %v3024, %v2800
  %v3026 = vadd.f32 %v3025, %v2801
  %v3027 = vadd.f32 %v3026, %v2802
  %v3028 = vadd.f32 %v3027, %v2803
  %v3029 = vadd.f32 %v3028, %v2804
  %v3030 = vadd.f32 %v3029, %v2805
  %v3031 = vadd.f32 %v3030, %v2806
  %v3032 = vadd.f32 %v3031, %v2807
  %v3033 = vadd.f32 %v3032, %v2808
  %v3034 = vadd.f32 %v3033, %v2809
  %v3035 = vadd.f32 %v3034, %v2810
  %v3036 = vadd.f32 %v3035, %v2811
  %v3037 = vadd.f32 %v3036, %v2812
  %v3038 = vadd.f32 %v3037, %v2813
  %v3039 = vadd.f32 %v3038, %v2814
  %v3040 = vadd.f32 %v3039, %v2815
  %v3041 = vadd.f32 %v3040, %v2816
  %v3042 = vadd.f32 %v3041, %v2817
  %v3043 = vadd.f32 %v3042, %v2818
  %v3044 = vadd.f32 %v3043, %v2819
  %v3045 = vadd.f32 %v3044, %v2820
  %v3046 = vadd.f32 %v3045, %v2821
  %v3047 = vadd.f32 %v3046, %v2822
  %v3048 = vadd.f32 %v3047, %v2823
  %v3049 = vadd.f32 %v3048, %v2824
  %v3050 = vadd.f32 %v3049, %v2825
  %v3051 = vadd.f32 %v3050, %v2826
  %v3052 = vadd.f32 %v3051, %v2827
  %v3053 = vadd.f32 %v3052, %v2828
  %v3054 = vadd.f32 %v3053, %v2829
  %v3055 = vadd.f32 %v3054, %v2830
  %v3056 = vadd.f32 %v3055, %v2831
  %v3057 = vadd.f32 %v3056, %v2832
  %v3058 = vadd.f32 %v3057, %v2833
  %v3059 = vadd.f32 %v3058, %v2834
  %v3060 = vadd.f32 %v3059, %v2835
  %v3061 = vadd.f32 %v3060, %v2836
  %v3062 = vadd.f32 %v3061, %v2837
  %v3063 = vrot.slane %v3062, 4
  %v3064 = vadd.f32 %v3062, %v3063
  %v3065 = vrot.slane %v3064, 2
  %v3066 = vadd.f32 %v3064, %v3065
  %v3067 = vrot.slane %v3066, 1
  %v3068 = vadd.f32 %v3066, %v3067
  %v3069 = vmul.f32 %v3068, 0.00055555557
  %v3070 = vmul.f32 %v2612, %v2612
  %v3071 = vmul.f32 %v2613, %v2613
  %v3072 = vmul.f32 %v2614, %v2614
  %v3073 = vmul.f32 %v2615, %v2615
  %v3074 = vmul.f32 %v2616, %v2616
  %v3075 = vmul.f32 %v2617, %v2617
  %v3076 = vmul.f32 %v2618, %v2618
  %v3077 = vmul.f32 %v2619, %v2619
  %v3078 = vmul.f32 %v2620, %v2620
  %v3079 = vmul.f32 %v2621, %v2621
  %v3080 = vmul.f32 %v2622, %v2622
  %v3081 = vmul.f32 %v2623, %v2623
  %v3082 = vmul.f32 %v2624, %v2624
  %v3083 = vmul.f32 %v2625, %v2625
  %v3084 = vmul.f32 %v2626, %v2626
  %v3085 = vmul.f32 %v2627, %v2627
  %v3086 = vmul.f32 %v2628, %v2628
  %v3087 = vmul.f32 %v2629, %v2629
  %v3088 = vmul.f32 %v2630, %v2630
  %v3089 = vmul.f32 %v2631, %v2631
  %v3090 = vmul.f32 %v2632, %v2632
  %v3091 = vmul.f32 %v2633, %v2633
  %v3092 = vmul.f32 %v2634, %v2634
  %v3093 = vmul.f32 %v2635, %v2635
  %v3094 = vmul.f32 %v2636, %v2636
  %v3095 = vmul.f32 %v2637, %v2637
  %v3096 = vmul.f32 %v2638, %v2638
  %v3097 = vmul.f32 %v2639, %v2639
  %v3098 = vmul.f32 %v2640, %v2640
  %v3099 = vmul.f32 %v2641, %v2641
  %v3100 = vmul.f32 %v2642, %v2642
  %v3101 = vmul.f32 %v2643, %v2643
  %v3102 = vmul.f32 %v2644, %v2644
  %v3103 = vmul.f32 %v2645, %v2645
  %v3104 = vmul.f32 %v2646, %v2646
  %v3105 = vmul.f32 %v2647, %v2647
  %v3106 = vmul.f32 %v2648, %v2648
  %v3107 = vmul.f32 %v2649, %v2649
  %v3108 = vmul.f32 %v2650, %v2650
  %v3109 = vmul.f32 %v2651, %v2651
  %v3110 = vmul.f32 %v2652, %v2652
  %v3111 = vmul.f32 %v2653, %v2653
  %v3112 = vmul.f32 %v2654, %v2654
  %v3113 = vmul.f32 %v2655, %v2655
  %v3114 = vmul.f32 %v2656, %v2656
  %v3115 = vmul.f32 %v2657, %v2657
  %v3116 = vmul.f32 %v2658, %v2658
  %v3117 = vmul.f32 %v2659, %v2659
  %v3118 = vmul.f32 %v2660, %v2660
  %v3119 = vmul.f32 %v2661, %v2661
  %v3120 = vmul.f32 %v2662, %v2662
  %v3121 = vmul.f32 %v2663, %v2663
  %v3122 = vmul.f32 %v2664, %v2664
  %v3123 = vmul.f32 %v2665, %v2665
  %v3124 = vmul.f32 %v2666, %v2666
  %v3125 = vmul.f32 %v2667, %v2667
  %v3126 = vmul.f32 %v2668, %v2668
  %v3127 = vmul.f32 %v2669, %v2669
  %v3128 = vmul.f32 %v2670, %v2670
  %v3129 = vmul.f32 %v2671, %v2671
  %v3130 = vmul.f32 %v2672, %v2672
  %v3131 = vmul.f32 %v2673, %v2673
  %v3132 = vmul.f32 %v2674, %v2674
  %v3133 = vmul.f32 %v2675, %v2675
  %v3134 = vmul.f32 %v2676, %v2676
  %v3135 = vmul.f32 %v2677, %v2677
  %v3136 = vmul.f32 %v2678, %v2678
  %v3137 = vmul.f32 %v2679, %v2679
  %v3138 = vmul.f32 %v2680, %v2680
  %v3139 = vmul.f32 %v2681, %v2681
  %v3140 = vmul.f32 %v2682, %v2682
  %v3141 = vmul.f32 %v2683, %v2683
  %v3142 = vmul.f32 %v2684, %v2684
  %v3143 = vmul.f32 %v2685, %v2685
  %v3144 = vmul.f32 %v2686, %v2686
  %v3145 = vmul.f32 %v2687, %v2687
  %v3146 = vmul.f32 %v2688, %v2688
  %v3147 = vmul.f32 %v2689, %v2689
  %v3148 = vmul.f32 %v2690, %v2690
  %v3149 = vmul.f32 %v2691, %v2691
  %v3150 = vmul.f32 %v2692, %v2692
  %v3151 = vmul.f32 %v2693, %v2693
  %v3152 = vmul.f32 %v2694, %v2694
  %v3153 = vmul.f32 %v2695, %v2695
  %v3154 = vmul.f32 %v2696, %v2696
  %v3155 = vmul.f32 %v2697, %v2697
  %v3156 = vmul.f32 %v2698, %v2698
  %v3157 = vmul.f32 %v2699, %v2699
  %v3158 = vmul.f32 %v2700, %v2700
  %v3159 = vmul.f32 %v2701, %v2701
  %v3160 = vmul.f32 %v2702, %v2702
  %v3161 = vmul.f32 %v2703, %v2703
  %v3162 = vmul.f32 %v2704, %v2704
  %v3163 = vmul.f32 %v2705, %v2705
  %v3164 = vmul.f32 %v2706, %v2706
  %v3165 = vmul.f32 %v2707, %v2707
  %v3166 = vmul.f32 %v2708, %v2708
  %v3167 = vmul.f32 %v2709, %v2709
  %v3168 = vmul.f32 %v2710, %v2710
  %v3169 = vmul.f32 %v2711, %v2711
  %v3170 = vmul.f32 %v2712, %v2712
  %v3171 = vmul.f32 %v2713, %v2713
  %v3172 = vmul.f32 %v2714, %v2714
  %v3173 = vmul.f32 %v2715, %v2715
  %v3174 = vmul.f32 %v2716, %v2716
  %v3175 = vmul.f32 %v2717, %v2717
  %v3176 = vmul.f32 %v2718, %v2718
  %v3177 = vmul.f32 %v2719, %v2719
  %v3178 = vmul.f32 %v2720, %v2720
  %v3179 = vmul.f32 %v2721, %v2721
  %v3180 = vmul.f32 %v2722, %v2722
  %v3181 = vmul.f32 %v2723, %v2723
  %v3182 = vmul.f32 %v2724, %v2724
  %v3183 = vmul.f32 %v2725, %v2725
  %v3184 = vmul.f32 %v2726, %v2726
  %v3185 = vmul.f32 %v2727, %v2727
  %v3186 = vmul.f32 %v2728, %v2728
  %v3187 = vmul.f32 %v2729, %v2729
  %v3188 = vmul.f32 %v2730, %v2730
  %v3189 = vmul.f32 %v2731, %v2731
  %v3190 = vmul.f32 %v2732, %v2732
  %v3191 = vmul.f32 %v2733, %v2733
  %v3192 = vmul.f32 %v2734, %v2734
  %v3193 = vmul.f32 %v2735, %v2735
  %v3194 = vmul.f32 %v2736, %v2736
  %v3195 = vmul.f32 %v2737, %v2737
  %v3196 = vmul.f32 %v2738, %v2738
  %v3197 = vmul.f32 %v2739, %v2739
  %v3198 = vmul.f32 %v2740, %v2740
  %v3199 = vmul.f32 %v2741, %v2741
  %v3200 = vmul.f32 %v2742, %v2742
  %v3201 = vmul.f32 %v2743, %v2743
  %v3202 = vmul.f32 %v2744, %v2744
  %v3203 = vmul.f32 %v2745, %v2745
  %v3204 = vmul.f32 %v2746, %v2746
  %v3205 = vmul.f32 %v2747, %v2747
  %v3206 = vmul.f32 %v2748, %v2748
  %v3207 = vmul.f32 %v2749, %v2749
  %v3208 = vmul.f32 %v2750, %v2750
  %v3209 = vmul.f32 %v2751, %v2751
  %v3210 = vmul.f32 %v2752, %v2752
  %v3211 = vmul.f32 %v2753, %v2753
  %v3212 = vmul.f32 %v2754, %v2754
  %v3213 = vmul.f32 %v2755, %v2755
  %v3214 = vmul.f32 %v2756, %v2756
  %v3215 = vmul.f32 %v2757, %v2757
  %v3216 = vmul.f32 %v2758, %v2758
  %v3217 = vmul.f32 %v2759, %v2759
  %v3218 = vmul.f32 %v2760, %v2760
  %v3219 = vmul.f32 %v2761, %v2761
  %v3220 = vmul.f32 %v2762, %v2762
  %v3221 = vmul.f32 %v2763, %v2763
  %v3222 = vmul.f32 %v2764, %v2764
  %v3223 = vmul.f32 %v2765, %v2765
  %v3224 = vmul.f32 %v2766, %v2766
  %v3225 = vmul.f32 %v2767, %v2767
  %v3226 = vmul.f32 %v2768, %v2768
  %v3227 = vmul.f32 %v2769, %v2769
  %v3228 = vmul.f32 %v2770, %v2770
  %v3229 = vmul.f32 %v2771, %v2771
  %v3230 = vmul.f32 %v2772, %v2772
  %v3231 = vmul.f32 %v2773, %v2773
  %v3232 = vmul.f32 %v2774, %v2774
  %v3233 = vmul.f32 %v2775, %v2775
  %v3234 = vmul.f32 %v2776, %v2776
  %v3235 = vmul.f32 %v2777, %v2777
  %v3236 = vmul.f32 %v2778, %v2778
  %v3237 = vmul.f32 %v2779, %v2779
  %v3238 = vmul.f32 %v2780, %v2780
  %v3239 = vmul.f32 %v2781, %v2781
  %v3240 = vmul.f32 %v2782, %v2782
  %v3241 = vmul.f32 %v2783, %v2783
  %v3242 = vmul.f32 %v2784, %v2784
  %v3243 = vmul.f32 %v2785, %v2785
  %v3244 = vmul.f32 %v2786, %v2786
  %v3245 = vmul.f32 %v2787, %v2787
  %v3246 = vmul.f32 %v2788, %v2788
  %v3247 = vmul.f32 %v2789, %v2789
  %v3248 = vmul.f32 %v2790, %v2790
  %v3249 = vmul.f32 %v2791, %v2791
  %v3250 = vmul.f32 %v2792, %v2792
  %v3251 = vmul.f32 %v2793, %v2793
  %v3252 = vmul.f32 %v2794, %v2794
  %v3253 = vmul.f32 %v2795, %v2795
  %v3254 = vmul.f32 %v2796, %v2796
  %v3255 = vmul.f32 %v2797, %v2797
  %v3256 = vmul.f32 %v2798, %v2798
  %v3257 = vmul.f32 %v2799, %v2799
  %v3258 = vmul.f32 %v2800, %v2800
  %v3259 = vmul.f32 %v2801, %v2801
  %v3260 = vmul.f32 %v2802, %v2802
  %v3261 = vmul.f32 %v2803, %v2803
  %v3262 = vmul.f32 %v2804, %v2804
  %v3263 = vmul.f32 %v2805, %v2805
  %v3264 = vmul.f32 %v2806, %v2806
  %v3265 = vmul.f32 %v2807, %v2807
  %v3266 = vmul.f32 %v2808, %v2808
  %v3267 = vmul.f32 %v2809, %v2809
  %v3268 = vmul.f32 %v2810, %v2810
  %v3269 = vmul.f32 %v2811, %v2811
  %v3270 = vmul.f32 %v2812, %v2812
  %v3271 = vmul.f32 %v2813, %v2813
  %v3272 = vmul.f32 %v2814, %v2814
  %v3273 = vmul.f32 %v2815, %v2815
  %v3274 = vmul.f32 %v2816, %v2816
  %v3275 = vmul.f32 %v2817, %v2817
  %v3276 = vmul.f32 %v2818, %v2818
  %v3277 = vmul.f32 %v2819, %v2819
  %v3278 = vmul.f32 %v2820, %v2820
  %v3279 = vmul.f32 %v2821, %v2821
  %v3280 = vmul.f32 %v2822, %v2822
  %v3281 = vmul.f32 %v2823, %v2823
  %v3282 = vmul.f32 %v2824, %v2824
  %v3283 = vmul.f32 %v2825, %v2825
  %v3284 = vmul.f32 %v2826, %v2826
  %v3285 = vmul.f32 %v2827, %v2827
  %v3286 = vmul.f32 %v2828, %v2828
  %v3287 = vmul.f32 %v2829, %v2829
  %v3288 = vmul.f32 %v2830, %v2830
  %v3289 = vmul.f32 %v2831, %v2831
  %v3290 = vmul.f32 %v2832, %v2832
  %v3291 = vmul.f32 %v2833, %v2833
  %v3292 = vmul.f32 %v2834, %v2834
  %v3293 = vmul.f32 %v2835, %v2835
  %v3294 = vmul.f32 %v2836, %v2836
  %v3295 = vmul.f32 %v2837, %v2837
  %v3296 = vadd.f32 %v3070, %v3071
  %v3297 = vadd.f32 %v3296, %v3072
  %v3298 = vadd.f32 %v3297, %v3073
  %v3299 = vadd.f32 %v3298, %v3074
  %v3300 = vadd.f32 %v3299, %v3075
  %v3301 = vadd.f32 %v3300, %v3076
  %v3302 = vadd.f32 %v3301, %v3077
  %v3303 = vadd.f32 %v3302, %v3078
  %v3304 = vadd.f32 %v3303, %v3079
  %v3305 = vadd.f32 %v3304, %v3080
  %v3306 = vadd.f32 %v3305, %v3081
  %v3307 = vadd.f32 %v3306, %v3082
  %v3308 = vadd.f32 %v3307, %v3083
  %v3309 = vadd.f32 %v3308, %v3084
  %v3310 = vadd.f32 %v3309, %v3085
  %v3311 = vadd.f32 %v3310, %v3086
  %v3312 = vadd.f32 %v3311, %v3087
  %v3313 = vadd.f32 %v3312, %v3088
  %v3314 = vadd.f32 %v3313, %v3089
  %v3315 = vadd.f32 %v3314, %v3090
  %v3316 = vadd.f32 %v3315, %v3091
  %v3317 = vadd.f32 %v3316, %v3092
  %v3318 = vadd.f32 %v3317, %v3093
  %v3319 = vadd.f32 %v3318, %v3094
  %v3320 = vadd.f32 %v3319, %v3095
  %v3321 = vadd.f32 %v3320, %v3096
  %v3322 = vadd.f32 %v3321, %v3097
  %v3323 = vadd.f32 %v3322, %v3098
  %v3324 = vadd.f32 %v3323, %v3099
  %v3325 = vadd.f32 %v3324, %v3100
  %v3326 = vadd.f32 %v3325, %v3101
  %v3327 = vadd.f32 %v3326, %v3102
  %v3328 = vadd.f32 %v3327, %v3103
  %v3329 = vadd.f32 %v3328, %v3104
  %v3330 = vadd.f32 %v3329, %v3105
  %v3331 = vadd.f32 %v3330, %v3106
  %v3332 = vadd.f32 %v3331, %v3107
  %v3333 = vadd.f32 %v3332, %v3108
  %v3334 = vadd.f32 %v3333, %v3109
  %v3335 = vadd.f32 %v3334, %v3110
  %v3336 = vadd.f32 %v3335, %v3111
  %v3337 = vadd.f32 %v3336, %v3112
  %v3338 = vadd.f32 %v3337, %v3113
  %v3339 = vadd.f32 %v3338, %v3114
  %v3340 = vadd.f32 %v3339, %v3115
  %v3341 = vadd.f32 %v3340, %v3116
  %v3342 = vadd.f32 %v3341, %v3117
  %v3343 = vadd.f32 %v3342, %v3118
  %v3344 = vadd.f32 %v3343, %v3119
  %v3345 = vadd.f32 %v3344, %v3120
  %v3346 = vadd.f32 %v3345, %v3121
  %v3347 = vadd.f32 %v3346, %v3122
  %v3348 = vadd.f32 %v3347, %v3123
  %v3349 = vadd.f32 %v3348, %v3124
  %v3350 = vadd.f32 %v3349, %v3125
  %v3351 = vadd.f32 %v3350, %v3126
  %v3352 = vadd.f32 %v3351, %v3127
  %v3353 = vadd.f32 %v3352, %v3128
  %v3354 = vadd.f32 %v3353, %v3129
  %v3355 = vadd.f32 %v3354, %v3130
  %v3356 = vadd.f32 %v3355, %v3131
  %v3357 = vadd.f32 %v3356, %v3132
  %v3358 = vadd.f32 %v3357, %v3133
  %v3359 = vadd.f32 %v3358, %v3134
  %v3360 = vadd.f32 %v3359, %v3135
  %v3361 = vadd.f32 %v3360, %v3136
  %v3362 = vadd.f32 %v3361, %v3137
  %v3363 = vadd.f32 %v3362, %v3138
  %v3364 = vadd.f32 %v3363, %v3139
  %v3365 = vadd.f32 %v3364, %v3140
  %v3366 = vadd.f32 %v3365, %v3141
  %v3367 = vadd.f32 %v3366, %v3142
  %v3368 = vadd.f32 %v3367, %v3143
  %v3369 = vadd.f32 %v3368, %v3144
  %v3370 = vadd.f32 %v3369, %v3145
  %v3371 = vadd.f32 %v3370, %v3146
  %v3372 = vadd.f32 %v3371, %v3147
  %v3373 = vadd.f32 %v3372, %v3148
  %v3374 = vadd.f32 %v3373, %v3149
  %v3375 = vadd.f32 %v3374, %v3150
  %v3376 = vadd.f32 %v3375, %v3151
  %v3377 = vadd.f32 %v3376, %v3152
  %v3378 = vadd.f32 %v3377, %v3153
  %v3379 = vadd.f32 %v3378, %v3154
  %v3380 = vadd.f32 %v3379, %v3155
  %v3381 = vadd.f32 %v3380, %v3156
  %v3382 = vadd.f32 %v3381, %v3157
  %v3383 = vadd.f32 %v3382, %v3158
  %v3384 = vadd.f32 %v3383, %v3159
  %v3385 = vadd.f32 %v3384, %v3160
  %v3386 = vadd.f32 %v3385, %v3161
  %v3387 = vadd.f32 %v3386, %v3162
  %v3388 = vadd.f32 %v3387, %v3163
  %v3389 = vadd.f32 %v3388, %v3164
  %v3390 = vadd.f32 %v3389, %v3165
  %v3391 = vadd.f32 %v3390, %v3166
  %v3392 = vadd.f32 %v3391, %v3167
  %v3393 = vadd.f32 %v3392, %v3168
  %v3394 = vadd.f32 %v3393, %v3169
  %v3395 = vadd.f32 %v3394, %v3170
  %v3396 = vadd.f32 %v3395, %v3171
  %v3397 = vadd.f32 %v3396, %v3172
  %v3398 = vadd.f32 %v3397, %v3173
  %v3399 = vadd.f32 %v3398, %v3174
  %v3400 = vadd.f32 %v3399, %v3175
  %v3401 = vadd.f32 %v3400, %v3176
  %v3402 = vadd.f32 %v3401, %v3177
  %v3403 = vadd.f32 %v3402, %v3178
  %v3404 = vadd.f32 %v3403, %v3179
  %v3405 = vadd.f32 %v3404, %v3180
  %v3406 = vadd.f32 %v3405, %v3181
  %v3407 = vadd.f32 %v3406, %v3182
  %v3408 = vadd.f32 %v3407, %v3183
  %v3409 = vadd.f32 %v3408, %v3184
  %v3410 = vadd.f32 %v3409, %v3185
  %v3411 = vadd.f32 %v3410, %v3186
  %v3412 = vadd.f32 %v3411, %v3187
  %v3413 = vadd.f32 %v3412, %v3188
  %v3414 = vadd.f32 %v3413, %v3189
  %v3415 = vadd.f32 %v3414, %v3190
  %v3416 = vadd.f32 %v3415, %v3191
  %v3417 = vadd.f32 %v3416, %v3192
  %v3418 = vadd.f32 %v3417, %v3193
  %v3419 = vadd.f32 %v3418, %v3194
  %v3420 = vadd.f32 %v3419, %v3195
  %v3421 = vadd.f32 %v3420, %v3196
  %v3422 = vadd.f32 %v3421, %v3197
  %v3423 = vadd.f32 %v3422, %v3198
  %v3424 = vadd.f32 %v3423, %v3199
  %v3425 = vadd.f32 %v3424, %v3200
  %v3426 = vadd.f32 %v3425, %v3201
  %v3427 = vadd.f32 %v3426, %v3202
  %v3428 = vadd.f32 %v3427, %v3203
  %v3429 = vadd.f32 %v3428, %v3204
  %v3430 = vadd.f32 %v3429, %v3205
  %v3431 = vadd.f32 %v3430, %v3206
  %v3432 = vadd.f32 %v3431, %v3207
  %v3433 = vadd.f32 %v3432, %v3208
  %v3434 = vadd.f32 %v3433, %v3209
  %v3435 = vadd.f32 %v3434, %v3210
  %v3436 = vadd.f32 %v3435, %v3211
  %v3437 = vadd.f32 %v3436, %v3212
  %v3438 = vadd.f32 %v3437, %v3213
  %v3439 = vadd.f32 %v3438, %v3214
  %v3440 = vadd.f32 %v3439, %v3215
  %v3441 = vadd.f32 %v3440, %v3216
  %v3442 = vadd.f32 %v3441, %v3217
  %v3443 = vadd.f32 %v3442, %v3218
  %v3444 = vadd.f32 %v3443, %v3219
  %v3445 = vadd.f32 %v3444, %v3220
  %v3446 = vadd.f32 %v3445, %v3221
  %v3447 = vadd.f32 %v3446, %v3222
  %v3448 = vadd.f32 %v3447, %v3223
  %v3449 = vadd.f32 %v3448, %v3224
  %v3450 = vadd.f32 %v3449, %v3225
  %v3451 = vadd.f32 %v3450, %v3226
  %v3452 = vadd.f32 %v3451, %v3227
  %v3453 = vadd.f32 %v3452, %v3228
  %v3454 = vadd.f32 %v3453, %v3229
  %v3455 = vadd.f32 %v3454, %v3230
  %v3456 = vadd.f32 %v3455, %v3231
  %v3457 = vadd.f32 %v3456, %v3232
  %v3458 = vadd.f32 %v3457, %v3233
  %v3459 = vadd.f32 %v3458, %v3234
  %v3460 = vadd.f32 %v3459, %v3235
  %v3461 = vadd.f32 %v3460, %v3236
  %v3462 = vadd.f32 %v3461, %v3237
  %v3463 = vadd.f32 %v3462, %v3238
  %v3464 = vadd.f32 %v3463, %v3239
  %v3465 = vadd.f32 %v3464, %v3240
  %v3466 = vadd.f32 %v3465, %v3241
  %v3467 = vadd.f32 %v3466, %v3242
  %v3468 = vadd.f32 %v3467, %v3243
  %v3469 = vadd.f32 %v3468, %v3244
  %v3470 = vadd.f32 %v3469, %v3245
  %v3471 = vadd.f32 %v3470, %v3246
  %v3472 = vadd.f32 %v3471, %v3247
  %v3473 = vadd.f32 %v3472, %v3248
  %v3474 = vadd.f32 %v3473, %v3249
  %v3475 = vadd.f32 %v3474, %v3250
  %v3476 = vadd.f32 %v3475, %v3251
  %v3477 = vadd.f32 %v3476, %v3252
  %v3478 = vadd.f32 %v3477, %v3253
  %v3479 = vadd.f32 %v3478, %v3254
  %v3480 = vadd.f32 %v3479, %v3255
  %v3481 = vadd.f32 %v3480, %v3256
  %v3482 = vadd.f32 %v3481, %v3257
  %v3483 = vadd.f32 %v3482, %v3258
  %v3484 = vadd.f32 %v3483, %v3259
  %v3485 = vadd.f32 %v3484, %v3260
  %v3486 = vadd.f32 %v3485, %v3261
  %v3487 = vadd.f32 %v3486, %v3262
  %v3488 = vadd.f32 %v3487, %v3263
  %v3489 = vadd.f32 %v3488, %v3264
  %v3490 = vadd.f32 %v3489, %v3265
  %v3491 = vadd.f32 %v3490, %v3266
  %v3492 = vadd.f32 %v3491, %v3267
  %v3493 = vadd.f32 %v3492, %v3268
  %v3494 = vadd.f32 %v3493, %v3269
  %v3495 = vadd.f32 %v3494, %v3270
  %v3496 = vadd.f32 %v3495, %v3271
  %v3497 = vadd.f32 %v3496, %v3272
  %v3498 = vadd.f32 %v3497, %v3273
  %v3499 = vadd.f32 %v3498, %v3274
  %v3500 = vadd.f32 %v3499, %v3275
  %v3501 = vadd.f32 %v3500, %v3276
  %v3502 = vadd.f32 %v3501, %v3277
  %v3503 = vadd.f32 %v3502, %v3278
  %v3504 = vadd.f32 %v3503, %v3279
  %v3505 = vadd.f32 %v3504, %v3280
  %v3506 = vadd.f32 %v3505, %v3281
  %v3507 = vadd.f32 %v3506, %v3282
  %v3508 = vadd.f32 %v3507, %v3283
  %v3509 = vadd.f32 %v3508, %v3284
  %v3510 = vadd.f32 %v3509, %v3285
  %v3511 = vadd.f32 %v3510, %v3286
  %v3512 = vadd.f32 %v3511, %v3287
  %v3513 = vadd.f32 %v3512, %v3288
  %v3514 = vadd.f32 %v3513, %v3289
  %v3515 = vadd.f32 %v3514, %v3290
  %v3516 = vadd.f32 %v3515, %v3291
  %v3517 = vadd.f32 %v3516, %v3292
  %v3518 = vadd.f32 %v3517, %v3293
  %v3519 = vadd.f32 %v3518, %v3294
  %v3520 = vadd.f32 %v3519, %v3295
  %v3521 = vrot.slane %v3520, 4
  %v3522 = vadd.f32 %v3520, %v3521
  %v3523 = vrot.slane %v3522, 2
  %v3524 = vadd.f32 %v3522, %v3523
  %v3525 = vrot.slane %v3524, 1
  %v3526 = vadd.f32 %v3524, %v3525
  %v3527 = vmul.f32 %v3526, 0.00055555557
  %v3528 = vmul.f32 %v3069, %v3069
  %v3529 = vsub.f32 %v3527, %v3528
  %v3530 = vmax.f32 %v3529, 0.0
  %v3531 = vld [vmem:[%s3] sm:$0x1]
  %v3532 = vadd.f32 %v3530, 1e-05
  %v3533 = vrsqrt.pop %v3532
  %v3534 = vmul.f32 %v3531, %v3533
  %v3535 = vld [vmem:[%s4] sm:$0x1]
  %v3536 = vmul.f32 %v3069, %v3534
  %v3537 = vsub.f32 %v3535, %v3536
  %v3539 = vlaneseq
  %v3540 = vshrl.u32 %v3539, 7
  %v3541 = vsub.s32 0, %v3540
  %v3542 = vrot.slane %v3534, %v3541
  %v3544 = vmul.f32 %v1933, %v3542
  %v3545 = vmul.f32 %v1934, %v3542
  %v3546 = vmul.f32 %v1935, %v3542
  %v3547 = vmul.f32 %v1936, %v3542
  %v3548 = vmul.f32 %v1937, %v3542
  %v3549 = vmul.f32 %v1938, %v3542
  %v3550 = vmul.f32 %v1939, %v3542
  %v3551 = vmul.f32 %v1940, %v3542
  %v3552 = vmul.f32 %v1941, %v3542
  %v3553 = vmul.f32 %v1942, %v3542
  %v3554 = vmul.f32 %v1943, %v3542
  %v3555 = vmul.f32 %v1944, %v3542
  %v3556 = vmul.f32 %v1945, %v3542
  %v3557 = vmul.f32 %v1946, %v3542
  %v3558 = vmul.f32 %v1947, %v3542
  %v3559 = vmul.f32 %v1948, %v3542
  %v3560 = vmul.f32 %v1949, %v3542
  %v3561 = vmul.f32 %v1950, %v3542
  %v3562 = vmul.f32 %v1951, %v3542
  %v3563 = vmul.f32 %v1952, %v3542
  %v3564 = vmul.f32 %v1953, %v3542
  %v3565 = vmul.f32 %v1954, %v3542
  %v3566 = vmul.f32 %v1955, %v3542
  %v3567 = vmul.f32 %v1956, %v3542
  %v3568 = vmul.f32 %v1957, %v3542
  %v3569 = vmul.f32 %v1958, %v3542
  %v3570 = vmul.f32 %v1959, %v3542
  %v3571 = vmul.f32 %v1960, %v3542
  %v3572 = vmul.f32 %v1961, %v3542
  %v3573 = vmul.f32 %v1962, %v3542
  %v3574 = vmul.f32 %v1963, %v3542
  %v3575 = vmul.f32 %v1964, %v3542
  %v3576 = vmul.f32 %v1965, %v3542
  %v3577 = vmul.f32 %v1966, %v3542
  %v3578 = vmul.f32 %v1967, %v3542
  %v3579 = vmul.f32 %v1968, %v3542
  %v3580 = vmul.f32 %v1969, %v3542
  %v3581 = vmul.f32 %v1970, %v3542
  %v3582 = vmul.f32 %v1971, %v3542
  %v3583 = vmul.f32 %v1972, %v3542
  %v3584 = vmul.f32 %v1973, %v3542
  %v3585 = vmul.f32 %v1974, %v3542
  %v3586 = vmul.f32 %v1975, %v3542
  %v3587 = vmul.f32 %v1976, %v3542
  %v3588 = vmul.f32 %v1977, %v3542
  %v3589 = vmul.f32 %v1978, %v3542
  %v3590 = vmul.f32 %v1979, %v3542
  %v3591 = vmul.f32 %v1980, %v3542
  %v3592 = vmul.f32 %v1981, %v3542
  %v3593 = vmul.f32 %v1982, %v3542
  %v3594 = vmul.f32 %v1983, %v3542
  %v3595 = vmul.f32 %v1984, %v3542
  %v3596 = vmul.f32 %v1985, %v3542
  %v3597 = vmul.f32 %v1986, %v3542
  %v3598 = vmul.f32 %v1987, %v3542
  %v3599 = vmul.f32 %v1988, %v3542
  %v3600 = vmul.f32 %v1989, %v3542
  %v3601 = vmul.f32 %v1990, %v3542
  %v3602 = vmul.f32 %v1991, %v3542
  %v3603 = vmul.f32 %v1992, %v3542
  %v3604 = vmul.f32 %v1993, %v3542
  %v3605 = vmul.f32 %v1994, %v3542
  %v3606 = vmul.f32 %v1995, %v3542
  %v3607 = vmul.f32 %v1996, %v3542
  %v3608 = vmul.f32 %v1997, %v3542
  %v3609 = vmul.f32 %v1998, %v3542
  %v3610 = vmul.f32 %v1999, %v3542
  %v3611 = vmul.f32 %v2000, %v3542
  %v3612 = vmul.f32 %v2001, %v3542
  %v3613 = vmul.f32 %v2002, %v3542
  %v3614 = vmul.f32 %v2003, %v3542
  %v3615 = vmul.f32 %v2004, %v3542
  %v3616 = vmul.f32 %v2005, %v3542
  %v3617 = vmul.f32 %v2006, %v3542
  %v3618 = vmul.f32 %v2007, %v3542
  %v3619 = vmul.f32 %v2008, %v3542
  %v3620 = vmul.f32 %v2009, %v3542
  %v3621 = vmul.f32 %v2010, %v3542
  %v3622 = vmul.f32 %v2011, %v3542
  %v3623 = vmul.f32 %v2012, %v3542
  %v3624 = vmul.f32 %v2013, %v3542
  %v3625 = vmul.f32 %v2014, %v3542
  %v3626 = vmul.f32 %v2015, %v3542
  %v3627 = vmul.f32 %v2016, %v3542
  %v3628 = vmul.f32 %v2017, %v3542
  %v3629 = vmul.f32 %v2018, %v3542
  %v3630 = vmul.f32 %v2019, %v3542
  %v3631 = vmul.f32 %v2020, %v3542
  %v3632 = vmul.f32 %v2021, %v3542
  %v3633 = vmul.f32 %v2022, %v3542
  %v3634 = vmul.f32 %v2023, %v3542
  %v3635 = vmul.f32 %v2024, %v3542
  %v3636 = vmul.f32 %v2025, %v3542
  %v3637 = vmul.f32 %v2026, %v3542
  %v3638 = vmul.f32 %v2027, %v3542
  %v3639 = vmul.f32 %v2028, %v3542
  %v3640 = vmul.f32 %v2029, %v3542
  %v3641 = vmul.f32 %v2030, %v3542
  %v3642 = vmul.f32 %v2031, %v3542
  %v3643 = vmul.f32 %v2032, %v3542
  %v3644 = vmul.f32 %v2033, %v3542
  %v3645 = vmul.f32 %v2034, %v3542
  %v3646 = vmul.f32 %v2035, %v3542
  %v3647 = vmul.f32 %v2036, %v3542
  %v3648 = vmul.f32 %v2037, %v3542
  %v3649 = vmul.f32 %v2038, %v3542
  %v3650 = vmul.f32 %v2039, %v3542
  %v3651 = vmul.f32 %v2040, %v3542
  %v3652 = vmul.f32 %v2041, %v3542
  %v3653 = vmul.f32 %v2042, %v3542
  %v3654 = vmul.f32 %v2043, %v3542
  %v3655 = vmul.f32 %v2044, %v3542
  %v3656 = vmul.f32 %v2045, %v3542
  %v3657 = vmul.f32 %v2046, %v3542
  %v3658 = vmul.f32 %v2047, %v3542
  %v3659 = vmul.f32 %v2048, %v3542
  %v3660 = vmul.f32 %v2049, %v3542
  %v3661 = vmul.f32 %v2050, %v3542
  %v3662 = vmul.f32 %v2051, %v3542
  %v3663 = vmul.f32 %v2052, %v3542
  %v3664 = vmul.f32 %v2053, %v3542
  %v3665 = vmul.f32 %v2054, %v3542
  %v3666 = vmul.f32 %v2055, %v3542
  %v3667 = vmul.f32 %v2056, %v3542
  %v3668 = vmul.f32 %v2057, %v3542
  %v3669 = vmul.f32 %v2058, %v3542
  %v3670 = vmul.f32 %v2059, %v3542
  %v3671 = vmul.f32 %v2060, %v3542
  %v3672 = vmul.f32 %v2061, %v3542
  %v3673 = vmul.f32 %v2062, %v3542
  %v3674 = vmul.f32 %v2063, %v3542
  %v3675 = vmul.f32 %v2064, %v3542
  %v3676 = vmul.f32 %v2065, %v3542
  %v3677 = vmul.f32 %v2066, %v3542
  %v3678 = vmul.f32 %v2067, %v3542
  %v3679 = vmul.f32 %v2068, %v3542
  %v3680 = vmul.f32 %v2069, %v3542
  %v3681 = vmul.f32 %v2070, %v3542
  %v3682 = vmul.f32 %v2071, %v3542
  %v3683 = vmul.f32 %v2072, %v3542
  %v3684 = vmul.f32 %v2073, %v3542
  %v3685 = vmul.f32 %v2074, %v3542
  %v3686 = vmul.f32 %v2075, %v3542
  %v3687 = vmul.f32 %v2076, %v3542
  %v3688 = vmul.f32 %v2077, %v3542
  %v3689 = vmul.f32 %v2078, %v3542
  %v3690 = vmul.f32 %v2079, %v3542
  %v3691 = vmul.f32 %v2080, %v3542
  %v3692 = vmul.f32 %v2081, %v3542
  %v3693 = vmul.f32 %v2082, %v3542
  %v3694 = vmul.f32 %v2083, %v3542
  %v3695 = vmul.f32 %v2084, %v3542
  %v3696 = vmul.f32 %v2085, %v3542
  %v3697 = vmul.f32 %v2086, %v3542
  %v3698 = vmul.f32 %v2087, %v3542
  %v3699 = vmul.f32 %v2088, %v3542
  %v3700 = vmul.f32 %v2089, %v3542
  %v3701 = vmul.f32 %v2090, %v3542
  %v3702 = vmul.f32 %v2091, %v3542
  %v3703 = vmul.f32 %v2092, %v3542
  %v3704 = vmul.f32 %v2093, %v3542
  %v3705 = vmul.f32 %v2094, %v3542
  %v3706 = vmul.f32 %v2095, %v3542
  %v3707 = vmul.f32 %v2096, %v3542
  %v3708 = vmul.f32 %v2097, %v3542
  %v3709 = vmul.f32 %v2098, %v3542
  %v3710 = vmul.f32 %v2099, %v3542
  %v3711 = vmul.f32 %v2100, %v3542
  %v3712 = vmul.f32 %v2101, %v3542
  %v3713 = vmul.f32 %v2102, %v3542
  %v3714 = vmul.f32 %v2103, %v3542
  %v3715 = vmul.f32 %v2104, %v3542
  %v3716 = vmul.f32 %v2105, %v3542
  %v3717 = vmul.f32 %v2106, %v3542
  %v3718 = vmul.f32 %v2107, %v3542
  %v3719 = vmul.f32 %v2108, %v3542
  %v3720 = vmul.f32 %v2109, %v3542
  %v3721 = vmul.f32 %v2110, %v3542
  %v3722 = vmul.f32 %v2111, %v3542
  %v3723 = vmul.f32 %v2112, %v3542
  %v3724 = vmul.f32 %v2113, %v3542
  %v3725 = vmul.f32 %v2114, %v3542
  %v3726 = vmul.f32 %v2115, %v3542
  %v3727 = vmul.f32 %v2116, %v3542
  %v3728 = vmul.f32 %v2117, %v3542
  %v3729 = vmul.f32 %v2118, %v3542
  %v3730 = vmul.f32 %v2119, %v3542
  %v3731 = vmul.f32 %v2120, %v3542
  %v3732 = vmul.f32 %v2121, %v3542
  %v3733 = vmul.f32 %v2122, %v3542
  %v3734 = vmul.f32 %v2123, %v3542
  %v3735 = vmul.f32 %v2124, %v3542
  %v3736 = vmul.f32 %v2125, %v3542
  %v3737 = vmul.f32 %v2126, %v3542
  %v3738 = vmul.f32 %v2127, %v3542
  %v3739 = vmul.f32 %v2128, %v3542
  %v3740 = vmul.f32 %v2129, %v3542
  %v3741 = vmul.f32 %v2130, %v3542
  %v3742 = vmul.f32 %v2131, %v3542
  %v3743 = vmul.f32 %v2132, %v3542
  %v3744 = vmul.f32 %v2133, %v3542
  %v3745 = vmul.f32 %v2134, %v3542
  %v3746 = vmul.f32 %v2135, %v3542
  %v3747 = vmul.f32 %v2136, %v3542
  %v3748 = vmul.f32 %v2137, %v3542
  %v3749 = vmul.f32 %v2138, %v3542
  %v3750 = vmul.f32 %v2139, %v3542
  %v3751 = vmul.f32 %v2140, %v3542
  %v3752 = vmul.f32 %v2141, %v3542
  %v3753 = vmul.f32 %v2142, %v3542
  %v3754 = vmul.f32 %v2143, %v3542
  %v3755 = vmul.f32 %v2144, %v3542
  %v3756 = vmul.f32 %v2145, %v3542
  %v3757 = vmul.f32 %v2146, %v3542
  %v3758 = vmul.f32 %v2147, %v3542
  %v3759 = vmul.f32 %v2148, %v3542
  %v3760 = vmul.f32 %v2149, %v3542
  %v3761 = vmul.f32 %v2150, %v3542
  %v3762 = vmul.f32 %v2151, %v3542
  %v3763 = vmul.f32 %v2152, %v3542
  %v3764 = vmul.f32 %v2153, %v3542
  %v3765 = vmul.f32 %v2154, %v3542
  %v3766 = vmul.f32 %v2155, %v3542
  %v3767 = vmul.f32 %v2156, %v3542
  %v3768 = vmul.f32 %v2157, %v3542
  %v3769 = vmul.f32 %v2158, %v3542
  %v3771 = vlaneseq
  %v3772 = vshrl.u32 %v3771, 7
  %v3773 = vsub.s32 0, %v3772
  %v3774 = vrot.slane %v3537, %v3773
  %v3776 = vadd.f32 %v3544, %v3774
  %v3777 = vadd.f32 %v3545, %v3774
  %v3778 = vadd.f32 %v3546, %v3774
  %v3779 = vadd.f32 %v3547, %v3774
  %v3780 = vadd.f32 %v3548, %v3774
  %v3781 = vadd.f32 %v3549, %v3774
  %v3782 = vadd.f32 %v3550, %v3774
  %v3783 = vadd.f32 %v3551, %v3774
  %v3784 = vadd.f32 %v3552, %v3774
  %v3785 = vadd.f32 %v3553, %v3774
  %v3786 = vadd.f32 %v3554, %v3774
  %v3787 = vadd.f32 %v3555, %v3774
  %v3788 = vadd.f32 %v3556, %v3774
  %v3789 = vadd.f32 %v3557, %v3774
  %v3790 = vadd.f32 %v3558, %v3774
  %v3791 = vadd.f32 %v3559, %v3774
  %v3792 = vadd.f32 %v3560, %v3774
  %v3793 = vadd.f32 %v3561, %v3774
  %v3794 = vadd.f32 %v3562, %v3774
  %v3795 = vadd.f32 %v3563, %v3774
  %v3796 = vadd.f32 %v3564, %v3774
  %v3797 = vadd.f32 %v3565, %v3774
  %v3798 = vadd.f32 %v3566, %v3774
  %v3799 = vadd.f32 %v3567, %v3774
  %v3800 = vadd.f32 %v3568, %v3774
  %v3801 = vadd.f32 %v3569, %v3774
  %v3802 = vadd.f32 %v3570, %v3774
  %v3803 = vadd.f32 %v3571, %v3774
  %v3804 = vadd.f32 %v3572, %v3774
  %v3805 = vadd.f32 %v3573, %v3774
  %v3806 = vadd.f32 %v3574, %v3774
  %v3807 = vadd.f32 %v3575, %v3774
  %v3808 = vadd.f32 %v3576, %v3774
  %v3809 = vadd.f32 %v3577, %v3774
  %v3810 = vadd.f32 %v3578, %v3774
  %v3811 = vadd.f32 %v3579, %v3774
  %v3812 = vadd.f32 %v3580, %v3774
  %v3813 = vadd.f32 %v3581, %v3774
  %v3814 = vadd.f32 %v3582, %v3774
  %v3815 = vadd.f32 %v3583, %v3774
  %v3816 = vadd.f32 %v3584, %v3774
  %v3817 = vadd.f32 %v3585, %v3774
  %v3818 = vadd.f32 %v3586, %v3774
  %v3819 = vadd.f32 %v3587, %v3774
  %v3820 = vadd.f32 %v3588, %v3774
  %v3821 = vadd.f32 %v3589, %v3774
  %v3822 = vadd.f32 %v3590, %v3774
  %v3823 = vadd.f32 %v3591, %v3774
  %v3824 = vadd.f32 %v3592, %v3774
  %v3825 = vadd.f32 %v3593, %v3774
  %v3826 = vadd.f32 %v3594, %v3774
  %v3827 = vadd.f32 %v3595, %v3774
  %v3828 = vadd.f32 %v3596, %v3774
  %v3829 = vadd.f32 %v3597, %v3774
  %v3830 = vadd.f32 %v3598, %v3774
  %v3831 = vadd.f32 %v3599, %v3774
  %v3832 = vadd.f32 %v3600, %v3774
  %v3833 = vadd.f32 %v3601, %v3774
  %v3834 = vadd.f32 %v3602, %v3774
  %v3835 = vadd.f32 %v3603, %v3774
  %v3836 = vadd.f32 %v3604, %v3774
  %v3837 = vadd.f32 %v3605, %v3774
  %v3838 = vadd.f32 %v3606, %v3774
  %v3839 = vadd.f32 %v3607, %v3774
  %v3840 = vadd.f32 %v3608, %v3774
  %v3841 = vadd.f32 %v3609, %v3774
  %v3842 = vadd.f32 %v3610, %v3774
  %v3843 = vadd.f32 %v3611, %v3774
  %v3844 = vadd.f32 %v3612, %v3774
  %v3845 = vadd.f32 %v3613, %v3774
  %v3846 = vadd.f32 %v3614, %v3774
  %v3847 = vadd.f32 %v3615, %v3774
  %v3848 = vadd.f32 %v3616, %v3774
  %v3849 = vadd.f32 %v3617, %v3774
  %v3850 = vadd.f32 %v3618, %v3774
  %v3851 = vadd.f32 %v3619, %v3774
  %v3852 = vadd.f32 %v3620, %v3774
  %v3853 = vadd.f32 %v3621, %v3774
  %v3854 = vadd.f32 %v3622, %v3774
  %v3855 = vadd.f32 %v3623, %v3774
  %v3856 = vadd.f32 %v3624, %v3774
  %v3857 = vadd.f32 %v3625, %v3774
  %v3858 = vadd.f32 %v3626, %v3774
  %v3859 = vadd.f32 %v3627, %v3774
  %v3860 = vadd.f32 %v3628, %v3774
  %v3861 = vadd.f32 %v3629, %v3774
  %v3862 = vadd.f32 %v3630, %v3774
  %v3863 = vadd.f32 %v3631, %v3774
  %v3864 = vadd.f32 %v3632, %v3774
  %v3865 = vadd.f32 %v3633, %v3774
  %v3866 = vadd.f32 %v3634, %v3774
  %v3867 = vadd.f32 %v3635, %v3774
  %v3868 = vadd.f32 %v3636, %v3774
  %v3869 = vadd.f32 %v3637, %v3774
  %v3870 = vadd.f32 %v3638, %v3774
  %v3871 = vadd.f32 %v3639, %v3774
  %v3872 = vadd.f32 %v3640, %v3774
  %v3873 = vadd.f32 %v3641, %v3774
  %v3874 = vadd.f32 %v3642, %v3774
  %v3875 = vadd.f32 %v3643, %v3774
  %v3876 = vadd.f32 %v3644, %v3774
  %v3877 = vadd.f32 %v3645, %v3774
  %v3878 = vadd.f32 %v3646, %v3774
  %v3879 = vadd.f32 %v3647, %v3774
  %v3880 = vadd.f32 %v3648, %v3774
  %v3881 = vadd.f32 %v3649, %v3774
  %v3882 = vadd.f32 %v3650, %v3774
  %v3883 = vadd.f32 %v3651, %v3774
  %v3884 = vadd.f32 %v3652, %v3774
  %v3885 = vadd.f32 %v3653, %v3774
  %v3886 = vadd.f32 %v3654, %v3774
  %v3887 = vadd.f32 %v3655, %v3774
  %v3888 = vadd.f32 %v3656, %v3774
  %v3889 = vadd.f32 %v3657, %v3774
  %v3890 = vadd.f32 %v3658, %v3774
  %v3891 = vadd.f32 %v3659, %v3774
  %v3892 = vadd.f32 %v3660, %v3774
  %v3893 = vadd.f32 %v3661, %v3774
  %v3894 = vadd.f32 %v3662, %v3774
  %v3895 = vadd.f32 %v3663, %v3774
  %v3896 = vadd.f32 %v3664, %v3774
  %v3897 = vadd.f32 %v3665, %v3774
  %v3898 = vadd.f32 %v3666, %v3774
  %v3899 = vadd.f32 %v3667, %v3774
  %v3900 = vadd.f32 %v3668, %v3774
  %v3901 = vadd.f32 %v3669, %v3774
  %v3902 = vadd.f32 %v3670, %v3774
  %v3903 = vadd.f32 %v3671, %v3774
  %v3904 = vadd.f32 %v3672, %v3774
  %v3905 = vadd.f32 %v3673, %v3774
  %v3906 = vadd.f32 %v3674, %v3774
  %v3907 = vadd.f32 %v3675, %v3774
  %v3908 = vadd.f32 %v3676, %v3774
  %v3909 = vadd.f32 %v3677, %v3774
  %v3910 = vadd.f32 %v3678, %v3774
  %v3911 = vadd.f32 %v3679, %v3774
  %v3912 = vadd.f32 %v3680, %v3774
  %v3913 = vadd.f32 %v3681, %v3774
  %v3914 = vadd.f32 %v3682, %v3774
  %v3915 = vadd.f32 %v3683, %v3774
  %v3916 = vadd.f32 %v3684, %v3774
  %v3917 = vadd.f32 %v3685, %v3774
  %v3918 = vadd.f32 %v3686, %v3774
  %v3919 = vadd.f32 %v3687, %v3774
  %v3920 = vadd.f32 %v3688, %v3774
  %v3921 = vadd.f32 %v3689, %v3774
  %v3922 = vadd.f32 %v3690, %v3774
  %v3923 = vadd.f32 %v3691, %v3774
  %v3924 = vadd.f32 %v3692, %v3774
  %v3925 = vadd.f32 %v3693, %v3774
  %v3926 = vadd.f32 %v3694, %v3774
  %v3927 = vadd.f32 %v3695, %v3774
  %v3928 = vadd.f32 %v3696, %v3774
  %v3929 = vadd.f32 %v3697, %v3774
  %v3930 = vadd.f32 %v3698, %v3774
  %v3931 = vadd.f32 %v3699, %v3774
  %v3932 = vadd.f32 %v3700, %v3774
  %v3933 = vadd.f32 %v3701, %v3774
  %v3934 = vadd.f32 %v3702, %v3774
  %v3935 = vadd.f32 %v3703, %v3774
  %v3936 = vadd.f32 %v3704, %v3774
  %v3937 = vadd.f32 %v3705, %v3774
  %v3938 = vadd.f32 %v3706, %v3774
  %v3939 = vadd.f32 %v3707, %v3774
  %v3940 = vadd.f32 %v3708, %v3774
  %v3941 = vadd.f32 %v3709, %v3774
  %v3942 = vadd.f32 %v3710, %v3774
  %v3943 = vadd.f32 %v3711, %v3774
  %v3944 = vadd.f32 %v3712, %v3774
  %v3945 = vadd.f32 %v3713, %v3774
  %v3946 = vadd.f32 %v3714, %v3774
  %v3947 = vadd.f32 %v3715, %v3774
  %v3948 = vadd.f32 %v3716, %v3774
  %v3949 = vadd.f32 %v3717, %v3774
  %v3950 = vadd.f32 %v3718, %v3774
  %v3951 = vadd.f32 %v3719, %v3774
  %v3952 = vadd.f32 %v3720, %v3774
  %v3953 = vadd.f32 %v3721, %v3774
  %v3954 = vadd.f32 %v3722, %v3774
  %v3955 = vadd.f32 %v3723, %v3774
  %v3956 = vadd.f32 %v3724, %v3774
  %v3957 = vadd.f32 %v3725, %v3774
  %v3958 = vadd.f32 %v3726, %v3774
  %v3959 = vadd.f32 %v3727, %v3774
  %v3960 = vadd.f32 %v3728, %v3774
  %v3961 = vadd.f32 %v3729, %v3774
  %v3962 = vadd.f32 %v3730, %v3774
  %v3963 = vadd.f32 %v3731, %v3774
  %v3964 = vadd.f32 %v3732, %v3774
  %v3965 = vadd.f32 %v3733, %v3774
  %v3966 = vadd.f32 %v3734, %v3774
  %v3967 = vadd.f32 %v3735, %v3774
  %v3968 = vadd.f32 %v3736, %v3774
  %v3969 = vadd.f32 %v3737, %v3774
  %v3970 = vadd.f32 %v3738, %v3774
  %v3971 = vadd.f32 %v3739, %v3774
  %v3972 = vadd.f32 %v3740, %v3774
  %v3973 = vadd.f32 %v3741, %v3774
  %v3974 = vadd.f32 %v3742, %v3774
  %v3975 = vadd.f32 %v3743, %v3774
  %v3976 = vadd.f32 %v3744, %v3774
  %v3977 = vadd.f32 %v3745, %v3774
  %v3978 = vadd.f32 %v3746, %v3774
  %v3979 = vadd.f32 %v3747, %v3774
  %v3980 = vadd.f32 %v3748, %v3774
  %v3981 = vadd.f32 %v3749, %v3774
  %v3982 = vadd.f32 %v3750, %v3774
  %v3983 = vadd.f32 %v3751, %v3774
  %v3984 = vadd.f32 %v3752, %v3774
  %v3985 = vadd.f32 %v3753, %v3774
  %v3986 = vadd.f32 %v3754, %v3774
  %v3987 = vadd.f32 %v3755, %v3774
  %v3988 = vadd.f32 %v3756, %v3774
  %v3989 = vadd.f32 %v3757, %v3774
  %v3990 = vadd.f32 %v3758, %v3774
  %v3991 = vadd.f32 %v3759, %v3774
  %v3992 = vadd.f32 %v3760, %v3774
  %v3993 = vadd.f32 %v3761, %v3774
  %v3994 = vadd.f32 %v3762, %v3774
  %v3995 = vadd.f32 %v3763, %v3774
  %v3996 = vadd.f32 %v3764, %v3774
  %v3997 = vadd.f32 %v3765, %v3774
  %v3998 = vadd.f32 %v3766, %v3774
  %v3999 = vadd.f32 %v3767, %v3774
  %v4000 = vadd.f32 %v3768, %v3774
  %v4001 = vadd.f32 %v3769, %v3774
  %v4002 = vpack.c.bf16 %v3777, %v3776
  %v4003 = vpack.c.bf16 %v3779, %v3778
  %v4004 = vpack.c.bf16 %v3781, %v3780
  %v4005 = vpack.c.bf16 %v3783, %v3782
  %v4006 = vpack.c.bf16 %v3785, %v3784
  %v4007 = vpack.c.bf16 %v3787, %v3786
  %v4008 = vpack.c.bf16 %v3789, %v3788
  %v4009 = vpack.c.bf16 %v3791, %v3790
  %v4010 = vpack.c.bf16 %v3793, %v3792
  %v4011 = vpack.c.bf16 %v3795, %v3794
  %v4012 = vpack.c.bf16 %v3797, %v3796
  %v4013 = vpack.c.bf16 %v3799, %v3798
  %v4014 = vpack.c.bf16 %v3801, %v3800
  %v4015 = vpack.c.bf16 %v3803, %v3802
  %v4016 = vpack.c.bf16 %v3805, %v3804
  %v4017 = vpack.c.bf16 %v3807, %v3806
  %v4018 = vpack.c.bf16 %v3809, %v3808
  %v4019 = vpack.c.bf16 %v3811, %v3810
  %v4020 = vpack.c.bf16 %v3813, %v3812
  %v4021 = vpack.c.bf16 %v3815, %v3814
  %v4022 = vpack.c.bf16 %v3817, %v3816
  %v4023 = vpack.c.bf16 %v3819, %v3818
  %v4024 = vpack.c.bf16 %v3821, %v3820
  %v4025 = vpack.c.bf16 %v3823, %v3822
  %v4026 = vpack.c.bf16 %v3825, %v3824
  %v4027 = vpack.c.bf16 %v3827, %v3826
  %v4028 = vpack.c.bf16 %v3829, %v3828
  %v4029 = vpack.c.bf16 %v3831, %v3830
  %v4030 = vpack.c.bf16 %v3833, %v3832
  %v4031 = vpack.c.bf16 %v3835, %v3834
  %v4032 = vpack.c.bf16 %v3837, %v3836
  %v4033 = vpack.c.bf16 %v3839, %v3838
  %v4034 = vpack.c.bf16 %v3841, %v3840
  %v4035 = vpack.c.bf16 %v3843, %v3842
  %v4036 = vpack.c.bf16 %v3845, %v3844
  %v4037 = vpack.c.bf16 %v3847, %v3846
  %v4038 = vpack.c.bf16 %v3849, %v3848
  %v4039 = vpack.c.bf16 %v3851, %v3850
  %v4040 = vpack.c.bf16 %v3853, %v3852
  %v4041 = vpack.c.bf16 %v3855, %v3854
  %v4042 = vpack.c.bf16 %v3857, %v3856
  %v4043 = vpack.c.bf16 %v3859, %v3858
  %v4044 = vpack.c.bf16 %v3861, %v3860
  %v4045 = vpack.c.bf16 %v3863, %v3862
  %v4046 = vpack.c.bf16 %v3865, %v3864
  %v4047 = vpack.c.bf16 %v3867, %v3866
  %v4048 = vpack.c.bf16 %v3869, %v3868
  %v4049 = vpack.c.bf16 %v3871, %v3870
  %v4050 = vpack.c.bf16 %v3873, %v3872
  %v4051 = vpack.c.bf16 %v3875, %v3874
  %v4052 = vpack.c.bf16 %v3877, %v3876
  %v4053 = vpack.c.bf16 %v3879, %v3878
  %v4054 = vpack.c.bf16 %v3881, %v3880
  %v4055 = vpack.c.bf16 %v3883, %v3882
  %v4056 = vpack.c.bf16 %v3885, %v3884
  %v4057 = vpack.c.bf16 %v3887, %v3886
  %v4058 = vpack.c.bf16 %v3889, %v3888
  %v4059 = vpack.c.bf16 %v3891, %v3890
  %v4060 = vpack.c.bf16 %v3893, %v3892
  %v4061 = vpack.c.bf16 %v3895, %v3894
  %v4062 = vpack.c.bf16 %v3897, %v3896
  %v4063 = vpack.c.bf16 %v3899, %v3898
  %v4064 = vpack.c.bf16 %v3901, %v3900
  %v4065 = vpack.c.bf16 %v3903, %v3902
  %v4066 = vpack.c.bf16 %v3905, %v3904
  %v4067 = vpack.c.bf16 %v3907, %v3906
  %v4068 = vpack.c.bf16 %v3909, %v3908
  %v4069 = vpack.c.bf16 %v3911, %v3910
  %v4070 = vpack.c.bf16 %v3913, %v3912
  %v4071 = vpack.c.bf16 %v3915, %v3914
  %v4072 = vpack.c.bf16 %v3917, %v3916
  %v4073 = vpack.c.bf16 %v3919, %v3918
  %v4074 = vpack.c.bf16 %v3921, %v3920
  %v4075 = vpack.c.bf16 %v3923, %v3922
  %v4076 = vpack.c.bf16 %v3925, %v3924
  %v4077 = vpack.c.bf16 %v3927, %v3926
  %v4078 = vpack.c.bf16 %v3929, %v3928
  %v4079 = vpack.c.bf16 %v3931, %v3930
  %v4080 = vpack.c.bf16 %v3933, %v3932
  %v4081 = vpack.c.bf16 %v3935, %v3934
  %v4082 = vpack.c.bf16 %v3937, %v3936
  %v4083 = vpack.c.bf16 %v3939, %v3938
  %v4084 = vpack.c.bf16 %v3941, %v3940
  %v4085 = vpack.c.bf16 %v3943, %v3942
  %v4086 = vpack.c.bf16 %v3945, %v3944
  %v4087 = vpack.c.bf16 %v3947, %v3946
  %v4088 = vpack.c.bf16 %v3949, %v3948
  %v4089 = vpack.c.bf16 %v3951, %v3950
  %v4090 = vpack.c.bf16 %v3953, %v3952
  %v4091 = vpack.c.bf16 %v3955, %v3954
  %v4092 = vpack.c.bf16 %v3957, %v3956
  %v4093 = vpack.c.bf16 %v3959, %v3958
  %v4094 = vpack.c.bf16 %v3961, %v3960
  %v4095 = vpack.c.bf16 %v3963, %v3962
  %v4096 = vpack.c.bf16 %v3965, %v3964
  %v4097 = vpack.c.bf16 %v3967, %v3966
  %v4098 = vpack.c.bf16 %v3969, %v3968
  %v4099 = vpack.c.bf16 %v3971, %v3970
  %v4100 = vpack.c.bf16 %v3973, %v3972
  %v4101 = vpack.c.bf16 %v3975, %v3974
  %v4102 = vpack.c.bf16 %v3977, %v3976
  %v4103 = vpack.c.bf16 %v3979, %v3978
  %v4104 = vpack.c.bf16 %v3981, %v3980
  %v4105 = vpack.c.bf16 %v3983, %v3982
  %v4106 = vpack.c.bf16 %v3985, %v3984
  %v4107 = vpack.c.bf16 %v3987, %v3986
  %v4108 = vpack.c.bf16 %v3989, %v3988
  %v4109 = vpack.c.bf16 %v3991, %v3990
  %v4110 = vpack.c.bf16 %v3993, %v3992
  %v4111 = vpack.c.bf16 %v3995, %v3994
  %v4112 = vpack.c.bf16 %v3997, %v3996
  %v4113 = vpack.c.bf16 %v3999, %v3998
  %v4114 = vpack.c.bf16 %v4001, %v4000
  %v4228 = vunpack.c.l.b16 %v4002
  %v4229 = vunpack.c.h.b16 %v4002
  %v4230 = vunpack.c.l.b16 %v4003
  %v4231 = vunpack.c.h.b16 %v4003
  %v4232 = vunpack.c.l.b16 %v4004
  %v4233 = vunpack.c.h.b16 %v4004
  %v4234 = vunpack.c.l.b16 %v4005
  %v4235 = vunpack.c.h.b16 %v4005
  %v4236 = vunpack.c.l.b16 %v4006
  %v4237 = vunpack.c.h.b16 %v4006
  %v4238 = vunpack.c.l.b16 %v4007
  %v4239 = vunpack.c.h.b16 %v4007
  %v4240 = vunpack.c.l.b16 %v4008
  %v4241 = vunpack.c.h.b16 %v4008
  %v4242 = vunpack.c.l.b16 %v4009
  %v4243 = vunpack.c.h.b16 %v4009
  %v4244 = vunpack.c.l.b16 %v4010
  %v4245 = vunpack.c.h.b16 %v4010
  %v4246 = vunpack.c.l.b16 %v4011
  %v4247 = vunpack.c.h.b16 %v4011
  %v4248 = vunpack.c.l.b16 %v4012
  %v4249 = vunpack.c.h.b16 %v4012
  %v4250 = vunpack.c.l.b16 %v4013
  %v4251 = vunpack.c.h.b16 %v4013
  %v4252 = vunpack.c.l.b16 %v4014
  %v4253 = vunpack.c.h.b16 %v4014
  %v4254 = vunpack.c.l.b16 %v4015
  %v4255 = vunpack.c.h.b16 %v4015
  %v4256 = vunpack.c.l.b16 %v4016
  %v4257 = vunpack.c.h.b16 %v4016
  %v4258 = vunpack.c.l.b16 %v4017
  %v4259 = vunpack.c.h.b16 %v4017
  %v4260 = vunpack.c.l.b16 %v4018
  %v4261 = vunpack.c.h.b16 %v4018
  %v4262 = vunpack.c.l.b16 %v4019
  %v4263 = vunpack.c.h.b16 %v4019
  %v4264 = vunpack.c.l.b16 %v4020
  %v4265 = vunpack.c.h.b16 %v4020
  %v4266 = vunpack.c.l.b16 %v4021
  %v4267 = vunpack.c.h.b16 %v4021
  %v4268 = vunpack.c.l.b16 %v4022
  %v4269 = vunpack.c.h.b16 %v4022
  %v4270 = vunpack.c.l.b16 %v4023
  %v4271 = vunpack.c.h.b16 %v4023
  %v4272 = vunpack.c.l.b16 %v4024
  %v4273 = vunpack.c.h.b16 %v4024
  %v4274 = vunpack.c.l.b16 %v4025
  %v4275 = vunpack.c.h.b16 %v4025
  %v4276 = vunpack.c.l.b16 %v4026
  %v4277 = vunpack.c.h.b16 %v4026
  %v4278 = vunpack.c.l.b16 %v4027
  %v4279 = vunpack.c.h.b16 %v4027
  %v4280 = vunpack.c.l.b16 %v4028
  %v4281 = vunpack.c.h.b16 %v4028
  %v4282 = vunpack.c.l.b16 %v4029
  %v4283 = vunpack.c.h.b16 %v4029
  %v4284 = vunpack.c.l.b16 %v4030
  %v4285 = vunpack.c.h.b16 %v4030
  %v4286 = vunpack.c.l.b16 %v4031
  %v4287 = vunpack.c.h.b16 %v4031
  %v4288 = vunpack.c.l.b16 %v4032
  %v4289 = vunpack.c.h.b16 %v4032
  %v4290 = vunpack.c.l.b16 %v4033
  %v4291 = vunpack.c.h.b16 %v4033
  %v4292 = vunpack.c.l.b16 %v4034
  %v4293 = vunpack.c.h.b16 %v4034
  %v4294 = vunpack.c.l.b16 %v4035
  %v4295 = vunpack.c.h.b16 %v4035
  %v4296 = vunpack.c.l.b16 %v4036
  %v4297 = vunpack.c.h.b16 %v4036
  %v4298 = vunpack.c.l.b16 %v4037
  %v4299 = vunpack.c.h.b16 %v4037
  %v4300 = vunpack.c.l.b16 %v4038
  %v4301 = vunpack.c.h.b16 %v4038
  %v4302 = vunpack.c.l.b16 %v4039
  %v4303 = vunpack.c.h.b16 %v4039
  %v4304 = vunpack.c.l.b16 %v4040
  %v4305 = vunpack.c.h.b16 %v4040
  %v4306 = vunpack.c.l.b16 %v4041
  %v4307 = vunpack.c.h.b16 %v4041
  %v4308 = vunpack.c.l.b16 %v4042
  %v4309 = vunpack.c.h.b16 %v4042
  %v4310 = vunpack.c.l.b16 %v4043
  %v4311 = vunpack.c.h.b16 %v4043
  %v4312 = vunpack.c.l.b16 %v4044
  %v4313 = vunpack.c.h.b16 %v4044
  %v4314 = vunpack.c.l.b16 %v4045
  %v4315 = vunpack.c.h.b16 %v4045
  %v4316 = vunpack.c.l.b16 %v4046
  %v4317 = vunpack.c.h.b16 %v4046
  %v4318 = vunpack.c.l.b16 %v4047
  %v4319 = vunpack.c.h.b16 %v4047
  %v4320 = vunpack.c.l.b16 %v4048
  %v4321 = vunpack.c.h.b16 %v4048
  %v4322 = vunpack.c.l.b16 %v4049
  %v4323 = vunpack.c.h.b16 %v4049
  %v4324 = vunpack.c.l.b16 %v4050
  %v4325 = vunpack.c.h.b16 %v4050
  %v4326 = vunpack.c.l.b16 %v4051
  %v4327 = vunpack.c.h.b16 %v4051
  %v4328 = vunpack.c.l.b16 %v4052
  %v4329 = vunpack.c.h.b16 %v4052
  %v4330 = vunpack.c.l.b16 %v4053
  %v4331 = vunpack.c.h.b16 %v4053
  %v4332 = vunpack.c.l.b16 %v4054
  %v4333 = vunpack.c.h.b16 %v4054
  %v4334 = vunpack.c.l.b16 %v4055
  %v4335 = vunpack.c.h.b16 %v4055
  %v4336 = vunpack.c.l.b16 %v4056
  %v4337 = vunpack.c.h.b16 %v4056
  %v4338 = vunpack.c.l.b16 %v4057
  %v4339 = vunpack.c.h.b16 %v4057
  %v4340 = vunpack.c.l.b16 %v4058
  %v4341 = vunpack.c.h.b16 %v4058
  %v4342 = vunpack.c.l.b16 %v4059
  %v4343 = vunpack.c.h.b16 %v4059
  %v4344 = vunpack.c.l.b16 %v4060
  %v4345 = vunpack.c.h.b16 %v4060
  %v4346 = vunpack.c.l.b16 %v4061
  %v4347 = vunpack.c.h.b16 %v4061
  %v4348 = vunpack.c.l.b16 %v4062
  %v4349 = vunpack.c.h.b16 %v4062
  %v4350 = vunpack.c.l.b16 %v4063
  %v4351 = vunpack.c.h.b16 %v4063
  %v4352 = vunpack.c.l.b16 %v4064
  %v4353 = vunpack.c.h.b16 %v4064
  %v4354 = vunpack.c.l.b16 %v4065
  %v4355 = vunpack.c.h.b16 %v4065
  %v4356 = vunpack.c.l.b16 %v4066
  %v4357 = vunpack.c.h.b16 %v4066
  %v4358 = vunpack.c.l.b16 %v4067
  %v4359 = vunpack.c.h.b16 %v4067
  %v4360 = vunpack.c.l.b16 %v4068
  %v4361 = vunpack.c.h.b16 %v4068
  %v4362 = vunpack.c.l.b16 %v4069
  %v4363 = vunpack.c.h.b16 %v4069
  %v4364 = vunpack.c.l.b16 %v4070
  %v4365 = vunpack.c.h.b16 %v4070
  %v4366 = vunpack.c.l.b16 %v4071
  %v4367 = vunpack.c.h.b16 %v4071
  %v4368 = vunpack.c.l.b16 %v4072
  %v4369 = vunpack.c.h.b16 %v4072
  %v4370 = vunpack.c.l.b16 %v4073
  %v4371 = vunpack.c.h.b16 %v4073
  %v4372 = vunpack.c.l.b16 %v4074
  %v4373 = vunpack.c.h.b16 %v4074
  %v4374 = vunpack.c.l.b16 %v4075
  %v4375 = vunpack.c.h.b16 %v4075
  %v4376 = vunpack.c.l.b16 %v4076
  %v4377 = vunpack.c.h.b16 %v4076
  %v4378 = vunpack.c.l.b16 %v4077
  %v4379 = vunpack.c.h.b16 %v4077
  %v4380 = vunpack.c.l.b16 %v4078
  %v4381 = vunpack.c.h.b16 %v4078
  %v4382 = vunpack.c.l.b16 %v4079
  %v4383 = vunpack.c.h.b16 %v4079
  %v4384 = vunpack.c.l.b16 %v4080
  %v4385 = vunpack.c.h.b16 %v4080
  %v4386 = vunpack.c.l.b16 %v4081
  %v4387 = vunpack.c.h.b16 %v4081
  %v4388 = vunpack.c.l.b16 %v4082
  %v4389 = vunpack.c.h.b16 %v4082
  %v4390 = vunpack.c.l.b16 %v4083
  %v4391 = vunpack.c.h.b16 %v4083
  %v4392 = vunpack.c.l.b16 %v4084
  %v4393 = vunpack.c.h.b16 %v4084
  %v4394 = vunpack.c.l.b16 %v4085
  %v4395 = vunpack.c.h.b16 %v4085
  %v4396 = vunpack.c.l.b16 %v4086
  %v4397 = vunpack.c.h.b16 %v4086
  %v4398 = vunpack.c.l.b16 %v4087
  %v4399 = vunpack.c.h.b16 %v4087
  %v4400 = vunpack.c.l.b16 %v4088
  %v4401 = vunpack.c.h.b16 %v4088
  %v4402 = vunpack.c.l.b16 %v4089
  %v4403 = vunpack.c.h.b16 %v4089
  %v4404 = vunpack.c.l.b16 %v4090
  %v4405 = vunpack.c.h.b16 %v4090
  %v4406 = vunpack.c.l.b16 %v4091
  %v4407 = vunpack.c.h.b16 %v4091
  %v4408 = vunpack.c.l.b16 %v4092
  %v4409 = vunpack.c.h.b16 %v4092
  %v4410 = vunpack.c.l.b16 %v4093
  %v4411 = vunpack.c.h.b16 %v4093
  %v4412 = vunpack.c.l.b16 %v4094
  %v4413 = vunpack.c.h.b16 %v4094
  %v4414 = vunpack.c.l.b16 %v4095
  %v4415 = vunpack.c.h.b16 %v4095
  %v4416 = vunpack.c.l.b16 %v4096
  %v4417 = vunpack.c.h.b16 %v4096
  %v4418 = vunpack.c.l.b16 %v4097
  %v4419 = vunpack.c.h.b16 %v4097
  %v4420 = vunpack.c.l.b16 %v4098
  %v4421 = vunpack.c.h.b16 %v4098
  %v4422 = vunpack.c.l.b16 %v4099
  %v4423 = vunpack.c.h.b16 %v4099
  %v4424 = vunpack.c.l.b16 %v4100
  %v4425 = vunpack.c.h.b16 %v4100
  %v4426 = vunpack.c.l.b16 %v4101
  %v4427 = vunpack.c.h.b16 %v4101
  %v4428 = vunpack.c.l.b16 %v4102
  %v4429 = vunpack.c.h.b16 %v4102
  %v4430 = vunpack.c.l.b16 %v4103
  %v4431 = vunpack.c.h.b16 %v4103
  %v4432 = vunpack.c.l.b16 %v4104
  %v4433 = vunpack.c.h.b16 %v4104
  %v4434 = vunpack.c.l.b16 %v4105
  %v4435 = vunpack.c.h.b16 %v4105
  %v4436 = vunpack.c.l.b16 %v4106
  %v4437 = vunpack.c.h.b16 %v4106
  %v4438 = vunpack.c.l.b16 %v4107
  %v4439 = vunpack.c.h.b16 %v4107
  %v4440 = vunpack.c.l.b16 %v4108
  %v4441 = vunpack.c.h.b16 %v4108
  %v4442 = vunpack.c.l.b16 %v4109
  %v4443 = vunpack.c.h.b16 %v4109
  %v4444 = vunpack.c.l.b16 %v4110
  %v4445 = vunpack.c.h.b16 %v4110
  %v4446 = vunpack.c.l.b16 %v4111
  %v4447 = vunpack.c.h.b16 %v4111
  %v4448 = vunpack.c.l.b16 %v4112
  %v4449 = vunpack.c.h.b16 %v4112
  %v4450 = vunpack.c.l.b16 %v4113
  %v4451 = vunpack.c.h.b16 %v4113
  %v4452 = vunpack.c.l.b16 %v4114
  %v4453 = vunpack.c.h.b16 %v4114
  %v4454 = vpack.c.b16 %v4228, %v4228
  %v4455 = vpack.c.b16 %v4229, %v4229
  %v4456 = vpack.c.b16 %v4230, %v4230
  %v4457 = vpack.c.b16 %v4231, %v4231
  %v4458 = vpack.c.b16 %v4232, %v4232
  %v4459 = vpack.c.b16 %v4233, %v4233
  %v4460 = vpack.c.b16 %v4234, %v4234
  %v4461 = vpack.c.b16 %v4235, %v4235
  %v4462 = vpack.c.b16 %v4236, %v4236
  %v4463 = vpack.c.b16 %v4237, %v4237
  %v4464 = vpack.c.b16 %v4238, %v4238
  %v4465 = vpack.c.b16 %v4239, %v4239
  %v4466 = vpack.c.b16 %v4240, %v4240
  %v4467 = vpack.c.b16 %v4241, %v4241
  %v4468 = vpack.c.b16 %v4242, %v4242
  %v4469 = vpack.c.b16 %v4243, %v4243
  %v4470 = vpack.c.b16 %v4244, %v4244
  %v4471 = vpack.c.b16 %v4245, %v4245
  %v4472 = vpack.c.b16 %v4246, %v4246
  %v4473 = vpack.c.b16 %v4247, %v4247
  %v4474 = vpack.c.b16 %v4248, %v4248
  %v4475 = vpack.c.b16 %v4249, %v4249
  %v4476 = vpack.c.b16 %v4250, %v4250
  %v4477 = vpack.c.b16 %v4251, %v4251
  %v4478 = vpack.c.b16 %v4252, %v4252
  %v4479 = vpack.c.b16 %v4253, %v4253
  %v4480 = vpack.c.b16 %v4254, %v4254
  %v4481 = vpack.c.b16 %v4255, %v4255
  %v4482 = vpack.c.b16 %v4256, %v4256
  %v4483 = vpack.c.b16 %v4257, %v4257
  %v4484 = vpack.c.b16 %v4258, %v4258
  %v4485 = vpack.c.b16 %v4259, %v4259
  %v4486 = vpack.c.b16 %v4260, %v4260
  %v4487 = vpack.c.b16 %v4261, %v4261
  %v4488 = vpack.c.b16 %v4262, %v4262
  %v4489 = vpack.c.b16 %v4263, %v4263
  %v4490 = vpack.c.b16 %v4264, %v4264
  %v4491 = vpack.c.b16 %v4265, %v4265
  %v4492 = vpack.c.b16 %v4266, %v4266
  %v4493 = vpack.c.b16 %v4267, %v4267
  %v4494 = vpack.c.b16 %v4268, %v4268
  %v4495 = vpack.c.b16 %v4269, %v4269
  %v4496 = vpack.c.b16 %v4270, %v4270
  %v4497 = vpack.c.b16 %v4271, %v4271
  %v4498 = vpack.c.b16 %v4272, %v4272
  %v4499 = vpack.c.b16 %v4273, %v4273
  %v4500 = vpack.c.b16 %v4274, %v4274
  %v4501 = vpack.c.b16 %v4275, %v4275
  %v4502 = vpack.c.b16 %v4276, %v4276
  %v4503 = vpack.c.b16 %v4277, %v4277
  %v4504 = vpack.c.b16 %v4278, %v4278
  %v4505 = vpack.c.b16 %v4279, %v4279
  %v4506 = vpack.c.b16 %v4280, %v4280
  %v4507 = vpack.c.b16 %v4281, %v4281
  %v4508 = vpack.c.b16 %v4282, %v4282
  %v4509 = vpack.c.b16 %v4283, %v4283
  %v4510 = vpack.c.b16 %v4284, %v4284
  %v4511 = vpack.c.b16 %v4285, %v4285
  %v4512 = vpack.c.b16 %v4286, %v4286
  %v4513 = vpack.c.b16 %v4287, %v4287
  %v4514 = vpack.c.b16 %v4288, %v4288
  %v4515 = vpack.c.b16 %v4289, %v4289
  %v4516 = vpack.c.b16 %v4290, %v4290
  %v4517 = vpack.c.b16 %v4291, %v4291
  %v4518 = vpack.c.b16 %v4292, %v4292
  %v4519 = vpack.c.b16 %v4293, %v4293
  %v4520 = vpack.c.b16 %v4294, %v4294
  %v4521 = vpack.c.b16 %v4295, %v4295
  %v4522 = vpack.c.b16 %v4296, %v4296
  %v4523 = vpack.c.b16 %v4297, %v4297
  %v4524 = vpack.c.b16 %v4298, %v4298
  %v4525 = vpack.c.b16 %v4299, %v4299
  %v4526 = vpack.c.b16 %v4300, %v4300
  %v4527 = vpack.c.b16 %v4301, %v4301
  %v4528 = vpack.c.b16 %v4302, %v4302
  %v4529 = vpack.c.b16 %v4303, %v4303
  %v4530 = vpack.c.b16 %v4304, %v4304
  %v4531 = vpack.c.b16 %v4305, %v4305
  %v4532 = vpack.c.b16 %v4306, %v4306
  %v4533 = vpack.c.b16 %v4307, %v4307
  %v4534 = vpack.c.b16 %v4308, %v4308
  %v4535 = vpack.c.b16 %v4309, %v4309
  %v4536 = vpack.c.b16 %v4310, %v4310
  %v4537 = vpack.c.b16 %v4311, %v4311
  %v4538 = vpack.c.b16 %v4312, %v4312
  %v4539 = vpack.c.b16 %v4313, %v4313
  %v4540 = vpack.c.b16 %v4314, %v4314
  %v4541 = vpack.c.b16 %v4315, %v4315
  %v4542 = vpack.c.b16 %v4316, %v4316
  %v4543 = vpack.c.b16 %v4317, %v4317
  %v4544 = vpack.c.b16 %v4318, %v4318
  %v4545 = vpack.c.b16 %v4319, %v4319
  %v4546 = vpack.c.b16 %v4320, %v4320
  %v4547 = vpack.c.b16 %v4321, %v4321
  %v4548 = vpack.c.b16 %v4322, %v4322
  %v4549 = vpack.c.b16 %v4323, %v4323
  %v4550 = vpack.c.b16 %v4324, %v4324
  %v4551 = vpack.c.b16 %v4325, %v4325
  %v4552 = vpack.c.b16 %v4326, %v4326
  %v4553 = vpack.c.b16 %v4327, %v4327
  %v4554 = vpack.c.b16 %v4328, %v4328
  %v4555 = vpack.c.b16 %v4329, %v4329
  %v4556 = vpack.c.b16 %v4330, %v4330
  %v4557 = vpack.c.b16 %v4331, %v4331
  %v4558 = vpack.c.b16 %v4332, %v4332
  %v4559 = vpack.c.b16 %v4333, %v4333
  %v4560 = vpack.c.b16 %v4334, %v4334
  %v4561 = vpack.c.b16 %v4335, %v4335
  %v4562 = vpack.c.b16 %v4336, %v4336
  %v4563 = vpack.c.b16 %v4337, %v4337
  %v4564 = vpack.c.b16 %v4338, %v4338
  %v4565 = vpack.c.b16 %v4339, %v4339
  %v4566 = vpack.c.b16 %v4340, %v4340
  %v4567 = vpack.c.b16 %v4341, %v4341
  %v4568 = vpack.c.b16 %v4342, %v4342
  %v4569 = vpack.c.b16 %v4343, %v4343
  %v4570 = vpack.c.b16 %v4344, %v4344
  %v4571 = vpack.c.b16 %v4345, %v4345
  %v4572 = vpack.c.b16 %v4346, %v4346
  %v4573 = vpack.c.b16 %v4347, %v4347
  %v4574 = vpack.c.b16 %v4348, %v4348
  %v4575 = vpack.c.b16 %v4349, %v4349
  %v4576 = vpack.c.b16 %v4350, %v4350
  %v4577 = vpack.c.b16 %v4351, %v4351
  %v4578 = vpack.c.b16 %v4352, %v4352
  %v4579 = vpack.c.b16 %v4353, %v4353
  %v4580 = vpack.c.b16 %v4354, %v4354
  %v4581 = vpack.c.b16 %v4355, %v4355
  %v4582 = vpack.c.b16 %v4356, %v4356
  %v4583 = vpack.c.b16 %v4357, %v4357
  %v4584 = vpack.c.b16 %v4358, %v4358
  %v4585 = vpack.c.b16 %v4359, %v4359
  %v4586 = vpack.c.b16 %v4360, %v4360
  %v4587 = vpack.c.b16 %v4361, %v4361
  %v4588 = vpack.c.b16 %v4362, %v4362
  %v4589 = vpack.c.b16 %v4363, %v4363
  %v4590 = vpack.c.b16 %v4364, %v4364
  %v4591 = vpack.c.b16 %v4365, %v4365
  %v4592 = vpack.c.b16 %v4366, %v4366
  %v4593 = vpack.c.b16 %v4367, %v4367
  %v4594 = vpack.c.b16 %v4368, %v4368
  %v4595 = vpack.c.b16 %v4369, %v4369
  %v4596 = vpack.c.b16 %v4370, %v4370
  %v4597 = vpack.c.b16 %v4371, %v4371
  %v4598 = vpack.c.b16 %v4372, %v4372
  %v4599 = vpack.c.b16 %v4373, %v4373
  %v4600 = vpack.c.b16 %v4374, %v4374
  %v4601 = vpack.c.b16 %v4375, %v4375
  %v4602 = vpack.c.b16 %v4376, %v4376
  %v4603 = vpack.c.b16 %v4377, %v4377
  %v4604 = vpack.c.b16 %v4378, %v4378
  %v4605 = vpack.c.b16 %v4379, %v4379
  %v4606 = vpack.c.b16 %v4380, %v4380
  %v4607 = vpack.c.b16 %v4381, %v4381
  %v4608 = vpack.c.b16 %v4382, %v4382
  %v4609 = vpack.c.b16 %v4383, %v4383
  %v4610 = vpack.c.b16 %v4384, %v4384
  %v4611 = vpack.c.b16 %v4385, %v4385
  %v4612 = vpack.c.b16 %v4386, %v4386
  %v4613 = vpack.c.b16 %v4387, %v4387
  %v4614 = vpack.c.b16 %v4388, %v4388
  %v4615 = vpack.c.b16 %v4389, %v4389
  %v4616 = vpack.c.b16 %v4390, %v4390
  %v4617 = vpack.c.b16 %v4391, %v4391
  %v4618 = vpack.c.b16 %v4392, %v4392
  %v4619 = vpack.c.b16 %v4393, %v4393
  %v4620 = vpack.c.b16 %v4394, %v4394
  %v4621 = vpack.c.b16 %v4395, %v4395
  %v4622 = vpack.c.b16 %v4396, %v4396
  %v4623 = vpack.c.b16 %v4397, %v4397
  %v4624 = vpack.c.b16 %v4398, %v4398
  %v4625 = vpack.c.b16 %v4399, %v4399
  %v4626 = vpack.c.b16 %v4400, %v4400
  %v4627 = vpack.c.b16 %v4401, %v4401
  %v4628 = vpack.c.b16 %v4402, %v4402
  %v4629 = vpack.c.b16 %v4403, %v4403
  %v4630 = vpack.c.b16 %v4404, %v4404
  %v4631 = vpack.c.b16 %v4405, %v4405
  %v4632 = vpack.c.b16 %v4406, %v4406
  %v4633 = vpack.c.b16 %v4407, %v4407
  %v4634 = vpack.c.b16 %v4408, %v4408
  %v4635 = vpack.c.b16 %v4409, %v4409
  %v4636 = vpack.c.b16 %v4410, %v4410
  %v4637 = vpack.c.b16 %v4411, %v4411
  %v4638 = vpack.c.b16 %v4412, %v4412
  %v4639 = vpack.c.b16 %v4413, %v4413
  %v4640 = vpack.c.b16 %v4414, %v4414
  %v4641 = vpack.c.b16 %v4415, %v4415
  %v4642 = vpack.c.b16 %v4416, %v4416
  %v4643 = vpack.c.b16 %v4417, %v4417
  %v4644 = vpack.c.b16 %v4418, %v4418
  %v4645 = vpack.c.b16 %v4419, %v4419
  %v4646 = vpack.c.b16 %v4420, %v4420
  %v4647 = vpack.c.b16 %v4421, %v4421
  %v4648 = vpack.c.b16 %v4422, %v4422
  %v4649 = vpack.c.b16 %v4423, %v4423
  %v4650 = vpack.c.b16 %v4424, %v4424
  %v4651 = vpack.c.b16 %v4425, %v4425
  %v4652 = vpack.c.b16 %v4426, %v4426
  %v4653 = vpack.c.b16 %v4427, %v4427
  %v4654 = vpack.c.b16 %v4428, %v4428
  %v4655 = vpack.c.b16 %v4429, %v4429
  %v4656 = vpack.c.b16 %v4430, %v4430
  %v4657 = vpack.c.b16 %v4431, %v4431
  %v4658 = vpack.c.b16 %v4432, %v4432
  %v4659 = vpack.c.b16 %v4433, %v4433
  %v4660 = vpack.c.b16 %v4434, %v4434
  %v4661 = vpack.c.b16 %v4435, %v4435
  %v4662 = vpack.c.b16 %v4436, %v4436
  %v4663 = vpack.c.b16 %v4437, %v4437
  %v4664 = vpack.c.b16 %v4438, %v4438
  %v4665 = vpack.c.b16 %v4439, %v4439
  %v4666 = vpack.c.b16 %v4440, %v4440
  %v4667 = vpack.c.b16 %v4441, %v4441
  %v4668 = vpack.c.b16 %v4442, %v4442
  %v4669 = vpack.c.b16 %v4443, %v4443
  %v4670 = vpack.c.b16 %v4444, %v4444
  %v4671 = vpack.c.b16 %v4445, %v4445
  %v4672 = vpack.c.b16 %v4446, %v4446
  %v4673 = vpack.c.b16 %v4447, %v4447
  %v4674 = vpack.c.b16 %v4448, %v4448
  %v4675 = vpack.c.b16 %v4449, %v4449
  %v4676 = vpack.c.b16 %v4450, %v4450
  %v4677 = vpack.c.b16 %v4451, %v4451
  %v4678 = vpack.c.b16 %v4452, %v4452
  %v4679 = vpack.c.b16 %v4453, %v4453
  %4906 = vst [vmem:[%s5] sm:$0xf] %v4454
  %4907 = vst [vmem:[%s5 + $0x4] sm:$0xf] %v4455
  %4908 = vst [vmem:[%s5 + $0x8] sm:$0xf] %v4456
  %4909 = vst [vmem:[%s5 + $0xc] sm:$0xf] %v4457
  %4910 = vst [vmem:[%s5 + $0x10] sm:$0xf] %v4458
  %4911 = vst [vmem:[%s5 + $0x14] sm:$0xf] %v4459
  %4912 = vst [vmem:[%s5 + $0x18] sm:$0xf] %v4460
  %4913 = vst [vmem:[%s5 + $0x1c] sm:$0xf] %v4461
  %4914 = vst [vmem:[%s5 + $0x20] sm:$0xf] %v4462
  %4915 = vst [vmem:[%s5 + $0x24] sm:$0xf] %v4463
  %4916 = vst [vmem:[%s5 + $0x28] sm:$0xf] %v4464
  %4917 = vst [vmem:[%s5 + $0x2c] sm:$0xf] %v4465
  %4918 = vst [vmem:[%s5 + $0x30] sm:$0xf] %v4466
  %4919 = vst [vmem:[%s5 + $0x34] sm:$0xf] %v4467
  %4920 = vst [vmem:[%s5 + $0x38] sm:$0xf] %v4468
  %4921 = vst [vmem:[%s5 + $0x3c] sm:$0xf] %v4469
  %4922 = vst [vmem:[%s5 + $0x40] sm:$0xf] %v4470
  %4923 = vst [vmem:[%s5 + $0x44] sm:$0xf] %v4471
  %4924 = vst [vmem:[%s5 + $0x48] sm:$0xf] %v4472
  %4925 = vst [vmem:[%s5 + $0x4c] sm:$0xf] %v4473
  %4926 = vst [vmem:[%s5 + $0x50] sm:$0xf] %v4474
  %4927 = vst [vmem:[%s5 + $0x54] sm:$0xf] %v4475
  %4928 = vst [vmem:[%s5 + $0x58] sm:$0xf] %v4476
  %4929 = vst [vmem:[%s5 + $0x5c] sm:$0xf] %v4477
  %4930 = vst [vmem:[%s5 + $0x60] sm:$0xf] %v4478
  %4931 = vst [vmem:[%s5 + $0x64] sm:$0xf] %v4479
  %4932 = vst [vmem:[%s5 + $0x68] sm:$0xf] %v4480
  %4933 = vst [vmem:[%s5 + $0x6c] sm:$0xf] %v4481
  %4934 = vst [vmem:[%s5 + $0x70] sm:$0xf] %v4482
  %4935 = vst [vmem:[%s5 + $0x74] sm:$0xf] %v4483
  %4936 = vst [vmem:[%s5 + $0x78] sm:$0xf] %v4484
  %4937 = vst [vmem:[%s5 + $0x7c] sm:$0xf] %v4485
  %4938 = vst [vmem:[%s5 + $0x80] sm:$0xf] %v4486
  %4939 = vst [vmem:[%s5 + $0x84] sm:$0xf] %v4487
  %4940 = vst [vmem:[%s5 + $0x88] sm:$0xf] %v4488
  %4941 = vst [vmem:[%s5 + $0x8c] sm:$0xf] %v4489
  %4942 = vst [vmem:[%s5 + $0x90] sm:$0xf] %v4490
  %4943 = vst [vmem:[%s5 + $0x94] sm:$0xf] %v4491
  %4944 = vst [vmem:[%s5 + $0x98] sm:$0xf] %v4492
  %4945 = vst [vmem:[%s5 + $0x9c] sm:$0xf] %v4493
  %4946 = vst [vmem:[%s5 + $0xa0] sm:$0xf] %v4494
  %4947 = vst [vmem:[%s5 + $0xa4] sm:$0xf] %v4495
  %4948 = vst [vmem:[%s5 + $0xa8] sm:$0xf] %v4496
  %4949 = vst [vmem:[%s5 + $0xac] sm:$0xf] %v4497
  %4950 = vst [vmem:[%s5 + $0xb0] sm:$0xf] %v4498
  %4951 = vst [vmem:[%s5 + $0xb4] sm:$0xf] %v4499
  %4952 = vst [vmem:[%s5 + $0xb8] sm:$0xf] %v4500
  %4953 = vst [vmem:[%s5 + $0xbc] sm:$0xf] %v4501
  %4954 = vst [vmem:[%s5 + $0xc0] sm:$0xf] %v4502
  %4955 = vst [vmem:[%s5 + $0xc4] sm:$0xf] %v4503
  %4956 = vst [vmem:[%s5 + $0xc8] sm:$0xf] %v4504
  %4957 = vst [vmem:[%s5 + $0xcc] sm:$0xf] %v4505
  %4958 = vst [vmem:[%s5 + $0xd0] sm:$0xf] %v4506
  %4959 = vst [vmem:[%s5 + $0xd4] sm:$0xf] %v4507
  %4960 = vst [vmem:[%s5 + $0xd8] sm:$0xf] %v4508
  %4961 = vst [vmem:[%s5 + $0xdc] sm:$0xf] %v4509
  %4962 = vst [vmem:[%s5 + $0xe0] sm:$0xf] %v4510
  %4963 = vst [vmem:[%s5 + $0xe4] sm:$0xf] %v4511
  %4964 = vst [vmem:[%s5 + $0xe8] sm:$0xf] %v4512
  %4965 = vst [vmem:[%s5 + $0xec] sm:$0xf] %v4513
  %4966 = vst [vmem:[%s5 + $0xf0] sm:$0xf] %v4514
  %4967 = vst [vmem:[%s5 + $0xf4] sm:$0xf] %v4515
  %4968 = vst [vmem:[%s5 + $0xf8] sm:$0xf] %v4516
  %4969 = vst [vmem:[%s5 + $0xfc] sm:$0xf] %v4517
  %4970 = vst [vmem:[%s5 + $0x100] sm:$0xf] %v4518
  %4971 = vst [vmem:[%s5 + $0x104] sm:$0xf] %v4519
  %4972 = vst [vmem:[%s5 + $0x108] sm:$0xf] %v4520
  %4973 = vst [vmem:[%s5 + $0x10c] sm:$0xf] %v4521
  %4974 = vst [vmem:[%s5 + $0x110] sm:$0xf] %v4522
  %4975 = vst [vmem:[%s5 + $0x114] sm:$0xf] %v4523
  %4976 = vst [vmem:[%s5 + $0x118] sm:$0xf] %v4524
  %4977 = vst [vmem:[%s5 + $0x11c] sm:$0xf] %v4525
  %4978 = vst [vmem:[%s5 + $0x120] sm:$0xf] %v4526
  %4979 = vst [vmem:[%s5 + $0x124] sm:$0xf] %v4527
  %4980 = vst [vmem:[%s5 + $0x128] sm:$0xf] %v4528
  %4981 = vst [vmem:[%s5 + $0x12c] sm:$0xf] %v4529
  %4982 = vst [vmem:[%s5 + $0x130] sm:$0xf] %v4530
  %4983 = vst [vmem:[%s5 + $0x134] sm:$0xf] %v4531
  %4984 = vst [vmem:[%s5 + $0x138] sm:$0xf] %v4532
  %4985 = vst [vmem:[%s5 + $0x13c] sm:$0xf] %v4533
  %4986 = vst [vmem:[%s5 + $0x140] sm:$0xf] %v4534
  %4987 = vst [vmem:[%s5 + $0x144] sm:$0xf] %v4535
  %4988 = vst [vmem:[%s5 + $0x148] sm:$0xf] %v4536
  %4989 = vst [vmem:[%s5 + $0x14c] sm:$0xf] %v4537
  %4990 = vst [vmem:[%s5 + $0x150] sm:$0xf] %v4538
  %4991 = vst [vmem:[%s5 + $0x154] sm:$0xf] %v4539
  %4992 = vst [vmem:[%s5 + $0x158] sm:$0xf] %v4540
  %4993 = vst [vmem:[%s5 + $0x15c] sm:$0xf] %v4541
  %4994 = vst [vmem:[%s5 + $0x160] sm:$0xf] %v4542
  %4995 = vst [vmem:[%s5 + $0x164] sm:$0xf] %v4543
  %4996 = vst [vmem:[%s5 + $0x168] sm:$0xf] %v4544
  %4997 = vst [vmem:[%s5 + $0x16c] sm:$0xf] %v4545
  %4998 = vst [vmem:[%s5 + $0x170] sm:$0xf] %v4546
  %4999 = vst [vmem:[%s5 + $0x174] sm:$0xf] %v4547
  %5000 = vst [vmem:[%s5 + $0x178] sm:$0xf] %v4548
  %5001 = vst [vmem:[%s5 + $0x17c] sm:$0xf] %v4549
  %5002 = vst [vmem:[%s5 + $0x180] sm:$0xf] %v4550
  %5003 = vst [vmem:[%s5 + $0x184] sm:$0xf] %v4551
  %5004 = vst [vmem:[%s5 + $0x188] sm:$0xf] %v4552
  %5005 = vst [vmem:[%s5 + $0x18c] sm:$0xf] %v4553
  %5006 = vst [vmem:[%s5 + $0x190] sm:$0xf] %v4554
  %5007 = vst [vmem:[%s5 + $0x194] sm:$0xf] %v4555
  %5008 = vst [vmem:[%s5 + $0x198] sm:$0xf] %v4556
  %5009 = vst [vmem:[%s5 + $0x19c] sm:$0xf] %v4557
  %5010 = vst [vmem:[%s5 + $0x1a0] sm:$0xf] %v4558
  %5011 = vst [vmem:[%s5 + $0x1a4] sm:$0xf] %v4559
  %5012 = vst [vmem:[%s5 + $0x1a8] sm:$0xf] %v4560
  %5013 = vst [vmem:[%s5 + $0x1ac] sm:$0xf] %v4561
  %5014 = vst [vmem:[%s5 + $0x1b0] sm:$0xf] %v4562
  %5015 = vst [vmem:[%s5 + $0x1b4] sm:$0xf] %v4563
  %5016 = vst [vmem:[%s5 + $0x1b8] sm:$0xf] %v4564
  %5017 = vst [vmem:[%s5 + $0x1bc] sm:$0xf] %v4565
  %5018 = vst [vmem:[%s5 + $0x1c0] sm:$0xf] %v4566
  %5019 = vst [vmem:[%s5 + $0x1c4] sm:$0xf] %v4567
  %5020 = vst [vmem:[%s5 + $0x1c8] sm:$0xf] %v4568
  %5021 = vst [vmem:[%s5 + $0x1cc] sm:$0xf] %v4569
  %5022 = vst [vmem:[%s5 + $0x1d0] sm:$0xf] %v4570
  %5023 = vst [vmem:[%s5 + $0x1d4] sm:$0xf] %v4571
  %5024 = vst [vmem:[%s5 + $0x1d8] sm:$0xf] %v4572
  %5025 = vst [vmem:[%s5 + $0x1dc] sm:$0xf] %v4573
  %5026 = vst [vmem:[%s5 + $0x1e0] sm:$0xf] %v4574
  %5027 = vst [vmem:[%s5 + $0x1e4] sm:$0xf] %v4575
  %5028 = vst [vmem:[%s5 + $0x1e8] sm:$0xf] %v4576
  %5029 = vst [vmem:[%s5 + $0x1ec] sm:$0xf] %v4577
  %5030 = vst [vmem:[%s5 + $0x1f0] sm:$0xf] %v4578
  %5031 = vst [vmem:[%s5 + $0x1f4] sm:$0xf] %v4579
  %5032 = vst [vmem:[%s5 + $0x1f8] sm:$0xf] %v4580
  %5033 = vst [vmem:[%s5 + $0x1fc] sm:$0xf] %v4581
  %5034 = vst [vmem:[%s5 + $0x200] sm:$0xf] %v4582
  %5035 = vst [vmem:[%s5 + $0x204] sm:$0xf] %v4583
  %5036 = vst [vmem:[%s5 + $0x208] sm:$0xf] %v4584
  %5037 = vst [vmem:[%s5 + $0x20c] sm:$0xf] %v4585
  %5038 = vst [vmem:[%s5 + $0x210] sm:$0xf] %v4586
  %5039 = vst [vmem:[%s5 + $0x214] sm:$0xf] %v4587
  %5040 = vst [vmem:[%s5 + $0x218] sm:$0xf] %v4588
  %5041 = vst [vmem:[%s5 + $0x21c] sm:$0xf] %v4589
  %5042 = vst [vmem:[%s5 + $0x220] sm:$0xf] %v4590
  %5043 = vst [vmem:[%s5 + $0x224] sm:$0xf] %v4591
  %5044 = vst [vmem:[%s5 + $0x228] sm:$0xf] %v4592
  %5045 = vst [vmem:[%s5 + $0x22c] sm:$0xf] %v4593
  %5046 = vst [vmem:[%s5 + $0x230] sm:$0xf] %v4594
  %5047 = vst [vmem:[%s5 + $0x234] sm:$0xf] %v4595
  %5048 = vst [vmem:[%s5 + $0x238] sm:$0xf] %v4596
  %5049 = vst [vmem:[%s5 + $0x23c] sm:$0xf] %v4597
  %5050 = vst [vmem:[%s5 + $0x240] sm:$0xf] %v4598
  %5051 = vst [vmem:[%s5 + $0x244] sm:$0xf] %v4599
  %5052 = vst [vmem:[%s5 + $0x248] sm:$0xf] %v4600
  %5053 = vst [vmem:[%s5 + $0x24c] sm:$0xf] %v4601
  %5054 = vst [vmem:[%s5 + $0x250] sm:$0xf] %v4602
  %5055 = vst [vmem:[%s5 + $0x254] sm:$0xf] %v4603
  %5056 = vst [vmem:[%s5 + $0x258] sm:$0xf] %v4604
  %5057 = vst [vmem:[%s5 + $0x25c] sm:$0xf] %v4605
  %5058 = vst [vmem:[%s5 + $0x260] sm:$0xf] %v4606
  %5059 = vst [vmem:[%s5 + $0x264] sm:$0xf] %v4607
  %5060 = vst [vmem:[%s5 + $0x268] sm:$0xf] %v4608
  %5061 = vst [vmem:[%s5 + $0x26c] sm:$0xf] %v4609
  %5062 = vst [vmem:[%s5 + $0x270] sm:$0xf] %v4610
  %5063 = vst [vmem:[%s5 + $0x274] sm:$0xf] %v4611
  %5064 = vst [vmem:[%s5 + $0x278] sm:$0xf] %v4612
  %5065 = vst [vmem:[%s5 + $0x27c] sm:$0xf] %v4613
  %5066 = vst [vmem:[%s5 + $0x280] sm:$0xf] %v4614
  %5067 = vst [vmem:[%s5 + $0x284] sm:$0xf] %v4615
  %5068 = vst [vmem:[%s5 + $0x288] sm:$0xf] %v4616
  %5069 = vst [vmem:[%s5 + $0x28c] sm:$0xf] %v4617
  %5070 = vst [vmem:[%s5 + $0x290] sm:$0xf] %v4618
  %5071 = vst [vmem:[%s5 + $0x294] sm:$0xf] %v4619
  %5072 = vst [vmem:[%s5 + $0x298] sm:$0xf] %v4620
  %5073 = vst [vmem:[%s5 + $0x29c] sm:$0xf] %v4621
  %5074 = vst [vmem:[%s5 + $0x2a0] sm:$0xf] %v4622
  %5075 = vst [vmem:[%s5 + $0x2a4] sm:$0xf] %v4623
  %5076 = vst [vmem:[%s5 + $0x2a8] sm:$0xf] %v4624
  %5077 = vst [vmem:[%s5 + $0x2ac] sm:$0xf] %v4625
  %5078 = vst [vmem:[%s5 + $0x2b0] sm:$0xf] %v4626
  %5079 = vst [vmem:[%s5 + $0x2b4] sm:$0xf] %v4627
  %5080 = vst [vmem:[%s5 + $0x2b8] sm:$0xf] %v4628
  %5081 = vst [vmem:[%s5 + $0x2bc] sm:$0xf] %v4629
  %5082 = vst [vmem:[%s5 + $0x2c0] sm:$0xf] %v4630
  %5083 = vst [vmem:[%s5 + $0x2c4] sm:$0xf] %v4631
  %5084 = vst [vmem:[%s5 + $0x2c8] sm:$0xf] %v4632
  %5085 = vst [vmem:[%s5 + $0x2cc] sm:$0xf] %v4633
  %5086 = vst [vmem:[%s5 + $0x2d0] sm:$0xf] %v4634
  %5087 = vst [vmem:[%s5 + $0x2d4] sm:$0xf] %v4635
  %5088 = vst [vmem:[%s5 + $0x2d8] sm:$0xf] %v4636
  %5089 = vst [vmem:[%s5 + $0x2dc] sm:$0xf] %v4637
  %5090 = vst [vmem:[%s5 + $0x2e0] sm:$0xf] %v4638
  %5091 = vst [vmem:[%s5 + $0x2e4] sm:$0xf] %v4639
  %5092 = vst [vmem:[%s5 + $0x2e8] sm:$0xf] %v4640
  %5093 = vst [vmem:[%s5 + $0x2ec] sm:$0xf] %v4641
  %5094 = vst [vmem:[%s5 + $0x2f0] sm:$0xf] %v4642
  %5095 = vst [vmem:[%s5 + $0x2f4] sm:$0xf] %v4643
  %5096 = vst [vmem:[%s5 + $0x2f8] sm:$0xf] %v4644
  %5097 = vst [vmem:[%s5 + $0x2fc] sm:$0xf] %v4645
  %5098 = vst [vmem:[%s5 + $0x300] sm:$0xf] %v4646
  %5099 = vst [vmem:[%s5 + $0x304] sm:$0xf] %v4647
  %5100 = vst [vmem:[%s5 + $0x308] sm:$0xf] %v4648
  %5101 = vst [vmem:[%s5 + $0x30c] sm:$0xf] %v4649
  %5102 = vst [vmem:[%s5 + $0x310] sm:$0xf] %v4650
  %5103 = vst [vmem:[%s5 + $0x314] sm:$0xf] %v4651
  %5104 = vst [vmem:[%s5 + $0x318] sm:$0xf] %v4652
  %5105 = vst [vmem:[%s5 + $0x31c] sm:$0xf] %v4653
  %5106 = vst [vmem:[%s5 + $0x320] sm:$0xf] %v4654
  %5107 = vst [vmem:[%s5 + $0x324] sm:$0xf] %v4655
  %5108 = vst [vmem:[%s5 + $0x328] sm:$0xf] %v4656
  %5109 = vst [vmem:[%s5 + $0x32c] sm:$0xf] %v4657
  %5110 = vst [vmem:[%s5 + $0x330] sm:$0xf] %v4658
  %5111 = vst [vmem:[%s5 + $0x334] sm:$0xf] %v4659
  %5112 = vst [vmem:[%s5 + $0x338] sm:$0xf] %v4660
  %5113 = vst [vmem:[%s5 + $0x33c] sm:$0xf] %v4661
  %5114 = vst [vmem:[%s5 + $0x340] sm:$0xf] %v4662
  %5115 = vst [vmem:[%s5 + $0x344] sm:$0xf] %v4663
  %5116 = vst [vmem:[%s5 + $0x348] sm:$0xf] %v4664
  %5117 = vst [vmem:[%s5 + $0x34c] sm:$0xf] %v4665
  %5118 = vst [vmem:[%s5 + $0x350] sm:$0xf] %v4666
  %5119 = vst [vmem:[%s5 + $0x354] sm:$0xf] %v4667
  %5120 = vst [vmem:[%s5 + $0x358] sm:$0xf] %v4668
  %5121 = vst [vmem:[%s5 + $0x35c] sm:$0xf] %v4669
  %5122 = vst [vmem:[%s5 + $0x360] sm:$0xf] %v4670
  %5123 = vst [vmem:[%s5 + $0x364] sm:$0xf] %v4671
  %5124 = vst [vmem:[%s5 + $0x368] sm:$0xf] %v4672
  %5125 = vst [vmem:[%s5 + $0x36c] sm:$0xf] %v4673
  %5126 = vst [vmem:[%s5 + $0x370] sm:$0xf] %v4674
  %5127 = vst [vmem:[%s5 + $0x374] sm:$0xf] %v4675
  %5128 = vst [vmem:[%s5 + $0x378] sm:$0xf] %v4676
  %5129 = vst [vmem:[%s5 + $0x37c] sm:$0xf] %v4677
  %5130 = vst [vmem:[%s5 + $0x380] sm:$0xf] %v4678
  %5131 = vst [vmem:[%s5 + $0x384] sm:$0xf] %v4679
  // Predicated region
  $region22: #{_net_forward.10} parent=0 // pred_check
    _
  $region23: #{_net_forward.10} parent=0 // pred_check_branch
    %5133 = sbr.rel (0) target = $region25
  $region24: #{_net_forward.10} parent=0 // pred_region
    _
  $region25: #{_net_forward.10} parent=0 // pred_fallthru
    _
  // Predicated region
  $region26: #{_net_forward.10} parent=0 // pred_check
    _
  $region27: #{_net_forward.10} parent=0 // pred_check_branch
    %5135 = sbr.rel (0) target = $region29
  $region28: #{_net_forward.10} parent=0 // pred_region
    _
  $region29: #{_net_forward.10} parent=0 // pred_fallthru
    _

// kernel: _net_forward.11
$region0: #{_net_forward.11}
  #allocation0 [shape = 'u32[]', space=smem, size = 0x4, offset = 0x4, fixed_abs, tag = 'smem constant byte address 0x4 - core index']
  #allocation1 [shape = 'u32[144,128]{1,0:T(1,128)}', space=vmem, size = 0x12000, scoped, tag = 'internal scratch']
  %s0 = inlined_call_operand.vmem [shape: bf16[464,256], index: 0, kind: input, shape index: {}]
  %s1 = inlined_call_operand.vmem [shape: bf16[256,128], index: 1, kind: input, shape index: {}]
  %s2 = inlined_call_operand.vmem [shape: f32[1,128], index: 2, kind: input, shape index: {}]
  %s3 = inlined_call_operand.vmem [shape: f32[1,128], index: 3, kind: input, shape index: {}]
  %s4 = inlined_call_operand.vmem [shape: f32[1,128], index: 4, kind: input, shape index: {}]
  %s5 = inlined_call_operand.vmem [shape: bf16[464,128], index: 5, kind: output, shape index: {}]
  %s6 = sld [smem:[#allocation0]]
  $region30: #{_net_forward.11} parent=0
    _
  %s8 = ssub.s32 1, %s6
  %s9 = scalar_select 0, %s8, %s6
  // Predicated region
  $region2: #{_net_forward.11} parent=0 // pred_check
    _
  $region3: #{_net_forward.11} parent=0 // pred_check_branch
    %11 = sbr.rel (0) target = $region5
  $region4: #{_net_forward.11} parent=0 // pred_region
    _
  $region5: #{_net_forward.11} parent=0 // pred_fallthru
    _
  // Predicated region
  $region6: #{_net_forward.11} parent=0 // pred_check
    _
  $region7: #{_net_forward.11} parent=0 // pred_check_branch
    %13 = sbr.rel (0) target = $region9
  $region8: #{_net_forward.11} parent=0 // pred_region
    _
  $region9: #{_net_forward.11} parent=0 // pred_fallthru
    _
  // Predicated region
  $region10: #{_net_forward.11} parent=0 // pred_check
    _
  $region11: #{_net_forward.11} parent=0 // pred_check_branch
    %15 = sbr.rel (0) target = $region13
  $region12: #{_net_forward.11} parent=0 // pred_region
    _
  $region13: #{_net_forward.11} parent=0 // pred_fallthru
    _
  // Predicated region
  $region14: #{_net_forward.11} parent=0 // pred_check
    _
  $region15: #{_net_forward.11} parent=0 // pred_check_branch
    %17 = sbr.rel (0) target = $region17
  $region16: #{_net_forward.11} parent=0 // pred_region
    _
  $region17: #{_net_forward.11} parent=0 // pred_fallthru
    _
  // Predicated region
  $region18: #{_net_forward.11} parent=0 // pred_check
    _
  $region19: #{_net_forward.11} parent=0 // pred_check_branch
    %19 = sbr.rel (0) target = $region21
  $region20: #{_net_forward.11} parent=0 // pred_region
    _
  $region21: #{_net_forward.11} parent=0 // pred_fallthru
    _
  %v21 = vld [vmem:[%s0] sm:$0xff]
  %v22 = vld [vmem:[%s0 + $0x8] sm:$0xff]
  %v23 = vld [vmem:[%s0 + $0x10] sm:$0xff]
  %v24 = vld [vmem:[%s0 + $0x18] sm:$0xff]
  %v25 = vld [vmem:[%s0 + $0x20] sm:$0xff]
  %v26 = vld [vmem:[%s0 + $0x28] sm:$0xff]
  %v27 = vld [vmem:[%s0 + $0x30] sm:$0xff]
  %v28 = vld [vmem:[%s0 + $0x38] sm:$0xff]
  %v29 = vld [vmem:[%s0 + $0x40] sm:$0xff]
  %v30 = vld [vmem:[%s0 + $0x48] sm:$0xff]
  %v31 = vld [vmem:[%s0 + $0x50] sm:$0xff]
  %v32 = vld [vmem:[%s0 + $0x58] sm:$0xff]
  %v33 = vld [vmem:[%s0 + $0x60] sm:$0xff]
  %v34 = vld [vmem:[%s0 + $0x68] sm:$0xff]
  %v35 = vld [vmem:[%s0 + $0x70] sm:$0xff]
  %v36 = vld [vmem:[%s0 + $0x78] sm:$0xff]
  %v37 = vld [vmem:[%s0 + $0x80] sm:$0xff]
  %v38 = vld [vmem:[%s0 + $0x88] sm:$0xff]
  %v39 = vld [vmem:[%s0 + $0x90] sm:$0xff]
  %v40 = vld [vmem:[%s0 + $0x98] sm:$0xff]
  %v41 = vld [vmem:[%s0 + $0xa0] sm:$0xff]
  %v42 = vld [vmem:[%s0 + $0xa8] sm:$0xff]
  %v43 = vld [vmem:[%s0 + $0xb0] sm:$0xff]
  %v44 = vld [vmem:[%s0 + $0xb8] sm:$0xff]
  %v45 = vld [vmem:[%s0 + $0xc0] sm:$0xff]
  %v46 = vld [vmem:[%s0 + $0xc8] sm:$0xff]
  %v47 = vld [vmem:[%s0 + $0xd0] sm:$0xff]
  %v48 = vld [vmem:[%s0 + $0xd8] sm:$0xff]
  %v49 = vld [vmem:[%s0 + $0xe0] sm:$0xff]
  %v50 = vld [vmem:[%s0 + $0xe8] sm:$0xff]
  %v51 = vld [vmem:[%s0 + $0xf0] sm:$0xff]
  %v52 = vld [vmem:[%s0 + $0xf8] sm:$0xff]
  %v53 = vld [vmem:[%s0 + $0x100] sm:$0xff]
  %v54 = vld [vmem:[%s0 + $0x108] sm:$0xff]
  %v55 = vld [vmem:[%s0 + $0x110] sm:$0xff]
  %v56 = vld [vmem:[%s0 + $0x118] sm:$0xff]
  %v57 = vld [vmem:[%s0 + $0x120] sm:$0xff]
  %v58 = vld [vmem:[%s0 + $0x128] sm:$0xff]
  %v59 = vld [vmem:[%s0 + $0x130] sm:$0xff]
  %v60 = vld [vmem:[%s0 + $0x138] sm:$0xff]
  %v61 = vld [vmem:[%s0 + $0x140] sm:$0xff]
  %v62 = vld [vmem:[%s0 + $0x148] sm:$0xff]
  %v63 = vld [vmem:[%s0 + $0x150] sm:$0xff]
  %v64 = vld [vmem:[%s0 + $0x158] sm:$0xff]
  %v65 = vld [vmem:[%s0 + $0x160] sm:$0xff]
  %v66 = vld [vmem:[%s0 + $0x168] sm:$0xff]
  %v67 = vld [vmem:[%s0 + $0x170] sm:$0xff]
  %v68 = vld [vmem:[%s0 + $0x178] sm:$0xff]
  %v69 = vld [vmem:[%s0 + $0x180] sm:$0xff]
  %v70 = vld [vmem:[%s0 + $0x188] sm:$0xff]
  %v71 = vld [vmem:[%s0 + $0x190] sm:$0xff]
  %v72 = vld [vmem:[%s0 + $0x198] sm:$0xff]
  %v73 = vld [vmem:[%s0 + $0x1a0] sm:$0xff]
  %v74 = vld [vmem:[%s0 + $0x1a8] sm:$0xff]
  %v75 = vld [vmem:[%s0 + $0x1b0] sm:$0xff]
  %v76 = vld [vmem:[%s0 + $0x1b8] sm:$0xff]
  %v77 = vld [vmem:[%s0 + $0x1c0] sm:$0xff]
  %v78 = vld [vmem:[%s0 + $0x1c8] sm:$0xff]
  %v79 = vld [vmem:[%s1] sm:$0xf]
  %v80 = vld [vmem:[%s1 + $0x4] sm:$0xf]
  %v81 = vld [vmem:[%s1 + $0x8] sm:$0xf]
  %v82 = vld [vmem:[%s1 + $0xc] sm:$0xf]
  %v83 = vld [vmem:[%s1 + $0x10] sm:$0xf]
  %v84 = vld [vmem:[%s1 + $0x14] sm:$0xf]
  %v85 = vld [vmem:[%s1 + $0x18] sm:$0xf]
  %v86 = vld [vmem:[%s1 + $0x1c] sm:$0xf]
  %v87 = vld [vmem:[%s1 + $0x20] sm:$0xf]
  %v88 = vld [vmem:[%s1 + $0x24] sm:$0xf]
  %v89 = vld [vmem:[%s1 + $0x28] sm:$0xf]
  %v90 = vld [vmem:[%s1 + $0x2c] sm:$0xf]
  %v91 = vld [vmem:[%s1 + $0x30] sm:$0xf]
  %v92 = vld [vmem:[%s1 + $0x34] sm:$0xf]
  %v93 = vld [vmem:[%s1 + $0x38] sm:$0xf]
  %v94 = vld [vmem:[%s1 + $0x3c] sm:$0xf]
  %v95 = vld [vmem:[%s1 + $0x40] sm:$0xf]
  %v96 = vld [vmem:[%s1 + $0x44] sm:$0xf]
  %v97 = vld [vmem:[%s1 + $0x48] sm:$0xf]
  %v98 = vld [vmem:[%s1 + $0x4c] sm:$0xf]
  %v99 = vld [vmem:[%s1 + $0x50] sm:$0xf]
  %v100 = vld [vmem:[%s1 + $0x54] sm:$0xf]
  %v101 = vld [vmem:[%s1 + $0x58] sm:$0xf]
  %v102 = vld [vmem:[%s1 + $0x5c] sm:$0xf]
  %v103 = vld [vmem:[%s1 + $0x60] sm:$0xf]
  %v104 = vld [vmem:[%s1 + $0x64] sm:$0xf]
  %v105 = vld [vmem:[%s1 + $0x68] sm:$0xf]
  %v106 = vld [vmem:[%s1 + $0x6c] sm:$0xf]
  %v107 = vld [vmem:[%s1 + $0x70] sm:$0xf]
  %v108 = vld [vmem:[%s1 + $0x74] sm:$0xf]
  %v109 = vld [vmem:[%s1 + $0x78] sm:$0xf]
  %v110 = vld [vmem:[%s1 + $0x7c] sm:$0xf]
  %v111 = vld [vmem:[%s2] sm:$0x1]
  %v113 = vlaneseq
  %v114 = vshrl.u32 %v113, 7
  %v115 = vsub.s32 0, %v114
  %v116 = vrot.slane %v111, %v115
  %v176 = vunpack.c.l.b16 %v21
  %v177 = vunpack.c.h.b16 %v21
  %v178 = vunpack.c.l.b16 %v22
  %v179 = vunpack.c.h.b16 %v22
  %v180 = vunpack.c.l.b16 %v23
  %v181 = vunpack.c.h.b16 %v23
  %v182 = vunpack.c.l.b16 %v24
  %v183 = vunpack.c.h.b16 %v24
  %v184 = vunpack.c.l.b16 %v25
  %v185 = vunpack.c.h.b16 %v25
  %v186 = vunpack.c.l.b16 %v26
  %v187 = vunpack.c.h.b16 %v26
  %v188 = vunpack.c.l.b16 %v27
  %v189 = vunpack.c.h.b16 %v27
  %v190 = vunpack.c.l.b16 %v28
  %v191 = vunpack.c.h.b16 %v28
  %v192 = vunpack.c.l.b16 %v29
  %v193 = vunpack.c.h.b16 %v29
  %v194 = vunpack.c.l.b16 %v30
  %v195 = vunpack.c.h.b16 %v30
  %v196 = vunpack.c.l.b16 %v31
  %v197 = vunpack.c.h.b16 %v31
  %v198 = vunpack.c.l.b16 %v32
  %v199 = vunpack.c.h.b16 %v32
  %v200 = vunpack.c.l.b16 %v33
  %v201 = vunpack.c.h.b16 %v33
  %v202 = vunpack.c.l.b16 %v34
  %v203 = vunpack.c.h.b16 %v34
  %v204 = vunpack.c.l.b16 %v35
  %v205 = vunpack.c.h.b16 %v35
  %v206 = vunpack.c.l.b16 %v36
  %v207 = vunpack.c.h.b16 %v36
  %v208 = vunpack.c.l.b16 %v37
  %v209 = vunpack.c.h.b16 %v37
  %v210 = vunpack.c.l.b16 %v38
  %v211 = vunpack.c.h.b16 %v38
  %v212 = vunpack.c.l.b16 %v39
  %v213 = vunpack.c.h.b16 %v39
  %v214 = vunpack.c.l.b16 %v40
  %v215 = vunpack.c.h.b16 %v40
  %v216 = vunpack.c.l.b16 %v41
  %v217 = vunpack.c.h.b16 %v41
  %v218 = vunpack.c.l.b16 %v42
  %v219 = vunpack.c.h.b16 %v42
  %v220 = vunpack.c.l.b16 %v43
  %v221 = vunpack.c.h.b16 %v43
  %v222 = vunpack.c.l.b16 %v44
  %v223 = vunpack.c.h.b16 %v44
  %v224 = vunpack.c.l.b16 %v45
  %v225 = vunpack.c.h.b16 %v45
  %v226 = vunpack.c.l.b16 %v46
  %v227 = vunpack.c.h.b16 %v46
  %v228 = vunpack.c.l.b16 %v47
  %v229 = vunpack.c.h.b16 %v47
  %v230 = vunpack.c.l.b16 %v48
  %v231 = vunpack.c.h.b16 %v48
  %v232 = vunpack.c.l.b16 %v49
  %v233 = vunpack.c.h.b16 %v49
  %v234 = vunpack.c.l.b16 %v50
  %v235 = vunpack.c.h.b16 %v50
  %v236 = vunpack.c.l.b16 %v51
  %v237 = vunpack.c.h.b16 %v51
  %v238 = vunpack.c.l.b16 %v52
  %v239 = vunpack.c.h.b16 %v52
  %v240 = vunpack.c.l.b16 %v53
  %v241 = vunpack.c.h.b16 %v53
  %v242 = vunpack.c.l.b16 %v54
  %v243 = vunpack.c.h.b16 %v54
  %v244 = vunpack.c.l.b16 %v55
  %v245 = vunpack.c.h.b16 %v55
  %v246 = vunpack.c.l.b16 %v56
  %v247 = vunpack.c.h.b16 %v56
  %v248 = vunpack.c.l.b16 %v57
  %v249 = vunpack.c.h.b16 %v57
  %v250 = vunpack.c.l.b16 %v58
  %v251 = vunpack.c.h.b16 %v58
  %v252 = vunpack.c.l.b16 %v59
  %v253 = vunpack.c.h.b16 %v59
  %v254 = vunpack.c.l.b16 %v60
  %v255 = vunpack.c.h.b16 %v60
  %v256 = vunpack.c.l.b16 %v61
  %v257 = vunpack.c.h.b16 %v61
  %v258 = vunpack.c.l.b16 %v62
  %v259 = vunpack.c.h.b16 %v62
  %v260 = vunpack.c.l.b16 %v63
  %v261 = vunpack.c.h.b16 %v63
  %v262 = vunpack.c.l.b16 %v64
  %v263 = vunpack.c.h.b16 %v64
  %v264 = vunpack.c.l.b16 %v65
  %v265 = vunpack.c.h.b16 %v65
  %v266 = vunpack.c.l.b16 %v66
  %v267 = vunpack.c.h.b16 %v66
  %v268 = vunpack.c.l.b16 %v67
  %v269 = vunpack.c.h.b16 %v67
  %v270 = vunpack.c.l.b16 %v68
  %v271 = vunpack.c.h.b16 %v68
  %v272 = vunpack.c.l.b16 %v69
  %v273 = vunpack.c.h.b16 %v69
  %v274 = vunpack.c.l.b16 %v70
  %v275 = vunpack.c.h.b16 %v70
  %v276 = vunpack.c.l.b16 %v71
  %v277 = vunpack.c.h.b16 %v71
  %v278 = vunpack.c.l.b16 %v72
  %v279 = vunpack.c.h.b16 %v72
  %v280 = vunpack.c.l.b16 %v73
  %v281 = vunpack.c.h.b16 %v73
  %v282 = vunpack.c.l.b16 %v74
  %v283 = vunpack.c.h.b16 %v74
  %v284 = vunpack.c.l.b16 %v75
  %v285 = vunpack.c.h.b16 %v75
  %v286 = vunpack.c.l.b16 %v76
  %v287 = vunpack.c.h.b16 %v76
  %v288 = vunpack.c.l.b16 %v77
  %v289 = vunpack.c.h.b16 %v77
  %v290 = vunpack.c.l.b16 %v78
  %v291 = vunpack.c.h.b16 %v78
  %v292 = vpack.c.b16 %v178, %v176
  %v293 = vpack.c.b16 %v179, %v177
  %v294 = vpack.c.b16 %v182, %v180
  %v295 = vpack.c.b16 %v183, %v181
  %v296 = vpack.c.b16 %v186, %v184
  %v297 = vpack.c.b16 %v187, %v185
  %v298 = vpack.c.b16 %v190, %v188
  %v299 = vpack.c.b16 %v191, %v189
  %v300 = vpack.c.b16 %v194, %v192
  %v301 = vpack.c.b16 %v195, %v193
  %v302 = vpack.c.b16 %v198, %v196
  %v303 = vpack.c.b16 %v199, %v197
  %v304 = vpack.c.b16 %v202, %v200
  %v305 = vpack.c.b16 %v203, %v201
  %v306 = vpack.c.b16 %v206, %v204
  %v307 = vpack.c.b16 %v207, %v205
  %v308 = vpack.c.b16 %v210, %v208
  %v309 = vpack.c.b16 %v211, %v209
  %v310 = vpack.c.b16 %v214, %v212
  %v311 = vpack.c.b16 %v215, %v213
  %v312 = vpack.c.b16 %v218, %v216
  %v313 = vpack.c.b16 %v219, %v217
  %v314 = vpack.c.b16 %v222, %v220
  %v315 = vpack.c.b16 %v223, %v221
  %v316 = vpack.c.b16 %v226, %v224
  %v317 = vpack.c.b16 %v227, %v225
  %v318 = vpack.c.b16 %v230, %v228
  %v319 = vpack.c.b16 %v231, %v229
  %v320 = vpack.c.b16 %v234, %v232
  %v321 = vpack.c.b16 %v235, %v233
  %v322 = vpack.c.b16 %v238, %v236
  %v323 = vpack.c.b16 %v239, %v237
  %v324 = vpack.c.b16 %v242, %v240
  %v325 = vpack.c.b16 %v243, %v241
  %v326 = vpack.c.b16 %v246, %v244
  %v327 = vpack.c.b16 %v247, %v245
  %v328 = vpack.c.b16 %v250, %v248
  %v329 = vpack.c.b16 %v251, %v249
  %v330 = vpack.c.b16 %v254, %v252
  %v331 = vpack.c.b16 %v255, %v253
  %v332 = vpack.c.b16 %v258, %v256
  %v333 = vpack.c.b16 %v259, %v257
  %v334 = vpack.c.b16 %v262, %v260
  %v335 = vpack.c.b16 %v263, %v261
  %v336 = vpack.c.b16 %v266, %v264
  %v337 = vpack.c.b16 %v267, %v265
  %v338 = vpack.c.b16 %v270, %v268
  %v339 = vpack.c.b16 %v271, %v269
  %v340 = vpack.c.b16 %v274, %v272
  %v341 = vpack.c.b16 %v275, %v273
  %v342 = vpack.c.b16 %v278, %v276
  %v343 = vpack.c.b16 %v279, %v277
  %v344 = vpack.c.b16 %v282, %v280
  %v345 = vpack.c.b16 %v283, %v281
  %v346 = vpack.c.b16 %v286, %v284
  %v347 = vpack.c.b16 %v287, %v285
  %v348 = vpack.c.b16 %v290, %v288
  %v349 = vpack.c.b16 %v291, %v289
  %v440 = vunpack.c.l.b16 %v79
  %v441 = vunpack.c.l.b16 %v80
  %v442 = vunpack.c.l.b16 %v81
  %v443 = vunpack.c.l.b16 %v82
  %v444 = vunpack.c.l.b16 %v83
  %v445 = vunpack.c.l.b16 %v84
  %v446 = vunpack.c.l.b16 %v85
  %v447 = vunpack.c.l.b16 %v86
  %v448 = vunpack.c.l.b16 %v87
  %v449 = vunpack.c.l.b16 %v88
  %v450 = vunpack.c.l.b16 %v89
  %v451 = vunpack.c.l.b16 %v90
  %v452 = vunpack.c.l.b16 %v91
  %v453 = vunpack.c.l.b16 %v92
  %v454 = vunpack.c.l.b16 %v93
  %v455 = vunpack.c.l.b16 %v94
  %v456 = vunpack.c.l.b16 %v95
  %v457 = vunpack.c.l.b16 %v96
  %v458 = vunpack.c.l.b16 %v97
  %v459 = vunpack.c.l.b16 %v98
  %v460 = vunpack.c.l.b16 %v99
  %v461 = vunpack.c.l.b16 %v100
  %v462 = vunpack.c.l.b16 %v101
  %v463 = vunpack.c.l.b16 %v102
  %v464 = vunpack.c.l.b16 %v103
  %v465 = vunpack.c.l.b16 %v104
  %v466 = vunpack.c.l.b16 %v105
  %v467 = vunpack.c.l.b16 %v106
  %v468 = vunpack.c.l.b16 %v107
  %v469 = vunpack.c.l.b16 %v108
  %v470 = vunpack.c.l.b16 %v109
  %v471 = vunpack.c.l.b16 %v110
  %v472 = vpack.c.b16 %v441, %v440
  %v473 = vpack.c.b16 %v443, %v442
  %v474 = vpack.c.b16 %v445, %v444
  %v475 = vpack.c.b16 %v447, %v446
  %v476 = vpack.c.b16 %v449, %v448
  %v477 = vpack.c.b16 %v451, %v450
  %v478 = vpack.c.b16 %v453, %v452
  %v479 = vpack.c.b16 %v455, %v454
  %v480 = vpack.c.b16 %v457, %v456
  %v481 = vpack.c.b16 %v459, %v458
  %v482 = vpack.c.b16 %v461, %v460
  %v483 = vpack.c.b16 %v463, %v462
  %v484 = vpack.c.b16 %v465, %v464
  %v485 = vpack.c.b16 %v467, %v466
  %v486 = vpack.c.b16 %v469, %v468
  %v487 = vpack.c.b16 %v471, %v470
  %504 = vmatprep.subr.bf16.mxu0 0
  %505 = vmatpush1.bf16.msra.mxu0 %v472
  %506 = vmatprep.subr.bf16.mxu0 0
  %507 = vmatpush1.bf16.msra.mxu0 %v473
  %508 = vmatprep.subr.bf16.mxu0 0
  %509 = vmatpush1.bf16.msra.mxu0 %v474
  %510 = vmatprep.subr.bf16.mxu0 0
  %511 = vmatpush1.bf16.msra.mxu0 %v475
  %512 = vmatprep.subr.bf16.mxu0 0
  %513 = vmatpush1.bf16.msra.mxu0 %v476
  %514 = vmatprep.subr.bf16.mxu0 0
  %515 = vmatpush1.bf16.msra.mxu0 %v477
  %516 = vmatprep.subr.bf16.mxu0 0
  %517 = vmatpush1.bf16.msra.mxu0 %v478
  %518 = vmatprep.subr.bf16.mxu0 0
  %519 = vmatpush1.bf16.msra.mxu0 %v479
  %520 = vmatprep.subr.bf16.mxu0 0
  %521 = vmatpush1.bf16.msra.mxu0 %v480
  %522 = vmatprep.subr.bf16.mxu0 0
  %523 = vmatpush1.bf16.msra.mxu0 %v481
  %524 = vmatprep.subr.bf16.mxu0 0
  %525 = vmatpush1.bf16.msra.mxu0 %v482
  %526 = vmatprep.subr.bf16.mxu0 0
  %527 = vmatpush1.bf16.msra.mxu0 %v483
  %528 = vmatprep.subr.bf16.mxu0 0
  %529 = vmatpush1.bf16.msra.mxu0 %v484
  %530 = vmatprep.subr.bf16.mxu0 0
  %531 = vmatpush1.bf16.msra.mxu0 %v485
  %532 = vmatprep.subr.bf16.mxu0 0
  %533 = vmatpush1.bf16.msra.mxu0 %v486
  %534 = vmatprep.subr.bf16.mxu0 0
  %535 = vmatpush1.bf16.msra.mxu0 %v487
  %536 = vmatprep.mubr.bf16.mxu0 %v293
  %537 = vmatmul.mubr.bf16.gmra.mrb[0].mxu0 %v292
  %v538 = vpop.f32.mrb[0].mxu0
  %v539 = vadd.f32 %v116, %v538
  %v540 = vpop.f32.mrb[0].mxu0
  %v541 = vpop.f32.mrb[0].mxu0
  %v542 = vadd.f32 %v116, %v541
  %v543 = vpop.f32.mrb[0].mxu0
  %544 = vmatprep.mubr.bf16.mxu0 %v295
  %545 = vmatmul.mubr.bf16.gmra.mrb[0].mxu0 %v294
  %v546 = vpop.f32.mrb[0].mxu0
  %v547 = vadd.f32 %v116, %v546
  %v548 = vpop.f32.mrb[0].mxu0
  %v549 = vpop.f32.mrb[0].mxu0
  %v550 = vadd.f32 %v116, %v549
  %v551 = vpop.f32.mrb[0].mxu0
  %552 = vmatprep.mubr.bf16.mxu0 %v297
  %553 = vmatmul.mubr.bf16.gmra.mrb[0].mxu0 %v296
  %v554 = vpop.f32.mrb[0].mxu0
  %v555 = vadd.f32 %v116, %v554
  %v556 = vpop.f32.mrb[0].mxu0
  %v557 = vpop.f32.mrb[0].mxu0
  %v558 = vadd.f32 %v116, %v557
  %v559 = vpop.f32.mrb[0].mxu0
  %560 = vmatprep.mubr.bf16.mxu0 %v299
  %561 = vmatmul.mubr.bf16.gmra.mrb[0].mxu0 %v298
  %v562 = vpop.f32.mrb[0].mxu0
  %v563 = vadd.f32 %v116, %v562
  %v564 = vpop.f32.mrb[0].mxu0
  %v565 = vpop.f32.mrb[0].mxu0
  %v566 = vadd.f32 %v116, %v565
  %v567 = vpop.f32.mrb[0].mxu0
  %568 = vmatprep.mubr.bf16.mxu0 %v301
  %569 = vmatmul.mubr.bf16.gmra.mrb[0].mxu0 %v300
  %v570 = vpop.f32.mrb[0].mxu0
  %v571 = vadd.f32 %v116, %v570
  %v572 = vpop.f32.mrb[0].mxu0
  %v573 = vpop.f32.mrb[0].mxu0
  %v574 = vadd.f32 %v116, %v573
  %v575 = vpop.f32.mrb[0].mxu0
  %576 = vmatprep.mubr.bf16.mxu0 %v303
  %577 = vmatmul.mubr.bf16.gmra.mrb[0].mxu0 %v302
  %v578 = vpop.f32.mrb[0].mxu0
  %v579 = vadd.f32 %v116, %v578
  %v580 = vpop.f32.mrb[0].mxu0
  %v581 = vpop.f32.mrb[0].mxu0
  %v582 = vadd.f32 %v116, %v581
  %v583 = vpop.f32.mrb[0].mxu0
  %584 = vmatprep.mubr.bf16.mxu0 %v305
  %585 = vmatmul.mubr.bf16.gmra.mrb[0].mxu0 %v304
  %v586 = vpop.f32.mrb[0].mxu0
  %v587 = vadd.f32 %v116, %v586
  %v588 = vpop.f32.mrb[0].mxu0
  %v589 = vpop.f32.mrb[0].mxu0
  %v590 = vadd.f32 %v116, %v589
  %v591 = vpop.f32.mrb[0].mxu0
  %592 = vmatprep.mubr.bf16.mxu0 %v307
  %593 = vmatmul.mubr.bf16.gmra.mrb[0].mxu0 %v306
  %v594 = vpop.f32.mrb[0].mxu0
  %v595 = vadd.f32 %v116, %v594
  %v596 = vpop.f32.mrb[0].mxu0
  %v597 = vpop.f32.mrb[0].mxu0
  %v598 = vadd.f32 %v116, %v597
  %v599 = vpop.f32.mrb[0].mxu0
  %600 = vmatprep.mubr.bf16.mxu0 %v309
  %601 = vmatmul.mubr.bf16.gmra.mrb[0].mxu0 %v308
  %v602 = vpop.f32.mrb[0].mxu0
  %v603 = vadd.f32 %v116, %v602
  %v604 = vpop.f32.mrb[0].mxu0
  %v605 = vpop.f32.mrb[0].mxu0
  %v606 = vadd.f32 %v116, %v605
  %v607 = vpop.f32.mrb[0].mxu0
  %608 = vmatprep.mubr.bf16.mxu0 %v311
  %609 = vmatmul.mubr.bf16.gmra.mrb[0].mxu0 %v310
  %v610 = vpop.f32.mrb[0].mxu0
  %v611 = vadd.f32 %v116, %v610
  %v612 = vpop.f32.mrb[0].mxu0
  %v613 = vpop.f32.mrb[0].mxu0
  %v614 = vadd.f32 %v116, %v613
  %v615 = vpop.f32.mrb[0].mxu0
  %616 = vmatprep.mubr.bf16.mxu0 %v313
  %617 = vmatmul.mubr.bf16.gmra.mrb[0].mxu0 %v312
  %v618 = vpop.f32.mrb[0].mxu0
  %v619 = vadd.f32 %v116, %v618
  %v620 = vpop.f32.mrb[0].mxu0
  %v621 = vpop.f32.mrb[0].mxu0
  %v622 = vadd.f32 %v116, %v621
  %v623 = vpop.f32.mrb[0].mxu0
  %624 = vmatprep.mubr.bf16.mxu0 %v315
  %625 = vmatmul.mubr.bf16.gmra.mrb[0].mxu0 %v314
  %v626 = vpop.f32.mrb[0].mxu0
  %v627 = vadd.f32 %v116, %v626
  %v628 = vpop.f32.mrb[0].mxu0
  %v629 = vpop.f32.mrb[0].mxu0
  %v630 = vadd.f32 %v116, %v629
  %v631 = vpop.f32.mrb[0].mxu0
  %632 = vmatprep.mubr.bf16.mxu0 %v317
  %633 = vmatmul.mubr.bf16.gmra.mrb[0].mxu0 %v316
  %v634 = vpop.f32.mrb[0].mxu0
  %v635 = vadd.f32 %v116, %v634
  %v636 = vpop.f32.mrb[0].mxu0
  %v637 = vpop.f32.mrb[0].mxu0
  %v638 = vadd.f32 %v116, %v637
  %v639 = vpop.f32.mrb[0].mxu0
  %640 = vmatprep.mubr.bf16.mxu0 %v319
  %641 = vmatmul.mubr.bf16.gmra.mrb[0].mxu0 %v318
  %v642 = vpop.f32.mrb[0].mxu0
  %v643 = vadd.f32 %v116, %v642
  %v644 = vpop.f32.mrb[0].mxu0
  %v645 = vpop.f32.mrb[0].mxu0
  %v646 = vadd.f32 %v116, %v645
  %v647 = vpop.f32.mrb[0].mxu0
  %648 = vmatprep.mubr.bf16.mxu0 %v321
  %649 = vmatmul.mubr.bf16.gmra.mrb[0].mxu0 %v320
  %v650 = vpop.f32.mrb[0].mxu0
  %v651 = vadd.f32 %v116, %v650
  %v652 = vpop.f32.mrb[0].mxu0
  %v653 = vpop.f32.mrb[0].mxu0
  %v654 = vadd.f32 %v116, %v653
  %v655 = vpop.f32.mrb[0].mxu0
  %656 = vmatprep.mubr.bf16.mxu0 %v323
  %657 = vmatmul.mubr.bf16.gmra.mrb[0].mxu0 %v322
  %v658 = vpop.f32.mrb[0].mxu0
  %v659 = vadd.f32 %v116, %v658
  %v660 = vpop.f32.mrb[0].mxu0
  %v661 = vpop.f32.mrb[0].mxu0
  %v662 = vadd.f32 %v116, %v661
  %v663 = vpop.f32.mrb[0].mxu0
  %664 = vmatprep.mubr.bf16.mxu0 %v325
  %665 = vmatmul.mubr.bf16.gmra.mrb[0].mxu0 %v324
  %v666 = vpop.f32.mrb[0].mxu0
  %v667 = vadd.f32 %v116, %v666
  %v668 = vpop.f32.mrb[0].mxu0
  %v669 = vpop.f32.mrb[0].mxu0
  %v670 = vadd.f32 %v116, %v669
  %v671 = vpop.f32.mrb[0].mxu0
  %672 = vmatprep.mubr.bf16.mxu0 %v327
  %673 = vmatmul.mubr.bf16.gmra.mrb[0].mxu0 %v326
  %v674 = vpop.f32.mrb[0].mxu0
  %v675 = vadd.f32 %v116, %v674
  %v676 = vpop.f32.mrb[0].mxu0
  %v677 = vpop.f32.mrb[0].mxu0
  %v678 = vadd.f32 %v116, %v677
  %v679 = vpop.f32.mrb[0].mxu0
  %680 = vmatprep.mubr.bf16.mxu0 %v329
  %681 = vmatmul.mubr.bf16.gmra.mrb[0].mxu0 %v328
  %v682 = vpop.f32.mrb[0].mxu0
  %v683 = vadd.f32 %v116, %v682
  %v684 = vpop.f32.mrb[0].mxu0
  %v685 = vpop.f32.mrb[0].mxu0
  %v686 = vadd.f32 %v116, %v685
  %v687 = vpop.f32.mrb[0].mxu0
  %688 = vmatprep.mubr.bf16.mxu0 %v331
  %689 = vmatmul.mubr.bf16.gmra.mrb[0].mxu0 %v330
  %v690 = vpop.f32.mrb[0].mxu0
  %v691 = vadd.f32 %v116, %v690
  %v692 = vpop.f32.mrb[0].mxu0
  %v693 = vpop.f32.mrb[0].mxu0
  %v694 = vadd.f32 %v116, %v693
  %v695 = vpop.f32.mrb[0].mxu0
  %696 = vmatprep.mubr.bf16.mxu0 %v333
  %697 = vmatmul.mubr.bf16.gmra.mrb[0].mxu0 %v332
  %v698 = vpop.f32.mrb[0].mxu0
  %v699 = vadd.f32 %v116, %v698
  %v700 = vpop.f32.mrb[0].mxu0
  %v701 = vpop.f32.mrb[0].mxu0
  %v702 = vadd.f32 %v116, %v701
  %v703 = vpop.f32.mrb[0].mxu0
  %704 = vmatprep.mubr.bf16.mxu0 %v335
  %705 = vmatmul.mubr.bf16.gmra.mrb[0].mxu0 %v334
  %v706 = vpop.f32.mrb[0].mxu0
  %v707 = vadd.f32 %v116, %v706
  %v708 = vpop.f32.mrb[0].mxu0
  %v709 = vpop.f32.mrb[0].mxu0
  %v710 = vadd.f32 %v116, %v709
  %v711 = vpop.f32.mrb[0].mxu0
  %712 = vmatprep.mubr.bf16.mxu0 %v337
  %713 = vmatmul.mubr.bf16.gmra.mrb[0].mxu0 %v336
  %v714 = vpop.f32.mrb[0].mxu0
  %v715 = vadd.f32 %v116, %v714
  %v716 = vpop.f32.mrb[0].mxu0
  %v717 = vpop.f32.mrb[0].mxu0
  %v718 = vadd.f32 %v116, %v717
  %v719 = vpop.f32.mrb[0].mxu0
  %720 = vmatprep.mubr.bf16.mxu0 %v339
  %721 = vmatmul.mubr.bf16.gmra.mrb[0].mxu0 %v338
  %v722 = vpop.f32.mrb[0].mxu0
  %v723 = vadd.f32 %v116, %v722
  %v724 = vpop.f32.mrb[0].mxu0
  %v725 = vpop.f32.mrb[0].mxu0
  %v726 = vadd.f32 %v116, %v725
  %v727 = vpop.f32.mrb[0].mxu0
  %728 = vmatprep.mubr.bf16.mxu0 %v341
  %729 = vmatmul.mubr.bf16.gmra.mrb[0].mxu0 %v340
  %v730 = vpop.f32.mrb[0].mxu0
  %v731 = vadd.f32 %v116, %v730
  %v732 = vpop.f32.mrb[0].mxu0
  %v733 = vpop.f32.mrb[0].mxu0
  %v734 = vadd.f32 %v116, %v733
  %v735 = vpop.f32.mrb[0].mxu0
  %736 = vmatprep.mubr.bf16.mxu0 %v343
  %737 = vmatmul.mubr.bf16.gmra.mrb[0].mxu0 %v342
  %v738 = vpop.f32.mrb[0].mxu0
  %v739 = vadd.f32 %v116, %v738
  %v740 = vpop.f32.mrb[0].mxu0
  %v741 = vpop.f32.mrb[0].mxu0
  %v742 = vadd.f32 %v116, %v741
  %v743 = vpop.f32.mrb[0].mxu0
  %744 = vmatprep.mubr.bf16.mxu0 %v345
  %745 = vmatmul.mubr.bf16.gmra.mrb[0].mxu0 %v344
  %v746 = vpop.f32.mrb[0].mxu0
  %v747 = vadd.f32 %v116, %v746
  %v748 = vpop.f32.mrb[0].mxu0
  %v749 = vpop.f32.mrb[0].mxu0
  %v750 = vadd.f32 %v116, %v749
  %v751 = vpop.f32.mrb[0].mxu0
  %752 = vmatprep.mubr.bf16.mxu0 %v347
  %753 = vmatmul.mubr.bf16.gmra.mrb[0].mxu0 %v346
  %v754 = vpop.f32.mrb[0].mxu0
  %v755 = vadd.f32 %v116, %v754
  %v756 = vpop.f32.mrb[0].mxu0
  %v757 = vpop.f32.mrb[0].mxu0
  %v758 = vadd.f32 %v116, %v757
  %v759 = vpop.f32.mrb[0].mxu0
  %760 = vmatprep.mubr.bf16.mxu0 %v349
  %761 = vmatmul.mubr.bf16.gmra.mrb[0].mxu0 %v348
  %v762 = vpop.f32.mrb[0].mxu0
  %v763 = vadd.f32 %v116, %v762
  %v764 = vpop.f32.mrb[0].mxu0
  %v765 = vpop.f32.mrb[0].mxu0
  %v766 = vadd.f32 %v116, %v765
  %v767 = vpop.f32.mrb[0].mxu0
  %768 = vdwg.mxu0
  %v769 = vmax.f32 %v539, 0.0
  %v770 = vmax.f32 %v542, 0.0
  %v771 = vmax.f32 %v547, 0.0
  %v772 = vmax.f32 %v550, 0.0
  %v773 = vmax.f32 %v555, 0.0
  %v774 = vmax.f32 %v558, 0.0
  %v775 = vmax.f32 %v563, 0.0
  %v776 = vmax.f32 %v566, 0.0
  %v777 = vmax.f32 %v571, 0.0
  %v778 = vmax.f32 %v574, 0.0
  %v779 = vmax.f32 %v579, 0.0
  %v780 = vmax.f32 %v582, 0.0
  %v781 = vmax.f32 %v587, 0.0
  %v782 = vmax.f32 %v590, 0.0
  %v783 = vmax.f32 %v595, 0.0
  %v784 = vmax.f32 %v598, 0.0
  %v785 = vmax.f32 %v603, 0.0
  %v786 = vmax.f32 %v606, 0.0
  %v787 = vmax.f32 %v611, 0.0
  %v788 = vmax.f32 %v614, 0.0
  %v789 = vmax.f32 %v619, 0.0
  %v790 = vmax.f32 %v622, 0.0
  %v791 = vmax.f32 %v627, 0.0
  %v792 = vmax.f32 %v630, 0.0
  %v793 = vmax.f32 %v635, 0.0
  %v794 = vmax.f32 %v638, 0.0
  %v795 = vmax.f32 %v643, 0.0
  %v796 = vmax.f32 %v646, 0.0
  %v797 = vmax.f32 %v651, 0.0
  %v798 = vmax.f32 %v654, 0.0
  %v799 = vmax.f32 %v659, 0.0
  %v800 = vmax.f32 %v662, 0.0
  %v801 = vmax.f32 %v667, 0.0
  %v802 = vmax.f32 %v670, 0.0
  %v803 = vmax.f32 %v675, 0.0
  %v804 = vmax.f32 %v678, 0.0
  %v805 = vmax.f32 %v683, 0.0
  %v806 = vmax.f32 %v686, 0.0
  %v807 = vmax.f32 %v691, 0.0
  %v808 = vmax.f32 %v694, 0.0
  %v809 = vmax.f32 %v699, 0.0
  %v810 = vmax.f32 %v702, 0.0
  %v811 = vmax.f32 %v707, 0.0
  %v812 = vmax.f32 %v710, 0.0
  %v813 = vmax.f32 %v715, 0.0
  %v814 = vmax.f32 %v718, 0.0
  %v815 = vmax.f32 %v723, 0.0
  %v816 = vmax.f32 %v726, 0.0
  %v817 = vmax.f32 %v731, 0.0
  %v818 = vmax.f32 %v734, 0.0
  %v819 = vmax.f32 %v739, 0.0
  %v820 = vmax.f32 %v742, 0.0
  %v821 = vmax.f32 %v747, 0.0
  %v822 = vmax.f32 %v750, 0.0
  %v823 = vmax.f32 %v755, 0.0
  %v824 = vmax.f32 %v758, 0.0
  %v825 = vmax.f32 %v763, 0.0
  %v826 = vmax.f32 %v766, 0.0
  %v827 = vlaneseq
  %v828 = vshrl.u32 %v827, 7
  %v829 = vadd.s32 %v828, 8
  %v830 = vadd.s32 %v828, 16
  %v831 = vadd.s32 %v828, 24
  %v832 = vadd.s32 %v828, 32
  %v833 = vadd.s32 %v828, 40
  %v834 = vadd.s32 %v828, 48
  %v835 = vadd.s32 %v828, 56
  %v836 = vadd.s32 %v828, 64
  %v837 = vadd.s32 %v828, 72
  %v838 = vadd.s32 %v828, 80
  %v839 = vadd.s32 %v828, 88
  %v840 = vadd.s32 %v828, 96
  %v841 = vadd.s32 %v828, 104
  %v842 = vadd.s32 %v828, 112
  %v843 = vadd.s32 %v828, 120
  %v844 = vadd.s32 %v828, 128
  %v845 = vadd.s32 %v828, 136
  %v846 = vadd.s32 %v828, 144
  %v847 = vadd.s32 %v828, 152
  %v848 = vadd.s32 %v828, 160
  %v849 = vadd.s32 %v828, 168
  %v850 = vadd.s32 %v828, 176
  %v851 = vadd.s32 %v828, 184
  %v852 = vadd.s32 %v828, 192
  %v853 = vadd.s32 %v828, 200
  %v854 = vadd.s32 %v828, 208
  %v855 = vadd.s32 %v828, 216
  %v856 = vadd.s32 %v828, 224
  %v857 = vadd.s32 %v828, 232
  %v858 = vadd.s32 %v828, 240
  %v859 = vadd.s32 %v828, 248
  %v860 = vadd.s32 %v828, 256
  %v861 = vadd.s32 %v828, 264
  %v862 = vadd.s32 %v828, 272
  %v863 = vadd.s32 %v828, 280
  %v864 = vadd.s32 %v828, 288
  %v865 = vadd.s32 %v828, 296
  %v866 = vadd.s32 %v828, 304
  %v867 = vadd.s32 %v828, 312
  %v868 = vadd.s32 %v828, 320
  %v869 = vadd.s32 %v828, 328
  %v870 = vadd.s32 %v828, 336
  %v871 = vadd.s32 %v828, 344
  %v872 = vadd.s32 %v828, 352
  %v873 = vadd.s32 %v828, 360
  %v874 = vadd.s32 %v828, 368
  %v875 = vadd.s32 %v828, 376
  %v876 = vadd.s32 %v828, 384
  %v877 = vadd.s32 %v828, 392
  %v878 = vadd.s32 %v828, 400
  %v879 = vadd.s32 %v828, 408
  %v880 = vadd.s32 %v828, 416
  %v881 = vadd.s32 %v828, 424
  %v882 = vadd.s32 %v828, 432
  %v883 = vadd.s32 %v828, 440
  %v884 = vadd.s32 %v828, 448
  %v885 = vadd.s32 %v828, 456
  %vm886 = vcmp.lt.s32.totalorder %v828, 450
  %vm887 = vcmp.lt.s32.totalorder %v829, 450
  %vm888 = vcmp.lt.s32.totalorder %v830, 450
  %vm889 = vcmp.lt.s32.totalorder %v831, 450
  %vm890 = vcmp.lt.s32.totalorder %v832, 450
  %vm891 = vcmp.lt.s32.totalorder %v833, 450
  %vm892 = vcmp.lt.s32.totalorder %v834, 450
  %vm893 = vcmp.lt.s32.totalorder %v835, 450
  %vm894 = vcmp.lt.s32.totalorder %v836, 450
  %vm895 = vcmp.lt.s32.totalorder %v837, 450
  %vm896 = vcmp.lt.s32.totalorder %v838, 450
  %vm897 = vcmp.lt.s32.totalorder %v839, 450
  %vm898 = vcmp.lt.s32.totalorder %v840, 450
  %vm899 = vcmp.lt.s32.totalorder %v841, 450
  %vm900 = vcmp.lt.s32.totalorder %v842, 450
  %vm901 = vcmp.lt.s32.totalorder %v843, 450
  %vm902 = vcmp.lt.s32.totalorder %v844, 450
  %vm903 = vcmp.lt.s32.totalorder %v845, 450
  %vm904 = vcmp.lt.s32.totalorder %v846, 450
  %vm905 = vcmp.lt.s32.totalorder %v847, 450
  %vm906 = vcmp.lt.s32.totalorder %v848, 450
  %vm907 = vcmp.lt.s32.totalorder %v849, 450
  %vm908 = vcmp.lt.s32.totalorder %v850, 450
  %vm909 = vcmp.lt.s32.totalorder %v851, 450
  %vm910 = vcmp.lt.s32.totalorder %v852, 450
  %vm911 = vcmp.lt.s32.totalorder %v853, 450
  %vm912 = vcmp.lt.s32.totalorder %v854, 450
  %vm913 = vcmp.lt.s32.totalorder %v855, 450
  %vm914 = vcmp.lt.s32.totalorder %v856, 450
  %vm915 = vcmp.lt.s32.totalorder %v857, 450
  %vm916 = vcmp.lt.s32.totalorder %v858, 450
  %vm917 = vcmp.lt.s32.totalorder %v859, 450
  %vm918 = vcmp.lt.s32.totalorder %v860, 450
  %vm919 = vcmp.lt.s32.totalorder %v861, 450
  %vm920 = vcmp.lt.s32.totalorder %v862, 450
  %vm921 = vcmp.lt.s32.totalorder %v863, 450
  %vm922 = vcmp.lt.s32.totalorder %v864, 450
  %vm923 = vcmp.lt.s32.totalorder %v865, 450
  %vm924 = vcmp.lt.s32.totalorder %v866, 450
  %vm925 = vcmp.lt.s32.totalorder %v867, 450
  %vm926 = vcmp.lt.s32.totalorder %v868, 450
  %vm927 = vcmp.lt.s32.totalorder %v869, 450
  %vm928 = vcmp.lt.s32.totalorder %v870, 450
  %vm929 = vcmp.lt.s32.totalorder %v871, 450
  %vm930 = vcmp.lt.s32.totalorder %v872, 450
  %vm931 = vcmp.lt.s32.totalorder %v873, 450
  %vm932 = vcmp.lt.s32.totalorder %v874, 450
  %vm933 = vcmp.lt.s32.totalorder %v875, 450
  %vm934 = vcmp.lt.s32.totalorder %v876, 450
  %vm935 = vcmp.lt.s32.totalorder %v877, 450
  %vm936 = vcmp.lt.s32.totalorder %v878, 450
  %vm937 = vcmp.lt.s32.totalorder %v879, 450
  %vm938 = vcmp.lt.s32.totalorder %v880, 450
  %vm939 = vcmp.lt.s32.totalorder %v881, 450
  %vm940 = vcmp.lt.s32.totalorder %v882, 450
  %vm941 = vcmp.lt.s32.totalorder %v883, 450
  %vm942 = vcmp.lt.s32.totalorder %v884, 450
  %vm943 = vcmp.lt.s32.totalorder %v885, 450
  %v944 = vsel %vm886, %v769, 0.0
  %v945 = vsel %vm887, %v770, 0.0
  %v946 = vsel %vm888, %v771, 0.0
  %v947 = vsel %vm889, %v772, 0.0
  %v948 = vsel %vm890, %v773, 0.0
  %v949 = vsel %vm891, %v774, 0.0
  %v950 = vsel %vm892, %v775, 0.0
  %v951 = vsel %vm893, %v776, 0.0
  %v952 = vsel %vm894, %v777, 0.0
  %v953 = vsel %vm895, %v778, 0.0
  %v954 = vsel %vm896, %v779, 0.0
  %v955 = vsel %vm897, %v780, 0.0
  %v956 = vsel %vm898, %v781, 0.0
  %v957 = vsel %vm899, %v782, 0.0
  %v958 = vsel %vm900, %v783, 0.0
  %v959 = vsel %vm901, %v784, 0.0
  %v960 = vsel %vm902, %v785, 0.0
  %v961 = vsel %vm903, %v786, 0.0
  %v962 = vsel %vm904, %v787, 0.0
  %v963 = vsel %vm905, %v788, 0.0
  %v964 = vsel %vm906, %v789, 0.0
  %v965 = vsel %vm907, %v790, 0.0
  %v966 = vsel %vm908, %v791, 0.0
  %v967 = vsel %vm909, %v792, 0.0
  %v968 = vsel %vm910, %v793, 0.0
  %v969 = vsel %vm911, %v794, 0.0
  %v970 = vsel %vm912, %v795, 0.0
  %v971 = vsel %vm913, %v796, 0.0
  %v972 = vsel %vm914, %v797, 0.0
  %v973 = vsel %vm915, %v798, 0.0
  %v974 = vsel %vm916, %v799, 0.0
  %v975 = vsel %vm917, %v800, 0.0
  %v976 = vsel %vm918, %v801, 0.0
  %v977 = vsel %vm919, %v802, 0.0
  %v978 = vsel %vm920, %v803, 0.0
  %v979 = vsel %vm921, %v804, 0.0
  %v980 = vsel %vm922, %v805, 0.0
  %v981 = vsel %vm923, %v806, 0.0
  %v982 = vsel %vm924, %v807, 0.0
  %v983 = vsel %vm925, %v808, 0.0
  %v984 = vsel %vm926, %v809, 0.0
  %v985 = vsel %vm927, %v810, 0.0
  %v986 = vsel %vm928, %v811, 0.0
  %v987 = vsel %vm929, %v812, 0.0
  %v988 = vsel %vm930, %v813, 0.0
  %v989 = vsel %vm931, %v814, 0.0
  %v990 = vsel %vm932, %v815, 0.0
  %v991 = vsel %vm933, %v816, 0.0
  %v992 = vsel %vm934, %v817, 0.0
  %v993 = vsel %vm935, %v818, 0.0
  %v994 = vsel %vm936, %v819, 0.0
  %v995 = vsel %vm937, %v820, 0.0
  %v996 = vsel %vm938, %v821, 0.0
  %v997 = vsel %vm939, %v822, 0.0
  %v998 = vsel %vm940, %v823, 0.0
  %v999 = vsel %vm941, %v824, 0.0
  %v1000 = vsel %vm942, %v825, 0.0
  %v1001 = vsel %vm943, %v826, 0.0
  %v1002 = vadd.f32 %v944, %v945
  %v1003 = vadd.f32 %v1002, %v946
  %v1004 = vadd.f32 %v1003, %v947
  %v1005 = vadd.f32 %v1004, %v948
  %v1006 = vadd.f32 %v1005, %v949
  %v1007 = vadd.f32 %v1006, %v950
  %v1008 = vadd.f32 %v1007, %v951
  %v1009 = vadd.f32 %v1008, %v952
  %v1010 = vadd.f32 %v1009, %v953
  %v1011 = vadd.f32 %v1010, %v954
  %v1012 = vadd.f32 %v1011, %v955
  %v1013 = vadd.f32 %v1012, %v956
  %v1014 = vadd.f32 %v1013, %v957
  %v1015 = vadd.f32 %v1014, %v958
  %v1016 = vadd.f32 %v1015, %v959
  %v1017 = vadd.f32 %v1016, %v960
  %v1018 = vadd.f32 %v1017, %v961
  %v1019 = vadd.f32 %v1018, %v962
  %v1020 = vadd.f32 %v1019, %v963
  %v1021 = vadd.f32 %v1020, %v964
  %v1022 = vadd.f32 %v1021, %v965
  %v1023 = vadd.f32 %v1022, %v966
  %v1024 = vadd.f32 %v1023, %v967
  %v1025 = vadd.f32 %v1024, %v968
  %v1026 = vadd.f32 %v1025, %v969
  %v1027 = vadd.f32 %v1026, %v970
  %v1028 = vadd.f32 %v1027, %v971
  %v1029 = vadd.f32 %v1028, %v972
  %v1030 = vadd.f32 %v1029, %v973
  %v1031 = vadd.f32 %v1030, %v974
  %v1032 = vadd.f32 %v1031, %v975
  %v1033 = vadd.f32 %v1032, %v976
  %v1034 = vadd.f32 %v1033, %v977
  %v1035 = vadd.f32 %v1034, %v978
  %v1036 = vadd.f32 %v1035, %v979
  %v1037 = vadd.f32 %v1036, %v980
  %v1038 = vadd.f32 %v1037, %v981
  %v1039 = vadd.f32 %v1038, %v982
  %v1040 = vadd.f32 %v1039, %v983
  %v1041 = vadd.f32 %v1040, %v984
  %v1042 = vadd.f32 %v1041, %v985
  %v1043 = vadd.f32 %v1042, %v986
  %v1044 = vadd.f32 %v1043, %v987
  %v1045 = vadd.f32 %v1044, %v988
  %v1046 = vadd.f32 %v1045, %v989
  %v1047 = vadd.f32 %v1046, %v990
  %v1048 = vadd.f32 %v1047, %v991
  %v1049 = vadd.f32 %v1048, %v992
  %v1050 = vadd.f32 %v1049, %v993
  %v1051 = vadd.f32 %v1050, %v994
  %v1052 = vadd.f32 %v1051, %v995
  %v1053 = vadd.f32 %v1052, %v996
  %v1054 = vadd.f32 %v1053, %v997
  %v1055 = vadd.f32 %v1054, %v998
  %v1056 = vadd.f32 %v1055, %v999
  %v1057 = vadd.f32 %v1056, %v1000
  %v1058 = vadd.f32 %v1057, %v1001
  %v1059 = vrot.slane %v1058, 4
  %v1060 = vadd.f32 %v1058, %v1059
  %v1061 = vrot.slane %v1060, 2
  %v1062 = vadd.f32 %v1060, %v1061
  %v1063 = vrot.slane %v1062, 1
  %v1064 = vadd.f32 %v1062, %v1063
  %v1065 = vmul.f32 %v1064, 0.0022222223
  %v1066 = vmul.f32 %v944, %v944
  %v1067 = vmul.f32 %v945, %v945
  %v1068 = vmul.f32 %v946, %v946
  %v1069 = vmul.f32 %v947, %v947
  %v1070 = vmul.f32 %v948, %v948
  %v1071 = vmul.f32 %v949, %v949
  %v1072 = vmul.f32 %v950, %v950
  %v1073 = vmul.f32 %v951, %v951
  %v1074 = vmul.f32 %v952, %v952
  %v1075 = vmul.f32 %v953, %v953
  %v1076 = vmul.f32 %v954, %v954
  %v1077 = vmul.f32 %v955, %v955
  %v1078 = vmul.f32 %v956, %v956
  %v1079 = vmul.f32 %v957, %v957
  %v1080 = vmul.f32 %v958, %v958
  %v1081 = vmul.f32 %v959, %v959
  %v1082 = vmul.f32 %v960, %v960
  %v1083 = vmul.f32 %v961, %v961
  %v1084 = vmul.f32 %v962, %v962
  %v1085 = vmul.f32 %v963, %v963
  %v1086 = vmul.f32 %v964, %v964
  %v1087 = vmul.f32 %v965, %v965
  %v1088 = vmul.f32 %v966, %v966
  %v1089 = vmul.f32 %v967, %v967
  %v1090 = vmul.f32 %v968, %v968
  %v1091 = vmul.f32 %v969, %v969
  %v1092 = vmul.f32 %v970, %v970
  %v1093 = vmul.f32 %v971, %v971
  %v1094 = vmul.f32 %v972, %v972
  %v1095 = vmul.f32 %v973, %v973
  %v1096 = vmul.f32 %v974, %v974
  %v1097 = vmul.f32 %v975, %v975
  %v1098 = vmul.f32 %v976, %v976
  %v1099 = vmul.f32 %v977, %v977
  %v1100 = vmul.f32 %v978, %v978
  %v1101 = vmul.f32 %v979, %v979
  %v1102 = vmul.f32 %v980, %v980
  %v1103 = vmul.f32 %v981, %v981
  %v1104 = vmul.f32 %v982, %v982
  %v1105 = vmul.f32 %v983, %v983
  %v1106 = vmul.f32 %v984, %v984
  %v1107 = vmul.f32 %v985, %v985
  %v1108 = vmul.f32 %v986, %v986
  %v1109 = vmul.f32 %v987, %v987
  %v1110 = vmul.f32 %v988, %v988
  %v1111 = vmul.f32 %v989, %v989
  %v1112 = vmul.f32 %v990, %v990
  %v1113 = vmul.f32 %v991, %v991
  %v1114 = vmul.f32 %v992, %v992
  %v1115 = vmul.f32 %v993, %v993
  %v1116 = vmul.f32 %v994, %v994
  %v1117 = vmul.f32 %v995, %v995
  %v1118 = vmul.f32 %v996, %v996
  %v1119 = vmul.f32 %v997, %v997
  %v1120 = vmul.f32 %v998, %v998
  %v1121 = vmul.f32 %v999, %v999
  %v1122 = vmul.f32 %v1000, %v1000
  %v1123 = vmul.f32 %v1001, %v1001
  %v1124 = vadd.f32 %v1066, %v1067
  %v1125 = vadd.f32 %v1124, %v1068
  %v1126 = vadd.f32 %v1125, %v1069
  %v1127 = vadd.f32 %v1126, %v1070
  %v1128 = vadd.f32 %v1127, %v1071
  %v1129 = vadd.f32 %v1128, %v1072
  %v1130 = vadd.f32 %v1129, %v1073
  %v1131 = vadd.f32 %v1130, %v1074
  %v1132 = vadd.f32 %v1131, %v1075
  %v1133 = vadd.f32 %v1132, %v1076
  %v1134 = vadd.f32 %v1133, %v1077
  %v1135 = vadd.f32 %v1134, %v1078
  %v1136 = vadd.f32 %v1135, %v1079
  %v1137 = vadd.f32 %v1136, %v1080
  %v1138 = vadd.f32 %v1137, %v1081
  %v1139 = vadd.f32 %v1138, %v1082
  %v1140 = vadd.f32 %v1139, %v1083
  %v1141 = vadd.f32 %v1140, %v1084
  %v1142 = vadd.f32 %v1141, %v1085
  %v1143 = vadd.f32 %v1142, %v1086
  %v1144 = vadd.f32 %v1143, %v1087
  %v1145 = vadd.f32 %v1144, %v1088
  %v1146 = vadd.f32 %v1145, %v1089
  %v1147 = vadd.f32 %v1146, %v1090
  %v1148 = vadd.f32 %v1147, %v1091
  %v1149 = vadd.f32 %v1148, %v1092
  %v1150 = vadd.f32 %v1149, %v1093
  %v1151 = vadd.f32 %v1150, %v1094
  %v1152 = vadd.f32 %v1151, %v1095
  %v1153 = vadd.f32 %v1152, %v1096
  %v1154 = vadd.f32 %v1153, %v1097
  %v1155 = vadd.f32 %v1154, %v1098
  %v1156 = vadd.f32 %v1155, %v1099
  %v1157 = vadd.f32 %v1156, %v1100
  %v1158 = vadd.f32 %v1157, %v1101
  %v1159 = vadd.f32 %v1158, %v1102
  %v1160 = vadd.f32 %v1159, %v1103
  %v1161 = vadd.f32 %v1160, %v1104
  %v1162 = vadd.f32 %v1161, %v1105
  %v1163 = vadd.f32 %v1162, %v1106
  %v1164 = vadd.f32 %v1163, %v1107
  %v1165 = vadd.f32 %v1164, %v1108
  %v1166 = vadd.f32 %v1165, %v1109
  %v1167 = vadd.f32 %v1166, %v1110
  %v1168 = vadd.f32 %v1167, %v1111
  %v1169 = vadd.f32 %v1168, %v1112
  %v1170 = vadd.f32 %v1169, %v1113
  %v1171 = vadd.f32 %v1170, %v1114
  %v1172 = vadd.f32 %v1171, %v1115
  %v1173 = vadd.f32 %v1172, %v1116
  %v1174 = vadd.f32 %v1173, %v1117
  %v1175 = vadd.f32 %v1174, %v1118
  %v1176 = vadd.f32 %v1175, %v1119
  %v1177 = vadd.f32 %v1176, %v1120
  %v1178 = vadd.f32 %v1177, %v1121
  %v1179 = vadd.f32 %v1178, %v1122
  %v1180 = vadd.f32 %v1179, %v1123
  %v1181 = vrot.slane %v1180, 4
  %v1182 = vadd.f32 %v1180, %v1181
  %v1183 = vrot.slane %v1182, 2
  %v1184 = vadd.f32 %v1182, %v1183
  %v1185 = vrot.slane %v1184, 1
  %v1186 = vadd.f32 %v1184, %v1185
  %v1187 = vmul.f32 %v1186, 0.0022222223
  %v1188 = vmul.f32 %v1065, %v1065
  %v1189 = vsub.f32 %v1187, %v1188
  %v1190 = vmax.f32 %v1189, 0.0
  %v1191 = vld [vmem:[%s3] sm:$0x1]
  %v1192 = vadd.f32 %v1190, 1e-05
  %v1193 = vrsqrt.pop %v1192
  %v1194 = vmul.f32 %v1191, %v1193
  %v1195 = vld [vmem:[%s4] sm:$0x1]
  %v1196 = vmul.f32 %v1065, %v1194
  %v1197 = vsub.f32 %v1195, %v1196
  %v1199 = vlaneseq
  %v1200 = vshrl.u32 %v1199, 7
  %v1201 = vsub.s32 0, %v1200
  %v1202 = vrot.slane %v1194, %v1201
  %v1204 = vmul.f32 %v769, %v1202
  %v1205 = vmul.f32 %v770, %v1202
  %v1206 = vmul.f32 %v771, %v1202
  %v1207 = vmul.f32 %v772, %v1202
  %v1208 = vmul.f32 %v773, %v1202
  %v1209 = vmul.f32 %v774, %v1202
  %v1210 = vmul.f32 %v775, %v1202
  %v1211 = vmul.f32 %v776, %v1202
  %v1212 = vmul.f32 %v777, %v1202
  %v1213 = vmul.f32 %v778, %v1202
  %v1214 = vmul.f32 %v779, %v1202
  %v1215 = vmul.f32 %v780, %v1202
  %v1216 = vmul.f32 %v781, %v1202
  %v1217 = vmul.f32 %v782, %v1202
  %v1218 = vmul.f32 %v783, %v1202
  %v1219 = vmul.f32 %v784, %v1202
  %v1220 = vmul.f32 %v785, %v1202
  %v1221 = vmul.f32 %v786, %v1202
  %v1222 = vmul.f32 %v787, %v1202
  %v1223 = vmul.f32 %v788, %v1202
  %v1224 = vmul.f32 %v789, %v1202
  %v1225 = vmul.f32 %v790, %v1202
  %v1226 = vmul.f32 %v791, %v1202
  %v1227 = vmul.f32 %v792, %v1202
  %v1228 = vmul.f32 %v793, %v1202
  %v1229 = vmul.f32 %v794, %v1202
  %v1230 = vmul.f32 %v795, %v1202
  %v1231 = vmul.f32 %v796, %v1202
  %v1232 = vmul.f32 %v797, %v1202
  %v1233 = vmul.f32 %v798, %v1202
  %v1234 = vmul.f32 %v799, %v1202
  %v1235 = vmul.f32 %v800, %v1202
  %v1236 = vmul.f32 %v801, %v1202
  %v1237 = vmul.f32 %v802, %v1202
  %v1238 = vmul.f32 %v803, %v1202
  %v1239 = vmul.f32 %v804, %v1202
  %v1240 = vmul.f32 %v805, %v1202
  %v1241 = vmul.f32 %v806, %v1202
  %v1242 = vmul.f32 %v807, %v1202
  %v1243 = vmul.f32 %v808, %v1202
  %v1244 = vmul.f32 %v809, %v1202
  %v1245 = vmul.f32 %v810, %v1202
  %v1246 = vmul.f32 %v811, %v1202
  %v1247 = vmul.f32 %v812, %v1202
  %v1248 = vmul.f32 %v813, %v1202
  %v1249 = vmul.f32 %v814, %v1202
  %v1250 = vmul.f32 %v815, %v1202
  %v1251 = vmul.f32 %v816, %v1202
  %v1252 = vmul.f32 %v817, %v1202
  %v1253 = vmul.f32 %v818, %v1202
  %v1254 = vmul.f32 %v819, %v1202
  %v1255 = vmul.f32 %v820, %v1202
  %v1256 = vmul.f32 %v821, %v1202
  %v1257 = vmul.f32 %v822, %v1202
  %v1258 = vmul.f32 %v823, %v1202
  %v1259 = vmul.f32 %v824, %v1202
  %v1260 = vmul.f32 %v825, %v1202
  %v1261 = vmul.f32 %v826, %v1202
  %v1263 = vlaneseq
  %v1264 = vshrl.u32 %v1263, 7
  %v1265 = vsub.s32 0, %v1264
  %v1266 = vrot.slane %v1197, %v1265
  %v1268 = vadd.f32 %v1204, %v1266
  %v1269 = vadd.f32 %v1205, %v1266
  %v1270 = vadd.f32 %v1206, %v1266
  %v1271 = vadd.f32 %v1207, %v1266
  %v1272 = vadd.f32 %v1208, %v1266
  %v1273 = vadd.f32 %v1209, %v1266
  %v1274 = vadd.f32 %v1210, %v1266
  %v1275 = vadd.f32 %v1211, %v1266
  %v1276 = vadd.f32 %v1212, %v1266
  %v1277 = vadd.f32 %v1213, %v1266
  %v1278 = vadd.f32 %v1214, %v1266
  %v1279 = vadd.f32 %v1215, %v1266
  %v1280 = vadd.f32 %v1216, %v1266
  %v1281 = vadd.f32 %v1217, %v1266
  %v1282 = vadd.f32 %v1218, %v1266
  %v1283 = vadd.f32 %v1219, %v1266
  %v1284 = vadd.f32 %v1220, %v1266
  %v1285 = vadd.f32 %v1221, %v1266
  %v1286 = vadd.f32 %v1222, %v1266
  %v1287 = vadd.f32 %v1223, %v1266
  %v1288 = vadd.f32 %v1224, %v1266
  %v1289 = vadd.f32 %v1225, %v1266
  %v1290 = vadd.f32 %v1226, %v1266
  %v1291 = vadd.f32 %v1227, %v1266
  %v1292 = vadd.f32 %v1228, %v1266
  %v1293 = vadd.f32 %v1229, %v1266
  %v1294 = vadd.f32 %v1230, %v1266
  %v1295 = vadd.f32 %v1231, %v1266
  %v1296 = vadd.f32 %v1232, %v1266
  %v1297 = vadd.f32 %v1233, %v1266
  %v1298 = vadd.f32 %v1234, %v1266
  %v1299 = vadd.f32 %v1235, %v1266
  %v1300 = vadd.f32 %v1236, %v1266
  %v1301 = vadd.f32 %v1237, %v1266
  %v1302 = vadd.f32 %v1238, %v1266
  %v1303 = vadd.f32 %v1239, %v1266
  %v1304 = vadd.f32 %v1240, %v1266
  %v1305 = vadd.f32 %v1241, %v1266
  %v1306 = vadd.f32 %v1242, %v1266
  %v1307 = vadd.f32 %v1243, %v1266
  %v1308 = vadd.f32 %v1244, %v1266
  %v1309 = vadd.f32 %v1245, %v1266
  %v1310 = vadd.f32 %v1246, %v1266
  %v1311 = vadd.f32 %v1247, %v1266
  %v1312 = vadd.f32 %v1248, %v1266
  %v1313 = vadd.f32 %v1249, %v1266
  %v1314 = vadd.f32 %v1250, %v1266
  %v1315 = vadd.f32 %v1251, %v1266
  %v1316 = vadd.f32 %v1252, %v1266
  %v1317 = vadd.f32 %v1253, %v1266
  %v1318 = vadd.f32 %v1254, %v1266
  %v1319 = vadd.f32 %v1255, %v1266
  %v1320 = vadd.f32 %v1256, %v1266
  %v1321 = vadd.f32 %v1257, %v1266
  %v1322 = vadd.f32 %v1258, %v1266
  %v1323 = vadd.f32 %v1259, %v1266
  %v1324 = vadd.f32 %v1260, %v1266
  %v1325 = vadd.f32 %v1261, %v1266
  %v1326 = vpack.c.bf16 %v1269, %v1268
  %v1327 = vpack.c.bf16 %v1271, %v1270
  %v1328 = vpack.c.bf16 %v1273, %v1272
  %v1329 = vpack.c.bf16 %v1275, %v1274
  %v1330 = vpack.c.bf16 %v1277, %v1276
  %v1331 = vpack.c.bf16 %v1279, %v1278
  %v1332 = vpack.c.bf16 %v1281, %v1280
  %v1333 = vpack.c.bf16 %v1283, %v1282
  %v1334 = vpack.c.bf16 %v1285, %v1284
  %v1335 = vpack.c.bf16 %v1287, %v1286
  %v1336 = vpack.c.bf16 %v1289, %v1288
  %v1337 = vpack.c.bf16 %v1291, %v1290
  %v1338 = vpack.c.bf16 %v1293, %v1292
  %v1339 = vpack.c.bf16 %v1295, %v1294
  %v1340 = vpack.c.bf16 %v1297, %v1296
  %v1341 = vpack.c.bf16 %v1299, %v1298
  %v1342 = vpack.c.bf16 %v1301, %v1300
  %v1343 = vpack.c.bf16 %v1303, %v1302
  %v1344 = vpack.c.bf16 %v1305, %v1304
  %v1345 = vpack.c.bf16 %v1307, %v1306
  %v1346 = vpack.c.bf16 %v1309, %v1308
  %v1347 = vpack.c.bf16 %v1311, %v1310
  %v1348 = vpack.c.bf16 %v1313, %v1312
  %v1349 = vpack.c.bf16 %v1315, %v1314
  %v1350 = vpack.c.bf16 %v1317, %v1316
  %v1351 = vpack.c.bf16 %v1319, %v1318
  %v1352 = vpack.c.bf16 %v1321, %v1320
  %v1353 = vpack.c.bf16 %v1323, %v1322
  %v1354 = vpack.c.bf16 %v1325, %v1324
  %v1384 = vunpack.c.l.b16 %v1326
  %v1385 = vunpack.c.h.b16 %v1326
  %v1386 = vunpack.c.l.b16 %v1327
  %v1387 = vunpack.c.h.b16 %v1327
  %v1388 = vunpack.c.l.b16 %v1328
  %v1389 = vunpack.c.h.b16 %v1328
  %v1390 = vunpack.c.l.b16 %v1329
  %v1391 = vunpack.c.h.b16 %v1329
  %v1392 = vunpack.c.l.b16 %v1330
  %v1393 = vunpack.c.h.b16 %v1330
  %v1394 = vunpack.c.l.b16 %v1331
  %v1395 = vunpack.c.h.b16 %v1331
  %v1396 = vunpack.c.l.b16 %v1332
  %v1397 = vunpack.c.h.b16 %v1332
  %v1398 = vunpack.c.l.b16 %v1333
  %v1399 = vunpack.c.h.b16 %v1333
  %v1400 = vunpack.c.l.b16 %v1334
  %v1401 = vunpack.c.h.b16 %v1334
  %v1402 = vunpack.c.l.b16 %v1335
  %v1403 = vunpack.c.h.b16 %v1335
  %v1404 = vunpack.c.l.b16 %v1336
  %v1405 = vunpack.c.h.b16 %v1336
  %v1406 = vunpack.c.l.b16 %v1337
  %v1407 = vunpack.c.h.b16 %v1337
  %v1408 = vunpack.c.l.b16 %v1338
  %v1409 = vunpack.c.h.b16 %v1338
  %v1410 = vunpack.c.l.b16 %v1339
  %v1411 = vunpack.c.h.b16 %v1339
  %v1412 = vunpack.c.l.b16 %v1340
  %v1413 = vunpack.c.h.b16 %v1340
  %v1414 = vunpack.c.l.b16 %v1341
  %v1415 = vunpack.c.h.b16 %v1341
  %v1416 = vunpack.c.l.b16 %v1342
  %v1417 = vunpack.c.h.b16 %v1342
  %v1418 = vunpack.c.l.b16 %v1343
  %v1419 = vunpack.c.h.b16 %v1343
  %v1420 = vunpack.c.l.b16 %v1344
  %v1421 = vunpack.c.h.b16 %v1344
  %v1422 = vunpack.c.l.b16 %v1345
  %v1423 = vunpack.c.h.b16 %v1345
  %v1424 = vunpack.c.l.b16 %v1346
  %v1425 = vunpack.c.h.b16 %v1346
  %v1426 = vunpack.c.l.b16 %v1347
  %v1427 = vunpack.c.h.b16 %v1347
  %v1428 = vunpack.c.l.b16 %v1348
  %v1429 = vunpack.c.h.b16 %v1348
  %v1430 = vunpack.c.l.b16 %v1349
  %v1431 = vunpack.c.h.b16 %v1349
  %v1432 = vunpack.c.l.b16 %v1350
  %v1433 = vunpack.c.h.b16 %v1350
  %v1434 = vunpack.c.l.b16 %v1351
  %v1435 = vunpack.c.h.b16 %v1351
  %v1436 = vunpack.c.l.b16 %v1352
  %v1437 = vunpack.c.h.b16 %v1352
  %v1438 = vunpack.c.l.b16 %v1353
  %v1439 = vunpack.c.h.b16 %v1353
  %v1440 = vunpack.c.l.b16 %v1354
  %v1441 = vunpack.c.h.b16 %v1354
  %v1442 = vpack.c.b16 %v1384, %v1384
  %v1443 = vpack.c.b16 %v1385, %v1385
  %v1444 = vpack.c.b16 %v1386, %v1386
  %v1445 = vpack.c.b16 %v1387, %v1387
  %v1446 = vpack.c.b16 %v1388, %v1388
  %v1447 = vpack.c.b16 %v1389, %v1389
  %v1448 = vpack.c.b16 %v1390, %v1390
  %v1449 = vpack.c.b16 %v1391, %v1391
  %v1450 = vpack.c.b16 %v1392, %v1392
  %v1451 = vpack.c.b16 %v1393, %v1393
  %v1452 = vpack.c.b16 %v1394, %v1394
  %v1453 = vpack.c.b16 %v1395, %v1395
  %v1454 = vpack.c.b16 %v1396, %v1396
  %v1455 = vpack.c.b16 %v1397, %v1397
  %v1456 = vpack.c.b16 %v1398, %v1398
  %v1457 = vpack.c.b16 %v1399, %v1399
  %v1458 = vpack.c.b16 %v1400, %v1400
  %v1459 = vpack.c.b16 %v1401, %v1401
  %v1460 = vpack.c.b16 %v1402, %v1402
  %v1461 = vpack.c.b16 %v1403, %v1403
  %v1462 = vpack.c.b16 %v1404, %v1404
  %v1463 = vpack.c.b16 %v1405, %v1405
  %v1464 = vpack.c.b16 %v1406, %v1406
  %v1465 = vpack.c.b16 %v1407, %v1407
  %v1466 = vpack.c.b16 %v1408, %v1408
  %v1467 = vpack.c.b16 %v1409, %v1409
  %v1468 = vpack.c.b16 %v1410, %v1410
  %v1469 = vpack.c.b16 %v1411, %v1411
  %v1470 = vpack.c.b16 %v1412, %v1412
  %v1471 = vpack.c.b16 %v1413, %v1413
  %v1472 = vpack.c.b16 %v1414, %v1414
  %v1473 = vpack.c.b16 %v1415, %v1415
  %v1474 = vpack.c.b16 %v1416, %v1416
  %v1475 = vpack.c.b16 %v1417, %v1417
  %v1476 = vpack.c.b16 %v1418, %v1418
  %v1477 = vpack.c.b16 %v1419, %v1419
  %v1478 = vpack.c.b16 %v1420, %v1420
  %v1479 = vpack.c.b16 %v1421, %v1421
  %v1480 = vpack.c.b16 %v1422, %v1422
  %v1481 = vpack.c.b16 %v1423, %v1423
  %v1482 = vpack.c.b16 %v1424, %v1424
  %v1483 = vpack.c.b16 %v1425, %v1425
  %v1484 = vpack.c.b16 %v1426, %v1426
  %v1485 = vpack.c.b16 %v1427, %v1427
  %v1486 = vpack.c.b16 %v1428, %v1428
  %v1487 = vpack.c.b16 %v1429, %v1429
  %v1488 = vpack.c.b16 %v1430, %v1430
  %v1489 = vpack.c.b16 %v1431, %v1431
  %v1490 = vpack.c.b16 %v1432, %v1432
  %v1491 = vpack.c.b16 %v1433, %v1433
  %v1492 = vpack.c.b16 %v1434, %v1434
  %v1493 = vpack.c.b16 %v1435, %v1435
  %v1494 = vpack.c.b16 %v1436, %v1436
  %v1495 = vpack.c.b16 %v1437, %v1437
  %v1496 = vpack.c.b16 %v1438, %v1438
  %v1497 = vpack.c.b16 %v1439, %v1439
  %v1498 = vpack.c.b16 %v1440, %v1440
  %v1499 = vpack.c.b16 %v1441, %v1441
  %1558 = vst [vmem:[%s5] sm:$0xf] %v1442
  %1559 = vst [vmem:[%s5 + $0x4] sm:$0xf] %v1443
  %1560 = vst [vmem:[%s5 + $0x8] sm:$0xf] %v1444
  %1561 = vst [vmem:[%s5 + $0xc] sm:$0xf] %v1445
  %1562 = vst [vmem:[%s5 + $0x10] sm:$0xf] %v1446
  %1563 = vst [vmem:[%s5 + $0x14] sm:$0xf] %v1447
  %1564 = vst [vmem:[%s5 + $0x18] sm:$0xf] %v1448
  %1565 = vst [vmem:[%s5 + $0x1c] sm:$0xf] %v1449
  %1566 = vst [vmem:[%s5 + $0x20] sm:$0xf] %v1450
  %1567 = vst [vmem:[%s5 + $0x24] sm:$0xf] %v1451
  %1568 = vst [vmem:[%s5 + $0x28] sm:$0xf] %v1452
  %1569 = vst [vmem:[%s5 + $0x2c] sm:$0xf] %v1453
  %1570 = vst [vmem:[%s5 + $0x30] sm:$0xf] %v1454
  %1571 = vst [vmem:[%s5 + $0x34] sm:$0xf] %v1455
  %1572 = vst [vmem:[%s5 + $0x38] sm:$0xf] %v1456
  %1573 = vst [vmem:[%s5 + $0x3c] sm:$0xf] %v1457
  %1574 = vst [vmem:[%s5 + $0x40] sm:$0xf] %v1458
  %1575 = vst [vmem:[%s5 + $0x44] sm:$0xf] %v1459
  %1576 = vst [vmem:[%s5 + $0x48] sm:$0xf] %v1460
  %1577 = vst [vmem:[%s5 + $0x4c] sm:$0xf] %v1461
  %1578 = vst [vmem:[%s5 + $0x50] sm:$0xf] %v1462
  %1579 = vst [vmem:[%s5 + $0x54] sm:$0xf] %v1463
  %1580 = vst [vmem:[%s5 + $0x58] sm:$0xf] %v1464
  %1581 = vst [vmem:[%s5 + $0x5c] sm:$0xf] %v1465
  %1582 = vst [vmem:[%s5 + $0x60] sm:$0xf] %v1466
  %1583 = vst [vmem:[%s5 + $0x64] sm:$0xf] %v1467
  %1584 = vst [vmem:[%s5 + $0x68] sm:$0xf] %v1468
  %1585 = vst [vmem:[%s5 + $0x6c] sm:$0xf] %v1469
  %1586 = vst [vmem:[%s5 + $0x70] sm:$0xf] %v1470
  %1587 = vst [vmem:[%s5 + $0x74] sm:$0xf] %v1471
  %1588 = vst [vmem:[%s5 + $0x78] sm:$0xf] %v1472
  %1589 = vst [vmem:[%s5 + $0x7c] sm:$0xf] %v1473
  %1590 = vst [vmem:[%s5 + $0x80] sm:$0xf] %v1474
  %1591 = vst [vmem:[%s5 + $0x84] sm:$0xf] %v1475
  %1592 = vst [vmem:[%s5 + $0x88] sm:$0xf] %v1476
  %1593 = vst [vmem:[%s5 + $0x8c] sm:$0xf] %v1477
  %1594 = vst [vmem:[%s5 + $0x90] sm:$0xf] %v1478
  %1595 = vst [vmem:[%s5 + $0x94] sm:$0xf] %v1479
  %1596 = vst [vmem:[%s5 + $0x98] sm:$0xf] %v1480
  %1597 = vst [vmem:[%s5 + $0x9c] sm:$0xf] %v1481
  %1598 = vst [vmem:[%s5 + $0xa0] sm:$0xf] %v1482
  %1599 = vst [vmem:[%s5 + $0xa4] sm:$0xf] %v1483
  %1600 = vst [vmem:[%s5 + $0xa8] sm:$0xf] %v1484
  %1601 = vst [vmem:[%s5 + $0xac] sm:$0xf] %v1485
  %1602 = vst [vmem:[%s5 + $0xb0] sm:$0xf] %v1486
  %1603 = vst [vmem:[%s5 + $0xb4] sm:$0xf] %v1487
  %1604 = vst [vmem:[%s5 + $0xb8] sm:$0xf] %v1488
  %1605 = vst [vmem:[%s5 + $0xbc] sm:$0xf] %v1489
  %1606 = vst [vmem:[%s5 + $0xc0] sm:$0xf] %v1490
  %1607 = vst [vmem:[%s5 + $0xc4] sm:$0xf] %v1491
  %1608 = vst [vmem:[%s5 + $0xc8] sm:$0xf] %v1492
  %1609 = vst [vmem:[%s5 + $0xcc] sm:$0xf] %v1493
  %1610 = vst [vmem:[%s5 + $0xd0] sm:$0xf] %v1494
  %1611 = vst [vmem:[%s5 + $0xd4] sm:$0xf] %v1495
  %1612 = vst [vmem:[%s5 + $0xd8] sm:$0xf] %v1496
  %1613 = vst [vmem:[%s5 + $0xdc] sm:$0xf] %v1497
  %1614 = vst [vmem:[%s5 + $0xe0] sm:$0xf] %v1498
  %1615 = vst [vmem:[%s5 + $0xe4] sm:$0xf] %v1499
  // Predicated region
  $region22: #{_net_forward.11} parent=0 // pred_check
    _
  $region23: #{_net_forward.11} parent=0 // pred_check_branch
    %1617 = sbr.rel (0) target = $region25
  $region24: #{_net_forward.11} parent=0 // pred_region
    _
  $region25: #{_net_forward.11} parent=0 // pred_fallthru
    _
  // Predicated region
  $region26: #{_net_forward.11} parent=0 // pred_check
    _
  $region27: #{_net_forward.11} parent=0 // pred_check_branch
    %1619 = sbr.rel (0) target = $region29
  $region28: #{_net_forward.11} parent=0 // pred_region
    _
  $region29: #{_net_forward.11} parent=0 // pred_fallthru
    _

// kernel: _net_forward.13
$region0: #{_net_forward.13}
  #allocation0 [shape = 'u32[]', space=smem, size = 0x4, offset = 0x4, fixed_abs, tag = 'smem constant byte address 0x4 - core index']
  #allocation1 [shape = 'u32[144,128]{1,0:T(1,128)}', space=vmem, size = 0x12000, scoped, tag = 'internal scratch']
  %s0 = inlined_call_operand.vmem [shape: bf16[464,384], index: 0, kind: input, shape index: {}]
  %s1 = inlined_call_operand.vmem [shape: bf16[384,128], index: 1, kind: input, shape index: {}]
  %s2 = inlined_call_operand.vmem [shape: f32[1,128], index: 2, kind: input, shape index: {}]
  %s3 = inlined_call_operand.vmem [shape: f32[1,128], index: 3, kind: input, shape index: {}]
  %s4 = inlined_call_operand.vmem [shape: f32[1,128], index: 4, kind: input, shape index: {}]
  %s5 = inlined_call_operand.vmem [shape: bf16[464,128], index: 5, kind: output, shape index: {}]
  %s6 = sld [smem:[#allocation0]]
  $region30: #{_net_forward.13} parent=0
    _
  %s8 = ssub.s32 1, %s6
  %s9 = scalar_select 0, %s8, %s6
  // Predicated region
  $region2: #{_net_forward.13} parent=0 // pred_check
    _
  $region3: #{_net_forward.13} parent=0 // pred_check_branch
    %11 = sbr.rel (0) target = $region5
  $region4: #{_net_forward.13} parent=0 // pred_region
    _
  $region5: #{_net_forward.13} parent=0 // pred_fallthru
    _
  // Predicated region
  $region6: #{_net_forward.13} parent=0 // pred_check
    _
  $region7: #{_net_forward.13} parent=0 // pred_check_branch
    %13 = sbr.rel (0) target = $region9
  $region8: #{_net_forward.13} parent=0 // pred_region
    _
  $region9: #{_net_forward.13} parent=0 // pred_fallthru
    _
  // Predicated region
  $region10: #{_net_forward.13} parent=0 // pred_check
    _
  $region11: #{_net_forward.13} parent=0 // pred_check_branch
    %15 = sbr.rel (0) target = $region13
  $region12: #{_net_forward.13} parent=0 // pred_region
    _
  $region13: #{_net_forward.13} parent=0 // pred_fallthru
    _
  // Predicated region
  $region14: #{_net_forward.13} parent=0 // pred_check
    _
  $region15: #{_net_forward.13} parent=0 // pred_check_branch
    %17 = sbr.rel (0) target = $region17
  $region16: #{_net_forward.13} parent=0 // pred_region
    _
  $region17: #{_net_forward.13} parent=0 // pred_fallthru
    _
  // Predicated region
  $region18: #{_net_forward.13} parent=0 // pred_check
    _
  $region19: #{_net_forward.13} parent=0 // pred_check_branch
    %19 = sbr.rel (0) target = $region21
  $region20: #{_net_forward.13} parent=0 // pred_region
    _
  $region21: #{_net_forward.13} parent=0 // pred_fallthru
    _
  %v21 = vld [vmem:[%s0] sm:$0xff]
  %v22 = vld [vmem:[%s0 + $0x8] sm:$0xf]
  %v23 = vld [vmem:[%s0 + $0xc] sm:$0xff]
  %v24 = vld [vmem:[%s0 + $0x14] sm:$0xf]
  %v25 = vld [vmem:[%s0 + $0x18] sm:$0xff]
  %v26 = vld [vmem:[%s0 + $0x20] sm:$0xf]
  %v27 = vld [vmem:[%s0 + $0x24] sm:$0xff]
  %v28 = vld [vmem:[%s0 + $0x2c] sm:$0xf]
  %v29 = vld [vmem:[%s0 + $0x30] sm:$0xff]
  %v30 = vld [vmem:[%s0 + $0x38] sm:$0xf]
  %v31 = vld [vmem:[%s0 + $0x3c] sm:$0xff]
  %v32 = vld [vmem:[%s0 + $0x44] sm:$0xf]
  %v33 = vld [vmem:[%s0 + $0x48] sm:$0xff]
  %v34 = vld [vmem:[%s0 + $0x50] sm:$0xf]
  %v35 = vld [vmem:[%s0 + $0x54] sm:$0xff]
  %v36 = vld [vmem:[%s0 + $0x5c] sm:$0xf]
  %v37 = vld [vmem:[%s0 + $0x60] sm:$0xff]
  %v38 = vld [vmem:[%s0 + $0x68] sm:$0xf]
  %v39 = vld [vmem:[%s0 + $0x6c] sm:$0xff]
  %v40 = vld [vmem:[%s0 + $0x74] sm:$0xf]
  %v41 = vld [vmem:[%s0 + $0x78] sm:$0xff]
  %v42 = vld [vmem:[%s0 + $0x80] sm:$0xf]
  %v43 = vld [vmem:[%s0 + $0x84] sm:$0xff]
  %v44 = vld [vmem:[%s0 + $0x8c] sm:$0xf]
  %v45 = vld [vmem:[%s0 + $0x90] sm:$0xff]
  %v46 = vld [vmem:[%s0 + $0x98] sm:$0xf]
  %v47 = vld [vmem:[%s0 + $0x9c] sm:$0xff]
  %v48 = vld [vmem:[%s0 + $0xa4] sm:$0xf]
  %v49 = vld [vmem:[%s0 + $0xa8] sm:$0xff]
  %v50 = vld [vmem:[%s0 + $0xb0] sm:$0xf]
  %v51 = vld [vmem:[%s0 + $0xb4] sm:$0xff]
  %v52 = vld [vmem:[%s0 + $0xbc] sm:$0xf]
  %v53 = vld [vmem:[%s0 + $0xc0] sm:$0xff]
  %v54 = vld [vmem:[%s0 + $0xc8] sm:$0xf]
  %v55 = vld [vmem:[%s0 + $0xcc] sm:$0xff]
  %v56 = vld [vmem:[%s0 + $0xd4] sm:$0xf]
  %v57 = vld [vmem:[%s0 + $0xd8] sm:$0xff]
  %v58 = vld [vmem:[%s0 + $0xe0] sm:$0xf]
  %v59 = vld [vmem:[%s0 + $0xe4] sm:$0xff]
  %v60 = vld [vmem:[%s0 + $0xec] sm:$0xf]
  %v61 = vld [vmem:[%s0 + $0xf0] sm:$0xff]
  %v62 = vld [vmem:[%s0 + $0xf8] sm:$0xf]
  %v63 = vld [vmem:[%s0 + $0xfc] sm:$0xff]
  %v64 = vld [vmem:[%s0 + $0x104] sm:$0xf]
  %v65 = vld [vmem:[%s0 + $0x108] sm:$0xff]
  %v66 = vld [vmem:[%s0 + $0x110] sm:$0xf]
  %v67 = vld [vmem:[%s0 + $0x114] sm:$0xff]
  %v68 = vld [vmem:[%s0 + $0x11c] sm:$0xf]
  %v69 = vld [vmem:[%s0 + $0x120] sm:$0xff]
  %v70 = vld [vmem:[%s0 + $0x128] sm:$0xf]
  %v71 = vld [vmem:[%s0 + $0x12c] sm:$0xff]
  %v72 = vld [vmem:[%s0 + $0x134] sm:$0xf]
  %v73 = vld [vmem:[%s0 + $0x138] sm:$0xff]
  %v74 = vld [vmem:[%s0 + $0x140] sm:$0xf]
  %v75 = vld [vmem:[%s0 + $0x144] sm:$0xff]
  %v76 = vld [vmem:[%s0 + $0x14c] sm:$0xf]
  %v77 = vld [vmem:[%s0 + $0x150] sm:$0xff]
  %v78 = vld [vmem:[%s0 + $0x158] sm:$0xf]
  %v79 = vld [vmem:[%s0 + $0x15c] sm:$0xff]
  %v80 = vld [vmem:[%s0 + $0x164] sm:$0xf]
  %v81 = vld [vmem:[%s0 + $0x168] sm:$0xff]
  %v82 = vld [vmem:[%s0 + $0x170] sm:$0xf]
  %v83 = vld [vmem:[%s0 + $0x174] sm:$0xff]
  %v84 = vld [vmem:[%s0 + $0x17c] sm:$0xf]
  %v85 = vld [vmem:[%s0 + $0x180] sm:$0xff]
  %v86 = vld [vmem:[%s0 + $0x188] sm:$0xf]
  %v87 = vld [vmem:[%s0 + $0x18c] sm:$0xff]
  %v88 = vld [vmem:[%s0 + $0x194] sm:$0xf]
  %v89 = vld [vmem:[%s0 + $0x198] sm:$0xff]
  %v90 = vld [vmem:[%s0 + $0x1a0] sm:$0xf]
  %v91 = vld [vmem:[%s0 + $0x1a4] sm:$0xff]
  %v92 = vld [vmem:[%s0 + $0x1ac] sm:$0xf]
  %v93 = vld [vmem:[%s0 + $0x1b0] sm:$0xff]
  %v94 = vld [vmem:[%s0 + $0x1b8] sm:$0xf]
  %v95 = vld [vmem:[%s0 + $0x1bc] sm:$0xff]
  %v96 = vld [vmem:[%s0 + $0x1c4] sm:$0xf]
  %v97 = vld [vmem:[%s0 + $0x1c8] sm:$0xff]
  %v98 = vld [vmem:[%s0 + $0x1d0] sm:$0xf]
  %v99 = vld [vmem:[%s0 + $0x1d4] sm:$0xff]
  %v100 = vld [vmem:[%s0 + $0x1dc] sm:$0xf]
  %v101 = vld [vmem:[%s0 + $0x1e0] sm:$0xff]
  %v102 = vld [vmem:[%s0 + $0x1e8] sm:$0xf]
  %v103 = vld [vmem:[%s0 + $0x1ec] sm:$0xff]
  %v104 = vld [vmem:[%s0 + $0x1f4] sm:$0xf]
  %v105 = vld [vmem:[%s0 + $0x1f8] sm:$0xff]
  %v106 = vld [vmem:[%s0 + $0x200] sm:$0xf]
  %v107 = vld [vmem:[%s0 + $0x204] sm:$0xff]
  %v108 = vld [vmem:[%s0 + $0x20c] sm:$0xf]
  %v109 = vld [vmem:[%s0 + $0x210] sm:$0xff]
  %v110 = vld [vmem:[%s0 + $0x218] sm:$0xf]
  %v111 = vld [vmem:[%s0 + $0x21c] sm:$0xff]
  %v112 = vld [vmem:[%s0 + $0x224] sm:$0xf]
  %v113 = vld [vmem:[%s0 + $0x228] sm:$0xff]
  %v114 = vld [vmem:[%s0 + $0x230] sm:$0xf]
  %v115 = vld [vmem:[%s0 + $0x234] sm:$0xff]
  %v116 = vld [vmem:[%s0 + $0x23c] sm:$0xf]
  %v117 = vld [vmem:[%s0 + $0x240] sm:$0xff]
  %v118 = vld [vmem:[%s0 + $0x248] sm:$0xf]
  %v119 = vld [vmem:[%s0 + $0x24c] sm:$0xff]
  %v120 = vld [vmem:[%s0 + $0x254] sm:$0xf]
  %v121 = vld [vmem:[%s0 + $0x258] sm:$0xff]
  %v122 = vld [vmem:[%s0 + $0x260] sm:$0xf]
  %v123 = vld [vmem:[%s0 + $0x264] sm:$0xff]
  %v124 = vld [vmem:[%s0 + $0x26c] sm:$0xf]
  %v125 = vld [vmem:[%s0 + $0x270] sm:$0xff]
  %v126 = vld [vmem:[%s0 + $0x278] sm:$0xf]
  %v127 = vld [vmem:[%s0 + $0x27c] sm:$0xff]
  %v128 = vld [vmem:[%s0 + $0x284] sm:$0xf]
  %v129 = vld [vmem:[%s0 + $0x288] sm:$0xff]
  %v130 = vld [vmem:[%s0 + $0x290] sm:$0xf]
  %v131 = vld [vmem:[%s0 + $0x294] sm:$0xff]
  %v132 = vld [vmem:[%s0 + $0x29c] sm:$0xf]
  %v133 = vld [vmem:[%s0 + $0x2a0] sm:$0xff]
  %v134 = vld [vmem:[%s0 + $0x2a8] sm:$0xf]
  %v135 = vld [vmem:[%s0 + $0x2ac] sm:$0xff]
  %v136 = vld [vmem:[%s0 + $0x2b4] sm:$0xf]
  %v137 = vld [vmem:[%s1] sm:$0xf]
  %v138 = vld [vmem:[%s1 + $0x4] sm:$0xf]
  %v139 = vld [vmem:[%s1 + $0x8] sm:$0xf]
  %v140 = vld [vmem:[%s1 + $0xc] sm:$0xf]
  %v141 = vld [vmem:[%s1 + $0x10] sm:$0xf]
  %v142 = vld [vmem:[%s1 + $0x14] sm:$0xf]
  %v143 = vld [vmem:[%s1 + $0x18] sm:$0xf]
  %v144 = vld [vmem:[%s1 + $0x1c] sm:$0xf]
  %v145 = vld [vmem:[%s1 + $0x20] sm:$0xf]
  %v146 = vld [vmem:[%s1 + $0x24] sm:$0xf]
  %v147 = vld [vmem:[%s1 + $0x28] sm:$0xf]
  %v148 = vld [vmem:[%s1 + $0x2c] sm:$0xf]
  %v149 = vld [vmem:[%s1 + $0x30] sm:$0xf]
  %v150 = vld [vmem:[%s1 + $0x34] sm:$0xf]
  %v151 = vld [vmem:[%s1 + $0x38] sm:$0xf]
  %v152 = vld [vmem:[%s1 + $0x3c] sm:$0xf]
  %v153 = vld [vmem:[%s1 + $0x40] sm:$0xf]
  %v154 = vld [vmem:[%s1 + $0x44] sm:$0xf]
  %v155 = vld [vmem:[%s1 + $0x48] sm:$0xf]
  %v156 = vld [vmem:[%s1 + $0x4c] sm:$0xf]
  %v157 = vld [vmem:[%s1 + $0x50] sm:$0xf]
  %v158 = vld [vmem:[%s1 + $0x54] sm:$0xf]
  %v159 = vld [vmem:[%s1 + $0x58] sm:$0xf]
  %v160 = vld [vmem:[%s1 + $0x5c] sm:$0xf]
  %v161 = vld [vmem:[%s1 + $0x60] sm:$0xf]
  %v162 = vld [vmem:[%s1 + $0x64] sm:$0xf]
  %v163 = vld [vmem:[%s1 + $0x68] sm:$0xf]
  %v164 = vld [vmem:[%s1 + $0x6c] sm:$0xf]
  %v165 = vld [vmem:[%s1 + $0x70] sm:$0xf]
  %v166 = vld [vmem:[%s1 + $0x74] sm:$0xf]
  %v167 = vld [vmem:[%s1 + $0x78] sm:$0xf]
  %v168 = vld [vmem:[%s1 + $0x7c] sm:$0xf]
  %v169 = vld [vmem:[%s1 + $0x80] sm:$0xf]
  %v170 = vld [vmem:[%s1 + $0x84] sm:$0xf]
  %v171 = vld [vmem:[%s1 + $0x88] sm:$0xf]
  %v172 = vld [vmem:[%s1 + $0x8c] sm:$0xf]
  %v173 = vld [vmem:[%s1 + $0x90] sm:$0xf]
  %v174 = vld [vmem:[%s1 + $0x94] sm:$0xf]
  %v175 = vld [vmem:[%s1 + $0x98] sm:$0xf]
  %v176 = vld [vmem:[%s1 + $0x9c] sm:$0xf]
  %v177 = vld [vmem:[%s1 + $0xa0] sm:$0xf]
  %v178 = vld [vmem:[%s1 + $0xa4] sm:$0xf]
  %v179 = vld [vmem:[%s1 + $0xa8] sm:$0xf]
  %v180 = vld [vmem:[%s1 + $0xac] sm:$0xf]
  %v181 = vld [vmem:[%s1 + $0xb0] sm:$0xf]
  %v182 = vld [vmem:[%s1 + $0xb4] sm:$0xf]
  %v183 = vld [vmem:[%s1 + $0xb8] sm:$0xf]
  %v184 = vld [vmem:[%s1 + $0xbc] sm:$0xf]
  %v185 = vld [vmem:[%s2] sm:$0x1]
  %v187 = vlaneseq
  %v188 = vshrl.u32 %v187, 7
  %v189 = vsub.s32 0, %v188
  %v190 = vrot.slane %v185, %v189
  %v308 = vunpack.c.l.b16 %v21
  %v309 = vunpack.c.h.b16 %v21
  %v310 = vunpack.c.l.b16 %v22
  %v311 = vunpack.c.l.b16 %v23
  %v312 = vunpack.c.h.b16 %v23
  %v313 = vunpack.c.l.b16 %v24
  %v314 = vunpack.c.l.b16 %v25
  %v315 = vunpack.c.h.b16 %v25
  %v316 = vunpack.c.l.b16 %v26
  %v317 = vunpack.c.l.b16 %v27
  %v318 = vunpack.c.h.b16 %v27
  %v319 = vunpack.c.l.b16 %v28
  %v320 = vunpack.c.l.b16 %v29
  %v321 = vunpack.c.h.b16 %v29
  %v322 = vunpack.c.l.b16 %v30
  %v323 = vunpack.c.l.b16 %v31
  %v324 = vunpack.c.h.b16 %v31
  %v325 = vunpack.c.l.b16 %v32
  %v326 = vunpack.c.l.b16 %v33
  %v327 = vunpack.c.h.b16 %v33
  %v328 = vunpack.c.l.b16 %v34
  %v329 = vunpack.c.l.b16 %v35
  %v330 = vunpack.c.h.b16 %v35
  %v331 = vunpack.c.l.b16 %v36
  %v332 = vunpack.c.l.b16 %v37
  %v333 = vunpack.c.h.b16 %v37
  %v334 = vunpack.c.l.b16 %v38
  %v335 = vunpack.c.l.b16 %v39
  %v336 = vunpack.c.h.b16 %v39
  %v337 = vunpack.c.l.b16 %v40
  %v338 = vunpack.c.l.b16 %v41
  %v339 = vunpack.c.h.b16 %v41
  %v340 = vunpack.c.l.b16 %v42
  %v341 = vunpack.c.l.b16 %v43
  %v342 = vunpack.c.h.b16 %v43
  %v343 = vunpack.c.l.b16 %v44
  %v344 = vunpack.c.l.b16 %v45
  %v345 = vunpack.c.h.b16 %v45
  %v346 = vunpack.c.l.b16 %v46
  %v347 = vunpack.c.l.b16 %v47
  %v348 = vunpack.c.h.b16 %v47
  %v349 = vunpack.c.l.b16 %v48
  %v350 = vunpack.c.l.b16 %v49
  %v351 = vunpack.c.h.b16 %v49
  %v352 = vunpack.c.l.b16 %v50
  %v353 = vunpack.c.l.b16 %v51
  %v354 = vunpack.c.h.b16 %v51
  %v355 = vunpack.c.l.b16 %v52
  %v356 = vunpack.c.l.b16 %v53
  %v357 = vunpack.c.h.b16 %v53
  %v358 = vunpack.c.l.b16 %v54
  %v359 = vunpack.c.l.b16 %v55
  %v360 = vunpack.c.h.b16 %v55
  %v361 = vunpack.c.l.b16 %v56
  %v362 = vunpack.c.l.b16 %v57
  %v363 = vunpack.c.h.b16 %v57
  %v364 = vunpack.c.l.b16 %v58
  %v365 = vunpack.c.l.b16 %v59
  %v366 = vunpack.c.h.b16 %v59
  %v367 = vunpack.c.l.b16 %v60
  %v368 = vunpack.c.l.b16 %v61
  %v369 = vunpack.c.h.b16 %v61
  %v370 = vunpack.c.l.b16 %v62
  %v371 = vunpack.c.l.b16 %v63
  %v372 = vunpack.c.h.b16 %v63
  %v373 = vunpack.c.l.b16 %v64
  %v374 = vunpack.c.l.b16 %v65
  %v375 = vunpack.c.h.b16 %v65
  %v376 = vunpack.c.l.b16 %v66
  %v377 = vunpack.c.l.b16 %v67
  %v378 = vunpack.c.h.b16 %v67
  %v379 = vunpack.c.l.b16 %v68
  %v380 = vunpack.c.l.b16 %v69
  %v381 = vunpack.c.h.b16 %v69
  %v382 = vunpack.c.l.b16 %v70
  %v383 = vunpack.c.l.b16 %v71
  %v384 = vunpack.c.h.b16 %v71
  %v385 = vunpack.c.l.b16 %v72
  %v386 = vunpack.c.l.b16 %v73
  %v387 = vunpack.c.h.b16 %v73
  %v388 = vunpack.c.l.b16 %v74
  %v389 = vunpack.c.l.b16 %v75
  %v390 = vunpack.c.h.b16 %v75
  %v391 = vunpack.c.l.b16 %v76
  %v392 = vunpack.c.l.b16 %v77
  %v393 = vunpack.c.h.b16 %v77
  %v394 = vunpack.c.l.b16 %v78
  %v395 = vunpack.c.l.b16 %v79
  %v396 = vunpack.c.h.b16 %v79
  %v397 = vunpack.c.l.b16 %v80
  %v398 = vunpack.c.l.b16 %v81
  %v399 = vunpack.c.h.b16 %v81
  %v400 = vunpack.c.l.b16 %v82
  %v401 = vunpack.c.l.b16 %v83
  %v402 = vunpack.c.h.b16 %v83
  %v403 = vunpack.c.l.b16 %v84
  %v404 = vunpack.c.l.b16 %v85
  %v405 = vunpack.c.h.b16 %v85
  %v406 = vunpack.c.l.b16 %v86
  %v407 = vunpack.c.l.b16 %v87
  %v408 = vunpack.c.h.b16 %v87
  %v409 = vunpack.c.l.b16 %v88
  %v410 = vunpack.c.l.b16 %v89
  %v411 = vunpack.c.h.b16 %v89
  %v412 = vunpack.c.l.b16 %v90
  %v413 = vunpack.c.l.b16 %v91
  %v414 = vunpack.c.h.b16 %v91
  %v415 = vunpack.c.l.b16 %v92
  %v416 = vunpack.c.l.b16 %v93
  %v417 = vunpack.c.h.b16 %v93
  %v418 = vunpack.c.l.b16 %v94
  %v419 = vunpack.c.l.b16 %v95
  %v420 = vunpack.c.h.b16 %v95
  %v421 = vunpack.c.l.b16 %v96
  %v422 = vunpack.c.l.b16 %v97
  %v423 = vunpack.c.h.b16 %v97
  %v424 = vunpack.c.l.b16 %v98
  %v425 = vunpack.c.l.b16 %v99
  %v426 = vunpack.c.h.b16 %v99
  %v427 = vunpack.c.l.b16 %v100
  %v428 = vunpack.c.l.b16 %v101
  %v429 = vunpack.c.h.b16 %v101
  %v430 = vunpack.c.l.b16 %v102
  %v431 = vunpack.c.l.b16 %v103
  %v432 = vunpack.c.h.b16 %v103
  %v433 = vunpack.c.l.b16 %v104
  %v434 = vunpack.c.l.b16 %v105
  %v435 = vunpack.c.h.b16 %v105
  %v436 = vunpack.c.l.b16 %v106
  %v437 = vunpack.c.l.b16 %v107
  %v438 = vunpack.c.h.b16 %v107
  %v439 = vunpack.c.l.b16 %v108
  %v440 = vunpack.c.l.b16 %v109
  %v441 = vunpack.c.h.b16 %v109
  %v442 = vunpack.c.l.b16 %v110
  %v443 = vunpack.c.l.b16 %v111
  %v444 = vunpack.c.h.b16 %v111
  %v445 = vunpack.c.l.b16 %v112
  %v446 = vunpack.c.l.b16 %v113
  %v447 = vunpack.c.h.b16 %v113
  %v448 = vunpack.c.l.b16 %v114
  %v449 = vunpack.c.l.b16 %v115
  %v450 = vunpack.c.h.b16 %v115
  %v451 = vunpack.c.l.b16 %v116
  %v452 = vunpack.c.l.b16 %v117
  %v453 = vunpack.c.h.b16 %v117
  %v454 = vunpack.c.l.b16 %v118
  %v455 = vunpack.c.l.b16 %v119
  %v456 = vunpack.c.h.b16 %v119
  %v457 = vunpack.c.l.b16 %v120
  %v458 = vunpack.c.l.b16 %v121
  %v459 = vunpack.c.h.b16 %v121
  %v460 = vunpack.c.l.b16 %v122
  %v461 = vunpack.c.l.b16 %v123
  %v462 = vunpack.c.h.b16 %v123
  %v463 = vunpack.c.l.b16 %v124
  %v464 = vunpack.c.l.b16 %v125
  %v465 = vunpack.c.h.b16 %v125
  %v466 = vunpack.c.l.b16 %v126
  %v467 = vunpack.c.l.b16 %v127
  %v468 = vunpack.c.h.b16 %v127
  %v469 = vunpack.c.l.b16 %v128
  %v470 = vunpack.c.l.b16 %v129
  %v471 = vunpack.c.h.b16 %v129
  %v472 = vunpack.c.l.b16 %v130
  %v473 = vunpack.c.l.b16 %v131
  %v474 = vunpack.c.h.b16 %v131
  %v475 = vunpack.c.l.b16 %v132
  %v476 = vunpack.c.l.b16 %v133
  %v477 = vunpack.c.h.b16 %v133
  %v478 = vunpack.c.l.b16 %v134
  %v479 = vunpack.c.l.b16 %v135
  %v480 = vunpack.c.h.b16 %v135
  %v481 = vunpack.c.l.b16 %v136
  %v482 = vpack.c.b16 %v311, %v308
  %v483 = vpack.c.b16 %v312, %v309
  %v484 = vpack.c.b16 %v313, %v310
  %v485 = vpack.c.b16 %v317, %v314
  %v486 = vpack.c.b16 %v318, %v315
  %v487 = vpack.c.b16 %v319, %v316
  %v488 = vpack.c.b16 %v323, %v320
  %v489 = vpack.c.b16 %v324, %v321
  %v490 = vpack.c.b16 %v325, %v322
  %v491 = vpack.c.b16 %v329, %v326
  %v492 = vpack.c.b16 %v330, %v327
  %v493 = vpack.c.b16 %v331, %v328
  %v494 = vpack.c.b16 %v335, %v332
  %v495 = vpack.c.b16 %v336, %v333
  %v496 = vpack.c.b16 %v337, %v334
  %v497 = vpack.c.b16 %v341, %v338
  %v498 = vpack.c.b16 %v342, %v339
  %v499 = vpack.c.b16 %v343, %v340
  %v500 = vpack.c.b16 %v347, %v344
  %v501 = vpack.c.b16 %v348, %v345
  %v502 = vpack.c.b16 %v349, %v346
  %v503 = vpack.c.b16 %v353, %v350
  %v504 = vpack.c.b16 %v354, %v351
  %v505 = vpack.c.b16 %v355, %v352
  %v506 = vpack.c.b16 %v359, %v356
  %v507 = vpack.c.b16 %v360, %v357
  %v508 = vpack.c.b16 %v361, %v358
  %v509 = vpack.c.b16 %v365, %v362
  %v510 = vpack.c.b16 %v366, %v363
  %v511 = vpack.c.b16 %v367, %v364
  %v512 = vpack.c.b16 %v371, %v368
  %v513 = vpack.c.b16 %v372, %v369
  %v514 = vpack.c.b16 %v373, %v370
  %v515 = vpack.c.b16 %v377, %v374
  %v516 = vpack.c.b16 %v378, %v375
  %v517 = vpack.c.b16 %v379, %v376
  %v518 = vpack.c.b16 %v383, %v380
  %v519 = vpack.c.b16 %v384, %v381
  %v520 = vpack.c.b16 %v385, %v382
  %v521 = vpack.c.b16 %v389, %v386
  %v522 = vpack.c.b16 %v390, %v387
  %v523 = vpack.c.b16 %v391, %v388
  %v524 = vpack.c.b16 %v395, %v392
  %v525 = vpack.c.b16 %v396, %v393
  %v526 = vpack.c.b16 %v397, %v394
  %v527 = vpack.c.b16 %v401, %v398
  %v528 = vpack.c.b16 %v402, %v399
  %v529 = vpack.c.b16 %v403, %v400
  %v530 = vpack.c.b16 %v407, %v404
  %v531 = vpack.c.b16 %v408, %v405
  %v532 = vpack.c.b16 %v409, %v406
  %v533 = vpack.c.b16 %v413, %v410
  %v534 = vpack.c.b16 %v414, %v411
  %v535 = vpack.c.b16 %v415, %v412
  %v536 = vpack.c.b16 %v419, %v416
  %v537 = vpack.c.b16 %v420, %v417
  %v538 = vpack.c.b16 %v421, %v418
  %v539 = vpack.c.b16 %v425, %v422
  %v540 = vpack.c.b16 %v426, %v423
  %v541 = vpack.c.b16 %v427, %v424
  %v542 = vpack.c.b16 %v431, %v428
  %v543 = vpack.c.b16 %v432, %v429
  %v544 = vpack.c.b16 %v433, %v430
  %v545 = vpack.c.b16 %v437, %v434
  %v546 = vpack.c.b16 %v438, %v435
  %v547 = vpack.c.b16 %v439, %v436
  %v548 = vpack.c.b16 %v443, %v440
  %v549 = vpack.c.b16 %v444, %v441
  %v550 = vpack.c.b16 %v445, %v442
  %v551 = vpack.c.b16 %v449, %v446
  %v552 = vpack.c.b16 %v450, %v447
  %v553 = vpack.c.b16 %v451, %v448
  %v554 = vpack.c.b16 %v455, %v452
  %v555 = vpack.c.b16 %v456, %v453
  %v556 = vpack.c.b16 %v457, %v454
  %v557 = vpack.c.b16 %v461, %v458
  %v558 = vpack.c.b16 %v462, %v459
  %v559 = vpack.c.b16 %v463, %v460
  %v560 = vpack.c.b16 %v467, %v464
  %v561 = vpack.c.b16 %v468, %v465
  %v562 = vpack.c.b16 %v469, %v466
  %v563 = vpack.c.b16 %v473, %v470
  %v564 = vpack.c.b16 %v474, %v471
  %v565 = vpack.c.b16 %v475, %v472
  %v566 = vpack.c.b16 %v479, %v476
  %v567 = vpack.c.b16 %v480, %v477
  %v568 = vpack.c.b16 %v481, %v478
  %v704 = vunpack.c.l.b16 %v137
  %v705 = vunpack.c.l.b16 %v138
  %v706 = vunpack.c.l.b16 %v139
  %v707 = vunpack.c.l.b16 %v140
  %v708 = vunpack.c.l.b16 %v141
  %v709 = vunpack.c.l.b16 %v142
  %v710 = vunpack.c.l.b16 %v143
  %v711 = vunpack.c.l.b16 %v144
  %v712 = vunpack.c.l.b16 %v145
  %v713 = vunpack.c.l.b16 %v146
  %v714 = vunpack.c.l.b16 %v147
  %v715 = vunpack.c.l.b16 %v148
  %v716 = vunpack.c.l.b16 %v149
  %v717 = vunpack.c.l.b16 %v150
  %v718 = vunpack.c.l.b16 %v151
  %v719 = vunpack.c.l.b16 %v152
  %v720 = vunpack.c.l.b16 %v153
  %v721 = vunpack.c.l.b16 %v154
  %v722 = vunpack.c.l.b16 %v155
  %v723 = vunpack.c.l.b16 %v156
  %v724 = vunpack.c.l.b16 %v157
  %v725 = vunpack.c.l.b16 %v158
  %v726 = vunpack.c.l.b16 %v159
  %v727 = vunpack.c.l.b16 %v160
  %v728 = vunpack.c.l.b16 %v161
  %v729 = vunpack.c.l.b16 %v162
  %v730 = vunpack.c.l.b16 %v163
  %v731 = vunpack.c.l.b16 %v164
  %v732 = vunpack.c.l.b16 %v165
  %v733 = vunpack.c.l.b16 %v166
  %v734 = vunpack.c.l.b16 %v167
  %v735 = vunpack.c.l.b16 %v168
  %v736 = vunpack.c.l.b16 %v169
  %v737 = vunpack.c.l.b16 %v170
  %v738 = vunpack.c.l.b16 %v171
  %v739 = vunpack.c.l.b16 %v172
  %v740 = vunpack.c.l.b16 %v173
  %v741 = vunpack.c.l.b16 %v174
  %v742 = vunpack.c.l.b16 %v175
  %v743 = vunpack.c.l.b16 %v176
  %v744 = vunpack.c.l.b16 %v177
  %v745 = vunpack.c.l.b16 %v178
  %v746 = vunpack.c.l.b16 %v179
  %v747 = vunpack.c.l.b16 %v180
  %v748 = vunpack.c.l.b16 %v181
  %v749 = vunpack.c.l.b16 %v182
  %v750 = vunpack.c.l.b16 %v183
  %v751 = vunpack.c.l.b16 %v184
  %v752 = vpack.c.b16 %v705, %v704
  %v753 = vpack.c.b16 %v707, %v706
  %v754 = vpack.c.b16 %v709, %v708
  %v755 = vpack.c.b16 %v711, %v710
  %v756 = vpack.c.b16 %v713, %v712
  %v757 = vpack.c.b16 %v715, %v714
  %v758 = vpack.c.b16 %v717, %v716
  %v759 = vpack.c.b16 %v719, %v718
  %v760 = vpack.c.b16 %v721, %v720
  %v761 = vpack.c.b16 %v723, %v722
  %v762 = vpack.c.b16 %v725, %v724
  %v763 = vpack.c.b16 %v727, %v726
  %v764 = vpack.c.b16 %v729, %v728
  %v765 = vpack.c.b16 %v731, %v730
  %v766 = vpack.c.b16 %v733, %v732
  %v767 = vpack.c.b16 %v735, %v734
  %v768 = vpack.c.b16 %v737, %v736
  %v769 = vpack.c.b16 %v739, %v738
  %v770 = vpack.c.b16 %v741, %v740
  %v771 = vpack.c.b16 %v743, %v742
  %v772 = vpack.c.b16 %v745, %v744
  %v773 = vpack.c.b16 %v747, %v746
  %v774 = vpack.c.b16 %v749, %v748
  %v775 = vpack.c.b16 %v751, %v750
  %800 = vmatprep.subr.bf16.mxu0 0
  %801 = vmatpush1.bf16.msra.mxu0 %v752
  %802 = vmatprep.subr.bf16.mxu0 0
  %803 = vmatpush1.bf16.msra.mxu0 %v753
  %804 = vmatprep.subr.bf16.mxu0 0
  %805 = vmatpush1.bf16.msra.mxu0 %v754
  %806 = vmatprep.subr.bf16.mxu0 0
  %807 = vmatpush1.bf16.msra.mxu0 %v755
  %808 = vmatprep.subr.bf16.mxu0 0
  %809 = vmatpush1.bf16.msra.mxu0 %v756
  %810 = vmatprep.subr.bf16.mxu0 0
  %811 = vmatpush1.bf16.msra.mxu0 %v757
  %812 = vmatprep.subr.bf16.mxu0 0
  %813 = vmatpush1.bf16.msra.mxu0 %v758
  %814 = vmatprep.subr.bf16.mxu0 0
  %815 = vmatpush1.bf16.msra.mxu0 %v759
  %816 = vmatprep.subr.bf16.mxu0 0
  %817 = vmatpush1.bf16.msra.mxu0 %v760
  %818 = vmatprep.subr.bf16.mxu0 0
  %819 = vmatpush1.bf16.msra.mxu0 %v761
  %820 = vmatprep.subr.bf16.mxu0 0
  %821 = vmatpush1.bf16.msra.mxu0 %v762
  %822 = vmatprep.subr.bf16.mxu0 0
  %823 = vmatpush1.bf16.msra.mxu0 %v763
  %824 = vmatprep.subr.bf16.mxu0 0
  %825 = vmatpush1.bf16.msra.mxu0 %v764
  %826 = vmatprep.subr.bf16.mxu0 0
  %827 = vmatpush1.bf16.msra.mxu0 %v765
  %828 = vmatprep.subr.bf16.mxu0 0
  %829 = vmatpush1.bf16.msra.mxu0 %v766
  %830 = vmatprep.subr.bf16.mxu0 0
  %831 = vmatpush1.bf16.msra.mxu0 %v767
  %832 = vmatprep.mubr.bf16.mxu0 %v483
  %833 = vmatmul.mubr.bf16.gmra.mrb[0].mxu0 %v482
  %v834 = vpop.f32.mrb[0].mxu0
  %v835 = vadd.f32 %v190, %v834
  %v836 = vpop.f32.mrb[0].mxu0
  %v837 = vpop.f32.mrb[0].mxu0
  %v838 = vadd.f32 %v190, %v837
  %v839 = vpop.f32.mrb[0].mxu0
  %840 = vmatprep.mubr.bf16.mxu0 %v486
  %841 = vmatmul.mubr.bf16.gmra.mrb[0].mxu0 %v485
  %v842 = vpop.f32.mrb[0].mxu0
  %v843 = vadd.f32 %v190, %v842
  %v844 = vpop.f32.mrb[0].mxu0
  %v845 = vpop.f32.mrb[0].mxu0
  %v846 = vadd.f32 %v190, %v845
  %v847 = vpop.f32.mrb[0].mxu0
  %848 = vmatprep.mubr.bf16.mxu0 %v489
  %849 = vmatmul.mubr.bf16.gmra.mrb[0].mxu0 %v488
  %v850 = vpop.f32.mrb[0].mxu0
  %v851 = vadd.f32 %v190, %v850
  %v852 = vpop.f32.mrb[0].mxu0
  %v853 = vpop.f32.mrb[0].mxu0
  %v854 = vadd.f32 %v190, %v853
  %v855 = vpop.f32.mrb[0].mxu0
  %856 = vmatprep.mubr.bf16.mxu0 %v492
  %857 = vmatmul.mubr.bf16.gmra.mrb[0].mxu0 %v491
  %v858 = vpop.f32.mrb[0].mxu0
  %v859 = vadd.f32 %v190, %v858
  %v860 = vpop.f32.mrb[0].mxu0
  %v861 = vpop.f32.mrb[0].mxu0
  %v862 = vadd.f32 %v190, %v861
  %v863 = vpop.f32.mrb[0].mxu0
  %864 = vmatprep.mubr.bf16.mxu0 %v495
  %865 = vmatmul.mubr.bf16.gmra.mrb[0].mxu0 %v494
  %v866 = vpop.f32.mrb[0].mxu0
  %v867 = vadd.f32 %v190, %v866
  %v868 = vpop.f32.mrb[0].mxu0
  %v869 = vpop.f32.mrb[0].mxu0
  %v870 = vadd.f32 %v190, %v869
  %v871 = vpop.f32.mrb[0].mxu0
  %872 = vmatprep.mubr.bf16.mxu0 %v498
  %873 = vmatmul.mubr.bf16.gmra.mrb[0].mxu0 %v497
  %v874 = vpop.f32.mrb[0].mxu0
  %v875 = vadd.f32 %v190, %v874
  %v876 = vpop.f32.mrb[0].mxu0
  %v877 = vpop.f32.mrb[0].mxu0
  %v878 = vadd.f32 %v190, %v877
  %v879 = vpop.f32.mrb[0].mxu0
  %880 = vmatprep.mubr.bf16.mxu0 %v501
  %881 = vmatmul.mubr.bf16.gmra.mrb[0].mxu0 %v500
  %v882 = vpop.f32.mrb[0].mxu0
  %v883 = vadd.f32 %v190, %v882
  %v884 = vpop.f32.mrb[0].mxu0
  %v885 = vpop.f32.mrb[0].mxu0
  %v886 = vadd.f32 %v190, %v885
  %v887 = vpop.f32.mrb[0].mxu0
  %888 = vmatprep.mubr.bf16.mxu0 %v504
  %889 = vmatmul.mubr.bf16.gmra.mrb[0].mxu0 %v503
  %v890 = vpop.f32.mrb[0].mxu0
  %v891 = vadd.f32 %v190, %v890
  %v892 = vpop.f32.mrb[0].mxu0
  %v893 = vpop.f32.mrb[0].mxu0
  %v894 = vadd.f32 %v190, %v893
  %v895 = vpop.f32.mrb[0].mxu0
  %896 = vmatprep.mubr.bf16.mxu0 %v507
  %897 = vmatmul.mubr.bf16.gmra.mrb[0].mxu0 %v506
  %v898 = vpop.f32.mrb[0].mxu0
  %v899 = vadd.f32 %v190, %v898
  %v900 = vpop.f32.mrb[0].mxu0
  %v901 = vpop.f32.mrb[0].mxu0
  %v902 = vadd.f32 %v190, %v901
  %v903 = vpop.f32.mrb[0].mxu0
  %904 = vmatprep.mubr.bf16.mxu0 %v510
  %905 = vmatmul.mubr.bf16.gmra.mrb[0].mxu0 %v509
  %v906 = vpop.f32.mrb[0].mxu0
  %v907 = vadd.f32 %v190, %v906
  %v908 = vpop.f32.mrb[0].mxu0
  %v909 = vpop.f32.mrb[0].mxu0
  %v910 = vadd.f32 %v190, %v909
  %v911 = vpop.f32.mrb[0].mxu0
  %912 = vmatprep.mubr.bf16.mxu0 %v513
  %913 = vmatmul.mubr.bf16.gmra.mrb[0].mxu0 %v512
  %v914 = vpop.f32.mrb[0].mxu0
  %v915 = vadd.f32 %v190, %v914
  %v916 = vpop.f32.mrb[0].mxu0
  %v917 = vpop.f32.mrb[0].mxu0
  %v918 = vadd.f32 %v190, %v917
  %v919 = vpop.f32.mrb[0].mxu0
  %920 = vmatprep.mubr.bf16.mxu0 %v516
  %921 = vmatmul.mubr.bf16.gmra.mrb[0].mxu0 %v515
  %v922 = vpop.f32.mrb[0].mxu0
  %v923 = vadd.f32 %v190, %v922
  %v924 = vpop.f32.mrb[0].mxu0
  %v925 = vpop.f32.mrb[0].mxu0
  %v926 = vadd.f32 %v190, %v925
  %v927 = vpop.f32.mrb[0].mxu0
  %928 = vmatprep.mubr.bf16.mxu0 %v519
  %929 = vmatmul.mubr.bf16.gmra.mrb[0].mxu0 %v518
  %v930 = vpop.f32.mrb[0].mxu0
  %v931 = vadd.f32 %v190, %v930
  %v932 = vpop.f32.mrb[0].mxu0
  %v933 = vpop.f32.mrb[0].mxu0
  %v934 = vadd.f32 %v190, %v933
  %v935 = vpop.f32.mrb[0].mxu0
  %936 = vmatprep.mubr.bf16.mxu0 %v522
  %937 = vmatmul.mubr.bf16.gmra.mrb[0].mxu0 %v521
  %v938 = vpop.f32.mrb[0].mxu0
  %v939 = vadd.f32 %v190, %v938
  %v940 = vpop.f32.mrb[0].mxu0
  %v941 = vpop.f32.mrb[0].mxu0
  %v942 = vadd.f32 %v190, %v941
  %v943 = vpop.f32.mrb[0].mxu0
  %944 = vmatprep.mubr.bf16.mxu0 %v525
  %945 = vmatmul.mubr.bf16.gmra.mrb[0].mxu0 %v524
  %v946 = vpop.f32.mrb[0].mxu0
  %v947 = vadd.f32 %v190, %v946
  %v948 = vpop.f32.mrb[0].mxu0
  %v949 = vpop.f32.mrb[0].mxu0
  %v950 = vadd.f32 %v190, %v949
  %v951 = vpop.f32.mrb[0].mxu0
  %952 = vmatprep.mubr.bf16.mxu0 %v528
  %953 = vmatmul.mubr.bf16.gmra.mrb[0].mxu0 %v527
  %v954 = vpop.f32.mrb[0].mxu0
  %v955 = vadd.f32 %v190, %v954
  %v956 = vpop.f32.mrb[0].mxu0
  %v957 = vpop.f32.mrb[0].mxu0
  %v958 = vadd.f32 %v190, %v957
  %v959 = vpop.f32.mrb[0].mxu0
  %960 = vmatprep.mubr.bf16.mxu0 %v531
  %961 = vmatmul.mubr.bf16.gmra.mrb[0].mxu0 %v530
  %v962 = vpop.f32.mrb[0].mxu0
  %v963 = vadd.f32 %v190, %v962
  %v964 = vpop.f32.mrb[0].mxu0
  %v965 = vpop.f32.mrb[0].mxu0
  %v966 = vadd.f32 %v190, %v965
  %v967 = vpop.f32.mrb[0].mxu0
  %968 = vmatprep.mubr.bf16.mxu0 %v534
  %969 = vmatmul.mubr.bf16.gmra.mrb[0].mxu0 %v533
  %v970 = vpop.f32.mrb[0].mxu0
  %v971 = vadd.f32 %v190, %v970
  %v972 = vpop.f32.mrb[0].mxu0
  %v973 = vpop.f32.mrb[0].mxu0
  %v974 = vadd.f32 %v190, %v973
  %v975 = vpop.f32.mrb[0].mxu0
  %976 = vmatprep.mubr.bf16.mxu0 %v537
  %977 = vmatmul.mubr.bf16.gmra.mrb[0].mxu0 %v536
  %v978 = vpop.f32.mrb[0].mxu0
  %v979 = vadd.f32 %v190, %v978
  %v980 = vpop.f32.mrb[0].mxu0
  %v981 = vpop.f32.mrb[0].mxu0
  %v982 = vadd.f32 %v190, %v981
  %v983 = vpop.f32.mrb[0].mxu0
  %984 = vmatprep.mubr.bf16.mxu0 %v540
  %985 = vmatmul.mubr.bf16.gmra.mrb[0].mxu0 %v539
  %v986 = vpop.f32.mrb[0].mxu0
  %v987 = vadd.f32 %v190, %v986
  %v988 = vpop.f32.mrb[0].mxu0
  %v989 = vpop.f32.mrb[0].mxu0
  %v990 = vadd.f32 %v190, %v989
  %v991 = vpop.f32.mrb[0].mxu0
  %992 = vmatprep.mubr.bf16.mxu0 %v543
  %993 = vmatmul.mubr.bf16.gmra.mrb[0].mxu0 %v542
  %v994 = vpop.f32.mrb[0].mxu0
  %v995 = vadd.f32 %v190, %v994
  %v996 = vpop.f32.mrb[0].mxu0
  %v997 = vpop.f32.mrb[0].mxu0
  %v998 = vadd.f32 %v190, %v997
  %v999 = vpop.f32.mrb[0].mxu0
  %1000 = vmatprep.mubr.bf16.mxu0 %v546
  %1001 = vmatmul.mubr.bf16.gmra.mrb[0].mxu0 %v545
  %v1002 = vpop.f32.mrb[0].mxu0
  %v1003 = vadd.f32 %v190, %v1002
  %v1004 = vpop.f32.mrb[0].mxu0
  %v1005 = vpop.f32.mrb[0].mxu0
  %v1006 = vadd.f32 %v190, %v1005
  %v1007 = vpop.f32.mrb[0].mxu0
  %1008 = vmatprep.mubr.bf16.mxu0 %v549
  %1009 = vmatmul.mubr.bf16.gmra.mrb[0].mxu0 %v548
  %v1010 = vpop.f32.mrb[0].mxu0
  %v1011 = vadd.f32 %v190, %v1010
  %v1012 = vpop.f32.mrb[0].mxu0
  %v1013 = vpop.f32.mrb[0].mxu0
  %v1014 = vadd.f32 %v190, %v1013
  %v1015 = vpop.f32.mrb[0].mxu0
  %1016 = vmatprep.mubr.bf16.mxu0 %v552
  %1017 = vmatmul.mubr.bf16.gmra.mrb[0].mxu0 %v551
  %v1018 = vpop.f32.mrb[0].mxu0
  %v1019 = vadd.f32 %v190, %v1018
  %v1020 = vpop.f32.mrb[0].mxu0
  %v1021 = vpop.f32.mrb[0].mxu0
  %v1022 = vadd.f32 %v190, %v1021
  %v1023 = vpop.f32.mrb[0].mxu0
  %1024 = vmatprep.mubr.bf16.mxu0 %v555
  %1025 = vmatmul.mubr.bf16.gmra.mrb[0].mxu0 %v554
  %v1026 = vpop.f32.mrb[0].mxu0
  %v1027 = vadd.f32 %v190, %v1026
  %v1028 = vpop.f32.mrb[0].mxu0
  %v1029 = vpop.f32.mrb[0].mxu0
  %v1030 = vadd.f32 %v190, %v1029
  %v1031 = vpop.f32.mrb[0].mxu0
  %1032 = vmatprep.mubr.bf16.mxu0 %v558
  %1033 = vmatmul.mubr.bf16.gmra.mrb[0].mxu0 %v557
  %v1034 = vpop.f32.mrb[0].mxu0
  %v1035 = vadd.f32 %v190, %v1034
  %v1036 = vpop.f32.mrb[0].mxu0
  %v1037 = vpop.f32.mrb[0].mxu0
  %v1038 = vadd.f32 %v190, %v1037
  %v1039 = vpop.f32.mrb[0].mxu0
  %1040 = vmatprep.mubr.bf16.mxu0 %v561
  %1041 = vmatmul.mubr.bf16.gmra.mrb[0].mxu0 %v560
  %v1042 = vpop.f32.mrb[0].mxu0
  %v1043 = vadd.f32 %v190, %v1042
  %v1044 = vpop.f32.mrb[0].mxu0
  %v1045 = vpop.f32.mrb[0].mxu0
  %v1046 = vadd.f32 %v190, %v1045
  %v1047 = vpop.f32.mrb[0].mxu0
  %1048 = vmatprep.mubr.bf16.mxu0 %v564
  %1049 = vmatmul.mubr.bf16.gmra.mrb[0].mxu0 %v563
  %v1050 = vpop.f32.mrb[0].mxu0
  %v1051 = vadd.f32 %v190, %v1050
  %v1052 = vpop.f32.mrb[0].mxu0
  %v1053 = vpop.f32.mrb[0].mxu0
  %v1054 = vadd.f32 %v190, %v1053
  %v1055 = vpop.f32.mrb[0].mxu0
  %1056 = vmatprep.mubr.bf16.mxu0 %v567
  %1057 = vmatmul.mubr.bf16.gmra.mrb[0].mxu0 %v566
  %v1058 = vpop.f32.mrb[0].mxu0
  %v1059 = vadd.f32 %v190, %v1058
  %v1060 = vpop.f32.mrb[0].mxu0
  %v1061 = vpop.f32.mrb[0].mxu0
  %v1062 = vadd.f32 %v190, %v1061
  %v1063 = vpop.f32.mrb[0].mxu0
  %1064 = vdwg.mxu0
  %1065 = vmatprep.subr.bf16.mxu0 0
  %1066 = vmatpush1.bf16.msra.mxu0 %v768
  %1067 = vmatprep.subr.bf16.mxu0 0
  %1068 = vmatpush1.bf16.msra.mxu0 %v769
  %1069 = vmatprep.subr.bf16.mxu0 0
  %1070 = vmatpush1.bf16.msra.mxu0 %v770
  %1071 = vmatprep.subr.bf16.mxu0 0
  %1072 = vmatpush1.bf16.msra.mxu0 %v771
  %1073 = vmatprep.subr.bf16.mxu0 0
  %1074 = vmatpush1.bf16.msra.mxu0 %v772
  %1075 = vmatprep.subr.bf16.mxu0 0
  %1076 = vmatpush1.bf16.msra.mxu0 %v773
  %1077 = vmatprep.subr.bf16.mxu0 0
  %1078 = vmatpush1.bf16.msra.mxu0 %v774
  %1079 = vmatprep.subr.bf16.mxu0 0
  %1080 = vmatpush1.bf16.msra.mxu0 %v775
  %1081 = vmatprep.subr.bf16.mxu0 0
  %1082 = vmatpush1.bf16.msra.mxu0 0
  %1083 = vmatprep.subr.bf16.mxu0 0
  %1084 = vmatpush1.bf16.msra.mxu0 0
  %1085 = vmatprep.subr.bf16.mxu0 0
  %1086 = vmatpush1.bf16.msra.mxu0 0
  %1087 = vmatprep.subr.bf16.mxu0 0
  %1088 = vmatpush1.bf16.msra.mxu0 0
  %1089 = vmatprep.subr.bf16.mxu0 0
  %1090 = vmatpush1.bf16.msra.mxu0 0
  %1091 = vmatprep.subr.bf16.mxu0 0
  %1092 = vmatpush1.bf16.msra.mxu0 0
  %1093 = vmatprep.subr.bf16.mxu0 0
  %1094 = vmatpush1.bf16.msra.mxu0 0
  %1095 = vmatprep.subr.bf16.mxu0 0
  %1096 = vmatpush1.bf16.msra.mxu0 0
  %1097 = vmatprep.mubr.bf16.mxu0 0
  %1098 = vmatmul.mubr.bf16.gmra.mrb[0].mxu0 %v484
  %v1099 = vpop.f32.mrb[0].mxu0
  %v1100 = vadd.f32 %v835, %v1099
  %v1101 = vpop.f32.mrb[0].mxu0
  %v1102 = vpop.f32.mrb[0].mxu0
  %v1103 = vadd.f32 %v838, %v1102
  %v1104 = vpop.f32.mrb[0].mxu0
  %1105 = vmatprep.mubr.bf16.mxu0 0
  %1106 = vmatmul.mubr.bf16.gmra.mrb[0].mxu0 %v487
  %v1107 = vpop.f32.mrb[0].mxu0
  %v1108 = vadd.f32 %v843, %v1107
  %v1109 = vpop.f32.mrb[0].mxu0
  %v1110 = vpop.f32.mrb[0].mxu0
  %v1111 = vadd.f32 %v846, %v1110
  %v1112 = vpop.f32.mrb[0].mxu0
  %1113 = vmatprep.mubr.bf16.mxu0 0
  %1114 = vmatmul.mubr.bf16.gmra.mrb[0].mxu0 %v490
  %v1115 = vpop.f32.mrb[0].mxu0
  %v1116 = vadd.f32 %v851, %v1115
  %v1117 = vpop.f32.mrb[0].mxu0
  %v1118 = vpop.f32.mrb[0].mxu0
  %v1119 = vadd.f32 %v854, %v1118
  %v1120 = vpop.f32.mrb[0].mxu0
  %1121 = vmatprep.mubr.bf16.mxu0 0
  %1122 = vmatmul.mubr.bf16.gmra.mrb[0].mxu0 %v493
  %v1123 = vpop.f32.mrb[0].mxu0
  %v1124 = vadd.f32 %v859, %v1123
  %v1125 = vpop.f32.mrb[0].mxu0
  %v1126 = vpop.f32.mrb[0].mxu0
  %v1127 = vadd.f32 %v862, %v1126
  %v1128 = vpop.f32.mrb[0].mxu0
  %1129 = vmatprep.mubr.bf16.mxu0 0
  %1130 = vmatmul.mubr.bf16.gmra.mrb[0].mxu0 %v496
  %v1131 = vpop.f32.mrb[0].mxu0
  %v1132 = vadd.f32 %v867, %v1131
  %v1133 = vpop.f32.mrb[0].mxu0
  %v1134 = vpop.f32.mrb[0].mxu0
  %v1135 = vadd.f32 %v870, %v1134
  %v1136 = vpop.f32.mrb[0].mxu0
  %1137 = vmatprep.mubr.bf16.mxu0 0
  %1138 = vmatmul.mubr.bf16.gmra.mrb[0].mxu0 %v499
  %v1139 = vpop.f32.mrb[0].mxu0
  %v1140 = vadd.f32 %v875, %v1139
  %v1141 = vpop.f32.mrb[0].mxu0
  %v1142 = vpop.f32.mrb[0].mxu0
  %v1143 = vadd.f32 %v878, %v1142
  %v1144 = vpop.f32.mrb[0].mxu0
  %1145 = vmatprep.mubr.bf16.mxu0 0
  %1146 = vmatmul.mubr.bf16.gmra.mrb[0].mxu0 %v502
  %v1147 = vpop.f32.mrb[0].mxu0
  %v1148 = vadd.f32 %v883, %v1147
  %v1149 = vpop.f32.mrb[0].mxu0
  %v1150 = vpop.f32.mrb[0].mxu0
  %v1151 = vadd.f32 %v886, %v1150
  %v1152 = vpop.f32.mrb[0].mxu0
  %1153 = vmatprep.mubr.bf16.mxu0 0
  %1154 = vmatmul.mubr.bf16.gmra.mrb[0].mxu0 %v505
  %v1155 = vpop.f32.mrb[0].mxu0
  %v1156 = vadd.f32 %v891, %v1155
  %v1157 = vpop.f32.mrb[0].mxu0
  %v1158 = vpop.f32.mrb[0].mxu0
  %v1159 = vadd.f32 %v894, %v1158
  %v1160 = vpop.f32.mrb[0].mxu0
  %1161 = vmatprep.mubr.bf16.mxu0 0
  %1162 = vmatmul.mubr.bf16.gmra.mrb[0].mxu0 %v508
  %v1163 = vpop.f32.mrb[0].mxu0
  %v1164 = vadd.f32 %v899, %v1163
  %v1165 = vpop.f32.mrb[0].mxu0
  %v1166 = vpop.f32.mrb[0].mxu0
  %v1167 = vadd.f32 %v902, %v1166
  %v1168 = vpop.f32.mrb[0].mxu0
  %1169 = vmatprep.mubr.bf16.mxu0 0
  %1170 = vmatmul.mubr.bf16.gmra.mrb[0].mxu0 %v511
  %v1171 = vpop.f32.mrb[0].mxu0
  %v1172 = vadd.f32 %v907, %v1171
  %v1173 = vpop.f32.mrb[0].mxu0
  %v1174 = vpop.f32.mrb[0].mxu0
  %v1175 = vadd.f32 %v910, %v1174
  %v1176 = vpop.f32.mrb[0].mxu0
  %1177 = vmatprep.mubr.bf16.mxu0 0
  %1178 = vmatmul.mubr.bf16.gmra.mrb[0].mxu0 %v514
  %v1179 = vpop.f32.mrb[0].mxu0
  %v1180 = vadd.f32 %v915, %v1179
  %v1181 = vpop.f32.mrb[0].mxu0
  %v1182 = vpop.f32.mrb[0].mxu0
  %v1183 = vadd.f32 %v918, %v1182
  %v1184 = vpop.f32.mrb[0].mxu0
  %1185 = vmatprep.mubr.bf16.mxu0 0
  %1186 = vmatmul.mubr.bf16.gmra.mrb[0].mxu0 %v517
  %v1187 = vpop.f32.mrb[0].mxu0
  %v1188 = vadd.f32 %v923, %v1187
  %v1189 = vpop.f32.mrb[0].mxu0
  %v1190 = vpop.f32.mrb[0].mxu0
  %v1191 = vadd.f32 %v926, %v1190
  %v1192 = vpop.f32.mrb[0].mxu0
  %1193 = vmatprep.mubr.bf16.mxu0 0
  %1194 = vmatmul.mubr.bf16.gmra.mrb[0].mxu0 %v520
  %v1195 = vpop.f32.mrb[0].mxu0
  %v1196 = vadd.f32 %v931, %v1195
  %v1197 = vpop.f32.mrb[0].mxu0
  %v1198 = vpop.f32.mrb[0].mxu0
  %v1199 = vadd.f32 %v934, %v1198
  %v1200 = vpop.f32.mrb[0].mxu0
  %1201 = vmatprep.mubr.bf16.mxu0 0
  %1202 = vmatmul.mubr.bf16.gmra.mrb[0].mxu0 %v523
  %v1203 = vpop.f32.mrb[0].mxu0
  %v1204 = vadd.f32 %v939, %v1203
  %v1205 = vpop.f32.mrb[0].mxu0
  %v1206 = vpop.f32.mrb[0].mxu0
  %v1207 = vadd.f32 %v942, %v1206
  %v1208 = vpop.f32.mrb[0].mxu0
  %1209 = vmatprep.mubr.bf16.mxu0 0
  %1210 = vmatmul.mubr.bf16.gmra.mrb[0].mxu0 %v526
  %v1211 = vpop.f32.mrb[0].mxu0
  %v1212 = vadd.f32 %v947, %v1211
  %v1213 = vpop.f32.mrb[0].mxu0
  %v1214 = vpop.f32.mrb[0].mxu0
  %v1215 = vadd.f32 %v950, %v1214
  %v1216 = vpop.f32.mrb[0].mxu0
  %1217 = vmatprep.mubr.bf16.mxu0 0
  %1218 = vmatmul.mubr.bf16.gmra.mrb[0].mxu0 %v529
  %v1219 = vpop.f32.mrb[0].mxu0
  %v1220 = vadd.f32 %v955, %v1219
  %v1221 = vpop.f32.mrb[0].mxu0
  %v1222 = vpop.f32.mrb[0].mxu0
  %v1223 = vadd.f32 %v958, %v1222
  %v1224 = vpop.f32.mrb[0].mxu0
  %1225 = vmatprep.mubr.bf16.mxu0 0
  %1226 = vmatmul.mubr.bf16.gmra.mrb[0].mxu0 %v532
  %v1227 = vpop.f32.mrb[0].mxu0
  %v1228 = vadd.f32 %v963, %v1227
  %v1229 = vpop.f32.mrb[0].mxu0
  %v1230 = vpop.f32.mrb[0].mxu0
  %v1231 = vadd.f32 %v966, %v1230
  %v1232 = vpop.f32.mrb[0].mxu0
  %1233 = vmatprep.mubr.bf16.mxu0 0
  %1234 = vmatmul.mubr.bf16.gmra.mrb[0].mxu0 %v535
  %v1235 = vpop.f32.mrb[0].mxu0
  %v1236 = vadd.f32 %v971, %v1235
  %v1237 = vpop.f32.mrb[0].mxu0
  %v1238 = vpop.f32.mrb[0].mxu0
  %v1239 = vadd.f32 %v974, %v1238
  %v1240 = vpop.f32.mrb[0].mxu0
  %1241 = vmatprep.mubr.bf16.mxu0 0
  %1242 = vmatmul.mubr.bf16.gmra.mrb[0].mxu0 %v538
  %v1243 = vpop.f32.mrb[0].mxu0
  %v1244 = vadd.f32 %v979, %v1243
  %v1245 = vpop.f32.mrb[0].mxu0
  %v1246 = vpop.f32.mrb[0].mxu0
  %v1247 = vadd.f32 %v982, %v1246
  %v1248 = vpop.f32.mrb[0].mxu0
  %1249 = vmatprep.mubr.bf16.mxu0 0
  %1250 = vmatmul.mubr.bf16.gmra.mrb[0].mxu0 %v541
  %v1251 = vpop.f32.mrb[0].mxu0
  %v1252 = vadd.f32 %v987, %v1251
  %v1253 = vpop.f32.mrb[0].mxu0
  %v1254 = vpop.f32.mrb[0].mxu0
  %v1255 = vadd.f32 %v990, %v1254
  %v1256 = vpop.f32.mrb[0].mxu0
  %1257 = vmatprep.mubr.bf16.mxu0 0
  %1258 = vmatmul.mubr.bf16.gmra.mrb[0].mxu0 %v544
  %v1259 = vpop.f32.mrb[0].mxu0
  %v1260 = vadd.f32 %v995, %v1259
  %v1261 = vpop.f32.mrb[0].mxu0
  %v1262 = vpop.f32.mrb[0].mxu0
  %v1263 = vadd.f32 %v998, %v1262
  %v1264 = vpop.f32.mrb[0].mxu0
  %1265 = vmatprep.mubr.bf16.mxu0 0
  %1266 = vmatmul.mubr.bf16.gmra.mrb[0].mxu0 %v547
  %v1267 = vpop.f32.mrb[0].mxu0
  %v1268 = vadd.f32 %v1003, %v1267
  %v1269 = vpop.f32.mrb[0].mxu0
  %v1270 = vpop.f32.mrb[0].mxu0
  %v1271 = vadd.f32 %v1006, %v1270
  %v1272 = vpop.f32.mrb[0].mxu0
  %1273 = vmatprep.mubr.bf16.mxu0 0
  %1274 = vmatmul.mubr.bf16.gmra.mrb[0].mxu0 %v550
  %v1275 = vpop.f32.mrb[0].mxu0
  %v1276 = vadd.f32 %v1011, %v1275
  %v1277 = vpop.f32.mrb[0].mxu0
  %v1278 = vpop.f32.mrb[0].mxu0
  %v1279 = vadd.f32 %v1014, %v1278
  %v1280 = vpop.f32.mrb[0].mxu0
  %1281 = vmatprep.mubr.bf16.mxu0 0
  %1282 = vmatmul.mubr.bf16.gmra.mrb[0].mxu0 %v553
  %v1283 = vpop.f32.mrb[0].mxu0
  %v1284 = vadd.f32 %v1019, %v1283
  %v1285 = vpop.f32.mrb[0].mxu0
  %v1286 = vpop.f32.mrb[0].mxu0
  %v1287 = vadd.f32 %v1022, %v1286
  %v1288 = vpop.f32.mrb[0].mxu0
  %1289 = vmatprep.mubr.bf16.mxu0 0
  %1290 = vmatmul.mubr.bf16.gmra.mrb[0].mxu0 %v556
  %v1291 = vpop.f32.mrb[0].mxu0
  %v1292 = vadd.f32 %v1027, %v1291
  %v1293 = vpop.f32.mrb[0].mxu0
  %v1294 = vpop.f32.mrb[0].mxu0
  %v1295 = vadd.f32 %v1030, %v1294
  %v1296 = vpop.f32.mrb[0].mxu0
  %1297 = vmatprep.mubr.bf16.mxu0 0
  %1298 = vmatmul.mubr.bf16.gmra.mrb[0].mxu0 %v559
  %v1299 = vpop.f32.mrb[0].mxu0
  %v1300 = vadd.f32 %v1035, %v1299
  %v1301 = vpop.f32.mrb[0].mxu0
  %v1302 = vpop.f32.mrb[0].mxu0
  %v1303 = vadd.f32 %v1038, %v1302
  %v1304 = vpop.f32.mrb[0].mxu0
  %1305 = vmatprep.mubr.bf16.mxu0 0
  %1306 = vmatmul.mubr.bf16.gmra.mrb[0].mxu0 %v562
  %v1307 = vpop.f32.mrb[0].mxu0
  %v1308 = vadd.f32 %v1043, %v1307
  %v1309 = vpop.f32.mrb[0].mxu0
  %v1310 = vpop.f32.mrb[0].mxu0
  %v1311 = vadd.f32 %v1046, %v1310
  %v1312 = vpop.f32.mrb[0].mxu0
  %1313 = vmatprep.mubr.bf16.mxu0 0
  %1314 = vmatmul.mubr.bf16.gmra.mrb[0].mxu0 %v565
  %v1315 = vpop.f32.mrb[0].mxu0
  %v1316 = vadd.f32 %v1051, %v1315
  %v1317 = vpop.f32.mrb[0].mxu0
  %v1318 = vpop.f32.mrb[0].mxu0
  %v1319 = vadd.f32 %v1054, %v1318
  %v1320 = vpop.f32.mrb[0].mxu0
  %1321 = vmatprep.mubr.bf16.mxu0 0
  %1322 = vmatmul.mubr.bf16.gmra.mrb[0].mxu0 %v568
  %v1323 = vpop.f32.mrb[0].mxu0
  %v1324 = vadd.f32 %v1059, %v1323
  %v1325 = vpop.f32.mrb[0].mxu0
  %v1326 = vpop.f32.mrb[0].mxu0
  %v1327 = vadd.f32 %v1062, %v1326
  %v1328 = vpop.f32.mrb[0].mxu0
  %1329 = vdwg.mxu0
  %v1330 = vmax.f32 %v1100, 0.0
  %v1331 = vmax.f32 %v1103, 0.0
  %v1332 = vmax.f32 %v1108, 0.0
  %v1333 = vmax.f32 %v1111, 0.0
  %v1334 = vmax.f32 %v1116, 0.0
  %v1335 = vmax.f32 %v1119, 0.0
  %v1336 = vmax.f32 %v1124, 0.0
  %v1337 = vmax.f32 %v1127, 0.0
  %v1338 = vmax.f32 %v1132, 0.0
  %v1339 = vmax.f32 %v1135, 0.0
  %v1340 = vmax.f32 %v1140, 0.0
  %v1341 = vmax.f32 %v1143, 0.0
  %v1342 = vmax.f32 %v1148, 0.0
  %v1343 = vmax.f32 %v1151, 0.0
  %v1344 = vmax.f32 %v1156, 0.0
  %v1345 = vmax.f32 %v1159, 0.0
  %v1346 = vmax.f32 %v1164, 0.0
  %v1347 = vmax.f32 %v1167, 0.0
  %v1348 = vmax.f32 %v1172, 0.0
  %v1349 = vmax.f32 %v1175, 0.0
  %v1350 = vmax.f32 %v1180, 0.0
  %v1351 = vmax.f32 %v1183, 0.0
  %v1352 = vmax.f32 %v1188, 0.0
  %v1353 = vmax.f32 %v1191, 0.0
  %v1354 = vmax.f32 %v1196, 0.0
  %v1355 = vmax.f32 %v1199, 0.0
  %v1356 = vmax.f32 %v1204, 0.0
  %v1357 = vmax.f32 %v1207, 0.0
  %v1358 = vmax.f32 %v1212, 0.0
  %v1359 = vmax.f32 %v1215, 0.0
  %v1360 = vmax.f32 %v1220, 0.0
  %v1361 = vmax.f32 %v1223, 0.0
  %v1362 = vmax.f32 %v1228, 0.0
  %v1363 = vmax.f32 %v1231, 0.0
  %v1364 = vmax.f32 %v1236, 0.0
  %v1365 = vmax.f32 %v1239, 0.0
  %v1366 = vmax.f32 %v1244, 0.0
  %v1367 = vmax.f32 %v1247, 0.0
  %v1368 = vmax.f32 %v1252, 0.0
  %v1369 = vmax.f32 %v1255, 0.0
  %v1370 = vmax.f32 %v1260, 0.0
  %v1371 = vmax.f32 %v1263, 0.0
  %v1372 = vmax.f32 %v1268, 0.0
  %v1373 = vmax.f32 %v1271, 0.0
  %v1374 = vmax.f32 %v1276, 0.0
  %v1375 = vmax.f32 %v1279, 0.0
  %v1376 = vmax.f32 %v1284, 0.0
  %v1377 = vmax.f32 %v1287, 0.0
  %v1378 = vmax.f32 %v1292, 0.0
  %v1379 = vmax.f32 %v1295, 0.0
  %v1380 = vmax.f32 %v1300, 0.0
  %v1381 = vmax.f32 %v1303, 0.0
  %v1382 = vmax.f32 %v1308, 0.0
  %v1383 = vmax.f32 %v1311, 0.0
  %v1384 = vmax.f32 %v1316, 0.0
  %v1385 = vmax.f32 %v1319, 0.0
  %v1386 = vmax.f32 %v1324, 0.0
  %v1387 = vmax.f32 %v1327, 0.0
  %v1388 = vlaneseq
  %v1389 = vshrl.u32 %v1388, 7
  %v1390 = vadd.s32 %v1389, 8
  %v1391 = vadd.s32 %v1389, 16
  %v1392 = vadd.s32 %v1389, 24
  %v1393 = vadd.s32 %v1389, 32
  %v1394 = vadd.s32 %v1389, 40
  %v1395 = vadd.s32 %v1389, 48
  %v1396 = vadd.s32 %v1389, 56
  %v1397 = vadd.s32 %v1389, 64
  %v1398 = vadd.s32 %v1389, 72
  %v1399 = vadd.s32 %v1389, 80
  %v1400 = vadd.s32 %v1389, 88
  %v1401 = vadd.s32 %v1389, 96
  %v1402 = vadd.s32 %v1389, 104
  %v1403 = vadd.s32 %v1389, 112
  %v1404 = vadd.s32 %v1389, 120
  %v1405 = vadd.s32 %v1389, 128
  %v1406 = vadd.s32 %v1389, 136
  %v1407 = vadd.s32 %v1389, 144
  %v1408 = vadd.s32 %v1389, 152
  %v1409 = vadd.s32 %v1389, 160
  %v1410 = vadd.s32 %v1389, 168
  %v1411 = vadd.s32 %v1389, 176
  %v1412 = vadd.s32 %v1389, 184
  %v1413 = vadd.s32 %v1389, 192
  %v1414 = vadd.s32 %v1389, 200
  %v1415 = vadd.s32 %v1389, 208
  %v1416 = vadd.s32 %v1389, 216
  %v1417 = vadd.s32 %v1389, 224
  %v1418 = vadd.s32 %v1389, 232
  %v1419 = vadd.s32 %v1389, 240
  %v1420 = vadd.s32 %v1389, 248
  %v1421 = vadd.s32 %v1389, 256
  %v1422 = vadd.s32 %v1389, 264
  %v1423 = vadd.s32 %v1389, 272
  %v1424 = vadd.s32 %v1389, 280
  %v1425 = vadd.s32 %v1389, 288
  %v1426 = vadd.s32 %v1389, 296
  %v1427 = vadd.s32 %v1389, 304
  %v1428 = vadd.s32 %v1389, 312
  %v1429 = vadd.s32 %v1389, 320
  %v1430 = vadd.s32 %v1389, 328
  %v1431 = vadd.s32 %v1389, 336
  %v1432 = vadd.s32 %v1389, 344
  %v1433 = vadd.s32 %v1389, 352
  %v1434 = vadd.s32 %v1389, 360
  %v1435 = vadd.s32 %v1389, 368
  %v1436 = vadd.s32 %v1389, 376
  %v1437 = vadd.s32 %v1389, 384
  %v1438 = vadd.s32 %v1389, 392
  %v1439 = vadd.s32 %v1389, 400
  %v1440 = vadd.s32 %v1389, 408
  %v1441 = vadd.s32 %v1389, 416
  %v1442 = vadd.s32 %v1389, 424
  %v1443 = vadd.s32 %v1389, 432
  %v1444 = vadd.s32 %v1389, 440
  %v1445 = vadd.s32 %v1389, 448
  %v1446 = vadd.s32 %v1389, 456
  %vm1447 = vcmp.lt.s32.totalorder %v1389, 450
  %vm1448 = vcmp.lt.s32.totalorder %v1390, 450
  %vm1449 = vcmp.lt.s32.totalorder %v1391, 450
  %vm1450 = vcmp.lt.s32.totalorder %v1392, 450
  %vm1451 = vcmp.lt.s32.totalorder %v1393, 450
  %vm1452 = vcmp.lt.s32.totalorder %v1394, 450
  %vm1453 = vcmp.lt.s32.totalorder %v1395, 450
  %vm1454 = vcmp.lt.s32.totalorder %v1396, 450
  %vm1455 = vcmp.lt.s32.totalorder %v1397, 450
  %vm1456 = vcmp.lt.s32.totalorder %v1398, 450
  %vm1457 = vcmp.lt.s32.totalorder %v1399, 450
  %vm1458 = vcmp.lt.s32.totalorder %v1400, 450
  %vm1459 = vcmp.lt.s32.totalorder %v1401, 450
  %vm1460 = vcmp.lt.s32.totalorder %v1402, 450
  %vm1461 = vcmp.lt.s32.totalorder %v1403, 450
  %vm1462 = vcmp.lt.s32.totalorder %v1404, 450
  %vm1463 = vcmp.lt.s32.totalorder %v1405, 450
  %vm1464 = vcmp.lt.s32.totalorder %v1406, 450
  %vm1465 = vcmp.lt.s32.totalorder %v1407, 450
  %vm1466 = vcmp.lt.s32.totalorder %v1408, 450
  %vm1467 = vcmp.lt.s32.totalorder %v1409, 450
  %vm1468 = vcmp.lt.s32.totalorder %v1410, 450
  %vm1469 = vcmp.lt.s32.totalorder %v1411, 450
  %vm1470 = vcmp.lt.s32.totalorder %v1412, 450
  %vm1471 = vcmp.lt.s32.totalorder %v1413, 450
  %vm1472 = vcmp.lt.s32.totalorder %v1414, 450
  %vm1473 = vcmp.lt.s32.totalorder %v1415, 450
  %vm1474 = vcmp.lt.s32.totalorder %v1416, 450
  %vm1475 = vcmp.lt.s32.totalorder %v1417, 450
  %vm1476 = vcmp.lt.s32.totalorder %v1418, 450
  %vm1477 = vcmp.lt.s32.totalorder %v1419, 450
  %vm1478 = vcmp.lt.s32.totalorder %v1420, 450
  %vm1479 = vcmp.lt.s32.totalorder %v1421, 450
  %vm1480 = vcmp.lt.s32.totalorder %v1422, 450
  %vm1481 = vcmp.lt.s32.totalorder %v1423, 450
  %vm1482 = vcmp.lt.s32.totalorder %v1424, 450
  %vm1483 = vcmp.lt.s32.totalorder %v1425, 450
  %vm1484 = vcmp.lt.s32.totalorder %v1426, 450
  %vm1485 = vcmp.lt.s32.totalorder %v1427, 450
  %vm1486 = vcmp.lt.s32.totalorder %v1428, 450
  %vm1487 = vcmp.lt.s32.totalorder %v1429, 450
  %vm1488 = vcmp.lt.s32.totalorder %v1430, 450
  %vm1489 = vcmp.lt.s32.totalorder %v1431, 450
  %vm1490 = vcmp.lt.s32.totalorder %v1432, 450
  %vm1491 = vcmp.lt.s32.totalorder %v1433, 450
  %vm1492 = vcmp.lt.s32.totalorder %v1434, 450
  %vm1493 = vcmp.lt.s32.totalorder %v1435, 450
  %vm1494 = vcmp.lt.s32.totalorder %v1436, 450
  %vm1495 = vcmp.lt.s32.totalorder %v1437, 450
  %vm1496 = vcmp.lt.s32.totalorder %v1438, 450
  %vm1497 = vcmp.lt.s32.totalorder %v1439, 450
  %vm1498 = vcmp.lt.s32.totalorder %v1440, 450
  %vm1499 = vcmp.lt.s32.totalorder %v1441, 450
  %vm1500 = vcmp.lt.s32.totalorder %v1442, 450
  %vm1501 = vcmp.lt.s32.totalorder %v1443, 450
  %vm1502 = vcmp.lt.s32.totalorder %v1444, 450
  %vm1503 = vcmp.lt.s32.totalorder %v1445, 450
  %vm1504 = vcmp.lt.s32.totalorder %v1446, 450
  %v1505 = vsel %vm1447, %v1330, 0.0
  %v1506 = vsel %vm1448, %v1331, 0.0
  %v1507 = vsel %vm1449, %v1332, 0.0
  %v1508 = vsel %vm1450, %v1333, 0.0
  %v1509 = vsel %vm1451, %v1334, 0.0
  %v1510 = vsel %vm1452, %v1335, 0.0
  %v1511 = vsel %vm1453, %v1336, 0.0
  %v1512 = vsel %vm1454, %v1337, 0.0
  %v1513 = vsel %vm1455, %v1338, 0.0
  %v1514 = vsel %vm1456, %v1339, 0.0
  %v1515 = vsel %vm1457, %v1340, 0.0
  %v1516 = vsel %vm1458, %v1341, 0.0
  %v1517 = vsel %vm1459, %v1342, 0.0
  %v1518 = vsel %vm1460, %v1343, 0.0
  %v1519 = vsel %vm1461, %v1344, 0.0
  %v1520 = vsel %vm1462, %v1345, 0.0
  %v1521 = vsel %vm1463, %v1346, 0.0
  %v1522 = vsel %vm1464, %v1347, 0.0
  %v1523 = vsel %vm1465, %v1348, 0.0
  %v1524 = vsel %vm1466, %v1349, 0.0
  %v1525 = vsel %vm1467, %v1350, 0.0
  %v1526 = vsel %vm1468, %v1351, 0.0
  %v1527 = vsel %vm1469, %v1352, 0.0
  %v1528 = vsel %vm1470, %v1353, 0.0
  %v1529 = vsel %vm1471, %v1354, 0.0
  %v1530 = vsel %vm1472, %v1355, 0.0
  %v1531 = vsel %vm1473, %v1356, 0.0
  %v1532 = vsel %vm1474, %v1357, 0.0
  %v1533 = vsel %vm1475, %v1358, 0.0
  %v1534 = vsel %vm1476, %v1359, 0.0
  %v1535 = vsel %vm1477, %v1360, 0.0
  %v1536 = vsel %vm1478, %v1361, 0.0
  %v1537 = vsel %vm1479, %v1362, 0.0
  %v1538 = vsel %vm1480, %v1363, 0.0
  %v1539 = vsel %vm1481, %v1364, 0.0
  %v1540 = vsel %vm1482, %v1365, 0.0
  %v1541 = vsel %vm1483, %v1366, 0.0
  %v1542 = vsel %vm1484, %v1367, 0.0
  %v1543 = vsel %vm1485, %v1368, 0.0
  %v1544 = vsel %vm1486, %v1369, 0.0
  %v1545 = vsel %vm1487, %v1370, 0.0
  %v1546 = vsel %vm1488, %v1371, 0.0
  %v1547 = vsel %vm1489, %v1372, 0.0
  %v1548 = vsel %vm1490, %v1373, 0.0
  %v1549 = vsel %vm1491, %v1374, 0.0
  %v1550 = vsel %vm1492, %v1375, 0.0
  %v1551 = vsel %vm1493, %v1376, 0.0
  %v1552 = vsel %vm1494, %v1377, 0.0
  %v1553 = vsel %vm1495, %v1378, 0.0
  %v1554 = vsel %vm1496, %v1379, 0.0
  %v1555 = vsel %vm1497, %v1380, 0.0
  %v1556 = vsel %vm1498, %v1381, 0.0
  %v1557 = vsel %vm1499, %v1382, 0.0
  %v1558 = vsel %vm1500, %v1383, 0.0
  %v1559 = vsel %vm1501, %v1384, 0.0
  %v1560 = vsel %vm1502, %v1385, 0.0
  %v1561 = vsel %vm1503, %v1386, 0.0
  %v1562 = vsel %vm1504, %v1387, 0.0
  %v1563 = vadd.f32 %v1505, %v1506
  %v1564 = vadd.f32 %v1563, %v1507
  %v1565 = vadd.f32 %v1564, %v1508
  %v1566 = vadd.f32 %v1565, %v1509
  %v1567 = vadd.f32 %v1566, %v1510
  %v1568 = vadd.f32 %v1567, %v1511
  %v1569 = vadd.f32 %v1568, %v1512
  %v1570 = vadd.f32 %v1569, %v1513
  %v1571 = vadd.f32 %v1570, %v1514
  %v1572 = vadd.f32 %v1571, %v1515
  %v1573 = vadd.f32 %v1572, %v1516
  %v1574 = vadd.f32 %v1573, %v1517
  %v1575 = vadd.f32 %v1574, %v1518
  %v1576 = vadd.f32 %v1575, %v1519
  %v1577 = vadd.f32 %v1576, %v1520
  %v1578 = vadd.f32 %v1577, %v1521
  %v1579 = vadd.f32 %v1578, %v1522
  %v1580 = vadd.f32 %v1579, %v1523
  %v1581 = vadd.f32 %v1580, %v1524
  %v1582 = vadd.f32 %v1581, %v1525
  %v1583 = vadd.f32 %v1582, %v1526
  %v1584 = vadd.f32 %v1583, %v1527
  %v1585 = vadd.f32 %v1584, %v1528
  %v1586 = vadd.f32 %v1585, %v1529
  %v1587 = vadd.f32 %v1586, %v1530
  %v1588 = vadd.f32 %v1587, %v1531
  %v1589 = vadd.f32 %v1588, %v1532
  %v1590 = vadd.f32 %v1589, %v1533
  %v1591 = vadd.f32 %v1590, %v1534
  %v1592 = vadd.f32 %v1591, %v1535
  %v1593 = vadd.f32 %v1592, %v1536
  %v1594 = vadd.f32 %v1593, %v1537
  %v1595 = vadd.f32 %v1594, %v1538
  %v1596 = vadd.f32 %v1595, %v1539
  %v1597 = vadd.f32 %v1596, %v1540
  %v1598 = vadd.f32 %v1597, %v1541
  %v1599 = vadd.f32 %v1598, %v1542
  %v1600 = vadd.f32 %v1599, %v1543
  %v1601 = vadd.f32 %v1600, %v1544
  %v1602 = vadd.f32 %v1601, %v1545
  %v1603 = vadd.f32 %v1602, %v1546
  %v1604 = vadd.f32 %v1603, %v1547
  %v1605 = vadd.f32 %v1604, %v1548
  %v1606 = vadd.f32 %v1605, %v1549
  %v1607 = vadd.f32 %v1606, %v1550
  %v1608 = vadd.f32 %v1607, %v1551
  %v1609 = vadd.f32 %v1608, %v1552
  %v1610 = vadd.f32 %v1609, %v1553
  %v1611 = vadd.f32 %v1610, %v1554
  %v1612 = vadd.f32 %v1611, %v1555
  %v1613 = vadd.f32 %v1612, %v1556
  %v1614 = vadd.f32 %v1613, %v1557
  %v1615 = vadd.f32 %v1614, %v1558
  %v1616 = vadd.f32 %v1615, %v1559
  %v1617 = vadd.f32 %v1616, %v1560
  %v1618 = vadd.f32 %v1617, %v1561
  %v1619 = vadd.f32 %v1618, %v1562
  %v1620 = vrot.slane %v1619, 4
  %v1621 = vadd.f32 %v1619, %v1620
  %v1622 = vrot.slane %v1621, 2
  %v1623 = vadd.f32 %v1621, %v1622
  %v1624 = vrot.slane %v1623, 1
  %v1625 = vadd.f32 %v1623, %v1624
  %v1626 = vmul.f32 %v1625, 0.0022222223
  %v1627 = vmul.f32 %v1505, %v1505
  %v1628 = vmul.f32 %v1506, %v1506
  %v1629 = vmul.f32 %v1507, %v1507
  %v1630 = vmul.f32 %v1508, %v1508
  %v1631 = vmul.f32 %v1509, %v1509
  %v1632 = vmul.f32 %v1510, %v1510
  %v1633 = vmul.f32 %v1511, %v1511
  %v1634 = vmul.f32 %v1512, %v1512
  %v1635 = vmul.f32 %v1513, %v1513
  %v1636 = vmul.f32 %v1514, %v1514
  %v1637 = vmul.f32 %v1515, %v1515
  %v1638 = vmul.f32 %v1516, %v1516
  %v1639 = vmul.f32 %v1517, %v1517
  %v1640 = vmul.f32 %v1518, %v1518
  %v1641 = vmul.f32 %v1519, %v1519
  %v1642 = vmul.f32 %v1520, %v1520
  %v1643 = vmul.f32 %v1521, %v1521
  %v1644 = vmul.f32 %v1522, %v1522
  %v1645 = vmul.f32 %v1523, %v1523
  %v1646 = vmul.f32 %v1524, %v1524
  %v1647 = vmul.f32 %v1525, %v1525
  %v1648 = vmul.f32 %v1526, %v1526
  %v1649 = vmul.f32 %v1527, %v1527
  %v1650 = vmul.f32 %v1528, %v1528
  %v1651 = vmul.f32 %v1529, %v1529
  %v1652 = vmul.f32 %v1530, %v1530
  %v1653 = vmul.f32 %v1531, %v1531
  %v1654 = vmul.f32 %v1532, %v1532
  %v1655 = vmul.f32 %v1533, %v1533
  %v1656 = vmul.f32 %v1534, %v1534
  %v1657 = vmul.f32 %v1535, %v1535
  %v1658 = vmul.f32 %v1536, %v1536
  %v1659 = vmul.f32 %v1537, %v1537
  %v1660 = vmul.f32 %v1538, %v1538
  %v1661 = vmul.f32 %v1539, %v1539
  %v1662 = vmul.f32 %v1540, %v1540
  %v1663 = vmul.f32 %v1541, %v1541
  %v1664 = vmul.f32 %v1542, %v1542
  %v1665 = vmul.f32 %v1543, %v1543
  %v1666 = vmul.f32 %v1544, %v1544
  %v1667 = vmul.f32 %v1545, %v1545
  %v1668 = vmul.f32 %v1546, %v1546
  %v1669 = vmul.f32 %v1547, %v1547
  %v1670 = vmul.f32 %v1548, %v1548
  %v1671 = vmul.f32 %v1549, %v1549
  %v1672 = vmul.f32 %v1550, %v1550
  %v1673 = vmul.f32 %v1551, %v1551
  %v1674 = vmul.f32 %v1552, %v1552
  %v1675 = vmul.f32 %v1553, %v1553
  %v1676 = vmul.f32 %v1554, %v1554
  %v1677 = vmul.f32 %v1555, %v1555
  %v1678 = vmul.f32 %v1556, %v1556
  %v1679 = vmul.f32 %v1557, %v1557
  %v1680 = vmul.f32 %v1558, %v1558
  %v1681 = vmul.f32 %v1559, %v1559
  %v1682 = vmul.f32 %v1560, %v1560
  %v1683 = vmul.f32 %v1561, %v1561
  %v1684 = vmul.f32 %v1562, %v1562
  %v1685 = vadd.f32 %v1627, %v1628
  %v1686 = vadd.f32 %v1685, %v1629
  %v1687 = vadd.f32 %v1686, %v1630
  %v1688 = vadd.f32 %v1687, %v1631
  %v1689 = vadd.f32 %v1688, %v1632
  %v1690 = vadd.f32 %v1689, %v1633
  %v1691 = vadd.f32 %v1690, %v1634
  %v1692 = vadd.f32 %v1691, %v1635
  %v1693 = vadd.f32 %v1692, %v1636
  %v1694 = vadd.f32 %v1693, %v1637
  %v1695 = vadd.f32 %v1694, %v1638
  %v1696 = vadd.f32 %v1695, %v1639
  %v1697 = vadd.f32 %v1696, %v1640
  %v1698 = vadd.f32 %v1697, %v1641
  %v1699 = vadd.f32 %v1698, %v1642
  %v1700 = vadd.f32 %v1699, %v1643
  %v1701 = vadd.f32 %v1700, %v1644
  %v1702 = vadd.f32 %v1701, %v1645
  %v1703 = vadd.f32 %v1702, %v1646
  %v1704 = vadd.f32 %v1703, %v1647
  %v1705 = vadd.f32 %v1704, %v1648
  %v1706 = vadd.f32 %v1705, %v1649
  %v1707 = vadd.f32 %v1706, %v1650
  %v1708 = vadd.f32 %v1707, %v1651
  %v1709 = vadd.f32 %v1708, %v1652
  %v1710 = vadd.f32 %v1709, %v1653
  %v1711 = vadd.f32 %v1710, %v1654
  %v1712 = vadd.f32 %v1711, %v1655
  %v1713 = vadd.f32 %v1712, %v1656
  %v1714 = vadd.f32 %v1713, %v1657
  %v1715 = vadd.f32 %v1714, %v1658
  %v1716 = vadd.f32 %v1715, %v1659
  %v1717 = vadd.f32 %v1716, %v1660
  %v1718 = vadd.f32 %v1717, %v1661
  %v1719 = vadd.f32 %v1718, %v1662
  %v1720 = vadd.f32 %v1719, %v1663
  %v1721 = vadd.f32 %v1720, %v1664
  %v1722 = vadd.f32 %v1721, %v1665
  %v1723 = vadd.f32 %v1722, %v1666
  %v1724 = vadd.f32 %v1723, %v1667
  %v1725 = vadd.f32 %v1724, %v1668
  %v1726 = vadd.f32 %v1725, %v1669
  %v1727 = vadd.f32 %v1726, %v1670
  %v1728 = vadd.f32 %v1727, %v1671
  %v1729 = vadd.f32 %v1728, %v1672
  %v1730 = vadd.f32 %v1729, %v1673
  %v1731 = vadd.f32 %v1730, %v1674
  %v1732 = vadd.f32 %v1731, %v1675
  %v1733 = vadd.f32 %v1732, %v1676
  %v1734 = vadd.f32 %v1733, %v1677
  %v1735 = vadd.f32 %v1734, %v1678
  %v1736 = vadd.f32 %v1735, %v1679
  %v1737 = vadd.f32 %v1736, %v1680
  %v1738 = vadd.f32 %v1737, %v1681
  %v1739 = vadd.f32 %v1738, %v1682
  %v1740 = vadd.f32 %v1739, %v1683
  %v1741 = vadd.f32 %v1740, %v1684
  %v1742 = vrot.slane %v1741, 4
  %v1743 = vadd.f32 %v1741, %v1742
  %v1744 = vrot.slane %v1743, 2
  %v1745 = vadd.f32 %v1743, %v1744
  %v1746 = vrot.slane %v1745, 1
  %v1747 = vadd.f32 %v1745, %v1746
  %v1748 = vmul.f32 %v1747, 0.0022222223
  %v1749 = vmul.f32 %v1626, %v1626
  %v1750 = vsub.f32 %v1748, %v1749
  %v1751 = vmax.f32 %v1750, 0.0
  %v1752 = vld [vmem:[%s3] sm:$0x1]
  %v1753 = vadd.f32 %v1751, 1e-05
  %v1754 = vrsqrt.pop %v1753
  %v1755 = vmul.f32 %v1752, %v1754
  %v1756 = vld [vmem:[%s4] sm:$0x1]
  %v1757 = vmul.f32 %v1626, %v1755
  %v1758 = vsub.f32 %v1756, %v1757
  %v1760 = vlaneseq
  %v1761 = vshrl.u32 %v1760, 7
  %v1762 = vsub.s32 0, %v1761
  %v1763 = vrot.slane %v1755, %v1762
  %v1765 = vmul.f32 %v1330, %v1763
  %v1766 = vmul.f32 %v1331, %v1763
  %v1767 = vmul.f32 %v1332, %v1763
  %v1768 = vmul.f32 %v1333, %v1763
  %v1769 = vmul.f32 %v1334, %v1763
  %v1770 = vmul.f32 %v1335, %v1763
  %v1771 = vmul.f32 %v1336, %v1763
  %v1772 = vmul.f32 %v1337, %v1763
  %v1773 = vmul.f32 %v1338, %v1763
  %v1774 = vmul.f32 %v1339, %v1763
  %v1775 = vmul.f32 %v1340, %v1763
  %v1776 = vmul.f32 %v1341, %v1763
  %v1777 = vmul.f32 %v1342, %v1763
  %v1778 = vmul.f32 %v1343, %v1763
  %v1779 = vmul.f32 %v1344, %v1763
  %v1780 = vmul.f32 %v1345, %v1763
  %v1781 = vmul.f32 %v1346, %v1763
  %v1782 = vmul.f32 %v1347, %v1763
  %v1783 = vmul.f32 %v1348, %v1763
  %v1784 = vmul.f32 %v1349, %v1763
  %v1785 = vmul.f32 %v1350, %v1763
  %v1786 = vmul.f32 %v1351, %v1763
  %v1787 = vmul.f32 %v1352, %v1763
  %v1788 = vmul.f32 %v1353, %v1763
  %v1789 = vmul.f32 %v1354, %v1763
  %v1790 = vmul.f32 %v1355, %v1763
  %v1791 = vmul.f32 %v1356, %v1763
  %v1792 = vmul.f32 %v1357, %v1763
  %v1793 = vmul.f32 %v1358, %v1763
  %v1794 = vmul.f32 %v1359, %v1763
  %v1795 = vmul.f32 %v1360, %v1763
  %v1796 = vmul.f32 %v1361, %v1763
  %v1797 = vmul.f32 %v1362, %v1763
  %v1798 = vmul.f32 %v1363, %v1763
  %v1799 = vmul.f32 %v1364, %v1763
  %v1800 = vmul.f32 %v1365, %v1763
  %v1801 = vmul.f32 %v1366, %v1763
  %v1802 = vmul.f32 %v1367, %v1763
  %v1803 = vmul.f32 %v1368, %v1763
  %v1804 = vmul.f32 %v1369, %v1763
  %v1805 = vmul.f32 %v1370, %v1763
  %v1806 = vmul.f32 %v1371, %v1763
  %v1807 = vmul.f32 %v1372, %v1763
  %v1808 = vmul.f32 %v1373, %v1763
  %v1809 = vmul.f32 %v1374, %v1763
  %v1810 = vmul.f32 %v1375, %v1763
  %v1811 = vmul.f32 %v1376, %v1763
  %v1812 = vmul.f32 %v1377, %v1763
  %v1813 = vmul.f32 %v1378, %v1763
  %v1814 = vmul.f32 %v1379, %v1763
  %v1815 = vmul.f32 %v1380, %v1763
  %v1816 = vmul.f32 %v1381, %v1763
  %v1817 = vmul.f32 %v1382, %v1763
  %v1818 = vmul.f32 %v1383, %v1763
  %v1819 = vmul.f32 %v1384, %v1763
  %v1820 = vmul.f32 %v1385, %v1763
  %v1821 = vmul.f32 %v1386, %v1763
  %v1822 = vmul.f32 %v1387, %v1763
  %v1824 = vlaneseq
  %v1825 = vshrl.u32 %v1824, 7
  %v1826 = vsub.s32 0, %v1825
  %v1827 = vrot.slane %v1758, %v1826
  %v1829 = vadd.f32 %v1765, %v1827
  %v1830 = vadd.f32 %v1766, %v1827
  %v1831 = vadd.f32 %v1767, %v1827
  %v1832 = vadd.f32 %v1768, %v1827
  %v1833 = vadd.f32 %v1769, %v1827
  %v1834 = vadd.f32 %v1770, %v1827
  %v1835 = vadd.f32 %v1771, %v1827
  %v1836 = vadd.f32 %v1772, %v1827
  %v1837 = vadd.f32 %v1773, %v1827
  %v1838 = vadd.f32 %v1774, %v1827
  %v1839 = vadd.f32 %v1775, %v1827
  %v1840 = vadd.f32 %v1776, %v1827
  %v1841 = vadd.f32 %v1777, %v1827
  %v1842 = vadd.f32 %v1778, %v1827
  %v1843 = vadd.f32 %v1779, %v1827
  %v1844 = vadd.f32 %v1780, %v1827
  %v1845 = vadd.f32 %v1781, %v1827
  %v1846 = vadd.f32 %v1782, %v1827
  %v1847 = vadd.f32 %v1783, %v1827
  %v1848 = vadd.f32 %v1784, %v1827
  %v1849 = vadd.f32 %v1785, %v1827
  %v1850 = vadd.f32 %v1786, %v1827
  %v1851 = vadd.f32 %v1787, %v1827
  %v1852 = vadd.f32 %v1788, %v1827
  %v1853 = vadd.f32 %v1789, %v1827
  %v1854 = vadd.f32 %v1790, %v1827
  %v1855 = vadd.f32 %v1791, %v1827
  %v1856 = vadd.f32 %v1792, %v1827
  %v1857 = vadd.f32 %v1793, %v1827
  %v1858 = vadd.f32 %v1794, %v1827
  %v1859 = vadd.f32 %v1795, %v1827
  %v1860 = vadd.f32 %v1796, %v1827
  %v1861 = vadd.f32 %v1797, %v1827
  %v1862 = vadd.f32 %v1798, %v1827
  %v1863 = vadd.f32 %v1799, %v1827
  %v1864 = vadd.f32 %v1800, %v1827
  %v1865 = vadd.f32 %v1801, %v1827
  %v1866 = vadd.f32 %v1802, %v1827
  %v1867 = vadd.f32 %v1803, %v1827
  %v1868 = vadd.f32 %v1804, %v1827
  %v1869 = vadd.f32 %v1805, %v1827
  %v1870 = vadd.f32 %v1806, %v1827
  %v1871 = vadd.f32 %v1807, %v1827
  %v1872 = vadd.f32 %v1808, %v1827
  %v1873 = vadd.f32 %v1809, %v1827
  %v1874 = vadd.f32 %v1810, %v1827
  %v1875 = vadd.f32 %v1811, %v1827
  %v1876 = vadd.f32 %v1812, %v1827
  %v1877 = vadd.f32 %v1813, %v1827
  %v1878 = vadd.f32 %v1814, %v1827
  %v1879 = vadd.f32 %v1815, %v1827
  %v1880 = vadd.f32 %v1816, %v1827
  %v1881 = vadd.f32 %v1817, %v1827
  %v1882 = vadd.f32 %v1818, %v1827
  %v1883 = vadd.f32 %v1819, %v1827
  %v1884 = vadd.f32 %v1820, %v1827
  %v1885 = vadd.f32 %v1821, %v1827
  %v1886 = vadd.f32 %v1822, %v1827
  %v1887 = vpack.c.bf16 %v1830, %v1829
  %v1888 = vpack.c.bf16 %v1832, %v1831
  %v1889 = vpack.c.bf16 %v1834, %v1833
  %v1890 = vpack.c.bf16 %v1836, %v1835
  %v1891 = vpack.c.bf16 %v1838, %v1837
  %v1892 = vpack.c.bf16 %v1840, %v1839
  %v1893 = vpack.c.bf16 %v1842, %v1841
  %v1894 = vpack.c.bf16 %v1844, %v1843
  %v1895 = vpack.c.bf16 %v1846, %v1845
  %v1896 = vpack.c.bf16 %v1848, %v1847
  %v1897 = vpack.c.bf16 %v1850, %v1849
  %v1898 = vpack.c.bf16 %v1852, %v1851
  %v1899 = vpack.c.bf16 %v1854, %v1853
  %v1900 = vpack.c.bf16 %v1856, %v1855
  %v1901 = vpack.c.bf16 %v1858, %v1857
  %v1902 = vpack.c.bf16 %v1860, %v1859
  %v1903 = vpack.c.bf16 %v1862, %v1861
  %v1904 = vpack.c.bf16 %v1864, %v1863
  %v1905 = vpack.c.bf16 %v1866, %v1865
  %v1906 = vpack.c.bf16 %v1868, %v1867
  %v1907 = vpack.c.bf16 %v1870, %v1869
  %v1908 = vpack.c.bf16 %v1872, %v1871
  %v1909 = vpack.c.bf16 %v1874, %v1873
  %v1910 = vpack.c.bf16 %v1876, %v1875
  %v1911 = vpack.c.bf16 %v1878, %v1877
  %v1912 = vpack.c.bf16 %v1880, %v1879
  %v1913 = vpack.c.bf16 %v1882, %v1881
  %v1914 = vpack.c.bf16 %v1884, %v1883
  %v1915 = vpack.c.bf16 %v1886, %v1885
  %v1945 = vunpack.c.l.b16 %v1887
  %v1946 = vunpack.c.h.b16 %v1887
  %v1947 = vunpack.c.l.b16 %v1888
  %v1948 = vunpack.c.h.b16 %v1888
  %v1949 = vunpack.c.l.b16 %v1889
  %v1950 = vunpack.c.h.b16 %v1889
  %v1951 = vunpack.c.l.b16 %v1890
  %v1952 = vunpack.c.h.b16 %v1890
  %v1953 = vunpack.c.l.b16 %v1891
  %v1954 = vunpack.c.h.b16 %v1891
  %v1955 = vunpack.c.l.b16 %v1892
  %v1956 = vunpack.c.h.b16 %v1892
  %v1957 = vunpack.c.l.b16 %v1893
  %v1958 = vunpack.c.h.b16 %v1893
  %v1959 = vunpack.c.l.b16 %v1894
  %v1960 = vunpack.c.h.b16 %v1894
  %v1961 = vunpack.c.l.b16 %v1895
  %v1962 = vunpack.c.h.b16 %v1895
  %v1963 = vunpack.c.l.b16 %v1896
  %v1964 = vunpack.c.h.b16 %v1896
  %v1965 = vunpack.c.l.b16 %v1897
  %v1966 = vunpack.c.h.b16 %v1897
  %v1967 = vunpack.c.l.b16 %v1898
  %v1968 = vunpack.c.h.b16 %v1898
  %v1969 = vunpack.c.l.b16 %v1899
  %v1970 = vunpack.c.h.b16 %v1899
  %v1971 = vunpack.c.l.b16 %v1900
  %v1972 = vunpack.c.h.b16 %v1900
  %v1973 = vunpack.c.l.b16 %v1901
  %v1974 = vunpack.c.h.b16 %v1901
  %v1975 = vunpack.c.l.b16 %v1902
  %v1976 = vunpack.c.h.b16 %v1902
  %v1977 = vunpack.c.l.b16 %v1903
  %v1978 = vunpack.c.h.b16 %v1903
  %v1979 = vunpack.c.l.b16 %v1904
  %v1980 = vunpack.c.h.b16 %v1904
  %v1981 = vunpack.c.l.b16 %v1905
  %v1982 = vunpack.c.h.b16 %v1905
  %v1983 = vunpack.c.l.b16 %v1906
  %v1984 = vunpack.c.h.b16 %v1906
  %v1985 = vunpack.c.l.b16 %v1907
  %v1986 = vunpack.c.h.b16 %v1907
  %v1987 = vunpack.c.l.b16 %v1908
  %v1988 = vunpack.c.h.b16 %v1908
  %v1989 = vunpack.c.l.b16 %v1909
  %v1990 = vunpack.c.h.b16 %v1909
  %v1991 = vunpack.c.l.b16 %v1910
  %v1992 = vunpack.c.h.b16 %v1910
  %v1993 = vunpack.c.l.b16 %v1911
  %v1994 = vunpack.c.h.b16 %v1911
  %v1995 = vunpack.c.l.b16 %v1912
  %v1996 = vunpack.c.h.b16 %v1912
  %v1997 = vunpack.c.l.b16 %v1913
  %v1998 = vunpack.c.h.b16 %v1913
  %v1999 = vunpack.c.l.b16 %v1914
  %v2000 = vunpack.c.h.b16 %v1914
  %v2001 = vunpack.c.l.b16 %v1915
  %v2002 = vunpack.c.h.b16 %v1915
  %v2003 = vpack.c.b16 %v1945, %v1945
  %v2004 = vpack.c.b16 %v1946, %v1946
  %v2005 = vpack.c.b16 %v1947, %v1947
  %v2006 = vpack.c.b16 %v1948, %v1948
  %v2007 = vpack.c.b16 %v1949, %v1949
  %v2008 = vpack.c.b16 %v1950, %v1950
  %v2009 = vpack.c.b16 %v1951, %v1951
  %v2010 = vpack.c.b16 %v1952, %v1952
  %v2011 = vpack.c.b16 %v1953, %v1953
  %v2012 = vpack.c.b16 %v1954, %v1954
  %v2013 = vpack.c.b16 %v1955, %v1955
  %v2014 = vpack.c.b16 %v1956, %v1956
  %v2015 = vpack.c.b16 %v1957, %v1957
  %v2016 = vpack.c.b16 %v1958, %v1958
  %v2017 = vpack.c.b16 %v1959, %v1959
  %v2018 = vpack.c.b16 %v1960, %v1960
  %v2019 = vpack.c.b16 %v1961, %v1961
  %v2020 = vpack.c.b16 %v1962, %v1962
  %v2021 = vpack.c.b16 %v1963, %v1963
  %v2022 = vpack.c.b16 %v1964, %v1964
  %v2023 = vpack.c.b16 %v1965, %v1965
  %v2024 = vpack.c.b16 %v1966, %v1966
  %v2025 = vpack.c.b16 %v1967, %v1967
  %v2026 = vpack.c.b16 %v1968, %v1968
  %v2027 = vpack.c.b16 %v1969, %v1969
  %v2028 = vpack.c.b16 %v1970, %v1970
  %v2029 = vpack.c.b16 %v1971, %v1971
  %v2030 = vpack.c.b16 %v1972, %v1972
  %v2031 = vpack.c.b16 %v1973, %v1973
  %v2032 = vpack.c.b16 %v1974, %v1974
  %v2033 = vpack.c.b16 %v1975, %v1975
  %v2034 = vpack.c.b16 %v1976, %v1976
  %v2035 = vpack.c.b16 %v1977, %v1977
  %v2036 = vpack.c.b16 %v1978, %v1978
  %v2037 = vpack.c.b16 %v1979, %v1979
  %v2038 = vpack.c.b16 %v1980, %v1980
  %v2039 = vpack.c.b16 %v1981, %v1981
  %v2040 = vpack.c.b16 %v1982, %v1982
  %v2041 = vpack.c.b16 %v1983, %v1983
  %v2042 = vpack.c.b16 %v1984, %v1984
  %v2043 = vpack.c.b16 %v1985, %v1985
  %v2044 = vpack.c.b16 %v1986, %v1986
  %v2045 = vpack.c.b16 %v1987, %v1987
  %v2046 = vpack.c.b16 %v1988, %v1988
  %v2047 = vpack.c.b16 %v1989, %v1989
  %v2048 = vpack.c.b16 %v1990, %v1990
  %v2049 = vpack.c.b16 %v1991, %v1991
  %v2050 = vpack.c.b16 %v1992, %v1992
  %v2051 = vpack.c.b16 %v1993, %v1993
  %v2052 = vpack.c.b16 %v1994, %v1994
  %v2053 = vpack.c.b16 %v1995, %v1995
  %v2054 = vpack.c.b16 %v1996, %v1996
  %v2055 = vpack.c.b16 %v1997, %v1997
  %v2056 = vpack.c.b16 %v1998, %v1998
  %v2057 = vpack.c.b16 %v1999, %v1999
  %v2058 = vpack.c.b16 %v2000, %v2000
  %v2059 = vpack.c.b16 %v2001, %v2001
  %v2060 = vpack.c.b16 %v2002, %v2002
  %2119 = vst [vmem:[%s5] sm:$0xf] %v2003
  %2120 = vst [vmem:[%s5 + $0x4] sm:$0xf] %v2004
  %2121 = vst [vmem:[%s5 + $0x8] sm:$0xf] %v2005
  %2122 = vst [vmem:[%s5 + $0xc] sm:$0xf] %v2006
  %2123 = vst [vmem:[%s5 + $0x10] sm:$0xf] %v2007
  %2124 = vst [vmem:[%s5 + $0x14] sm:$0xf] %v2008
  %2125 = vst [vmem:[%s5 + $0x18] sm:$0xf] %v2009
  %2126 = vst [vmem:[%s5 + $0x1c] sm:$0xf] %v2010
  %2127 = vst [vmem:[%s5 + $0x20] sm:$0xf] %v2011
  %2128 = vst [vmem:[%s5 + $0x24] sm:$0xf] %v2012
  %2129 = vst [vmem:[%s5 + $0x28] sm:$0xf] %v2013
  %2130 = vst [vmem:[%s5 + $0x2c] sm:$0xf] %v2014
  %2131 = vst [vmem:[%s5 + $0x30] sm:$0xf] %v2015
  %2132 = vst [vmem:[%s5 + $0x34] sm:$0xf] %v2016
  %2133 = vst [vmem:[%s5 + $0x38] sm:$0xf] %v2017
  %2134 = vst [vmem:[%s5 + $0x3c] sm:$0xf] %v2018
  %2135 = vst [vmem:[%s5 + $0x40] sm:$0xf] %v2019
  %2136 = vst [vmem:[%s5 + $0x44] sm:$0xf] %v2020
  %2137 = vst [vmem:[%s5 + $0x48] sm:$0xf] %v2021
  %2138 = vst [vmem:[%s5 + $0x4c] sm:$0xf] %v2022
  %2139 = vst [vmem:[%s5 + $0x50] sm:$0xf] %v2023
  %2140 = vst [vmem:[%s5 + $0x54] sm:$0xf] %v2024
  %2141 = vst [vmem:[%s5 + $0x58] sm:$0xf] %v2025
  %2142 = vst [vmem:[%s5 + $0x5c] sm:$0xf] %v2026
  %2143 = vst [vmem:[%s5 + $0x60] sm:$0xf] %v2027
  %2144 = vst [vmem:[%s5 + $0x64] sm:$0xf] %v2028
  %2145 = vst [vmem:[%s5 + $0x68] sm:$0xf] %v2029
  %2146 = vst [vmem:[%s5 + $0x6c] sm:$0xf] %v2030
  %2147 = vst [vmem:[%s5 + $0x70] sm:$0xf] %v2031
  %2148 = vst [vmem:[%s5 + $0x74] sm:$0xf] %v2032
  %2149 = vst [vmem:[%s5 + $0x78] sm:$0xf] %v2033
  %2150 = vst [vmem:[%s5 + $0x7c] sm:$0xf] %v2034
  %2151 = vst [vmem:[%s5 + $0x80] sm:$0xf] %v2035
  %2152 = vst [vmem:[%s5 + $0x84] sm:$0xf] %v2036
  %2153 = vst [vmem:[%s5 + $0x88] sm:$0xf] %v2037
  %2154 = vst [vmem:[%s5 + $0x8c] sm:$0xf] %v2038
  %2155 = vst [vmem:[%s5 + $0x90] sm:$0xf] %v2039
  %2156 = vst [vmem:[%s5 + $0x94] sm:$0xf] %v2040
  %2157 = vst [vmem:[%s5 + $0x98] sm:$0xf] %v2041
  %2158 = vst [vmem:[%s5 + $0x9c] sm:$0xf] %v2042
  %2159 = vst [vmem:[%s5 + $0xa0] sm:$0xf] %v2043
  %2160 = vst [vmem:[%s5 + $0xa4] sm:$0xf] %v2044
  %2161 = vst [vmem:[%s5 + $0xa8] sm:$0xf] %v2045
  %2162 = vst [vmem:[%s5 + $0xac] sm:$0xf] %v2046
  %2163 = vst [vmem:[%s5 + $0xb0] sm:$0xf] %v2047
  %2164 = vst [vmem:[%s5 + $0xb4] sm:$0xf] %v2048
  %2165 = vst [vmem:[%s5 + $0xb8] sm:$0xf] %v2049
  %2166 = vst [vmem:[%s5 + $0xbc] sm:$0xf] %v2050
  %2167 = vst [vmem:[%s5 + $0xc0] sm:$0xf] %v2051
  %2168 = vst [vmem:[%s5 + $0xc4] sm:$0xf] %v2052
  %2169 = vst [vmem:[%s5 + $0xc8] sm:$0xf] %v2053
  %2170 = vst [vmem:[%s5 + $0xcc] sm:$0xf] %v2054
  %2171 = vst [vmem:[%s5 + $0xd0] sm:$0xf] %v2055
  %2172 = vst [vmem:[%s5 + $0xd4] sm:$0xf] %v2056
  %2173 = vst [vmem:[%s5 + $0xd8] sm:$0xf] %v2057
  %2174 = vst [vmem:[%s5 + $0xdc] sm:$0xf] %v2058
  %2175 = vst [vmem:[%s5 + $0xe0] sm:$0xf] %v2059
  %2176 = vst [vmem:[%s5 + $0xe4] sm:$0xf] %v2060
  // Predicated region
  $region22: #{_net_forward.13} parent=0 // pred_check
    _
  $region23: #{_net_forward.13} parent=0 // pred_check_branch
    %2178 = sbr.rel (0) target = $region25
  $region24: #{_net_forward.13} parent=0 // pred_region
    _
  $region25: #{_net_forward.13} parent=0 // pred_fallthru
    _
  // Predicated region
  $region26: #{_net_forward.13} parent=0 // pred_check
    _
  $region27: #{_net_forward.13} parent=0 // pred_check_branch
    %2180 = sbr.rel (0) target = $region29
  $region28: #{_net_forward.13} parent=0 // pred_region
    _
  $region29: #{_net_forward.13} parent=0 // pred_fallthru
    _

// kernel: _net_forward.14
$region0: #{_net_forward.14}
  #allocation0 [shape = 'u32[]', space=smem, size = 0x4, offset = 0x4, fixed_abs, tag = 'smem constant byte address 0x4 - core index']
  #allocation1 [shape = 'u32[144,128]{1,0:T(1,128)}', space=vmem, size = 0x12000, scoped, tag = 'internal scratch']
  %s0 = inlined_call_operand.vmem [shape: bf16[128,640], index: 0, kind: input, shape index: {}]
  %s1 = inlined_call_operand.vmem [shape: bf16[640,128], index: 1, kind: input, shape index: {}]
  %s2 = inlined_call_operand.vmem [shape: f32[1,128], index: 2, kind: input, shape index: {}]
  %s3 = inlined_call_operand.vmem [shape: f32[1,128], index: 3, kind: input, shape index: {}]
  %s4 = inlined_call_operand.vmem [shape: f32[1,128], index: 4, kind: input, shape index: {}]
  %s5 = inlined_call_operand.vmem [shape: bf16[128,128], index: 5, kind: output, shape index: {}]
  %s6 = sld [smem:[#allocation0]]
  $region30: #{_net_forward.14} parent=0
    _
  %s8 = ssub.s32 1, %s6
  %s9 = scalar_select 0, %s8, %s6
  // Predicated region
  $region2: #{_net_forward.14} parent=0 // pred_check
    _
  $region3: #{_net_forward.14} parent=0 // pred_check_branch
    %11 = sbr.rel (0) target = $region5
  $region4: #{_net_forward.14} parent=0 // pred_region
    _
  $region5: #{_net_forward.14} parent=0 // pred_fallthru
    _
  // Predicated region
  $region6: #{_net_forward.14} parent=0 // pred_check
    _
  $region7: #{_net_forward.14} parent=0 // pred_check_branch
    %13 = sbr.rel (0) target = $region9
  $region8: #{_net_forward.14} parent=0 // pred_region
    _
  $region9: #{_net_forward.14} parent=0 // pred_fallthru
    _
  // Predicated region
  $region10: #{_net_forward.14} parent=0 // pred_check
    _
  $region11: #{_net_forward.14} parent=0 // pred_check_branch
    %15 = sbr.rel (0) target = $region13
  $region12: #{_net_forward.14} parent=0 // pred_region
    _
  $region13: #{_net_forward.14} parent=0 // pred_fallthru
    _
  // Predicated region
  $region14: #{_net_forward.14} parent=0 // pred_check
    _
  $region15: #{_net_forward.14} parent=0 // pred_check_branch
    %17 = sbr.rel (0) target = $region17
  $region16: #{_net_forward.14} parent=0 // pred_region
    _
  $region17: #{_net_forward.14} parent=0 // pred_fallthru
    _
  // Predicated region
  $region18: #{_net_forward.14} parent=0 // pred_check
    _
  $region19: #{_net_forward.14} parent=0 // pred_check_branch
    %19 = sbr.rel (0) target = $region21
  $region20: #{_net_forward.14} parent=0 // pred_region
    _
  $region21: #{_net_forward.14} parent=0 // pred_fallthru
    _
  %v21 = vld [vmem:[%s0] sm:$0xff]
  %v22 = vld [vmem:[%s0 + $0x8] sm:$0xff]
  %v23 = vld [vmem:[%s0 + $0x10] sm:$0xf]
  %v24 = vld [vmem:[%s0 + $0x14] sm:$0xff]
  %v25 = vld [vmem:[%s0 + $0x1c] sm:$0xff]
  %v26 = vld [vmem:[%s0 + $0x24] sm:$0xf]
  %v27 = vld [vmem:[%s0 + $0x28] sm:$0xff]
  %v28 = vld [vmem:[%s0 + $0x30] sm:$0xff]
  %v29 = vld [vmem:[%s0 + $0x38] sm:$0xf]
  %v30 = vld [vmem:[%s0 + $0x3c] sm:$0xff]
  %v31 = vld [vmem:[%s0 + $0x44] sm:$0xff]
  %v32 = vld [vmem:[%s0 + $0x4c] sm:$0xf]
  %v33 = vld [vmem:[%s0 + $0x50] sm:$0xff]
  %v34 = vld [vmem:[%s0 + $0x58] sm:$0xff]
  %v35 = vld [vmem:[%s0 + $0x60] sm:$0xf]
  %v36 = vld [vmem:[%s0 + $0x64] sm:$0xff]
  %v37 = vld [vmem:[%s0 + $0x6c] sm:$0xff]
  %v38 = vld [vmem:[%s0 + $0x74] sm:$0xf]
  %v39 = vld [vmem:[%s0 + $0x78] sm:$0xff]
  %v40 = vld [vmem:[%s0 + $0x80] sm:$0xff]
  %v41 = vld [vmem:[%s0 + $0x88] sm:$0xf]
  %v42 = vld [vmem:[%s0 + $0x8c] sm:$0xff]
  %v43 = vld [vmem:[%s0 + $0x94] sm:$0xff]
  %v44 = vld [vmem:[%s0 + $0x9c] sm:$0xf]
  %v45 = vld [vmem:[%s0 + $0xa0] sm:$0xff]
  %v46 = vld [vmem:[%s0 + $0xa8] sm:$0xff]
  %v47 = vld [vmem:[%s0 + $0xb0] sm:$0xf]
  %v48 = vld [vmem:[%s0 + $0xb4] sm:$0xff]
  %v49 = vld [vmem:[%s0 + $0xbc] sm:$0xff]
  %v50 = vld [vmem:[%s0 + $0xc4] sm:$0xf]
  %v51 = vld [vmem:[%s0 + $0xc8] sm:$0xff]
  %v52 = vld [vmem:[%s0 + $0xd0] sm:$0xff]
  %v53 = vld [vmem:[%s0 + $0xd8] sm:$0xf]
  %v54 = vld [vmem:[%s0 + $0xdc] sm:$0xff]
  %v55 = vld [vmem:[%s0 + $0xe4] sm:$0xff]
  %v56 = vld [vmem:[%s0 + $0xec] sm:$0xf]
  %v57 = vld [vmem:[%s0 + $0xf0] sm:$0xff]
  %v58 = vld [vmem:[%s0 + $0xf8] sm:$0xff]
  %v59 = vld [vmem:[%s0 + $0x100] sm:$0xf]
  %v60 = vld [vmem:[%s0 + $0x104] sm:$0xff]
  %v61 = vld [vmem:[%s0 + $0x10c] sm:$0xff]
  %v62 = vld [vmem:[%s0 + $0x114] sm:$0xf]
  %v63 = vld [vmem:[%s0 + $0x118] sm:$0xff]
  %v64 = vld [vmem:[%s0 + $0x120] sm:$0xff]
  %v65 = vld [vmem:[%s0 + $0x128] sm:$0xf]
  %v66 = vld [vmem:[%s0 + $0x12c] sm:$0xff]
  %v67 = vld [vmem:[%s0 + $0x134] sm:$0xff]
  %v68 = vld [vmem:[%s0 + $0x13c] sm:$0xf]
  %v69 = vld [vmem:[%s1] sm:$0xf]
  %v70 = vld [vmem:[%s1 + $0x4] sm:$0xf]
  %v71 = vld [vmem:[%s1 + $0x8] sm:$0xf]
  %v72 = vld [vmem:[%s1 + $0xc] sm:$0xf]
  %v73 = vld [vmem:[%s1 + $0x10] sm:$0xf]
  %v74 = vld [vmem:[%s1 + $0x14] sm:$0xf]
  %v75 = vld [vmem:[%s1 + $0x18] sm:$0xf]
  %v76 = vld [vmem:[%s1 + $0x1c] sm:$0xf]
  %v77 = vld [vmem:[%s1 + $0x20] sm:$0xf]
  %v78 = vld [vmem:[%s1 + $0x24] sm:$0xf]
  %v79 = vld [vmem:[%s1 + $0x28] sm:$0xf]
  %v80 = vld [vmem:[%s1 + $0x2c] sm:$0xf]
  %v81 = vld [vmem:[%s1 + $0x30] sm:$0xf]
  %v82 = vld [vmem:[%s1 + $0x34] sm:$0xf]
  %v83 = vld [vmem:[%s1 + $0x38] sm:$0xf]
  %v84 = vld [vmem:[%s1 + $0x3c] sm:$0xf]
  %v85 = vld [vmem:[%s1 + $0x40] sm:$0xf]
  %v86 = vld [vmem:[%s1 + $0x44] sm:$0xf]
  %v87 = vld [vmem:[%s1 + $0x48] sm:$0xf]
  %v88 = vld [vmem:[%s1 + $0x4c] sm:$0xf]
  %v89 = vld [vmem:[%s1 + $0x50] sm:$0xf]
  %v90 = vld [vmem:[%s1 + $0x54] sm:$0xf]
  %v91 = vld [vmem:[%s1 + $0x58] sm:$0xf]
  %v92 = vld [vmem:[%s1 + $0x5c] sm:$0xf]
  %v93 = vld [vmem:[%s1 + $0x60] sm:$0xf]
  %v94 = vld [vmem:[%s1 + $0x64] sm:$0xf]
  %v95 = vld [vmem:[%s1 + $0x68] sm:$0xf]
  %v96 = vld [vmem:[%s1 + $0x6c] sm:$0xf]
  %v97 = vld [vmem:[%s1 + $0x70] sm:$0xf]
  %v98 = vld [vmem:[%s1 + $0x74] sm:$0xf]
  %v99 = vld [vmem:[%s1 + $0x78] sm:$0xf]
  %v100 = vld [vmem:[%s1 + $0x7c] sm:$0xf]
  %v101 = vld [vmem:[%s1 + $0x80] sm:$0xf]
  %v102 = vld [vmem:[%s1 + $0x84] sm:$0xf]
  %v103 = vld [vmem:[%s1 + $0x88] sm:$0xf]
  %v104 = vld [vmem:[%s1 + $0x8c] sm:$0xf]
  %v105 = vld [vmem:[%s1 + $0x90] sm:$0xf]
  %v106 = vld [vmem:[%s1 + $0x94] sm:$0xf]
  %v107 = vld [vmem:[%s1 + $0x98] sm:$0xf]
  %v108 = vld [vmem:[%s1 + $0x9c] sm:$0xf]
  %v109 = vld [vmem:[%s1 + $0xa0] sm:$0xf]
  %v110 = vld [vmem:[%s1 + $0xa4] sm:$0xf]
  %v111 = vld [vmem:[%s1 + $0xa8] sm:$0xf]
  %v112 = vld [vmem:[%s1 + $0xac] sm:$0xf]
  %v113 = vld [vmem:[%s1 + $0xb0] sm:$0xf]
  %v114 = vld [vmem:[%s1 + $0xb4] sm:$0xf]
  %v115 = vld [vmem:[%s1 + $0xb8] sm:$0xf]
  %v116 = vld [vmem:[%s1 + $0xbc] sm:$0xf]
  %v117 = vld [vmem:[%s1 + $0xc0] sm:$0xf]
  %v118 = vld [vmem:[%s1 + $0xc4] sm:$0xf]
  %v119 = vld [vmem:[%s1 + $0xc8] sm:$0xf]
  %v120 = vld [vmem:[%s1 + $0xcc] sm:$0xf]
  %v121 = vld [vmem:[%s1 + $0xd0] sm:$0xf]
  %v122 = vld [vmem:[%s1 + $0xd4] sm:$0xf]
  %v123 = vld [vmem:[%s1 + $0xd8] sm:$0xf]
  %v124 = vld [vmem:[%s1 + $0xdc] sm:$0xf]
  %v125 = vld [vmem:[%s1 + $0xe0] sm:$0xf]
  %v126 = vld [vmem:[%s1 + $0xe4] sm:$0xf]
  %v127 = vld [vmem:[%s1 + $0xe8] sm:$0xf]
  %v128 = vld [vmem:[%s1 + $0xec] sm:$0xf]
  %v129 = vld [vmem:[%s1 + $0xf0] sm:$0xf]
  %v130 = vld [vmem:[%s1 + $0xf4] sm:$0xf]
  %v131 = vld [vmem:[%s1 + $0xf8] sm:$0xf]
  %v132 = vld [vmem:[%s1 + $0xfc] sm:$0xf]
  %v133 = vld [vmem:[%s1 + $0x100] sm:$0xf]
  %v134 = vld [vmem:[%s1 + $0x104] sm:$0xf]
  %v135 = vld [vmem:[%s1 + $0x108] sm:$0xf]
  %v136 = vld [vmem:[%s1 + $0x10c] sm:$0xf]
  %v137 = vld [vmem:[%s1 + $0x110] sm:$0xf]
  %v138 = vld [vmem:[%s1 + $0x114] sm:$0xf]
  %v139 = vld [vmem:[%s1 + $0x118] sm:$0xf]
  %v140 = vld [vmem:[%s1 + $0x11c] sm:$0xf]
  %v141 = vld [vmem:[%s1 + $0x120] sm:$0xf]
  %v142 = vld [vmem:[%s1 + $0x124] sm:$0xf]
  %v143 = vld [vmem:[%s1 + $0x128] sm:$0xf]
  %v144 = vld [vmem:[%s1 + $0x12c] sm:$0xf]
  %v145 = vld [vmem:[%s1 + $0x130] sm:$0xf]
  %v146 = vld [vmem:[%s1 + $0x134] sm:$0xf]
  %v147 = vld [vmem:[%s1 + $0x138] sm:$0xf]
  %v148 = vld [vmem:[%s1 + $0x13c] sm:$0xf]
  %v149 = vld [vmem:[%s2] sm:$0x1]
  %v151 = vlaneseq
  %v152 = vshrl.u32 %v151, 7
  %v153 = vsub.s32 0, %v152
  %v154 = vrot.slane %v149, %v153
  %v204 = vunpack.c.l.b16 %v21
  %v205 = vunpack.c.h.b16 %v21
  %v206 = vunpack.c.l.b16 %v22
  %v207 = vunpack.c.h.b16 %v22
  %v208 = vunpack.c.l.b16 %v23
  %v209 = vunpack.c.l.b16 %v24
  %v210 = vunpack.c.h.b16 %v24
  %v211 = vunpack.c.l.b16 %v25
  %v212 = vunpack.c.h.b16 %v25
  %v213 = vunpack.c.l.b16 %v26
  %v214 = vunpack.c.l.b16 %v27
  %v215 = vunpack.c.h.b16 %v27
  %v216 = vunpack.c.l.b16 %v28
  %v217 = vunpack.c.h.b16 %v28
  %v218 = vunpack.c.l.b16 %v29
  %v219 = vunpack.c.l.b16 %v30
  %v220 = vunpack.c.h.b16 %v30
  %v221 = vunpack.c.l.b16 %v31
  %v222 = vunpack.c.h.b16 %v31
  %v223 = vunpack.c.l.b16 %v32
  %v224 = vunpack.c.l.b16 %v33
  %v225 = vunpack.c.h.b16 %v33
  %v226 = vunpack.c.l.b16 %v34
  %v227 = vunpack.c.h.b16 %v34
  %v228 = vunpack.c.l.b16 %v35
  %v229 = vunpack.c.l.b16 %v36
  %v230 = vunpack.c.h.b16 %v36
  %v231 = vunpack.c.l.b16 %v37
  %v232 = vunpack.c.h.b16 %v37
  %v233 = vunpack.c.l.b16 %v38
  %v234 = vunpack.c.l.b16 %v39
  %v235 = vunpack.c.h.b16 %v39
  %v236 = vunpack.c.l.b16 %v40
  %v237 = vunpack.c.h.b16 %v40
  %v238 = vunpack.c.l.b16 %v41
  %v239 = vunpack.c.l.b16 %v42
  %v240 = vunpack.c.h.b16 %v42
  %v241 = vunpack.c.l.b16 %v43
  %v242 = vunpack.c.h.b16 %v43
  %v243 = vunpack.c.l.b16 %v44
  %v244 = vunpack.c.l.b16 %v45
  %v245 = vunpack.c.h.b16 %v45
  %v246 = vunpack.c.l.b16 %v46
  %v247 = vunpack.c.h.b16 %v46
  %v248 = vunpack.c.l.b16 %v47
  %v249 = vunpack.c.l.b16 %v48
  %v250 = vunpack.c.h.b16 %v48
  %v251 = vunpack.c.l.b16 %v49
  %v252 = vunpack.c.h.b16 %v49
  %v253 = vunpack.c.l.b16 %v50
  %v254 = vunpack.c.l.b16 %v51
  %v255 = vunpack.c.h.b16 %v51
  %v256 = vunpack.c.l.b16 %v52
  %v257 = vunpack.c.h.b16 %v52
  %v258 = vunpack.c.l.b16 %v53
  %v259 = vunpack.c.l.b16 %v54
  %v260 = vunpack.c.h.b16 %v54
  %v261 = vunpack.c.l.b16 %v55
  %v262 = vunpack.c.h.b16 %v55
  %v263 = vunpack.c.l.b16 %v56
  %v264 = vunpack.c.l.b16 %v57
  %v265 = vunpack.c.h.b16 %v57
  %v266 = vunpack.c.l.b16 %v58
  %v267 = vunpack.c.h.b16 %v58
  %v268 = vunpack.c.l.b16 %v59
  %v269 = vunpack.c.l.b16 %v60
  %v270 = vunpack.c.h.b16 %v60
  %v271 = vunpack.c.l.b16 %v61
  %v272 = vunpack.c.h.b16 %v61
  %v273 = vunpack.c.l.b16 %v62
  %v274 = vunpack.c.l.b16 %v63
  %v275 = vunpack.c.h.b16 %v63
  %v276 = vunpack.c.l.b16 %v64
  %v277 = vunpack.c.h.b16 %v64
  %v278 = vunpack.c.l.b16 %v65
  %v279 = vunpack.c.l.b16 %v66
  %v280 = vunpack.c.h.b16 %v66
  %v281 = vunpack.c.l.b16 %v67
  %v282 = vunpack.c.h.b16 %v67
  %v283 = vunpack.c.l.b16 %v68
  %v284 = vpack.c.b16 %v209, %v204
  %v285 = vpack.c.b16 %v210, %v205
  %v286 = vpack.c.b16 %v211, %v206
  %v287 = vpack.c.b16 %v212, %v207
  %v288 = vpack.c.b16 %v213, %v208
  %v289 = vpack.c.b16 %v219, %v214
  %v290 = vpack.c.b16 %v220, %v215
  %v291 = vpack.c.b16 %v221, %v216
  %v292 = vpack.c.b16 %v222, %v217
  %v293 = vpack.c.b16 %v223, %v218
  %v294 = vpack.c.b16 %v229, %v224
  %v295 = vpack.c.b16 %v230, %v225
  %v296 = vpack.c.b16 %v231, %v226
  %v297 = vpack.c.b16 %v232, %v227
  %v298 = vpack.c.b16 %v233, %v228
  %v299 = vpack.c.b16 %v239, %v234
  %v300 = vpack.c.b16 %v240, %v235
  %v301 = vpack.c.b16 %v241, %v236
  %v302 = vpack.c.b16 %v242, %v237
  %v303 = vpack.c.b16 %v243, %v238
  %v304 = vpack.c.b16 %v249, %v244
  %v305 = vpack.c.b16 %v250, %v245
  %v306 = vpack.c.b16 %v251, %v246
  %v307 = vpack.c.b16 %v252, %v247
  %v308 = vpack.c.b16 %v253, %v248
  %v309 = vpack.c.b16 %v259, %v254
  %v310 = vpack.c.b16 %v260, %v255
  %v311 = vpack.c.b16 %v261, %v256
  %v312 = vpack.c.b16 %v262, %v257
  %v313 = vpack.c.b16 %v263, %v258
  %v314 = vpack.c.b16 %v269, %v264
  %v315 = vpack.c.b16 %v270, %v265
  %v316 = vpack.c.b16 %v271, %v266
  %v317 = vpack.c.b16 %v272, %v267
  %v318 = vpack.c.b16 %v273, %v268
  %v319 = vpack.c.b16 %v279, %v274
  %v320 = vpack.c.b16 %v280, %v275
  %v321 = vpack.c.b16 %v281, %v276
  %v322 = vpack.c.b16 %v282, %v277
  %v323 = vpack.c.b16 %v283, %v278
  %v444 = vunpack.c.l.b16 %v69
  %v445 = vunpack.c.l.b16 %v70
  %v446 = vunpack.c.l.b16 %v71
  %v447 = vunpack.c.l.b16 %v72
  %v448 = vunpack.c.l.b16 %v73
  %v449 = vunpack.c.l.b16 %v74
  %v450 = vunpack.c.l.b16 %v75
  %v451 = vunpack.c.l.b16 %v76
  %v452 = vunpack.c.l.b16 %v77
  %v453 = vunpack.c.l.b16 %v78
  %v454 = vunpack.c.l.b16 %v79
  %v455 = vunpack.c.l.b16 %v80
  %v456 = vunpack.c.l.b16 %v81
  %v457 = vunpack.c.l.b16 %v82
  %v458 = vunpack.c.l.b16 %v83
  %v459 = vunpack.c.l.b16 %v84
  %v460 = vunpack.c.l.b16 %v85
  %v461 = vunpack.c.l.b16 %v86
  %v462 = vunpack.c.l.b16 %v87
  %v463 = vunpack.c.l.b16 %v88
  %v464 = vunpack.c.l.b16 %v89
  %v465 = vunpack.c.l.b16 %v90
  %v466 = vunpack.c.l.b16 %v91
  %v467 = vunpack.c.l.b16 %v92
  %v468 = vunpack.c.l.b16 %v93
  %v469 = vunpack.c.l.b16 %v94
  %v470 = vunpack.c.l.b16 %v95
  %v471 = vunpack.c.l.b16 %v96
  %v472 = vunpack.c.l.b16 %v97
  %v473 = vunpack.c.l.b16 %v98
  %v474 = vunpack.c.l.b16 %v99
  %v475 = vunpack.c.l.b16 %v100
  %v476 = vunpack.c.l.b16 %v101
  %v477 = vunpack.c.l.b16 %v102
  %v478 = vunpack.c.l.b16 %v103
  %v479 = vunpack.c.l.b16 %v104
  %v480 = vunpack.c.l.b16 %v105
  %v481 = vunpack.c.l.b16 %v106
  %v482 = vunpack.c.l.b16 %v107
  %v483 = vunpack.c.l.b16 %v108
  %v484 = vunpack.c.l.b16 %v109
  %v485 = vunpack.c.l.b16 %v110
  %v486 = vunpack.c.l.b16 %v111
  %v487 = vunpack.c.l.b16 %v112
  %v488 = vunpack.c.l.b16 %v113
  %v489 = vunpack.c.l.b16 %v114
  %v490 = vunpack.c.l.b16 %v115
  %v491 = vunpack.c.l.b16 %v116
  %v492 = vunpack.c.l.b16 %v117
  %v493 = vunpack.c.l.b16 %v118
  %v494 = vunpack.c.l.b16 %v119
  %v495 = vunpack.c.l.b16 %v120
  %v496 = vunpack.c.l.b16 %v121
  %v497 = vunpack.c.l.b16 %v122
  %v498 = vunpack.c.l.b16 %v123
  %v499 = vunpack.c.l.b16 %v124
  %v500 = vunpack.c.l.b16 %v125
  %v501 = vunpack.c.l.b16 %v126
  %v502 = vunpack.c.l.b16 %v127
  %v503 = vunpack.c.l.b16 %v128
  %v504 = vunpack.c.l.b16 %v129
  %v505 = vunpack.c.l.b16 %v130
  %v506 = vunpack.c.l.b16 %v131
  %v507 = vunpack.c.l.b16 %v132
  %v508 = vunpack.c.l.b16 %v133
  %v509 = vunpack.c.l.b16 %v134
  %v510 = vunpack.c.l.b16 %v135
  %v511 = vunpack.c.l.b16 %v136
  %v512 = vunpack.c.l.b16 %v137
  %v513 = vunpack.c.l.b16 %v138
  %v514 = vunpack.c.l.b16 %v139
  %v515 = vunpack.c.l.b16 %v140
  %v516 = vunpack.c.l.b16 %v141
  %v517 = vunpack.c.l.b16 %v142
  %v518 = vunpack.c.l.b16 %v143
  %v519 = vunpack.c.l.b16 %v144
  %v520 = vunpack.c.l.b16 %v145
  %v521 = vunpack.c.l.b16 %v146
  %v522 = vunpack.c.l.b16 %v147
  %v523 = vunpack.c.l.b16 %v148
  %v524 = vpack.c.b16 %v445, %v444
  %v525 = vpack.c.b16 %v447, %v446
  %v526 = vpack.c.b16 %v449, %v448
  %v527 = vpack.c.b16 %v451, %v450
  %v528 = vpack.c.b16 %v453, %v452
  %v529 = vpack.c.b16 %v455, %v454
  %v530 = vpack.c.b16 %v457, %v456
  %v531 = vpack.c.b16 %v459, %v458
  %v532 = vpack.c.b16 %v461, %v460
  %v533 = vpack.c.b16 %v463, %v462
  %v534 = vpack.c.b16 %v465, %v464
  %v535 = vpack.c.b16 %v467, %v466
  %v536 = vpack.c.b16 %v469, %v468
  %v537 = vpack.c.b16 %v471, %v470
  %v538 = vpack.c.b16 %v473, %v472
  %v539 = vpack.c.b16 %v475, %v474
  %v540 = vpack.c.b16 %v477, %v476
  %v541 = vpack.c.b16 %v479, %v478
  %v542 = vpack.c.b16 %v481, %v480
  %v543 = vpack.c.b16 %v483, %v482
  %v544 = vpack.c.b16 %v485, %v484
  %v545 = vpack.c.b16 %v487, %v486
  %v546 = vpack.c.b16 %v489, %v488
  %v547 = vpack.c.b16 %v491, %v490
  %v548 = vpack.c.b16 %v493, %v492
  %v549 = vpack.c.b16 %v495, %v494
  %v550 = vpack.c.b16 %v497, %v496
  %v551 = vpack.c.b16 %v499, %v498
  %v552 = vpack.c.b16 %v501, %v500
  %v553 = vpack.c.b16 %v503, %v502
  %v554 = vpack.c.b16 %v505, %v504
  %v555 = vpack.c.b16 %v507, %v506
  %v556 = vpack.c.b16 %v509, %v508
  %v557 = vpack.c.b16 %v511, %v510
  %v558 = vpack.c.b16 %v513, %v512
  %v559 = vpack.c.b16 %v515, %v514
  %v560 = vpack.c.b16 %v517, %v516
  %v561 = vpack.c.b16 %v519, %v518
  %v562 = vpack.c.b16 %v521, %v520
  %v563 = vpack.c.b16 %v523, %v522
  %604 = vmatprep.subr.bf16.mxu0 0
  %605 = vmatpush1.bf16.msra.mxu0 %v524
  %606 = vmatprep.subr.bf16.mxu0 0
  %607 = vmatpush1.bf16.msra.mxu0 %v525
  %608 = vmatprep.subr.bf16.mxu0 0
  %609 = vmatpush1.bf16.msra.mxu0 %v526
  %610 = vmatprep.subr.bf16.mxu0 0
  %611 = vmatpush1.bf16.msra.mxu0 %v527
  %612 = vmatprep.subr.bf16.mxu0 0
  %613 = vmatpush1.bf16.msra.mxu0 %v528
  %614 = vmatprep.subr.bf16.mxu0 0
  %615 = vmatpush1.bf16.msra.mxu0 %v529
  %616 = vmatprep.subr.bf16.mxu0 0
  %617 = vmatpush1.bf16.msra.mxu0 %v530
  %618 = vmatprep.subr.bf16.mxu0 0
  %619 = vmatpush1.bf16.msra.mxu0 %v531
  %620 = vmatprep.subr.bf16.mxu0 0
  %621 = vmatpush1.bf16.msra.mxu0 %v532
  %622 = vmatprep.subr.bf16.mxu0 0
  %623 = vmatpush1.bf16.msra.mxu0 %v533
  %624 = vmatprep.subr.bf16.mxu0 0
  %625 = vmatpush1.bf16.msra.mxu0 %v534
  %626 = vmatprep.subr.bf16.mxu0 0
  %627 = vmatpush1.bf16.msra.mxu0 %v535
  %628 = vmatprep.subr.bf16.mxu0 0
  %629 = vmatpush1.bf16.msra.mxu0 %v536
  %630 = vmatprep.subr.bf16.mxu0 0
  %631 = vmatpush1.bf16.msra.mxu0 %v537
  %632 = vmatprep.subr.bf16.mxu0 0
  %633 = vmatpush1.bf16.msra.mxu0 %v538
  %634 = vmatprep.subr.bf16.mxu0 0
  %635 = vmatpush1.bf16.msra.mxu0 %v539
  %636 = vmatprep.mubr.bf16.mxu0 %v285
  %637 = vmatmul.mubr.bf16.gmra.mrb[0].mxu0 %v284
  %v638 = vpop.f32.mrb[0].mxu0
  %v639 = vadd.f32 %v154, %v638
  %v640 = vpop.f32.mrb[0].mxu0
  %v641 = vpop.f32.mrb[0].mxu0
  %v642 = vadd.f32 %v154, %v641
  %v643 = vpop.f32.mrb[0].mxu0
  %644 = vmatprep.mubr.bf16.mxu0 %v290
  %645 = vmatmul.mubr.bf16.gmra.mrb[0].mxu0 %v289
  %v646 = vpop.f32.mrb[0].mxu0
  %v647 = vadd.f32 %v154, %v646
  %v648 = vpop.f32.mrb[0].mxu0
  %v649 = vpop.f32.mrb[0].mxu0
  %v650 = vadd.f32 %v154, %v649
  %v651 = vpop.f32.mrb[0].mxu0
  %652 = vmatprep.mubr.bf16.mxu0 %v295
  %653 = vmatmul.mubr.bf16.gmra.mrb[0].mxu0 %v294
  %v654 = vpop.f32.mrb[0].mxu0
  %v655 = vadd.f32 %v154, %v654
  %v656 = vpop.f32.mrb[0].mxu0
  %v657 = vpop.f32.mrb[0].mxu0
  %v658 = vadd.f32 %v154, %v657
  %v659 = vpop.f32.mrb[0].mxu0
  %660 = vmatprep.mubr.bf16.mxu0 %v300
  %661 = vmatmul.mubr.bf16.gmra.mrb[0].mxu0 %v299
  %v662 = vpop.f32.mrb[0].mxu0
  %v663 = vadd.f32 %v154, %v662
  %v664 = vpop.f32.mrb[0].mxu0
  %v665 = vpop.f32.mrb[0].mxu0
  %v666 = vadd.f32 %v154, %v665
  %v667 = vpop.f32.mrb[0].mxu0
  %668 = vmatprep.mubr.bf16.mxu0 %v305
  %669 = vmatmul.mubr.bf16.gmra.mrb[0].mxu0 %v304
  %v670 = vpop.f32.mrb[0].mxu0
  %v671 = vadd.f32 %v154, %v670
  %v672 = vpop.f32.mrb[0].mxu0
  %v673 = vpop.f32.mrb[0].mxu0
  %v674 = vadd.f32 %v154, %v673
  %v675 = vpop.f32.mrb[0].mxu0
  %676 = vmatprep.mubr.bf16.mxu0 %v310
  %677 = vmatmul.mubr.bf16.gmra.mrb[0].mxu0 %v309
  %v678 = vpop.f32.mrb[0].mxu0
  %v679 = vadd.f32 %v154, %v678
  %v680 = vpop.f32.mrb[0].mxu0
  %v681 = vpop.f32.mrb[0].mxu0
  %v682 = vadd.f32 %v154, %v681
  %v683 = vpop.f32.mrb[0].mxu0
  %684 = vmatprep.mubr.bf16.mxu0 %v315
  %685 = vmatmul.mubr.bf16.gmra.mrb[0].mxu0 %v314
  %v686 = vpop.f32.mrb[0].mxu0
  %v687 = vadd.f32 %v154, %v686
  %v688 = vpop.f32.mrb[0].mxu0
  %v689 = vpop.f32.mrb[0].mxu0
  %v690 = vadd.f32 %v154, %v689
  %v691 = vpop.f32.mrb[0].mxu0
  %692 = vmatprep.mubr.bf16.mxu0 %v320
  %693 = vmatmul.mubr.bf16.gmra.mrb[0].mxu0 %v319
  %v694 = vpop.f32.mrb[0].mxu0
  %v695 = vadd.f32 %v154, %v694
  %v696 = vpop.f32.mrb[0].mxu0
  %v697 = vpop.f32.mrb[0].mxu0
  %v698 = vadd.f32 %v154, %v697
  %v699 = vpop.f32.mrb[0].mxu0
  %700 = vdwg.mxu0
  %701 = vmatprep.subr.bf16.mxu0 0
  %702 = vmatpush1.bf16.msra.mxu0 %v540
  %703 = vmatprep.subr.bf16.mxu0 0
  %704 = vmatpush1.bf16.msra.mxu0 %v541
  %705 = vmatprep.subr.bf16.mxu0 0
  %706 = vmatpush1.bf16.msra.mxu0 %v542
  %707 = vmatprep.subr.bf16.mxu0 0
  %708 = vmatpush1.bf16.msra.mxu0 %v543
  %709 = vmatprep.subr.bf16.mxu0 0
  %710 = vmatpush1.bf16.msra.mxu0 %v544
  %711 = vmatprep.subr.bf16.mxu0 0
  %712 = vmatpush1.bf16.msra.mxu0 %v545
  %713 = vmatprep.subr.bf16.mxu0 0
  %714 = vmatpush1.bf16.msra.mxu0 %v546
  %715 = vmatprep.subr.bf16.mxu0 0
  %716 = vmatpush1.bf16.msra.mxu0 %v547
  %717 = vmatprep.subr.bf16.mxu0 0
  %718 = vmatpush1.bf16.msra.mxu0 %v548
  %719 = vmatprep.subr.bf16.mxu0 0
  %720 = vmatpush1.bf16.msra.mxu0 %v549
  %721 = vmatprep.subr.bf16.mxu0 0
  %722 = vmatpush1.bf16.msra.mxu0 %v550
  %723 = vmatprep.subr.bf16.mxu0 0
  %724 = vmatpush1.bf16.msra.mxu0 %v551
  %725 = vmatprep.subr.bf16.mxu0 0
  %726 = vmatpush1.bf16.msra.mxu0 %v552
  %727 = vmatprep.subr.bf16.mxu0 0
  %728 = vmatpush1.bf16.msra.mxu0 %v553
  %729 = vmatprep.subr.bf16.mxu0 0
  %730 = vmatpush1.bf16.msra.mxu0 %v554
  %731 = vmatprep.subr.bf16.mxu0 0
  %732 = vmatpush1.bf16.msra.mxu0 %v555
  %733 = vmatprep.mubr.bf16.mxu0 %v287
  %734 = vmatmul.mubr.bf16.gmra.mrb[0].mxu0 %v286
  %v735 = vpop.f32.mrb[0].mxu0
  %v736 = vadd.f32 %v639, %v735
  %v737 = vpop.f32.mrb[0].mxu0
  %v738 = vpop.f32.mrb[0].mxu0
  %v739 = vadd.f32 %v642, %v738
  %v740 = vpop.f32.mrb[0].mxu0
  %741 = vmatprep.mubr.bf16.mxu0 %v292
  %742 = vmatmul.mubr.bf16.gmra.mrb[0].mxu0 %v291
  %v743 = vpop.f32.mrb[0].mxu0
  %v744 = vadd.f32 %v647, %v743
  %v745 = vpop.f32.mrb[0].mxu0
  %v746 = vpop.f32.mrb[0].mxu0
  %v747 = vadd.f32 %v650, %v746
  %v748 = vpop.f32.mrb[0].mxu0
  %749 = vmatprep.mubr.bf16.mxu0 %v297
  %750 = vmatmul.mubr.bf16.gmra.mrb[0].mxu0 %v296
  %v751 = vpop.f32.mrb[0].mxu0
  %v752 = vadd.f32 %v655, %v751
  %v753 = vpop.f32.mrb[0].mxu0
  %v754 = vpop.f32.mrb[0].mxu0
  %v755 = vadd.f32 %v658, %v754
  %v756 = vpop.f32.mrb[0].mxu0
  %757 = vmatprep.mubr.bf16.mxu0 %v302
  %758 = vmatmul.mubr.bf16.gmra.mrb[0].mxu0 %v301
  %v759 = vpop.f32.mrb[0].mxu0
  %v760 = vadd.f32 %v663, %v759
  %v761 = vpop.f32.mrb[0].mxu0
  %v762 = vpop.f32.mrb[0].mxu0
  %v763 = vadd.f32 %v666, %v762
  %v764 = vpop.f32.mrb[0].mxu0
  %765 = vmatprep.mubr.bf16.mxu0 %v307
  %766 = vmatmul.mubr.bf16.gmra.mrb[0].mxu0 %v306
  %v767 = vpop.f32.mrb[0].mxu0
  %v768 = vadd.f32 %v671, %v767
  %v769 = vpop.f32.mrb[0].mxu0
  %v770 = vpop.f32.mrb[0].mxu0
  %v771 = vadd.f32 %v674, %v770
  %v772 = vpop.f32.mrb[0].mxu0
  %773 = vmatprep.mubr.bf16.mxu0 %v312
  %774 = vmatmul.mubr.bf16.gmra.mrb[0].mxu0 %v311
  %v775 = vpop.f32.mrb[0].mxu0
  %v776 = vadd.f32 %v679, %v775
  %v777 = vpop.f32.mrb[0].mxu0
  %v778 = vpop.f32.mrb[0].mxu0
  %v779 = vadd.f32 %v682, %v778
  %v780 = vpop.f32.mrb[0].mxu0
  %781 = vmatprep.mubr.bf16.mxu0 %v317
  %782 = vmatmul.mubr.bf16.gmra.mrb[0].mxu0 %v316
  %v783 = vpop.f32.mrb[0].mxu0
  %v784 = vadd.f32 %v687, %v783
  %v785 = vpop.f32.mrb[0].mxu0
  %v786 = vpop.f32.mrb[0].mxu0
  %v787 = vadd.f32 %v690, %v786
  %v788 = vpop.f32.mrb[0].mxu0
  %789 = vmatprep.mubr.bf16.mxu0 %v322
  %790 = vmatmul.mubr.bf16.gmra.mrb[0].mxu0 %v321
  %v791 = vpop.f32.mrb[0].mxu0
  %v792 = vadd.f32 %v695, %v791
  %v793 = vpop.f32.mrb[0].mxu0
  %v794 = vpop.f32.mrb[0].mxu0
  %v795 = vadd.f32 %v698, %v794
  %v796 = vpop.f32.mrb[0].mxu0
  %797 = vdwg.mxu0
  %798 = vmatprep.subr.bf16.mxu0 0
  %799 = vmatpush1.bf16.msra.mxu0 %v556
  %800 = vmatprep.subr.bf16.mxu0 0
  %801 = vmatpush1.bf16.msra.mxu0 %v557
  %802 = vmatprep.subr.bf16.mxu0 0
  %803 = vmatpush1.bf16.msra.mxu0 %v558
  %804 = vmatprep.subr.bf16.mxu0 0
  %805 = vmatpush1.bf16.msra.mxu0 %v559
  %806 = vmatprep.subr.bf16.mxu0 0
  %807 = vmatpush1.bf16.msra.mxu0 %v560
  %808 = vmatprep.subr.bf16.mxu0 0
  %809 = vmatpush1.bf16.msra.mxu0 %v561
  %810 = vmatprep.subr.bf16.mxu0 0
  %811 = vmatpush1.bf16.msra.mxu0 %v562
  %812 = vmatprep.subr.bf16.mxu0 0
  %813 = vmatpush1.bf16.msra.mxu0 %v563
  %814 = vmatprep.subr.bf16.mxu0 0
  %815 = vmatpush1.bf16.msra.mxu0 0
  %816 = vmatprep.subr.bf16.mxu0 0
  %817 = vmatpush1.bf16.msra.mxu0 0
  %818 = vmatprep.subr.bf16.mxu0 0
  %819 = vmatpush1.bf16.msra.mxu0 0
  %820 = vmatprep.subr.bf16.mxu0 0
  %821 = vmatpush1.bf16.msra.mxu0 0
  %822 = vmatprep.subr.bf16.mxu0 0
  %823 = vmatpush1.bf16.msra.mxu0 0
  %824 = vmatprep.subr.bf16.mxu0 0
  %825 = vmatpush1.bf16.msra.mxu0 0
  %826 = vmatprep.subr.bf16.mxu0 0
  %827 = vmatpush1.bf16.msra.mxu0 0
  %828 = vmatprep.subr.bf16.mxu0 0
  %829 = vmatpush1.bf16.msra.mxu0 0
  %830 = vmatprep.mubr.bf16.mxu0 0
  %831 = vmatmul.mubr.bf16.gmra.mrb[0].mxu0 %v288
  %v832 = vpop.f32.mrb[0].mxu0
  %v833 = vadd.f32 %v736, %v832
  %v834 = vpop.f32.mrb[0].mxu0
  %v835 = vpop.f32.mrb[0].mxu0
  %v836 = vadd.f32 %v739, %v835
  %v837 = vpop.f32.mrb[0].mxu0
  %838 = vmatprep.mubr.bf16.mxu0 0
  %839 = vmatmul.mubr.bf16.gmra.mrb[0].mxu0 %v293
  %v840 = vpop.f32.mrb[0].mxu0
  %v841 = vadd.f32 %v744, %v840
  %v842 = vpop.f32.mrb[0].mxu0
  %v843 = vpop.f32.mrb[0].mxu0
  %v844 = vadd.f32 %v747, %v843
  %v845 = vpop.f32.mrb[0].mxu0
  %846 = vmatprep.mubr.bf16.mxu0 0
  %847 = vmatmul.mubr.bf16.gmra.mrb[0].mxu0 %v298
  %v848 = vpop.f32.mrb[0].mxu0
  %v849 = vadd.f32 %v752, %v848
  %v850 = vpop.f32.mrb[0].mxu0
  %v851 = vpop.f32.mrb[0].mxu0
  %v852 = vadd.f32 %v755, %v851
  %v853 = vpop.f32.mrb[0].mxu0
  %854 = vmatprep.mubr.bf16.mxu0 0
  %855 = vmatmul.mubr.bf16.gmra.mrb[0].mxu0 %v303
  %v856 = vpop.f32.mrb[0].mxu0
  %v857 = vadd.f32 %v760, %v856
  %v858 = vpop.f32.mrb[0].mxu0
  %v859 = vpop.f32.mrb[0].mxu0
  %v860 = vadd.f32 %v763, %v859
  %v861 = vpop.f32.mrb[0].mxu0
  %862 = vmatprep.mubr.bf16.mxu0 0
  %863 = vmatmul.mubr.bf16.gmra.mrb[0].mxu0 %v308
  %v864 = vpop.f32.mrb[0].mxu0
  %v865 = vadd.f32 %v768, %v864
  %v866 = vpop.f32.mrb[0].mxu0
  %v867 = vpop.f32.mrb[0].mxu0
  %v868 = vadd.f32 %v771, %v867
  %v869 = vpop.f32.mrb[0].mxu0
  %870 = vmatprep.mubr.bf16.mxu0 0
  %871 = vmatmul.mubr.bf16.gmra.mrb[0].mxu0 %v313
  %v872 = vpop.f32.mrb[0].mxu0
  %v873 = vadd.f32 %v776, %v872
  %v874 = vpop.f32.mrb[0].mxu0
  %v875 = vpop.f32.mrb[0].mxu0
  %v876 = vadd.f32 %v779, %v875
  %v877 = vpop.f32.mrb[0].mxu0
  %878 = vmatprep.mubr.bf16.mxu0 0
  %879 = vmatmul.mubr.bf16.gmra.mrb[0].mxu0 %v318
  %v880 = vpop.f32.mrb[0].mxu0
  %v881 = vadd.f32 %v784, %v880
  %v882 = vpop.f32.mrb[0].mxu0
  %v883 = vpop.f32.mrb[0].mxu0
  %v884 = vadd.f32 %v787, %v883
  %v885 = vpop.f32.mrb[0].mxu0
  %886 = vmatprep.mubr.bf16.mxu0 0
  %887 = vmatmul.mubr.bf16.gmra.mrb[0].mxu0 %v323
  %v888 = vpop.f32.mrb[0].mxu0
  %v889 = vadd.f32 %v792, %v888
  %v890 = vpop.f32.mrb[0].mxu0
  %v891 = vpop.f32.mrb[0].mxu0
  %v892 = vadd.f32 %v795, %v891
  %v893 = vpop.f32.mrb[0].mxu0
  %894 = vdwg.mxu0
  %v895 = vmax.f32 %v833, 0.0
  %v896 = vmax.f32 %v836, 0.0
  %v897 = vmax.f32 %v841, 0.0
  %v898 = vmax.f32 %v844, 0.0
  %v899 = vmax.f32 %v849, 0.0
  %v900 = vmax.f32 %v852, 0.0
  %v901 = vmax.f32 %v857, 0.0
  %v902 = vmax.f32 %v860, 0.0
  %v903 = vmax.f32 %v865, 0.0
  %v904 = vmax.f32 %v868, 0.0
  %v905 = vmax.f32 %v873, 0.0
  %v906 = vmax.f32 %v876, 0.0
  %v907 = vmax.f32 %v881, 0.0
  %v908 = vmax.f32 %v884, 0.0
  %v909 = vmax.f32 %v889, 0.0
  %v910 = vmax.f32 %v892, 0.0
  %v911 = vlaneseq
  %v912 = vshrl.u32 %v911, 7
  %v913 = vadd.s32 %v912, 8
  %v914 = vadd.s32 %v912, 16
  %v915 = vadd.s32 %v912, 24
  %v916 = vadd.s32 %v912, 32
  %v917 = vadd.s32 %v912, 40
  %v918 = vadd.s32 %v912, 48
  %v919 = vadd.s32 %v912, 56
  %v920 = vadd.s32 %v912, 64
  %v921 = vadd.s32 %v912, 72
  %v922 = vadd.s32 %v912, 80
  %v923 = vadd.s32 %v912, 88
  %v924 = vadd.s32 %v912, 96
  %v925 = vadd.s32 %v912, 104
  %v926 = vadd.s32 %v912, 112
  %v927 = vadd.s32 %v912, 120
  %vm928 = vcmp.lt.s32.totalorder %v912, 128
  %vm929 = vcmp.lt.s32.totalorder %v913, 128
  %vm930 = vcmp.lt.s32.totalorder %v914, 128
  %vm931 = vcmp.lt.s32.totalorder %v915, 128
  %vm932 = vcmp.lt.s32.totalorder %v916, 128
  %vm933 = vcmp.lt.s32.totalorder %v917, 128
  %vm934 = vcmp.lt.s32.totalorder %v918, 128
  %vm935 = vcmp.lt.s32.totalorder %v919, 128
  %vm936 = vcmp.lt.s32.totalorder %v920, 128
  %vm937 = vcmp.lt.s32.totalorder %v921, 128
  %vm938 = vcmp.lt.s32.totalorder %v922, 128
  %vm939 = vcmp.lt.s32.totalorder %v923, 128
  %vm940 = vcmp.lt.s32.totalorder %v924, 128
  %vm941 = vcmp.lt.s32.totalorder %v925, 128
  %vm942 = vcmp.lt.s32.totalorder %v926, 128
  %vm943 = vcmp.lt.s32.totalorder %v927, 128
  %v944 = vsel %vm928, %v895, 0.0
  %v945 = vsel %vm929, %v896, 0.0
  %v946 = vsel %vm930, %v897, 0.0
  %v947 = vsel %vm931, %v898, 0.0
  %v948 = vsel %vm932, %v899, 0.0
  %v949 = vsel %vm933, %v900, 0.0
  %v950 = vsel %vm934, %v901, 0.0
  %v951 = vsel %vm935, %v902, 0.0
  %v952 = vsel %vm936, %v903, 0.0
  %v953 = vsel %vm937, %v904, 0.0
  %v954 = vsel %vm938, %v905, 0.0
  %v955 = vsel %vm939, %v906, 0.0
  %v956 = vsel %vm940, %v907, 0.0
  %v957 = vsel %vm941, %v908, 0.0
  %v958 = vsel %vm942, %v909, 0.0
  %v959 = vsel %vm943, %v910, 0.0
  %v960 = vadd.f32 %v944, %v945
  %v961 = vadd.f32 %v960, %v946
  %v962 = vadd.f32 %v961, %v947
  %v963 = vadd.f32 %v962, %v948
  %v964 = vadd.f32 %v963, %v949
  %v965 = vadd.f32 %v964, %v950
  %v966 = vadd.f32 %v965, %v951
  %v967 = vadd.f32 %v966, %v952
  %v968 = vadd.f32 %v967, %v953
  %v969 = vadd.f32 %v968, %v954
  %v970 = vadd.f32 %v969, %v955
  %v971 = vadd.f32 %v970, %v956
  %v972 = vadd.f32 %v971, %v957
  %v973 = vadd.f32 %v972, %v958
  %v974 = vadd.f32 %v973, %v959
  %v975 = vrot.slane %v974, 4
  %v976 = vadd.f32 %v974, %v975
  %v977 = vrot.slane %v976, 2
  %v978 = vadd.f32 %v976, %v977
  %v979 = vrot.slane %v978, 1
  %v980 = vadd.f32 %v978, %v979
  %v981 = vmul.f32 %v980, 0.0078125
  %v982 = vmul.f32 %v944, %v944
  %v983 = vmul.f32 %v945, %v945
  %v984 = vmul.f32 %v946, %v946
  %v985 = vmul.f32 %v947, %v947
  %v986 = vmul.f32 %v948, %v948
  %v987 = vmul.f32 %v949, %v949
  %v988 = vmul.f32 %v950, %v950
  %v989 = vmul.f32 %v951, %v951
  %v990 = vmul.f32 %v952, %v952
  %v991 = vmul.f32 %v953, %v953
  %v992 = vmul.f32 %v954, %v954
  %v993 = vmul.f32 %v955, %v955
  %v994 = vmul.f32 %v956, %v956
  %v995 = vmul.f32 %v957, %v957
  %v996 = vmul.f32 %v958, %v958
  %v997 = vmul.f32 %v959, %v959
  %v998 = vadd.f32 %v982, %v983
  %v999 = vadd.f32 %v998, %v984
  %v1000 = vadd.f32 %v999, %v985
  %v1001 = vadd.f32 %v1000, %v986
  %v1002 = vadd.f32 %v1001, %v987
  %v1003 = vadd.f32 %v1002, %v988
  %v1004 = vadd.f32 %v1003, %v989
  %v1005 = vadd.f32 %v1004, %v990
  %v1006 = vadd.f32 %v1005, %v991
  %v1007 = vadd.f32 %v1006, %v992
  %v1008 = vadd.f32 %v1007, %v993
  %v1009 = vadd.f32 %v1008, %v994
  %v1010 = vadd.f32 %v1009, %v995
  %v1011 = vadd.f32 %v1010, %v996
  %v1012 = vadd.f32 %v1011, %v997
  %v1013 = vrot.slane %v1012, 4
  %v1014 = vadd.f32 %v1012, %v1013
  %v1015 = vrot.slane %v1014, 2
  %v1016 = vadd.f32 %v1014, %v1015
  %v1017 = vrot.slane %v1016, 1
  %v1018 = vadd.f32 %v1016, %v1017
  %v1019 = vmul.f32 %v1018, 0.0078125
  %v1020 = vmul.f32 %v981, %v981
  %v1021 = vsub.f32 %v1019, %v1020
  %v1022 = vmax.f32 %v1021, 0.0
  %v1023 = vld [vmem:[%s3] sm:$0x1]
  %v1024 = vadd.f32 %v1022, 1e-05
  %v1025 = vrsqrt.pop %v1024
  %v1026 = vmul.f32 %v1023, %v1025
  %v1027 = vld [vmem:[%s4] sm:$0x1]
  %v1028 = vmul.f32 %v981, %v1026
  %v1029 = vsub.f32 %v1027, %v1028
  %v1031 = vlaneseq
  %v1032 = vshrl.u32 %v1031, 7
  %v1033 = vsub.s32 0, %v1032
  %v1034 = vrot.slane %v1026, %v1033
  %v1036 = vmul.f32 %v895, %v1034
  %v1037 = vmul.f32 %v896, %v1034
  %v1038 = vmul.f32 %v897, %v1034
  %v1039 = vmul.f32 %v898, %v1034
  %v1040 = vmul.f32 %v899, %v1034
  %v1041 = vmul.f32 %v900, %v1034
  %v1042 = vmul.f32 %v901, %v1034
  %v1043 = vmul.f32 %v902, %v1034
  %v1044 = vmul.f32 %v903, %v1034
  %v1045 = vmul.f32 %v904, %v1034
  %v1046 = vmul.f32 %v905, %v1034
  %v1047 = vmul.f32 %v906, %v1034
  %v1048 = vmul.f32 %v907, %v1034
  %v1049 = vmul.f32 %v908, %v1034
  %v1050 = vmul.f32 %v909, %v1034
  %v1051 = vmul.f32 %v910, %v1034
  %v1053 = vlaneseq
  %v1054 = vshrl.u32 %v1053, 7
  %v1055 = vsub.s32 0, %v1054
  %v1056 = vrot.slane %v1029, %v1055
  %v1058 = vadd.f32 %v1036, %v1056
  %v1059 = vadd.f32 %v1037, %v1056
  %v1060 = vadd.f32 %v1038, %v1056
  %v1061 = vadd.f32 %v1039, %v1056
  %v1062 = vadd.f32 %v1040, %v1056
  %v1063 = vadd.f32 %v1041, %v1056
  %v1064 = vadd.f32 %v1042, %v1056
  %v1065 = vadd.f32 %v1043, %v1056
  %v1066 = vadd.f32 %v1044, %v1056
  %v1067 = vadd.f32 %v1045, %v1056
  %v1068 = vadd.f32 %v1046, %v1056
  %v1069 = vadd.f32 %v1047, %v1056
  %v1070 = vadd.f32 %v1048, %v1056
  %v1071 = vadd.f32 %v1049, %v1056
  %v1072 = vadd.f32 %v1050, %v1056
  %v1073 = vadd.f32 %v1051, %v1056
  %v1074 = vpack.c.bf16 %v1059, %v1058
  %v1075 = vpack.c.bf16 %v1061, %v1060
  %v1076 = vpack.c.bf16 %v1063, %v1062
  %v1077 = vpack.c.bf16 %v1065, %v1064
  %v1078 = vpack.c.bf16 %v1067, %v1066
  %v1079 = vpack.c.bf16 %v1069, %v1068
  %v1080 = vpack.c.bf16 %v1071, %v1070
  %v1081 = vpack.c.bf16 %v1073, %v1072
  %v1090 = vunpack.c.l.b16 %v1074
  %v1091 = vunpack.c.h.b16 %v1074
  %v1092 = vunpack.c.l.b16 %v1075
  %v1093 = vunpack.c.h.b16 %v1075
  %v1094 = vunpack.c.l.b16 %v1076
  %v1095 = vunpack.c.h.b16 %v1076
  %v1096 = vunpack.c.l.b16 %v1077
  %v1097 = vunpack.c.h.b16 %v1077
  %v1098 = vunpack.c.l.b16 %v1078
  %v1099 = vunpack.c.h.b16 %v1078
  %v1100 = vunpack.c.l.b16 %v1079
  %v1101 = vunpack.c.h.b16 %v1079
  %v1102 = vunpack.c.l.b16 %v1080
  %v1103 = vunpack.c.h.b16 %v1080
  %v1104 = vunpack.c.l.b16 %v1081
  %v1105 = vunpack.c.h.b16 %v1081
  %v1106 = vpack.c.b16 %v1090, %v1090
  %v1107 = vpack.c.b16 %v1091, %v1091
  %v1108 = vpack.c.b16 %v1092, %v1092
  %v1109 = vpack.c.b16 %v1093, %v1093
  %v1110 = vpack.c.b16 %v1094, %v1094
  %v1111 = vpack.c.b16 %v1095, %v1095
  %v1112 = vpack.c.b16 %v1096, %v1096
  %v1113 = vpack.c.b16 %v1097, %v1097
  %v1114 = vpack.c.b16 %v1098, %v1098
  %v1115 = vpack.c.b16 %v1099, %v1099
  %v1116 = vpack.c.b16 %v1100, %v1100
  %v1117 = vpack.c.b16 %v1101, %v1101
  %v1118 = vpack.c.b16 %v1102, %v1102
  %v1119 = vpack.c.b16 %v1103, %v1103
  %v1120 = vpack.c.b16 %v1104, %v1104
  %v1121 = vpack.c.b16 %v1105, %v1105
  %1138 = vst [vmem:[%s5] sm:$0xf] %v1106
  %1139 = vst [vmem:[%s5 + $0x4] sm:$0xf] %v1107
  %1140 = vst [vmem:[%s5 + $0x8] sm:$0xf] %v1108
  %1141 = vst [vmem:[%s5 + $0xc] sm:$0xf] %v1109
  %1142 = vst [vmem:[%s5 + $0x10] sm:$0xf] %v1110
  %1143 = vst [vmem:[%s5 + $0x14] sm:$0xf] %v1111
  %1144 = vst [vmem:[%s5 + $0x18] sm:$0xf] %v1112
  %1145 = vst [vmem:[%s5 + $0x1c] sm:$0xf] %v1113
  %1146 = vst [vmem:[%s5 + $0x20] sm:$0xf] %v1114
  %1147 = vst [vmem:[%s5 + $0x24] sm:$0xf] %v1115
  %1148 = vst [vmem:[%s5 + $0x28] sm:$0xf] %v1116
  %1149 = vst [vmem:[%s5 + $0x2c] sm:$0xf] %v1117
  %1150 = vst [vmem:[%s5 + $0x30] sm:$0xf] %v1118
  %1151 = vst [vmem:[%s5 + $0x34] sm:$0xf] %v1119
  %1152 = vst [vmem:[%s5 + $0x38] sm:$0xf] %v1120
  %1153 = vst [vmem:[%s5 + $0x3c] sm:$0xf] %v1121
  // Predicated region
  $region22: #{_net_forward.14} parent=0 // pred_check
    _
  $region23: #{_net_forward.14} parent=0 // pred_check_branch
    %1155 = sbr.rel (0) target = $region25
  $region24: #{_net_forward.14} parent=0 // pred_region
    _
  $region25: #{_net_forward.14} parent=0 // pred_fallthru
    _
  // Predicated region
  $region26: #{_net_forward.14} parent=0 // pred_check
    _
  $region27: #{_net_forward.14} parent=0 // pred_check_branch
    %1157 = sbr.rel (0) target = $region29
  $region28: #{_net_forward.14} parent=0 // pred_region
    _
  $region29: #{_net_forward.14} parent=0 // pred_fallthru
    _

// kernel: _net_forward.15
$region0: #{_net_forward.15}
  #allocation0 [shape = 'u32[]', space=smem, size = 0x4, offset = 0x4, fixed_abs, tag = 'smem constant byte address 0x4 - core index']
  #allocation1 [shape = 'u32[144,128]{1,0:T(1,128)}', space=vmem, size = 0x12000, scoped, tag = 'internal scratch']
  %s0 = inlined_call_operand.vmem [shape: bf16[128,1152], index: 0, kind: input, shape index: {}]
  %s1 = inlined_call_operand.vmem [shape: bf16[1152,128], index: 1, kind: input, shape index: {}]
  %s2 = inlined_call_operand.vmem [shape: f32[1,128], index: 2, kind: input, shape index: {}]
  %s3 = inlined_call_operand.vmem [shape: f32[1,128], index: 3, kind: input, shape index: {}]
  %s4 = inlined_call_operand.vmem [shape: f32[1,128], index: 4, kind: input, shape index: {}]
  %s5 = inlined_call_operand.vmem [shape: bf16[128,128], index: 5, kind: output, shape index: {}]
  %s6 = sld [smem:[#allocation0]]
  $region30: #{_net_forward.15} parent=0
    _
  %s8 = ssub.s32 1, %s6
  %s9 = scalar_select 0, %s8, %s6
  // Predicated region
  $region2: #{_net_forward.15} parent=0 // pred_check
    _
  $region3: #{_net_forward.15} parent=0 // pred_check_branch
    %11 = sbr.rel (0) target = $region5
  $region4: #{_net_forward.15} parent=0 // pred_region
    _
  $region5: #{_net_forward.15} parent=0 // pred_fallthru
    _
  // Predicated region
  $region6: #{_net_forward.15} parent=0 // pred_check
    _
  $region7: #{_net_forward.15} parent=0 // pred_check_branch
    %13 = sbr.rel (0) target = $region9
  $region8: #{_net_forward.15} parent=0 // pred_region
    _
  $region9: #{_net_forward.15} parent=0 // pred_fallthru
    _
  // Predicated region
  $region10: #{_net_forward.15} parent=0 // pred_check
    _
  $region11: #{_net_forward.15} parent=0 // pred_check_branch
    %15 = sbr.rel (0) target = $region13
  $region12: #{_net_forward.15} parent=0 // pred_region
    _
  $region13: #{_net_forward.15} parent=0 // pred_fallthru
    _
  // Predicated region
  $region14: #{_net_forward.15} parent=0 // pred_check
    _
  $region15: #{_net_forward.15} parent=0 // pred_check_branch
    %17 = sbr.rel (0) target = $region17
  $region16: #{_net_forward.15} parent=0 // pred_region
    _
  $region17: #{_net_forward.15} parent=0 // pred_fallthru
    _
  // Predicated region
  $region18: #{_net_forward.15} parent=0 // pred_check
    _
  $region19: #{_net_forward.15} parent=0 // pred_check_branch
    %19 = sbr.rel (0) target = $region21
  $region20: #{_net_forward.15} parent=0 // pred_region
    _
  $region21: #{_net_forward.15} parent=0 // pred_fallthru
    _
  %v21 = vld [vmem:[%s0] sm:$0xff]
  %v22 = vld [vmem:[%s0 + $0x8] sm:$0xff]
  %v23 = vld [vmem:[%s0 + $0x10] sm:$0xff]
  %v24 = vld [vmem:[%s0 + $0x18] sm:$0xff]
  %v25 = vld [vmem:[%s0 + $0x20] sm:$0xf]
  %v26 = vld [vmem:[%s0 + $0x24] sm:$0xff]
  %v27 = vld [vmem:[%s0 + $0x2c] sm:$0xff]
  %v28 = vld [vmem:[%s0 + $0x34] sm:$0xff]
  %v29 = vld [vmem:[%s0 + $0x3c] sm:$0xff]
  %v30 = vld [vmem:[%s0 + $0x44] sm:$0xf]
  %v31 = vld [vmem:[%s0 + $0x48] sm:$0xff]
  %v32 = vld [vmem:[%s0 + $0x50] sm:$0xff]
  %v33 = vld [vmem:[%s0 + $0x58] sm:$0xff]
  %v34 = vld [vmem:[%s0 + $0x60] sm:$0xff]
  %v35 = vld [vmem:[%s0 + $0x68] sm:$0xf]
  %v36 = vld [vmem:[%s0 + $0x6c] sm:$0xff]
  %v37 = vld [vmem:[%s0 + $0x74] sm:$0xff]
  %v38 = vld [vmem:[%s0 + $0x7c] sm:$0xff]
  %v39 = vld [vmem:[%s0 + $0x84] sm:$0xff]
  %v40 = vld [vmem:[%s0 + $0x8c] sm:$0xf]
  %v41 = vld [vmem:[%s0 + $0x90] sm:$0xff]
  %v42 = vld [vmem:[%s0 + $0x98] sm:$0xff]
  %v43 = vld [vmem:[%s0 + $0xa0] sm:$0xff]
  %v44 = vld [vmem:[%s0 + $0xa8] sm:$0xff]
  %v45 = vld [vmem:[%s0 + $0xb0] sm:$0xf]
  %v46 = vld [vmem:[%s0 + $0xb4] sm:$0xff]
  %v47 = vld [vmem:[%s0 + $0xbc] sm:$0xff]
  %v48 = vld [vmem:[%s0 + $0xc4] sm:$0xff]
  %v49 = vld [vmem:[%s0 + $0xcc] sm:$0xff]
  %v50 = vld [vmem:[%s0 + $0xd4] sm:$0xf]
  %v51 = vld [vmem:[%s0 + $0xd8] sm:$0xff]
  %v52 = vld [vmem:[%s0 + $0xe0] sm:$0xff]
  %v53 = vld [vmem:[%s0 + $0xe8] sm:$0xff]
  %v54 = vld [vmem:[%s0 + $0xf0] sm:$0xff]
  %v55 = vld [vmem:[%s0 + $0xf8] sm:$0xf]
  %v56 = vld [vmem:[%s0 + $0xfc] sm:$0xff]
  %v57 = vld [vmem:[%s0 + $0x104] sm:$0xff]
  %v58 = vld [vmem:[%s0 + $0x10c] sm:$0xff]
  %v59 = vld [vmem:[%s0 + $0x114] sm:$0xff]
  %v60 = vld [vmem:[%s0 + $0x11c] sm:$0xf]
  %v61 = vld [vmem:[%s0 + $0x120] sm:$0xff]
  %v62 = vld [vmem:[%s0 + $0x128] sm:$0xff]
  %v63 = vld [vmem:[%s0 + $0x130] sm:$0xff]
  %v64 = vld [vmem:[%s0 + $0x138] sm:$0xff]
  %v65 = vld [vmem:[%s0 + $0x140] sm:$0xf]
  %v66 = vld [vmem:[%s0 + $0x144] sm:$0xff]
  %v67 = vld [vmem:[%s0 + $0x14c] sm:$0xff]
  %v68 = vld [vmem:[%s0 + $0x154] sm:$0xff]
  %v69 = vld [vmem:[%s0 + $0x15c] sm:$0xff]
  %v70 = vld [vmem:[%s0 + $0x164] sm:$0xf]
  %v71 = vld [vmem:[%s0 + $0x168] sm:$0xff]
  %v72 = vld [vmem:[%s0 + $0x170] sm:$0xff]
  %v73 = vld [vmem:[%s0 + $0x178] sm:$0xff]
  %v74 = vld [vmem:[%s0 + $0x180] sm:$0xff]
  %v75 = vld [vmem:[%s0 + $0x188] sm:$0xf]
  %v76 = vld [vmem:[%s0 + $0x18c] sm:$0xff]
  %v77 = vld [vmem:[%s0 + $0x194] sm:$0xff]
  %v78 = vld [vmem:[%s0 + $0x19c] sm:$0xff]
  %v79 = vld [vmem:[%s0 + $0x1a4] sm:$0xff]
  %v80 = vld [vmem:[%s0 + $0x1ac] sm:$0xf]
  %v81 = vld [vmem:[%s0 + $0x1b0] sm:$0xff]
  %v82 = vld [vmem:[%s0 + $0x1b8] sm:$0xff]
  %v83 = vld [vmem:[%s0 + $0x1c0] sm:$0xff]
  %v84 = vld [vmem:[%s0 + $0x1c8] sm:$0xff]
  %v85 = vld [vmem:[%s0 + $0x1d0] sm:$0xf]
  %v86 = vld [vmem:[%s0 + $0x1d4] sm:$0xff]
  %v87 = vld [vmem:[%s0 + $0x1dc] sm:$0xff]
  %v88 = vld [vmem:[%s0 + $0x1e4] sm:$0xff]
  %v89 = vld [vmem:[%s0 + $0x1ec] sm:$0xff]
  %v90 = vld [vmem:[%s0 + $0x1f4] sm:$0xf]
  %v91 = vld [vmem:[%s0 + $0x1f8] sm:$0xff]
  %v92 = vld [vmem:[%s0 + $0x200] sm:$0xff]
  %v93 = vld [vmem:[%s0 + $0x208] sm:$0xff]
  %v94 = vld [vmem:[%s0 + $0x210] sm:$0xff]
  %v95 = vld [vmem:[%s0 + $0x218] sm:$0xf]
  %v96 = vld [vmem:[%s0 + $0x21c] sm:$0xff]
  %v97 = vld [vmem:[%s0 + $0x224] sm:$0xff]
  %v98 = vld [vmem:[%s0 + $0x22c] sm:$0xff]
  %v99 = vld [vmem:[%s0 + $0x234] sm:$0xff]
  %v100 = vld [vmem:[%s0 + $0x23c] sm:$0xf]
  %v101 = vld [vmem:[%s1] sm:$0xf]
  %v102 = vld [vmem:[%s1 + $0x4] sm:$0xf]
  %v103 = vld [vmem:[%s1 + $0x8] sm:$0xf]
  %v104 = vld [vmem:[%s1 + $0xc] sm:$0xf]
  %v105 = vld [vmem:[%s1 + $0x10] sm:$0xf]
  %v106 = vld [vmem:[%s1 + $0x14] sm:$0xf]
  %v107 = vld [vmem:[%s1 + $0x18] sm:$0xf]
  %v108 = vld [vmem:[%s1 + $0x1c] sm:$0xf]
  %v109 = vld [vmem:[%s1 + $0x20] sm:$0xf]
  %v110 = vld [vmem:[%s1 + $0x24] sm:$0xf]
  %v111 = vld [vmem:[%s1 + $0x28] sm:$0xf]
  %v112 = vld [vmem:[%s1 + $0x2c] sm:$0xf]
  %v113 = vld [vmem:[%s1 + $0x30] sm:$0xf]
  %v114 = vld [vmem:[%s1 + $0x34] sm:$0xf]
  %v115 = vld [vmem:[%s1 + $0x38] sm:$0xf]
  %v116 = vld [vmem:[%s1 + $0x3c] sm:$0xf]
  %v117 = vld [vmem:[%s1 + $0x40] sm:$0xf]
  %v118 = vld [vmem:[%s1 + $0x44] sm:$0xf]
  %v119 = vld [vmem:[%s1 + $0x48] sm:$0xf]
  %v120 = vld [vmem:[%s1 + $0x4c] sm:$0xf]
  %v121 = vld [vmem:[%s1 + $0x50] sm:$0xf]
  %v122 = vld [vmem:[%s1 + $0x54] sm:$0xf]
  %v123 = vld [vmem:[%s1 + $0x58] sm:$0xf]
  %v124 = vld [vmem:[%s1 + $0x5c] sm:$0xf]
  %v125 = vld [vmem:[%s1 + $0x60] sm:$0xf]
  %v126 = vld [vmem:[%s1 + $0x64] sm:$0xf]
  %v127 = vld [vmem:[%s1 + $0x68] sm:$0xf]
  %v128 = vld [vmem:[%s1 + $0x6c] sm:$0xf]
  %v129 = vld [vmem:[%s1 + $0x70] sm:$0xf]
  %v130 = vld [vmem:[%s1 + $0x74] sm:$0xf]
  %v131 = vld [vmem:[%s1 + $0x78] sm:$0xf]
  %v132 = vld [vmem:[%s1 + $0x7c] sm:$0xf]
  %v133 = vld [vmem:[%s1 + $0x80] sm:$0xf]
  %v134 = vld [vmem:[%s1 + $0x84] sm:$0xf]
  %v135 = vld [vmem:[%s1 + $0x88] sm:$0xf]
  %v136 = vld [vmem:[%s1 + $0x8c] sm:$0xf]
  %v137 = vld [vmem:[%s1 + $0x90] sm:$0xf]
  %v138 = vld [vmem:[%s1 + $0x94] sm:$0xf]
  %v139 = vld [vmem:[%s1 + $0x98] sm:$0xf]
  %v140 = vld [vmem:[%s1 + $0x9c] sm:$0xf]
  %v141 = vld [vmem:[%s1 + $0xa0] sm:$0xf]
  %v142 = vld [vmem:[%s1 + $0xa4] sm:$0xf]
  %v143 = vld [vmem:[%s1 + $0xa8] sm:$0xf]
  %v144 = vld [vmem:[%s1 + $0xac] sm:$0xf]
  %v145 = vld [vmem:[%s1 + $0xb0] sm:$0xf]
  %v146 = vld [vmem:[%s1 + $0xb4] sm:$0xf]
  %v147 = vld [vmem:[%s1 + $0xb8] sm:$0xf]
  %v148 = vld [vmem:[%s1 + $0xbc] sm:$0xf]
  %v149 = vld [vmem:[%s1 + $0xc0] sm:$0xf]
  %v150 = vld [vmem:[%s1 + $0xc4] sm:$0xf]
  %v151 = vld [vmem:[%s1 + $0xc8] sm:$0xf]
  %v152 = vld [vmem:[%s1 + $0xcc] sm:$0xf]
  %v153 = vld [vmem:[%s1 + $0xd0] sm:$0xf]
  %v154 = vld [vmem:[%s1 + $0xd4] sm:$0xf]
  %v155 = vld [vmem:[%s1 + $0xd8] sm:$0xf]
  %v156 = vld [vmem:[%s1 + $0xdc] sm:$0xf]
  %v157 = vld [vmem:[%s1 + $0xe0] sm:$0xf]
  %v158 = vld [vmem:[%s1 + $0xe4] sm:$0xf]
  %v159 = vld [vmem:[%s1 + $0xe8] sm:$0xf]
  %v160 = vld [vmem:[%s1 + $0xec] sm:$0xf]
  %v161 = vld [vmem:[%s1 + $0xf0] sm:$0xf]
  %v162 = vld [vmem:[%s1 + $0xf4] sm:$0xf]
  %v163 = vld [vmem:[%s1 + $0xf8] sm:$0xf]
  %v164 = vld [vmem:[%s1 + $0xfc] sm:$0xf]
  %v165 = vld [vmem:[%s1 + $0x100] sm:$0xf]
  %v166 = vld [vmem:[%s1 + $0x104] sm:$0xf]
  %v167 = vld [vmem:[%s1 + $0x108] sm:$0xf]
  %v168 = vld [vmem:[%s1 + $0x10c] sm:$0xf]
  %v169 = vld [vmem:[%s1 + $0x110] sm:$0xf]
  %v170 = vld [vmem:[%s1 + $0x114] sm:$0xf]
  %v171 = vld [vmem:[%s1 + $0x118] sm:$0xf]
  %v172 = vld [vmem:[%s1 + $0x11c] sm:$0xf]
  %v173 = vld [vmem:[%s1 + $0x120] sm:$0xf]
  %v174 = vld [vmem:[%s1 + $0x124] sm:$0xf]
  %v175 = vld [vmem:[%s1 + $0x128] sm:$0xf]
  %v176 = vld [vmem:[%s1 + $0x12c] sm:$0xf]
  %v177 = vld [vmem:[%s1 + $0x130] sm:$0xf]
  %v178 = vld [vmem:[%s1 + $0x134] sm:$0xf]
  %v179 = vld [vmem:[%s1 + $0x138] sm:$0xf]
  %v180 = vld [vmem:[%s1 + $0x13c] sm:$0xf]
  %v181 = vld [vmem:[%s1 + $0x140] sm:$0xf]
  %v182 = vld [vmem:[%s1 + $0x144] sm:$0xf]
  %v183 = vld [vmem:[%s1 + $0x148] sm:$0xf]
  %v184 = vld [vmem:[%s1 + $0x14c] sm:$0xf]
  %v185 = vld [vmem:[%s1 + $0x150] sm:$0xf]
  %v186 = vld [vmem:[%s1 + $0x154] sm:$0xf]
  %v187 = vld [vmem:[%s1 + $0x158] sm:$0xf]
  %v188 = vld [vmem:[%s1 + $0x15c] sm:$0xf]
  %v189 = vld [vmem:[%s1 + $0x160] sm:$0xf]
  %v190 = vld [vmem:[%s1 + $0x164] sm:$0xf]
  %v191 = vld [vmem:[%s1 + $0x168] sm:$0xf]
  %v192 = vld [vmem:[%s1 + $0x16c] sm:$0xf]
  %v193 = vld [vmem:[%s1 + $0x170] sm:$0xf]
  %v194 = vld [vmem:[%s1 + $0x174] sm:$0xf]
  %v195 = vld [vmem:[%s1 + $0x178] sm:$0xf]
  %v196 = vld [vmem:[%s1 + $0x17c] sm:$0xf]
  %v197 = vld [vmem:[%s1 + $0x180] sm:$0xf]
  %v198 = vld [vmem:[%s1 + $0x184] sm:$0xf]
  %v199 = vld [vmem:[%s1 + $0x188] sm:$0xf]
  %v200 = vld [vmem:[%s1 + $0x18c] sm:$0xf]
  %v201 = vld [vmem:[%s1 + $0x190] sm:$0xf]
  %v202 = vld [vmem:[%s1 + $0x194] sm:$0xf]
  %v203 = vld [vmem:[%s1 + $0x198] sm:$0xf]
  %v204 = vld [vmem:[%s1 + $0x19c] sm:$0xf]
  %v205 = vld [vmem:[%s1 + $0x1a0] sm:$0xf]
  %v206 = vld [vmem:[%s1 + $0x1a4] sm:$0xf]
  %v207 = vld [vmem:[%s1 + $0x1a8] sm:$0xf]
  %v208 = vld [vmem:[%s1 + $0x1ac] sm:$0xf]
  %v209 = vld [vmem:[%s1 + $0x1b0] sm:$0xf]
  %v210 = vld [vmem:[%s1 + $0x1b4] sm:$0xf]
  %v211 = vld [vmem:[%s1 + $0x1b8] sm:$0xf]
  %v212 = vld [vmem:[%s1 + $0x1bc] sm:$0xf]
  %v213 = vld [vmem:[%s1 + $0x1c0] sm:$0xf]
  %v214 = vld [vmem:[%s1 + $0x1c4] sm:$0xf]
  %v215 = vld [vmem:[%s1 + $0x1c8] sm:$0xf]
  %v216 = vld [vmem:[%s1 + $0x1cc] sm:$0xf]
  %v217 = vld [vmem:[%s1 + $0x1d0] sm:$0xf]
  %v218 = vld [vmem:[%s1 + $0x1d4] sm:$0xf]
  %v219 = vld [vmem:[%s1 + $0x1d8] sm:$0xf]
  %v220 = vld [vmem:[%s1 + $0x1dc] sm:$0xf]
  %v221 = vld [vmem:[%s1 + $0x1e0] sm:$0xf]
  %v222 = vld [vmem:[%s1 + $0x1e4] sm:$0xf]
  %v223 = vld [vmem:[%s1 + $0x1e8] sm:$0xf]
  %v224 = vld [vmem:[%s1 + $0x1ec] sm:$0xf]
  %v225 = vld [vmem:[%s1 + $0x1f0] sm:$0xf]
  %v226 = vld [vmem:[%s1 + $0x1f4] sm:$0xf]
  %v227 = vld [vmem:[%s1 + $0x1f8] sm:$0xf]
  %v228 = vld [vmem:[%s1 + $0x1fc] sm:$0xf]
  %v229 = vld [vmem:[%s1 + $0x200] sm:$0xf]
  %v230 = vld [vmem:[%s1 + $0x204] sm:$0xf]
  %v231 = vld [vmem:[%s1 + $0x208] sm:$0xf]
  %v232 = vld [vmem:[%s1 + $0x20c] sm:$0xf]
  %v233 = vld [vmem:[%s1 + $0x210] sm:$0xf]
  %v234 = vld [vmem:[%s1 + $0x214] sm:$0xf]
  %v235 = vld [vmem:[%s1 + $0x218] sm:$0xf]
  %v236 = vld [vmem:[%s1 + $0x21c] sm:$0xf]
  %v237 = vld [vmem:[%s1 + $0x220] sm:$0xf]
  %v238 = vld [vmem:[%s1 + $0x224] sm:$0xf]
  %v239 = vld [vmem:[%s1 + $0x228] sm:$0xf]
  %v240 = vld [vmem:[%s1 + $0x22c] sm:$0xf]
  %v241 = vld [vmem:[%s1 + $0x230] sm:$0xf]
  %v242 = vld [vmem:[%s1 + $0x234] sm:$0xf]
  %v243 = vld [vmem:[%s1 + $0x238] sm:$0xf]
  %v244 = vld [vmem:[%s1 + $0x23c] sm:$0xf]
  %v245 = vld [vmem:[%s2] sm:$0x1]
  %v247 = vlaneseq
  %v248 = vshrl.u32 %v247, 7
  %v249 = vsub.s32 0, %v248
  %v250 = vrot.slane %v245, %v249
  %v332 = vunpack.c.l.b16 %v21
  %v333 = vunpack.c.h.b16 %v21
  %v334 = vunpack.c.l.b16 %v22
  %v335 = vunpack.c.h.b16 %v22
  %v336 = vunpack.c.l.b16 %v23
  %v337 = vunpack.c.h.b16 %v23
  %v338 = vunpack.c.l.b16 %v24
  %v339 = vunpack.c.h.b16 %v24
  %v340 = vunpack.c.l.b16 %v25
  %v341 = vunpack.c.l.b16 %v26
  %v342 = vunpack.c.h.b16 %v26
  %v343 = vunpack.c.l.b16 %v27
  %v344 = vunpack.c.h.b16 %v27
  %v345 = vunpack.c.l.b16 %v28
  %v346 = vunpack.c.h.b16 %v28
  %v347 = vunpack.c.l.b16 %v29
  %v348 = vunpack.c.h.b16 %v29
  %v349 = vunpack.c.l.b16 %v30
  %v350 = vunpack.c.l.b16 %v31
  %v351 = vunpack.c.h.b16 %v31
  %v352 = vunpack.c.l.b16 %v32
  %v353 = vunpack.c.h.b16 %v32
  %v354 = vunpack.c.l.b16 %v33
  %v355 = vunpack.c.h.b16 %v33
  %v356 = vunpack.c.l.b16 %v34
  %v357 = vunpack.c.h.b16 %v34
  %v358 = vunpack.c.l.b16 %v35
  %v359 = vunpack.c.l.b16 %v36
  %v360 = vunpack.c.h.b16 %v36
  %v361 = vunpack.c.l.b16 %v37
  %v362 = vunpack.c.h.b16 %v37
  %v363 = vunpack.c.l.b16 %v38
  %v364 = vunpack.c.h.b16 %v38
  %v365 = vunpack.c.l.b16 %v39
  %v366 = vunpack.c.h.b16 %v39
  %v367 = vunpack.c.l.b16 %v40
  %v368 = vunpack.c.l.b16 %v41
  %v369 = vunpack.c.h.b16 %v41
  %v370 = vunpack.c.l.b16 %v42
  %v371 = vunpack.c.h.b16 %v42
  %v372 = vunpack.c.l.b16 %v43
  %v373 = vunpack.c.h.b16 %v43
  %v374 = vunpack.c.l.b16 %v44
  %v375 = vunpack.c.h.b16 %v44
  %v376 = vunpack.c.l.b16 %v45
  %v377 = vunpack.c.l.b16 %v46
  %v378 = vunpack.c.h.b16 %v46
  %v379 = vunpack.c.l.b16 %v47
  %v380 = vunpack.c.h.b16 %v47
  %v381 = vunpack.c.l.b16 %v48
  %v382 = vunpack.c.h.b16 %v48
  %v383 = vunpack.c.l.b16 %v49
  %v384 = vunpack.c.h.b16 %v49
  %v385 = vunpack.c.l.b16 %v50
  %v386 = vunpack.c.l.b16 %v51
  %v387 = vunpack.c.h.b16 %v51
  %v388 = vunpack.c.l.b16 %v52
  %v389 = vunpack.c.h.b16 %v52
  %v390 = vunpack.c.l.b16 %v53
  %v391 = vunpack.c.h.b16 %v53
  %v392 = vunpack.c.l.b16 %v54
  %v393 = vunpack.c.h.b16 %v54
  %v394 = vunpack.c.l.b16 %v55
  %v395 = vunpack.c.l.b16 %v56
  %v396 = vunpack.c.h.b16 %v56
  %v397 = vunpack.c.l.b16 %v57
  %v398 = vunpack.c.h.b16 %v57
  %v399 = vunpack.c.l.b16 %v58
  %v400 = vunpack.c.h.b16 %v58
  %v401 = vunpack.c.l.b16 %v59
  %v402 = vunpack.c.h.b16 %v59
  %v403 = vunpack.c.l.b16 %v60
  %v404 = vunpack.c.l.b16 %v61
  %v405 = vunpack.c.h.b16 %v61
  %v406 = vunpack.c.l.b16 %v62
  %v407 = vunpack.c.h.b16 %v62
  %v408 = vunpack.c.l.b16 %v63
  %v409 = vunpack.c.h.b16 %v63
  %v410 = vunpack.c.l.b16 %v64
  %v411 = vunpack.c.h.b16 %v64
  %v412 = vunpack.c.l.b16 %v65
  %v413 = vunpack.c.l.b16 %v66
  %v414 = vunpack.c.h.b16 %v66
  %v415 = vunpack.c.l.b16 %v67
  %v416 = vunpack.c.h.b16 %v67
  %v417 = vunpack.c.l.b16 %v68
  %v418 = vunpack.c.h.b16 %v68
  %v419 = vunpack.c.l.b16 %v69
  %v420 = vunpack.c.h.b16 %v69
  %v421 = vunpack.c.l.b16 %v70
  %v422 = vunpack.c.l.b16 %v71
  %v423 = vunpack.c.h.b16 %v71
  %v424 = vunpack.c.l.b16 %v72
  %v425 = vunpack.c.h.b16 %v72
  %v426 = vunpack.c.l.b16 %v73
  %v427 = vunpack.c.h.b16 %v73
  %v428 = vunpack.c.l.b16 %v74
  %v429 = vunpack.c.h.b16 %v74
  %v430 = vunpack.c.l.b16 %v75
  %v431 = vunpack.c.l.b16 %v76
  %v432 = vunpack.c.h.b16 %v76
  %v433 = vunpack.c.l.b16 %v77
  %v434 = vunpack.c.h.b16 %v77
  %v435 = vunpack.c.l.b16 %v78
  %v436 = vunpack.c.h.b16 %v78
  %v437 = vunpack.c.l.b16 %v79
  %v438 = vunpack.c.h.b16 %v79
  %v439 = vunpack.c.l.b16 %v80
  %v440 = vunpack.c.l.b16 %v81
  %v441 = vunpack.c.h.b16 %v81
  %v442 = vunpack.c.l.b16 %v82
  %v443 = vunpack.c.h.b16 %v82
  %v444 = vunpack.c.l.b16 %v83
  %v445 = vunpack.c.h.b16 %v83
  %v446 = vunpack.c.l.b16 %v84
  %v447 = vunpack.c.h.b16 %v84
  %v448 = vunpack.c.l.b16 %v85
  %v449 = vunpack.c.l.b16 %v86
  %v450 = vunpack.c.h.b16 %v86
  %v451 = vunpack.c.l.b16 %v87
  %v452 = vunpack.c.h.b16 %v87
  %v453 = vunpack.c.l.b16 %v88
  %v454 = vunpack.c.h.b16 %v88
  %v455 = vunpack.c.l.b16 %v89
  %v456 = vunpack.c.h.b16 %v89
  %v457 = vunpack.c.l.b16 %v90
  %v458 = vunpack.c.l.b16 %v91
  %v459 = vunpack.c.h.b16 %v91
  %v460 = vunpack.c.l.b16 %v92
  %v461 = vunpack.c.h.b16 %v92
  %v462 = vunpack.c.l.b16 %v93
  %v463 = vunpack.c.h.b16 %v93
  %v464 = vunpack.c.l.b16 %v94
  %v465 = vunpack.c.h.b16 %v94
  %v466 = vunpack.c.l.b16 %v95
  %v467 = vunpack.c.l.b16 %v96
  %v468 = vunpack.c.h.b16 %v96
  %v469 = vunpack.c.l.b16 %v97
  %v470 = vunpack.c.h.b16 %v97
  %v471 = vunpack.c.l.b16 %v98
  %v472 = vunpack.c.h.b16 %v98
  %v473 = vunpack.c.l.b16 %v99
  %v474 = vunpack.c.h.b16 %v99
  %v475 = vunpack.c.l.b16 %v100
  %v476 = vpack.c.b16 %v341, %v332
  %v477 = vpack.c.b16 %v342, %v333
  %v478 = vpack.c.b16 %v343, %v334
  %v479 = vpack.c.b16 %v344, %v335
  %v480 = vpack.c.b16 %v345, %v336
  %v481 = vpack.c.b16 %v346, %v337
  %v482 = vpack.c.b16 %v347, %v338
  %v483 = vpack.c.b16 %v348, %v339
  %v484 = vpack.c.b16 %v349, %v340
  %v485 = vpack.c.b16 %v359, %v350
  %v486 = vpack.c.b16 %v360, %v351
  %v487 = vpack.c.b16 %v361, %v352
  %v488 = vpack.c.b16 %v362, %v353
  %v489 = vpack.c.b16 %v363, %v354
  %v490 = vpack.c.b16 %v364, %v355
  %v491 = vpack.c.b16 %v365, %v356
  %v492 = vpack.c.b16 %v366, %v357
  %v493 = vpack.c.b16 %v367, %v358
  %v494 = vpack.c.b16 %v377, %v368
  %v495 = vpack.c.b16 %v378, %v369
  %v496 = vpack.c.b16 %v379, %v370
  %v497 = vpack.c.b16 %v380, %v371
  %v498 = vpack.c.b16 %v381, %v372
  %v499 = vpack.c.b16 %v382, %v373
  %v500 = vpack.c.b16 %v383, %v374
  %v501 = vpack.c.b16 %v384, %v375
  %v502 = vpack.c.b16 %v385, %v376
  %v503 = vpack.c.b16 %v395, %v386
  %v504 = vpack.c.b16 %v396, %v387
  %v505 = vpack.c.b16 %v397, %v388
  %v506 = vpack.c.b16 %v398, %v389
  %v507 = vpack.c.b16 %v399, %v390
  %v508 = vpack.c.b16 %v400, %v391
  %v509 = vpack.c.b16 %v401, %v392
  %v510 = vpack.c.b16 %v402, %v393
  %v511 = vpack.c.b16 %v403, %v394
  %v512 = vpack.c.b16 %v413, %v404
  %v513 = vpack.c.b16 %v414, %v405
  %v514 = vpack.c.b16 %v415, %v406
  %v515 = vpack.c.b16 %v416, %v407
  %v516 = vpack.c.b16 %v417, %v408
  %v517 = vpack.c.b16 %v418, %v409
  %v518 = vpack.c.b16 %v419, %v410
  %v519 = vpack.c.b16 %v420, %v411
  %v520 = vpack.c.b16 %v421, %v412
  %v521 = vpack.c.b16 %v431, %v422
  %v522 = vpack.c.b16 %v432, %v423
  %v523 = vpack.c.b16 %v433, %v424
  %v524 = vpack.c.b16 %v434, %v425
  %v525 = vpack.c.b16 %v435, %v426
  %v526 = vpack.c.b16 %v436, %v427
  %v527 = vpack.c.b16 %v437, %v428
  %v528 = vpack.c.b16 %v438, %v429
  %v529 = vpack.c.b16 %v439, %v430
  %v530 = vpack.c.b16 %v449, %v440
  %v531 = vpack.c.b16 %v450, %v441
  %v532 = vpack.c.b16 %v451, %v442
  %v533 = vpack.c.b16 %v452, %v443
  %v534 = vpack.c.b16 %v453, %v444
  %v535 = vpack.c.b16 %v454, %v445
  %v536 = vpack.c.b16 %v455, %v446
  %v537 = vpack.c.b16 %v456, %v447
  %v538 = vpack.c.b16 %v457, %v448
  %v539 = vpack.c.b16 %v467, %v458
  %v540 = vpack.c.b16 %v468, %v459
  %v541 = vpack.c.b16 %v469, %v460
  %v542 = vpack.c.b16 %v470, %v461
  %v543 = vpack.c.b16 %v471, %v462
  %v544 = vpack.c.b16 %v472, %v463
  %v545 = vpack.c.b16 %v473, %v464
  %v546 = vpack.c.b16 %v474, %v465
  %v547 = vpack.c.b16 %v475, %v466
  %v764 = vunpack.c.l.b16 %v101
  %v765 = vunpack.c.l.b16 %v102
  %v766 = vunpack.c.l.b16 %v103
  %v767 = vunpack.c.l.b16 %v104
  %v768 = vunpack.c.l.b16 %v105
  %v769 = vunpack.c.l.b16 %v106
  %v770 = vunpack.c.l.b16 %v107
  %v771 = vunpack.c.l.b16 %v108
  %v772 = vunpack.c.l.b16 %v109
  %v773 = vunpack.c.l.b16 %v110
  %v774 = vunpack.c.l.b16 %v111
  %v775 = vunpack.c.l.b16 %v112
  %v776 = vunpack.c.l.b16 %v113
  %v777 = vunpack.c.l.b16 %v114
  %v778 = vunpack.c.l.b16 %v115
  %v779 = vunpack.c.l.b16 %v116
  %v780 = vunpack.c.l.b16 %v117
  %v781 = vunpack.c.l.b16 %v118
  %v782 = vunpack.c.l.b16 %v119
  %v783 = vunpack.c.l.b16 %v120
  %v784 = vunpack.c.l.b16 %v121
  %v785 = vunpack.c.l.b16 %v122
  %v786 = vunpack.c.l.b16 %v123
  %v787 = vunpack.c.l.b16 %v124
  %v788 = vunpack.c.l.b16 %v125
  %v789 = vunpack.c.l.b16 %v126
  %v790 = vunpack.c.l.b16 %v127
  %v791 = vunpack.c.l.b16 %v128
  %v792 = vunpack.c.l.b16 %v129
  %v793 = vunpack.c.l.b16 %v130
  %v794 = vunpack.c.l.b16 %v131
  %v795 = vunpack.c.l.b16 %v132
  %v796 = vunpack.c.l.b16 %v133
  %v797 = vunpack.c.l.b16 %v134
  %v798 = vunpack.c.l.b16 %v135
  %v799 = vunpack.c.l.b16 %v136
  %v800 = vunpack.c.l.b16 %v137
  %v801 = vunpack.c.l.b16 %v138
  %v802 = vunpack.c.l.b16 %v139
  %v803 = vunpack.c.l.b16 %v140
  %v804 = vunpack.c.l.b16 %v141
  %v805 = vunpack.c.l.b16 %v142
  %v806 = vunpack.c.l.b16 %v143
  %v807 = vunpack.c.l.b16 %v144
  %v808 = vunpack.c.l.b16 %v145
  %v809 = vunpack.c.l.b16 %v146
  %v810 = vunpack.c.l.b16 %v147
  %v811 = vunpack.c.l.b16 %v148
  %v812 = vunpack.c.l.b16 %v149
  %v813 = vunpack.c.l.b16 %v150
  %v814 = vunpack.c.l.b16 %v151
  %v815 = vunpack.c.l.b16 %v152
  %v816 = vunpack.c.l.b16 %v153
  %v817 = vunpack.c.l.b16 %v154
  %v818 = vunpack.c.l.b16 %v155
  %v819 = vunpack.c.l.b16 %v156
  %v820 = vunpack.c.l.b16 %v157
  %v821 = vunpack.c.l.b16 %v158
  %v822 = vunpack.c.l.b16 %v159
  %v823 = vunpack.c.l.b16 %v160
  %v824 = vunpack.c.l.b16 %v161
  %v825 = vunpack.c.l.b16 %v162
  %v826 = vunpack.c.l.b16 %v163
  %v827 = vunpack.c.l.b16 %v164
  %v828 = vunpack.c.l.b16 %v165
  %v829 = vunpack.c.l.b16 %v166
  %v830 = vunpack.c.l.b16 %v167
  %v831 = vunpack.c.l.b16 %v168
  %v832 = vunpack.c.l.b16 %v169
  %v833 = vunpack.c.l.b16 %v170
  %v834 = vunpack.c.l.b16 %v171
  %v835 = vunpack.c.l.b16 %v172
  %v836 = vunpack.c.l.b16 %v173
  %v837 = vunpack.c.l.b16 %v174
  %v838 = vunpack.c.l.b16 %v175
  %v839 = vunpack.c.l.b16 %v176
  %v840 = vunpack.c.l.b16 %v177
  %v841 = vunpack.c.l.b16 %v178
  %v842 = vunpack.c.l.b16 %v179
  %v843 = vunpack.c.l.b16 %v180
  %v844 = vunpack.c.l.b16 %v181
  %v845 = vunpack.c.l.b16 %v182
  %v846 = vunpack.c.l.b16 %v183
  %v847 = vunpack.c.l.b16 %v184
  %v848 = vunpack.c.l.b16 %v185
  %v849 = vunpack.c.l.b16 %v186
  %v850 = vunpack.c.l.b16 %v187
  %v851 = vunpack.c.l.b16 %v188
  %v852 = vunpack.c.l.b16 %v189
  %v853 = vunpack.c.l.b16 %v190
  %v854 = vunpack.c.l.b16 %v191
  %v855 = vunpack.c.l.b16 %v192
  %v856 = vunpack.c.l.b16 %v193
  %v857 = vunpack.c.l.b16 %v194
  %v858 = vunpack.c.l.b16 %v195
  %v859 = vunpack.c.l.b16 %v196
  %v860 = vunpack.c.l.b16 %v197
  %v861 = vunpack.c.l.b16 %v198
  %v862 = vunpack.c.l.b16 %v199
  %v863 = vunpack.c.l.b16 %v200
  %v864 = vunpack.c.l.b16 %v201
  %v865 = vunpack.c.l.b16 %v202
  %v866 = vunpack.c.l.b16 %v203
  %v867 = vunpack.c.l.b16 %v204
  %v868 = vunpack.c.l.b16 %v205
  %v869 = vunpack.c.l.b16 %v206
  %v870 = vunpack.c.l.b16 %v207
  %v871 = vunpack.c.l.b16 %v208
  %v872 = vunpack.c.l.b16 %v209
  %v873 = vunpack.c.l.b16 %v210
  %v874 = vunpack.c.l.b16 %v211
  %v875 = vunpack.c.l.b16 %v212
  %v876 = vunpack.c.l.b16 %v213
  %v877 = vunpack.c.l.b16 %v214
  %v878 = vunpack.c.l.b16 %v215
  %v879 = vunpack.c.l.b16 %v216
  %v880 = vunpack.c.l.b16 %v217
  %v881 = vunpack.c.l.b16 %v218
  %v882 = vunpack.c.l.b16 %v219
  %v883 = vunpack.c.l.b16 %v220
  %v884 = vunpack.c.l.b16 %v221
  %v885 = vunpack.c.l.b16 %v222
  %v886 = vunpack.c.l.b16 %v223
  %v887 = vunpack.c.l.b16 %v224
  %v888 = vunpack.c.l.b16 %v225
  %v889 = vunpack.c.l.b16 %v226
  %v890 = vunpack.c.l.b16 %v227
  %v891 = vunpack.c.l.b16 %v228
  %v892 = vunpack.c.l.b16 %v229
  %v893 = vunpack.c.l.b16 %v230
  %v894 = vunpack.c.l.b16 %v231
  %v895 = vunpack.c.l.b16 %v232
  %v896 = vunpack.c.l.b16 %v233
  %v897 = vunpack.c.l.b16 %v234
  %v898 = vunpack.c.l.b16 %v235
  %v899 = vunpack.c.l.b16 %v236
  %v900 = vunpack.c.l.b16 %v237
  %v901 = vunpack.c.l.b16 %v238
  %v902 = vunpack.c.l.b16 %v239
  %v903 = vunpack.c.l.b16 %v240
  %v904 = vunpack.c.l.b16 %v241
  %v905 = vunpack.c.l.b16 %v242
  %v906 = vunpack.c.l.b16 %v243
  %v907 = vunpack.c.l.b16 %v244
  %v908 = vpack.c.b16 %v765, %v764
  %v909 = vpack.c.b16 %v767, %v766
  %v910 = vpack.c.b16 %v769, %v768
  %v911 = vpack.c.b16 %v771, %v770
  %v912 = vpack.c.b16 %v773, %v772
  %v913 = vpack.c.b16 %v775, %v774
  %v914 = vpack.c.b16 %v777, %v776
  %v915 = vpack.c.b16 %v779, %v778
  %v916 = vpack.c.b16 %v781, %v780
  %v917 = vpack.c.b16 %v783, %v782
  %v918 = vpack.c.b16 %v785, %v784
  %v919 = vpack.c.b16 %v787, %v786
  %v920 = vpack.c.b16 %v789, %v788
  %v921 = vpack.c.b16 %v791, %v790
  %v922 = vpack.c.b16 %v793, %v792
  %v923 = vpack.c.b16 %v795, %v794
  %v924 = vpack.c.b16 %v797, %v796
  %v925 = vpack.c.b16 %v799, %v798
  %v926 = vpack.c.b16 %v801, %v800
  %v927 = vpack.c.b16 %v803, %v802
  %v928 = vpack.c.b16 %v805, %v804
  %v929 = vpack.c.b16 %v807, %v806
  %v930 = vpack.c.b16 %v809, %v808
  %v931 = vpack.c.b16 %v811, %v810
  %v932 = vpack.c.b16 %v813, %v812
  %v933 = vpack.c.b16 %v815, %v814
  %v934 = vpack.c.b16 %v817, %v816
  %v935 = vpack.c.b16 %v819, %v818
  %v936 = vpack.c.b16 %v821, %v820
  %v937 = vpack.c.b16 %v823, %v822
  %v938 = vpack.c.b16 %v825, %v824
  %v939 = vpack.c.b16 %v827, %v826
  %v940 = vpack.c.b16 %v829, %v828
  %v941 = vpack.c.b16 %v831, %v830
  %v942 = vpack.c.b16 %v833, %v832
  %v943 = vpack.c.b16 %v835, %v834
  %v944 = vpack.c.b16 %v837, %v836
  %v945 = vpack.c.b16 %v839, %v838
  %v946 = vpack.c.b16 %v841, %v840
  %v947 = vpack.c.b16 %v843, %v842
  %v948 = vpack.c.b16 %v845, %v844
  %v949 = vpack.c.b16 %v847, %v846
  %v950 = vpack.c.b16 %v849, %v848
  %v951 = vpack.c.b16 %v851, %v850
  %v952 = vpack.c.b16 %v853, %v852
  %v953 = vpack.c.b16 %v855, %v854
  %v954 = vpack.c.b16 %v857, %v856
  %v955 = vpack.c.b16 %v859, %v858
  %v956 = vpack.c.b16 %v861, %v860
  %v957 = vpack.c.b16 %v863, %v862
  %v958 = vpack.c.b16 %v865, %v864
  %v959 = vpack.c.b16 %v867, %v866
  %v960 = vpack.c.b16 %v869, %v868
  %v961 = vpack.c.b16 %v871, %v870
  %v962 = vpack.c.b16 %v873, %v872
  %v963 = vpack.c.b16 %v875, %v874
  %v964 = vpack.c.b16 %v877, %v876
  %v965 = vpack.c.b16 %v879, %v878
  %v966 = vpack.c.b16 %v881, %v880
  %v967 = vpack.c.b16 %v883, %v882
  %v968 = vpack.c.b16 %v885, %v884
  %v969 = vpack.c.b16 %v887, %v886
  %v970 = vpack.c.b16 %v889, %v888
  %v971 = vpack.c.b16 %v891, %v890
  %v972 = vpack.c.b16 %v893, %v892
  %v973 = vpack.c.b16 %v895, %v894
  %v974 = vpack.c.b16 %v897, %v896
  %v975 = vpack.c.b16 %v899, %v898
  %v976 = vpack.c.b16 %v901, %v900
  %v977 = vpack.c.b16 %v903, %v902
  %v978 = vpack.c.b16 %v905, %v904
  %v979 = vpack.c.b16 %v907, %v906
  %1052 = vmatprep.subr.bf16.mxu0 0
  %1053 = vmatpush1.bf16.msra.mxu0 %v908
  %1054 = vmatprep.subr.bf16.mxu0 0
  %1055 = vmatpush1.bf16.msra.mxu0 %v909
  %1056 = vmatprep.subr.bf16.mxu0 0
  %1057 = vmatpush1.bf16.msra.mxu0 %v910
  %1058 = vmatprep.subr.bf16.mxu0 0
  %1059 = vmatpush1.bf16.msra.mxu0 %v911
  %1060 = vmatprep.subr.bf16.mxu0 0
  %1061 = vmatpush1.bf16.msra.mxu0 %v912
  %1062 = vmatprep.subr.bf16.mxu0 0
  %1063 = vmatpush1.bf16.msra.mxu0 %v913
  %1064 = vmatprep.subr.bf16.mxu0 0
  %1065 = vmatpush1.bf16.msra.mxu0 %v914
  %1066 = vmatprep.subr.bf16.mxu0 0
  %1067 = vmatpush1.bf16.msra.mxu0 %v915
  %1068 = vmatprep.subr.bf16.mxu0 0
  %1069 = vmatpush1.bf16.msra.mxu0 %v916
  %1070 = vmatprep.subr.bf16.mxu0 0
  %1071 = vmatpush1.bf16.msra.mxu0 %v917
  %1072 = vmatprep.subr.bf16.mxu0 0
  %1073 = vmatpush1.bf16.msra.mxu0 %v918
  %1074 = vmatprep.subr.bf16.mxu0 0
  %1075 = vmatpush1.bf16.msra.mxu0 %v919
  %1076 = vmatprep.subr.bf16.mxu0 0
  %1077 = vmatpush1.bf16.msra.mxu0 %v920
  %1078 = vmatprep.subr.bf16.mxu0 0
  %1079 = vmatpush1.bf16.msra.mxu0 %v921
  %1080 = vmatprep.subr.bf16.mxu0 0
  %1081 = vmatpush1.bf16.msra.mxu0 %v922
  %1082 = vmatprep.subr.bf16.mxu0 0
  %1083 = vmatpush1.bf16.msra.mxu0 %v923
  %1084 = vmatprep.mubr.bf16.mxu0 %v477
  %1085 = vmatmul.mubr.bf16.gmra.mrb[0].mxu0 %v476
  %v1086 = vpop.f32.mrb[0].mxu0
  %v1087 = vadd.f32 %v250, %v1086
  %v1088 = vpop.f32.mrb[0].mxu0
  %v1089 = vpop.f32.mrb[0].mxu0
  %v1090 = vadd.f32 %v250, %v1089
  %v1091 = vpop.f32.mrb[0].mxu0
  %1092 = vmatprep.mubr.bf16.mxu0 %v486
  %1093 = vmatmul.mubr.bf16.gmra.mrb[0].mxu0 %v485
  %v1094 = vpop.f32.mrb[0].mxu0
  %v1095 = vadd.f32 %v250, %v1094
  %v1096 = vpop.f32.mrb[0].mxu0
  %v1097 = vpop.f32.mrb[0].mxu0
  %v1098 = vadd.f32 %v250, %v1097
  %v1099 = vpop.f32.mrb[0].mxu0
  %1100 = vmatprep.mubr.bf16.mxu0 %v495
  %1101 = vmatmul.mubr.bf16.gmra.mrb[0].mxu0 %v494
  %v1102 = vpop.f32.mrb[0].mxu0
  %v1103 = vadd.f32 %v250, %v1102
  %v1104 = vpop.f32.mrb[0].mxu0
  %v1105 = vpop.f32.mrb[0].mxu0
  %v1106 = vadd.f32 %v250, %v1105
  %v1107 = vpop.f32.mrb[0].mxu0
  %1108 = vmatprep.mubr.bf16.mxu0 %v504
  %1109 = vmatmul.mubr.bf16.gmra.mrb[0].mxu0 %v503
  %v1110 = vpop.f32.mrb[0].mxu0
  %v1111 = vadd.f32 %v250, %v1110
  %v1112 = vpop.f32.mrb[0].mxu0
  %v1113 = vpop.f32.mrb[0].mxu0
  %v1114 = vadd.f32 %v250, %v1113
  %v1115 = vpop.f32.mrb[0].mxu0
  %1116 = vmatprep.mubr.bf16.mxu0 %v513
  %1117 = vmatmul.mubr.bf16.gmra.mrb[0].mxu0 %v512
  %v1118 = vpop.f32.mrb[0].mxu0
  %v1119 = vadd.f32 %v250, %v1118
  %v1120 = vpop.f32.mrb[0].mxu0
  %v1121 = vpop.f32.mrb[0].mxu0
  %v1122 = vadd.f32 %v250, %v1121
  %v1123 = vpop.f32.mrb[0].mxu0
  %1124 = vmatprep.mubr.bf16.mxu0 %v522
  %1125 = vmatmul.mubr.bf16.gmra.mrb[0].mxu0 %v521
  %v1126 = vpop.f32.mrb[0].mxu0
  %v1127 = vadd.f32 %v250, %v1126
  %v1128 = vpop.f32.mrb[0].mxu0
  %v1129 = vpop.f32.mrb[0].mxu0
  %v1130 = vadd.f32 %v250, %v1129
  %v1131 = vpop.f32.mrb[0].mxu0
  %1132 = vmatprep.mubr.bf16.mxu0 %v531
  %1133 = vmatmul.mubr.bf16.gmra.mrb[0].mxu0 %v530
  %v1134 = vpop.f32.mrb[0].mxu0
  %v1135 = vadd.f32 %v250, %v1134
  %v1136 = vpop.f32.mrb[0].mxu0
  %v1137 = vpop.f32.mrb[0].mxu0
  %v1138 = vadd.f32 %v250, %v1137
  %v1139 = vpop.f32.mrb[0].mxu0
  %1140 = vmatprep.mubr.bf16.mxu0 %v540
  %1141 = vmatmul.mubr.bf16.gmra.mrb[0].mxu0 %v539
  %v1142 = vpop.f32.mrb[0].mxu0
  %v1143 = vadd.f32 %v250, %v1142
  %v1144 = vpop.f32.mrb[0].mxu0
  %v1145 = vpop.f32.mrb[0].mxu0
  %v1146 = vadd.f32 %v250, %v1145
  %v1147 = vpop.f32.mrb[0].mxu0
  %1148 = vdwg.mxu0
  %1149 = vmatprep.subr.bf16.mxu0 0
  %1150 = vmatpush1.bf16.msra.mxu0 %v924
  %1151 = vmatprep.subr.bf16.mxu0 0
  %1152 = vmatpush1.bf16.msra.mxu0 %v925
  %1153 = vmatprep.subr.bf16.mxu0 0
  %1154 = vmatpush1.bf16.msra.mxu0 %v926
  %1155 = vmatprep.subr.bf16.mxu0 0
  %1156 = vmatpush1.bf16.msra.mxu0 %v927
  %1157 = vmatprep.subr.bf16.mxu0 0
  %1158 = vmatpush1.bf16.msra.mxu0 %v928
  %1159 = vmatprep.subr.bf16.mxu0 0
  %1160 = vmatpush1.bf16.msra.mxu0 %v929
  %1161 = vmatprep.subr.bf16.mxu0 0
  %1162 = vmatpush1.bf16.msra.mxu0 %v930
  %1163 = vmatprep.subr.bf16.mxu0 0
  %1164 = vmatpush1.bf16.msra.mxu0 %v931
  %1165 = vmatprep.subr.bf16.mxu0 0
  %1166 = vmatpush1.bf16.msra.mxu0 %v932
  %1167 = vmatprep.subr.bf16.mxu0 0
  %1168 = vmatpush1.bf16.msra.mxu0 %v933
  %1169 = vmatprep.subr.bf16.mxu0 0
  %1170 = vmatpush1.bf16.msra.mxu0 %v934
  %1171 = vmatprep.subr.bf16.mxu0 0
  %1172 = vmatpush1.bf16.msra.mxu0 %v935
  %1173 = vmatprep.subr.bf16.mxu0 0
  %1174 = vmatpush1.bf16.msra.mxu0 %v936
  %1175 = vmatprep.subr.bf16.mxu0 0
  %1176 = vmatpush1.bf16.msra.mxu0 %v937
  %1177 = vmatprep.subr.bf16.mxu0 0
  %1178 = vmatpush1.bf16.msra.mxu0 %v938
  %1179 = vmatprep.subr.bf16.mxu0 0
  %1180 = vmatpush1.bf16.msra.mxu0 %v939
  %1181 = vmatprep.mubr.bf16.mxu0 %v479
  %1182 = vmatmul.mubr.bf16.gmra.mrb[0].mxu0 %v478
  %v1183 = vpop.f32.mrb[0].mxu0
  %v1184 = vadd.f32 %v1087, %v1183
  %v1185 = vpop.f32.mrb[0].mxu0
  %v1186 = vpop.f32.mrb[0].mxu0
  %v1187 = vadd.f32 %v1090, %v1186
  %v1188 = vpop.f32.mrb[0].mxu0
  %1189 = vmatprep.mubr.bf16.mxu0 %v488
  %1190 = vmatmul.mubr.bf16.gmra.mrb[0].mxu0 %v487
  %v1191 = vpop.f32.mrb[0].mxu0
  %v1192 = vadd.f32 %v1095, %v1191
  %v1193 = vpop.f32.mrb[0].mxu0
  %v1194 = vpop.f32.mrb[0].mxu0
  %v1195 = vadd.f32 %v1098, %v1194
  %v1196 = vpop.f32.mrb[0].mxu0
  %1197 = vmatprep.mubr.bf16.mxu0 %v497
  %1198 = vmatmul.mubr.bf16.gmra.mrb[0].mxu0 %v496
  %v1199 = vpop.f32.mrb[0].mxu0
  %v1200 = vadd.f32 %v1103, %v1199
  %v1201 = vpop.f32.mrb[0].mxu0
  %v1202 = vpop.f32.mrb[0].mxu0
  %v1203 = vadd.f32 %v1106, %v1202
  %v1204 = vpop.f32.mrb[0].mxu0
  %1205 = vmatprep.mubr.bf16.mxu0 %v506
  %1206 = vmatmul.mubr.bf16.gmra.mrb[0].mxu0 %v505
  %v1207 = vpop.f32.mrb[0].mxu0
  %v1208 = vadd.f32 %v1111, %v1207
  %v1209 = vpop.f32.mrb[0].mxu0
  %v1210 = vpop.f32.mrb[0].mxu0
  %v1211 = vadd.f32 %v1114, %v1210
  %v1212 = vpop.f32.mrb[0].mxu0
  %1213 = vmatprep.mubr.bf16.mxu0 %v515
  %1214 = vmatmul.mubr.bf16.gmra.mrb[0].mxu0 %v514
  %v1215 = vpop.f32.mrb[0].mxu0
  %v1216 = vadd.f32 %v1119, %v1215
  %v1217 = vpop.f32.mrb[0].mxu0
  %v1218 = vpop.f32.mrb[0].mxu0
  %v1219 = vadd.f32 %v1122, %v1218
  %v1220 = vpop.f32.mrb[0].mxu0
  %1221 = vmatprep.mubr.bf16.mxu0 %v524
  %1222 = vmatmul.mubr.bf16.gmra.mrb[0].mxu0 %v523
  %v1223 = vpop.f32.mrb[0].mxu0
  %v1224 = vadd.f32 %v1127, %v1223
  %v1225 = vpop.f32.mrb[0].mxu0
  %v1226 = vpop.f32.mrb[0].mxu0
  %v1227 = vadd.f32 %v1130, %v1226
  %v1228 = vpop.f32.mrb[0].mxu0
  %1229 = vmatprep.mubr.bf16.mxu0 %v533
  %1230 = vmatmul.mubr.bf16.gmra.mrb[0].mxu0 %v532
  %v1231 = vpop.f32.mrb[0].mxu0
  %v1232 = vadd.f32 %v1135, %v1231
  %v1233 = vpop.f32.mrb[0].mxu0
  %v1234 = vpop.f32.mrb[0].mxu0
  %v1235 = vadd.f32 %v1138, %v1234
  %v1236 = vpop.f32.mrb[0].mxu0
  %1237 = vmatprep.mubr.bf16.mxu0 %v542
  %1238 = vmatmul.mubr.bf16.gmra.mrb[0].mxu0 %v541
  %v1239 = vpop.f32.mrb[0].mxu0
  %v1240 = vadd.f32 %v1143, %v1239
  %v1241 = vpop.f32.mrb[0].mxu0
  %v1242 = vpop.f32.mrb[0].mxu0
  %v1243 = vadd.f32 %v1146, %v1242
  %v1244 = vpop.f32.mrb[0].mxu0
  %1245 = vdwg.mxu0
  %1246 = vmatprep.subr.bf16.mxu0 0
  %1247 = vmatpush1.bf16.msra.mxu0 %v940
  %1248 = vmatprep.subr.bf16.mxu0 0
  %1249 = vmatpush1.bf16.msra.mxu0 %v941
  %1250 = vmatprep.subr.bf16.mxu0 0
  %1251 = vmatpush1.bf16.msra.mxu0 %v942
  %1252 = vmatprep.subr.bf16.mxu0 0
  %1253 = vmatpush1.bf16.msra.mxu0 %v943
  %1254 = vmatprep.subr.bf16.mxu0 0
  %1255 = vmatpush1.bf16.msra.mxu0 %v944
  %1256 = vmatprep.subr.bf16.mxu0 0
  %1257 = vmatpush1.bf16.msra.mxu0 %v945
  %1258 = vmatprep.subr.bf16.mxu0 0
  %1259 = vmatpush1.bf16.msra.mxu0 %v946
  %1260 = vmatprep.subr.bf16.mxu0 0
  %1261 = vmatpush1.bf16.msra.mxu0 %v947
  %1262 = vmatprep.subr.bf16.mxu0 0
  %1263 = vmatpush1.bf16.msra.mxu0 %v948
  %1264 = vmatprep.subr.bf16.mxu0 0
  %1265 = vmatpush1.bf16.msra.mxu0 %v949
  %1266 = vmatprep.subr.bf16.mxu0 0
  %1267 = vmatpush1.bf16.msra.mxu0 %v950
  %1268 = vmatprep.subr.bf16.mxu0 0
  %1269 = vmatpush1.bf16.msra.mxu0 %v951
  %1270 = vmatprep.subr.bf16.mxu0 0
  %1271 = vmatpush1.bf16.msra.mxu0 %v952
  %1272 = vmatprep.subr.bf16.mxu0 0
  %1273 = vmatpush1.bf16.msra.mxu0 %v953
  %1274 = vmatprep.subr.bf16.mxu0 0
  %1275 = vmatpush1.bf16.msra.mxu0 %v954
  %1276 = vmatprep.subr.bf16.mxu0 0
  %1277 = vmatpush1.bf16.msra.mxu0 %v955
  %1278 = vmatprep.mubr.bf16.mxu0 %v481
  %1279 = vmatmul.mubr.bf16.gmra.mrb[0].mxu0 %v480
  %v1280 = vpop.f32.mrb[0].mxu0
  %v1281 = vadd.f32 %v1184, %v1280
  %v1282 = vpop.f32.mrb[0].mxu0
  %v1283 = vpop.f32.mrb[0].mxu0
  %v1284 = vadd.f32 %v1187, %v1283
  %v1285 = vpop.f32.mrb[0].mxu0
  %1286 = vmatprep.mubr.bf16.mxu0 %v490
  %1287 = vmatmul.mubr.bf16.gmra.mrb[0].mxu0 %v489
  %v1288 = vpop.f32.mrb[0].mxu0
  %v1289 = vadd.f32 %v1192, %v1288
  %v1290 = vpop.f32.mrb[0].mxu0
  %v1291 = vpop.f32.mrb[0].mxu0
  %v1292 = vadd.f32 %v1195, %v1291
  %v1293 = vpop.f32.mrb[0].mxu0
  %1294 = vmatprep.mubr.bf16.mxu0 %v499
  %1295 = vmatmul.mubr.bf16.gmra.mrb[0].mxu0 %v498
  %v1296 = vpop.f32.mrb[0].mxu0
  %v1297 = vadd.f32 %v1200, %v1296
  %v1298 = vpop.f32.mrb[0].mxu0
  %v1299 = vpop.f32.mrb[0].mxu0
  %v1300 = vadd.f32 %v1203, %v1299
  %v1301 = vpop.f32.mrb[0].mxu0
  %1302 = vmatprep.mubr.bf16.mxu0 %v508
  %1303 = vmatmul.mubr.bf16.gmra.mrb[0].mxu0 %v507
  %v1304 = vpop.f32.mrb[0].mxu0
  %v1305 = vadd.f32 %v1208, %v1304
  %v1306 = vpop.f32.mrb[0].mxu0
  %v1307 = vpop.f32.mrb[0].mxu0
  %v1308 = vadd.f32 %v1211, %v1307
  %v1309 = vpop.f32.mrb[0].mxu0
  %1310 = vmatprep.mubr.bf16.mxu0 %v517
  %1311 = vmatmul.mubr.bf16.gmra.mrb[0].mxu0 %v516
  %v1312 = vpop.f32.mrb[0].mxu0
  %v1313 = vadd.f32 %v1216, %v1312
  %v1314 = vpop.f32.mrb[0].mxu0
  %v1315 = vpop.f32.mrb[0].mxu0
  %v1316 = vadd.f32 %v1219, %v1315
  %v1317 = vpop.f32.mrb[0].mxu0
  %1318 = vmatprep.mubr.bf16.mxu0 %v526
  %1319 = vmatmul.mubr.bf16.gmra.mrb[0].mxu0 %v525
  %v1320 = vpop.f32.mrb[0].mxu0
  %v1321 = vadd.f32 %v1224, %v1320
  %v1322 = vpop.f32.mrb[0].mxu0
  %v1323 = vpop.f32.mrb[0].mxu0
  %v1324 = vadd.f32 %v1227, %v1323
  %v1325 = vpop.f32.mrb[0].mxu0
  %1326 = vmatprep.mubr.bf16.mxu0 %v535
  %1327 = vmatmul.mubr.bf16.gmra.mrb[0].mxu0 %v534
  %v1328 = vpop.f32.mrb[0].mxu0
  %v1329 = vadd.f32 %v1232, %v1328
  %v1330 = vpop.f32.mrb[0].mxu0
  %v1331 = vpop.f32.mrb[0].mxu0
  %v1332 = vadd.f32 %v1235, %v1331
  %v1333 = vpop.f32.mrb[0].mxu0
  %1334 = vmatprep.mubr.bf16.mxu0 %v544
  %1335 = vmatmul.mubr.bf16.gmra.mrb[0].mxu0 %v543
  %v1336 = vpop.f32.mrb[0].mxu0
  %v1337 = vadd.f32 %v1240, %v1336
  %v1338 = vpop.f32.mrb[0].mxu0
  %v1339 = vpop.f32.mrb[0].mxu0
  %v1340 = vadd.f32 %v1243, %v1339
  %v1341 = vpop.f32.mrb[0].mxu0
  %1342 = vdwg.mxu0
  %1343 = vmatprep.subr.bf16.mxu0 0
  %1344 = vmatpush1.bf16.msra.mxu0 %v956
  %1345 = vmatprep.subr.bf16.mxu0 0
  %1346 = vmatpush1.bf16.msra.mxu0 %v957
  %1347 = vmatprep.subr.bf16.mxu0 0
  %1348 = vmatpush1.bf16.msra.mxu0 %v958
  %1349 = vmatprep.subr.bf16.mxu0 0
  %1350 = vmatpush1.bf16.msra.mxu0 %v959
  %1351 = vmatprep.subr.bf16.mxu0 0
  %1352 = vmatpush1.bf16.msra.mxu0 %v960
  %1353 = vmatprep.subr.bf16.mxu0 0
  %1354 = vmatpush1.bf16.msra.mxu0 %v961
  %1355 = vmatprep.subr.bf16.mxu0 0
  %1356 = vmatpush1.bf16.msra.mxu0 %v962
  %1357 = vmatprep.subr.bf16.mxu0 0
  %1358 = vmatpush1.bf16.msra.mxu0 %v963
  %1359 = vmatprep.subr.bf16.mxu0 0
  %1360 = vmatpush1.bf16.msra.mxu0 %v964
  %1361 = vmatprep.subr.bf16.mxu0 0
  %1362 = vmatpush1.bf16.msra.mxu0 %v965
  %1363 = vmatprep.subr.bf16.mxu0 0
  %1364 = vmatpush1.bf16.msra.mxu0 %v966
  %1365 = vmatprep.subr.bf16.mxu0 0
  %1366 = vmatpush1.bf16.msra.mxu0 %v967
  %1367 = vmatprep.subr.bf16.mxu0 0
  %1368 = vmatpush1.bf16.msra.mxu0 %v968
  %1369 = vmatprep.subr.bf16.mxu0 0
  %1370 = vmatpush1.bf16.msra.mxu0 %v969
  %1371 = vmatprep.subr.bf16.mxu0 0
  %1372 = vmatpush1.bf16.msra.mxu0 %v970
  %1373 = vmatprep.subr.bf16.mxu0 0
  %1374 = vmatpush1.bf16.msra.mxu0 %v971
  %1375 = vmatprep.mubr.bf16.mxu0 %v483
  %1376 = vmatmul.mubr.bf16.gmra.mrb[0].mxu0 %v482
  %v1377 = vpop.f32.mrb[0].mxu0
  %v1378 = vadd.f32 %v1281, %v1377
  %v1379 = vpop.f32.mrb[0].mxu0
  %v1380 = vpop.f32.mrb[0].mxu0
  %v1381 = vadd.f32 %v1284, %v1380
  %v1382 = vpop.f32.mrb[0].mxu0
  %1383 = vmatprep.mubr.bf16.mxu0 %v492
  %1384 = vmatmul.mubr.bf16.gmra.mrb[0].mxu0 %v491
  %v1385 = vpop.f32.mrb[0].mxu0
  %v1386 = vadd.f32 %v1289, %v1385
  %v1387 = vpop.f32.mrb[0].mxu0
  %v1388 = vpop.f32.mrb[0].mxu0
  %v1389 = vadd.f32 %v1292, %v1388
  %v1390 = vpop.f32.mrb[0].mxu0
  %1391 = vmatprep.mubr.bf16.mxu0 %v501
  %1392 = vmatmul.mubr.bf16.gmra.mrb[0].mxu0 %v500
  %v1393 = vpop.f32.mrb[0].mxu0
  %v1394 = vadd.f32 %v1297, %v1393
  %v1395 = vpop.f32.mrb[0].mxu0
  %v1396 = vpop.f32.mrb[0].mxu0
  %v1397 = vadd.f32 %v1300, %v1396
  %v1398 = vpop.f32.mrb[0].mxu0
  %1399 = vmatprep.mubr.bf16.mxu0 %v510
  %1400 = vmatmul.mubr.bf16.gmra.mrb[0].mxu0 %v509
  %v1401 = vpop.f32.mrb[0].mxu0
  %v1402 = vadd.f32 %v1305, %v1401
  %v1403 = vpop.f32.mrb[0].mxu0
  %v1404 = vpop.f32.mrb[0].mxu0
  %v1405 = vadd.f32 %v1308, %v1404
  %v1406 = vpop.f32.mrb[0].mxu0
  %1407 = vmatprep.mubr.bf16.mxu0 %v519
  %1408 = vmatmul.mubr.bf16.gmra.mrb[0].mxu0 %v518
  %v1409 = vpop.f32.mrb[0].mxu0
  %v1410 = vadd.f32 %v1313, %v1409
  %v1411 = vpop.f32.mrb[0].mxu0
  %v1412 = vpop.f32.mrb[0].mxu0
  %v1413 = vadd.f32 %v1316, %v1412
  %v1414 = vpop.f32.mrb[0].mxu0
  %1415 = vmatprep.mubr.bf16.mxu0 %v528
  %1416 = vmatmul.mubr.bf16.gmra.mrb[0].mxu0 %v527
  %v1417 = vpop.f32.mrb[0].mxu0
  %v1418 = vadd.f32 %v1321, %v1417
  %v1419 = vpop.f32.mrb[0].mxu0
  %v1420 = vpop.f32.mrb[0].mxu0
  %v1421 = vadd.f32 %v1324, %v1420
  %v1422 = vpop.f32.mrb[0].mxu0
  %1423 = vmatprep.mubr.bf16.mxu0 %v537
  %1424 = vmatmul.mubr.bf16.gmra.mrb[0].mxu0 %v536
  %v1425 = vpop.f32.mrb[0].mxu0
  %v1426 = vadd.f32 %v1329, %v1425
  %v1427 = vpop.f32.mrb[0].mxu0
  %v1428 = vpop.f32.mrb[0].mxu0
  %v1429 = vadd.f32 %v1332, %v1428
  %v1430 = vpop.f32.mrb[0].mxu0
  %1431 = vmatprep.mubr.bf16.mxu0 %v546
  %1432 = vmatmul.mubr.bf16.gmra.mrb[0].mxu0 %v545
  %v1433 = vpop.f32.mrb[0].mxu0
  %v1434 = vadd.f32 %v1337, %v1433
  %v1435 = vpop.f32.mrb[0].mxu0
  %v1436 = vpop.f32.mrb[0].mxu0
  %v1437 = vadd.f32 %v1340, %v1436
  %v1438 = vpop.f32.mrb[0].mxu0
  %1439 = vdwg.mxu0
  %1440 = vmatprep.subr.bf16.mxu0 0
  %1441 = vmatpush1.bf16.msra.mxu0 %v972
  %1442 = vmatprep.subr.bf16.mxu0 0
  %1443 = vmatpush1.bf16.msra.mxu0 %v973
  %1444 = vmatprep.subr.bf16.mxu0 0
  %1445 = vmatpush1.bf16.msra.mxu0 %v974
  %1446 = vmatprep.subr.bf16.mxu0 0
  %1447 = vmatpush1.bf16.msra.mxu0 %v975
  %1448 = vmatprep.subr.bf16.mxu0 0
  %1449 = vmatpush1.bf16.msra.mxu0 %v976
  %1450 = vmatprep.subr.bf16.mxu0 0
  %1451 = vmatpush1.bf16.msra.mxu0 %v977
  %1452 = vmatprep.subr.bf16.mxu0 0
  %1453 = vmatpush1.bf16.msra.mxu0 %v978
  %1454 = vmatprep.subr.bf16.mxu0 0
  %1455 = vmatpush1.bf16.msra.mxu0 %v979
  %1456 = vmatprep.subr.bf16.mxu0 0
  %1457 = vmatpush1.bf16.msra.mxu0 0
  %1458 = vmatprep.subr.bf16.mxu0 0
  %1459 = vmatpush1.bf16.msra.mxu0 0
  %1460 = vmatprep.subr.bf16.mxu0 0
  %1461 = vmatpush1.bf16.msra.mxu0 0
  %1462 = vmatprep.subr.bf16.mxu0 0
  %1463 = vmatpush1.bf16.msra.mxu0 0
  %1464 = vmatprep.subr.bf16.mxu0 0
  %1465 = vmatpush1.bf16.msra.mxu0 0
  %1466 = vmatprep.subr.bf16.mxu0 0
  %1467 = vmatpush1.bf16.msra.mxu0 0
  %1468 = vmatprep.subr.bf16.mxu0 0
  %1469 = vmatpush1.bf16.msra.mxu0 0
  %1470 = vmatprep.subr.bf16.mxu0 0
  %1471 = vmatpush1.bf16.msra.mxu0 0
  %1472 = vmatprep.mubr.bf16.mxu0 0
  %1473 = vmatmul.mubr.bf16.gmra.mrb[0].mxu0 %v484
  %v1474 = vpop.f32.mrb[0].mxu0
  %v1475 = vadd.f32 %v1378, %v1474
  %v1476 = vpop.f32.mrb[0].mxu0
  %v1477 = vpop.f32.mrb[0].mxu0
  %v1478 = vadd.f32 %v1381, %v1477
  %v1479 = vpop.f32.mrb[0].mxu0
  %1480 = vmatprep.mubr.bf16.mxu0 0
  %1481 = vmatmul.mubr.bf16.gmra.mrb[0].mxu0 %v493
  %v1482 = vpop.f32.mrb[0].mxu0
  %v1483 = vadd.f32 %v1386, %v1482
  %v1484 = vpop.f32.mrb[0].mxu0
  %v1485 = vpop.f32.mrb[0].mxu0
  %v1486 = vadd.f32 %v1389, %v1485
  %v1487 = vpop.f32.mrb[0].mxu0
  %1488 = vmatprep.mubr.bf16.mxu0 0
  %1489 = vmatmul.mubr.bf16.gmra.mrb[0].mxu0 %v502
  %v1490 = vpop.f32.mrb[0].mxu0
  %v1491 = vadd.f32 %v1394, %v1490
  %v1492 = vpop.f32.mrb[0].mxu0
  %v1493 = vpop.f32.mrb[0].mxu0
  %v1494 = vadd.f32 %v1397, %v1493
  %v1495 = vpop.f32.mrb[0].mxu0
  %1496 = vmatprep.mubr.bf16.mxu0 0
  %1497 = vmatmul.mubr.bf16.gmra.mrb[0].mxu0 %v511
  %v1498 = vpop.f32.mrb[0].mxu0
  %v1499 = vadd.f32 %v1402, %v1498
  %v1500 = vpop.f32.mrb[0].mxu0
  %v1501 = vpop.f32.mrb[0].mxu0
  %v1502 = vadd.f32 %v1405, %v1501
  %v1503 = vpop.f32.mrb[0].mxu0
  %1504 = vmatprep.mubr.bf16.mxu0 0
  %1505 = vmatmul.mubr.bf16.gmra.mrb[0].mxu0 %v520
  %v1506 = vpop.f32.mrb[0].mxu0
  %v1507 = vadd.f32 %v1410, %v1506
  %v1508 = vpop.f32.mrb[0].mxu0
  %v1509 = vpop.f32.mrb[0].mxu0
  %v1510 = vadd.f32 %v1413, %v1509
  %v1511 = vpop.f32.mrb[0].mxu0
  %1512 = vmatprep.mubr.bf16.mxu0 0
  %1513 = vmatmul.mubr.bf16.gmra.mrb[0].mxu0 %v529
  %v1514 = vpop.f32.mrb[0].mxu0
  %v1515 = vadd.f32 %v1418, %v1514
  %v1516 = vpop.f32.mrb[0].mxu0
  %v1517 = vpop.f32.mrb[0].mxu0
  %v1518 = vadd.f32 %v1421, %v1517
  %v1519 = vpop.f32.mrb[0].mxu0
  %1520 = vmatprep.mubr.bf16.mxu0 0
  %1521 = vmatmul.mubr.bf16.gmra.mrb[0].mxu0 %v538
  %v1522 = vpop.f32.mrb[0].mxu0
  %v1523 = vadd.f32 %v1426, %v1522
  %v1524 = vpop.f32.mrb[0].mxu0
  %v1525 = vpop.f32.mrb[0].mxu0
  %v1526 = vadd.f32 %v1429, %v1525
  %v1527 = vpop.f32.mrb[0].mxu0
  %1528 = vmatprep.mubr.bf16.mxu0 0
  %1529 = vmatmul.mubr.bf16.gmra.mrb[0].mxu0 %v547
  %v1530 = vpop.f32.mrb[0].mxu0
  %v1531 = vadd.f32 %v1434, %v1530
  %v1532 = vpop.f32.mrb[0].mxu0
  %v1533 = vpop.f32.mrb[0].mxu0
  %v1534 = vadd.f32 %v1437, %v1533
  %v1535 = vpop.f32.mrb[0].mxu0
  %1536 = vdwg.mxu0
  %v1537 = vmax.f32 %v1475, 0.0
  %v1538 = vmax.f32 %v1478, 0.0
  %v1539 = vmax.f32 %v1483, 0.0
  %v1540 = vmax.f32 %v1486, 0.0
  %v1541 = vmax.f32 %v1491, 0.0
  %v1542 = vmax.f32 %v1494, 0.0
  %v1543 = vmax.f32 %v1499, 0.0
  %v1544 = vmax.f32 %v1502, 0.0
  %v1545 = vmax.f32 %v1507, 0.0
  %v1546 = vmax.f32 %v1510, 0.0
  %v1547 = vmax.f32 %v1515, 0.0
  %v1548 = vmax.f32 %v1518, 0.0
  %v1549 = vmax.f32 %v1523, 0.0
  %v1550 = vmax.f32 %v1526, 0.0
  %v1551 = vmax.f32 %v1531, 0.0
  %v1552 = vmax.f32 %v1534, 0.0
  %v1553 = vlaneseq
  %v1554 = vshrl.u32 %v1553, 7
  %v1555 = vadd.s32 %v1554, 8
  %v1556 = vadd.s32 %v1554, 16
  %v1557 = vadd.s32 %v1554, 24
  %v1558 = vadd.s32 %v1554, 32
  %v1559 = vadd.s32 %v1554, 40
  %v1560 = vadd.s32 %v1554, 48
  %v1561 = vadd.s32 %v1554, 56
  %v1562 = vadd.s32 %v1554, 64
  %v1563 = vadd.s32 %v1554, 72
  %v1564 = vadd.s32 %v1554, 80
  %v1565 = vadd.s32 %v1554, 88
  %v1566 = vadd.s32 %v1554, 96
  %v1567 = vadd.s32 %v1554, 104
  %v1568 = vadd.s32 %v1554, 112
  %v1569 = vadd.s32 %v1554, 120
  %vm1570 = vcmp.lt.s32.totalorder %v1554, 128
  %vm1571 = vcmp.lt.s32.totalorder %v1555, 128
  %vm1572 = vcmp.lt.s32.totalorder %v1556, 128
  %vm1573 = vcmp.lt.s32.totalorder %v1557, 128
  %vm1574 = vcmp.lt.s32.totalorder %v1558, 128
  %vm1575 = vcmp.lt.s32.totalorder %v1559, 128
  %vm1576 = vcmp.lt.s32.totalorder %v1560, 128
  %vm1577 = vcmp.lt.s32.totalorder %v1561, 128
  %vm1578 = vcmp.lt.s32.totalorder %v1562, 128
  %vm1579 = vcmp.lt.s32.totalorder %v1563, 128
  %vm1580 = vcmp.lt.s32.totalorder %v1564, 128
  %vm1581 = vcmp.lt.s32.totalorder %v1565, 128
  %vm1582 = vcmp.lt.s32.totalorder %v1566, 128
  %vm1583 = vcmp.lt.s32.totalorder %v1567, 128
  %vm1584 = vcmp.lt.s32.totalorder %v1568, 128
  %vm1585 = vcmp.lt.s32.totalorder %v1569, 128
  %v1586 = vsel %vm1570, %v1537, 0.0
  %v1587 = vsel %vm1571, %v1538, 0.0
  %v1588 = vsel %vm1572, %v1539, 0.0
  %v1589 = vsel %vm1573, %v1540, 0.0
  %v1590 = vsel %vm1574, %v1541, 0.0
  %v1591 = vsel %vm1575, %v1542, 0.0
  %v1592 = vsel %vm1576, %v1543, 0.0
  %v1593 = vsel %vm1577, %v1544, 0.0
  %v1594 = vsel %vm1578, %v1545, 0.0
  %v1595 = vsel %vm1579, %v1546, 0.0
  %v1596 = vsel %vm1580, %v1547, 0.0
  %v1597 = vsel %vm1581, %v1548, 0.0
  %v1598 = vsel %vm1582, %v1549, 0.0
  %v1599 = vsel %vm1583, %v1550, 0.0
  %v1600 = vsel %vm1584, %v1551, 0.0
  %v1601 = vsel %vm1585, %v1552, 0.0
  %v1602 = vadd.f32 %v1586, %v1587
  %v1603 = vadd.f32 %v1602, %v1588
  %v1604 = vadd.f32 %v1603, %v1589
  %v1605 = vadd.f32 %v1604, %v1590
  %v1606 = vadd.f32 %v1605, %v1591
  %v1607 = vadd.f32 %v1606, %v1592
  %v1608 = vadd.f32 %v1607, %v1593
  %v1609 = vadd.f32 %v1608, %v1594
  %v1610 = vadd.f32 %v1609, %v1595
  %v1611 = vadd.f32 %v1610, %v1596
  %v1612 = vadd.f32 %v1611, %v1597
  %v1613 = vadd.f32 %v1612, %v1598
  %v1614 = vadd.f32 %v1613, %v1599
  %v1615 = vadd.f32 %v1614, %v1600
  %v1616 = vadd.f32 %v1615, %v1601
  %v1617 = vrot.slane %v1616, 4
  %v1618 = vadd.f32 %v1616, %v1617
  %v1619 = vrot.slane %v1618, 2
  %v1620 = vadd.f32 %v1618, %v1619
  %v1621 = vrot.slane %v1620, 1
  %v1622 = vadd.f32 %v1620, %v1621
  %v1623 = vmul.f32 %v1622, 0.0078125
  %v1624 = vmul.f32 %v1586, %v1586
  %v1625 = vmul.f32 %v1587, %v1587
  %v1626 = vmul.f32 %v1588, %v1588
  %v1627 = vmul.f32 %v1589, %v1589
  %v1628 = vmul.f32 %v1590, %v1590
  %v1629 = vmul.f32 %v1591, %v1591
  %v1630 = vmul.f32 %v1592, %v1592
  %v1631 = vmul.f32 %v1593, %v1593
  %v1632 = vmul.f32 %v1594, %v1594
  %v1633 = vmul.f32 %v1595, %v1595
  %v1634 = vmul.f32 %v1596, %v1596
  %v1635 = vmul.f32 %v1597, %v1597
  %v1636 = vmul.f32 %v1598, %v1598
  %v1637 = vmul.f32 %v1599, %v1599
  %v1638 = vmul.f32 %v1600, %v1600
  %v1639 = vmul.f32 %v1601, %v1601
  %v1640 = vadd.f32 %v1624, %v1625
  %v1641 = vadd.f32 %v1640, %v1626
  %v1642 = vadd.f32 %v1641, %v1627
  %v1643 = vadd.f32 %v1642, %v1628
  %v1644 = vadd.f32 %v1643, %v1629
  %v1645 = vadd.f32 %v1644, %v1630
  %v1646 = vadd.f32 %v1645, %v1631
  %v1647 = vadd.f32 %v1646, %v1632
  %v1648 = vadd.f32 %v1647, %v1633
  %v1649 = vadd.f32 %v1648, %v1634
  %v1650 = vadd.f32 %v1649, %v1635
  %v1651 = vadd.f32 %v1650, %v1636
  %v1652 = vadd.f32 %v1651, %v1637
  %v1653 = vadd.f32 %v1652, %v1638
  %v1654 = vadd.f32 %v1653, %v1639
  %v1655 = vrot.slane %v1654, 4
  %v1656 = vadd.f32 %v1654, %v1655
  %v1657 = vrot.slane %v1656, 2
  %v1658 = vadd.f32 %v1656, %v1657
  %v1659 = vrot.slane %v1658, 1
  %v1660 = vadd.f32 %v1658, %v1659
  %v1661 = vmul.f32 %v1660, 0.0078125
  %v1662 = vmul.f32 %v1623, %v1623
  %v1663 = vsub.f32 %v1661, %v1662
  %v1664 = vmax.f32 %v1663, 0.0
  %v1665 = vld [vmem:[%s3] sm:$0x1]
  %v1666 = vadd.f32 %v1664, 1e-05
  %v1667 = vrsqrt.pop %v1666
  %v1668 = vmul.f32 %v1665, %v1667
  %v1669 = vld [vmem:[%s4] sm:$0x1]
  %v1670 = vmul.f32 %v1623, %v1668
  %v1671 = vsub.f32 %v1669, %v1670
  %v1673 = vlaneseq
  %v1674 = vshrl.u32 %v1673, 7
  %v1675 = vsub.s32 0, %v1674
  %v1676 = vrot.slane %v1668, %v1675
  %v1678 = vmul.f32 %v1537, %v1676
  %v1679 = vmul.f32 %v1538, %v1676
  %v1680 = vmul.f32 %v1539, %v1676
  %v1681 = vmul.f32 %v1540, %v1676
  %v1682 = vmul.f32 %v1541, %v1676
  %v1683 = vmul.f32 %v1542, %v1676
  %v1684 = vmul.f32 %v1543, %v1676
  %v1685 = vmul.f32 %v1544, %v1676
  %v1686 = vmul.f32 %v1545, %v1676
  %v1687 = vmul.f32 %v1546, %v1676
  %v1688 = vmul.f32 %v1547, %v1676
  %v1689 = vmul.f32 %v1548, %v1676
  %v1690 = vmul.f32 %v1549, %v1676
  %v1691 = vmul.f32 %v1550, %v1676
  %v1692 = vmul.f32 %v1551, %v1676
  %v1693 = vmul.f32 %v1552, %v1676
  %v1695 = vlaneseq
  %v1696 = vshrl.u32 %v1695, 7
  %v1697 = vsub.s32 0, %v1696
  %v1698 = vrot.slane %v1671, %v1697
  %v1700 = vadd.f32 %v1678, %v1698
  %v1701 = vadd.f32 %v1679, %v1698
  %v1702 = vadd.f32 %v1680, %v1698
  %v1703 = vadd.f32 %v1681, %v1698
  %v1704 = vadd.f32 %v1682, %v1698
  %v1705 = vadd.f32 %v1683, %v1698
  %v1706 = vadd.f32 %v1684, %v1698
  %v1707 = vadd.f32 %v1685, %v1698
  %v1708 = vadd.f32 %v1686, %v1698
  %v1709 = vadd.f32 %v1687, %v1698
  %v1710 = vadd.f32 %v1688, %v1698
  %v1711 = vadd.f32 %v1689, %v1698
  %v1712 = vadd.f32 %v1690, %v1698
  %v1713 = vadd.f32 %v1691, %v1698
  %v1714 = vadd.f32 %v1692, %v1698
  %v1715 = vadd.f32 %v1693, %v1698
  %v1716 = vpack.c.bf16 %v1701, %v1700
  %v1717 = vpack.c.bf16 %v1703, %v1702
  %v1718 = vpack.c.bf16 %v1705, %v1704
  %v1719 = vpack.c.bf16 %v1707, %v1706
  %v1720 = vpack.c.bf16 %v1709, %v1708
  %v1721 = vpack.c.bf16 %v1711, %v1710
  %v1722 = vpack.c.bf16 %v1713, %v1712
  %v1723 = vpack.c.bf16 %v1715, %v1714
  %v1732 = vunpack.c.l.b16 %v1716
  %v1733 = vunpack.c.h.b16 %v1716
  %v1734 = vunpack.c.l.b16 %v1717
  %v1735 = vunpack.c.h.b16 %v1717
  %v1736 = vunpack.c.l.b16 %v1718
  %v1737 = vunpack.c.h.b16 %v1718
  %v1738 = vunpack.c.l.b16 %v1719
  %v1739 = vunpack.c.h.b16 %v1719
  %v1740 = vunpack.c.l.b16 %v1720
  %v1741 = vunpack.c.h.b16 %v1720
  %v1742 = vunpack.c.l.b16 %v1721
  %v1743 = vunpack.c.h.b16 %v1721
  %v1744 = vunpack.c.l.b16 %v1722
  %v1745 = vunpack.c.h.b16 %v1722
  %v1746 = vunpack.c.l.b16 %v1723
  %v1747 = vunpack.c.h.b16 %v1723
  %v1748 = vpack.c.b16 %v1732, %v1732
  %v1749 = vpack.c.b16 %v1733, %v1733
  %v1750 = vpack.c.b16 %v1734, %v1734
  %v1751 = vpack.c.b16 %v1735, %v1735
  %v1752 = vpack.c.b16 %v1736, %v1736
  %v1753 = vpack.c.b16 %v1737, %v1737
  %v1754 = vpack.c.b16 %v1738, %v1738
  %v1755 = vpack.c.b16 %v1739, %v1739
  %v1756 = vpack.c.b16 %v1740, %v1740
  %v1757 = vpack.c.b16 %v1741, %v1741
  %v1758 = vpack.c.b16 %v1742, %v1742
  %v1759 = vpack.c.b16 %v1743, %v1743
  %v1760 = vpack.c.b16 %v1744, %v1744
  %v1761 = vpack.c.b16 %v1745, %v1745
  %v1762 = vpack.c.b16 %v1746, %v1746
  %v1763 = vpack.c.b16 %v1747, %v1747
  %1780 = vst [vmem:[%s5] sm:$0xf] %v1748
  %1781 = vst [vmem:[%s5 + $0x4] sm:$0xf] %v1749
  %1782 = vst [vmem:[%s5 + $0x8] sm:$0xf] %v1750
  %1783 = vst [vmem:[%s5 + $0xc] sm:$0xf] %v1751
  %1784 = vst [vmem:[%s5 + $0x10] sm:$0xf] %v1752
  %1785 = vst [vmem:[%s5 + $0x14] sm:$0xf] %v1753
  %1786 = vst [vmem:[%s5 + $0x18] sm:$0xf] %v1754
  %1787 = vst [vmem:[%s5 + $0x1c] sm:$0xf] %v1755
  %1788 = vst [vmem:[%s5 + $0x20] sm:$0xf] %v1756
  %1789 = vst [vmem:[%s5 + $0x24] sm:$0xf] %v1757
  %1790 = vst [vmem:[%s5 + $0x28] sm:$0xf] %v1758
  %1791 = vst [vmem:[%s5 + $0x2c] sm:$0xf] %v1759
  %1792 = vst [vmem:[%s5 + $0x30] sm:$0xf] %v1760
  %1793 = vst [vmem:[%s5 + $0x34] sm:$0xf] %v1761
  %1794 = vst [vmem:[%s5 + $0x38] sm:$0xf] %v1762
  %1795 = vst [vmem:[%s5 + $0x3c] sm:$0xf] %v1763
  // Predicated region
  $region22: #{_net_forward.15} parent=0 // pred_check
    _
  $region23: #{_net_forward.15} parent=0 // pred_check_branch
    %1797 = sbr.rel (0) target = $region25
  $region24: #{_net_forward.15} parent=0 // pred_region
    _
  $region25: #{_net_forward.15} parent=0 // pred_fallthru
    _
  // Predicated region
  $region26: #{_net_forward.15} parent=0 // pred_check
    _
  $region27: #{_net_forward.15} parent=0 // pred_check_branch
    %1799 = sbr.rel (0) target = $region29
  $region28: #{_net_forward.15} parent=0 // pred_region
    _
  $region29: #{_net_forward.15} parent=0 // pred_fallthru
    _

// kernel: _net_forward.17
$region0: #{_net_forward.17}
  #allocation0 [shape = 'u32[]', space=smem, size = 0x4, offset = 0x4, fixed_abs, tag = 'smem constant byte address 0x4 - core index']
  #allocation1 [shape = 'u32[144,128]{1,0:T(1,128)}', space=vmem, size = 0x12000, scoped, tag = 'internal scratch']
  %s0 = inlined_call_operand.vmem [shape: bf16[32,128], index: 0, kind: input, shape index: {}]
  %s1 = inlined_call_operand.vmem [shape: bf16[128,128], index: 1, kind: input, shape index: {}]
  %s2 = inlined_call_operand.vmem [shape: f32[1,128], index: 2, kind: input, shape index: {}]
  %s3 = inlined_call_operand.vmem [shape: bf16[32,128], index: 3, kind: output, shape index: {}]
  %s4 = sld [smem:[#allocation0]]
  $region22: #{_net_forward.17} parent=0
    _
  %s6 = ssub.s32 1, %s4
  %s7 = scalar_select 0, %s6, %s4
  // Predicated region
  $region2: #{_net_forward.17} parent=0 // pred_check
    _
  $region3: #{_net_forward.17} parent=0 // pred_check_branch
    %9 = sbr.rel (0) target = $region5
  $region4: #{_net_forward.17} parent=0 // pred_region
    _
  $region5: #{_net_forward.17} parent=0 // pred_fallthru
    _
  // Predicated region
  $region6: #{_net_forward.17} parent=0 // pred_check
    _
  $region7: #{_net_forward.17} parent=0 // pred_check_branch
    %11 = sbr.rel (0) target = $region9
  $region8: #{_net_forward.17} parent=0 // pred_region
    _
  $region9: #{_net_forward.17} parent=0 // pred_fallthru
    _
  // Predicated region
  $region10: #{_net_forward.17} parent=0 // pred_check
    _
  $region11: #{_net_forward.17} parent=0 // pred_check_branch
    %13 = sbr.rel (0) target = $region13
  $region12: #{_net_forward.17} parent=0 // pred_region
    _
  $region13: #{_net_forward.17} parent=0 // pred_fallthru
    _
  %v15 = vld [vmem:[%s0] sm:$0xf]
  %v16 = vld [vmem:[%s0 + $0x4] sm:$0xf]
  %v17 = vld [vmem:[%s0 + $0x8] sm:$0xf]
  %v18 = vld [vmem:[%s0 + $0xc] sm:$0xf]
  %v19 = vld [vmem:[%s1] sm:$0xf]
  %v20 = vld [vmem:[%s1 + $0x4] sm:$0xf]
  %v21 = vld [vmem:[%s1 + $0x8] sm:$0xf]
  %v22 = vld [vmem:[%s1 + $0xc] sm:$0xf]
  %v23 = vld [vmem:[%s1 + $0x10] sm:$0xf]
  %v24 = vld [vmem:[%s1 + $0x14] sm:$0xf]
  %v25 = vld [vmem:[%s1 + $0x18] sm:$0xf]
  %v26 = vld [vmem:[%s1 + $0x1c] sm:$0xf]
  %v27 = vld [vmem:[%s1 + $0x20] sm:$0xf]
  %v28 = vld [vmem:[%s1 + $0x24] sm:$0xf]
  %v29 = vld [vmem:[%s1 + $0x28] sm:$0xf]
  %v30 = vld [vmem:[%s1 + $0x2c] sm:$0xf]
  %v31 = vld [vmem:[%s1 + $0x30] sm:$0xf]
  %v32 = vld [vmem:[%s1 + $0x34] sm:$0xf]
  %v33 = vld [vmem:[%s1 + $0x38] sm:$0xf]
  %v34 = vld [vmem:[%s1 + $0x3c] sm:$0xf]
  %v35 = vld [vmem:[%s2] sm:$0x1]
  %v37 = vlaneseq
  %v38 = vshrl.u32 %v37, 7
  %v39 = vsub.s32 0, %v38
  %v40 = vrot.slane %v35, %v39
  %v46 = vunpack.c.l.b16 %v15
  %v47 = vunpack.c.l.b16 %v16
  %v48 = vunpack.c.l.b16 %v17
  %v49 = vunpack.c.l.b16 %v18
  %v50 = vpack.c.b16 %v47, %v46
  %v51 = vpack.c.b16 %v49, %v48
  %v70 = vunpack.c.l.b16 %v19
  %v71 = vunpack.c.l.b16 %v20
  %v72 = vunpack.c.l.b16 %v21
  %v73 = vunpack.c.l.b16 %v22
  %v74 = vunpack.c.l.b16 %v23
  %v75 = vunpack.c.l.b16 %v24
  %v76 = vunpack.c.l.b16 %v25
  %v77 = vunpack.c.l.b16 %v26
  %v78 = vunpack.c.l.b16 %v27
  %v79 = vunpack.c.l.b16 %v28
  %v80 = vunpack.c.l.b16 %v29
  %v81 = vunpack.c.l.b16 %v30
  %v82 = vunpack.c.l.b16 %v31
  %v83 = vunpack.c.l.b16 %v32
  %v84 = vunpack.c.l.b16 %v33
  %v85 = vunpack.c.l.b16 %v34
  %v86 = vpack.c.b16 %v71, %v70
  %v87 = vpack.c.b16 %v73, %v72
  %v88 = vpack.c.b16 %v75, %v74
  %v89 = vpack.c.b16 %v77, %v76
  %v90 = vpack.c.b16 %v79, %v78
  %v91 = vpack.c.b16 %v81, %v80
  %v92 = vpack.c.b16 %v83, %v82
  %v93 = vpack.c.b16 %v85, %v84
  %102 = vmatprep.subr.bf16.mxu0 0
  %103 = vmatpush1.bf16.msra.mxu0 %v86
  %104 = vmatprep.subr.bf16.mxu0 0
  %105 = vmatpush1.bf16.msra.mxu0 %v87
  %106 = vmatprep.subr.bf16.mxu0 0
  %107 = vmatpush1.bf16.msra.mxu0 %v88
  %108 = vmatprep.subr.bf16.mxu0 0
  %109 = vmatpush1.bf16.msra.mxu0 %v89
  %110 = vmatprep.subr.bf16.mxu0 0
  %111 = vmatpush1.bf16.msra.mxu0 %v90
  %112 = vmatprep.subr.bf16.mxu0 0
  %113 = vmatpush1.bf16.msra.mxu0 %v91
  %114 = vmatprep.subr.bf16.mxu0 0
  %115 = vmatpush1.bf16.msra.mxu0 %v92
  %116 = vmatprep.subr.bf16.mxu0 0
  %117 = vmatpush1.bf16.msra.mxu0 %v93
  %118 = vmatprep.subr.bf16.mxu0 0
  %119 = vmatpush1.bf16.msra.mxu0 0
  %120 = vmatprep.subr.bf16.mxu0 0
  %121 = vmatpush1.bf16.msra.mxu0 0
  %122 = vmatprep.subr.bf16.mxu0 0
  %123 = vmatpush1.bf16.msra.mxu0 0
  %124 = vmatprep.subr.bf16.mxu0 0
  %125 = vmatpush1.bf16.msra.mxu0 0
  %126 = vmatprep.subr.bf16.mxu0 0
  %127 = vmatpush1.bf16.msra.mxu0 0
  %128 = vmatprep.subr.bf16.mxu0 0
  %129 = vmatpush1.bf16.msra.mxu0 0
  %130 = vmatprep.subr.bf16.mxu0 0
  %131 = vmatpush1.bf16.msra.mxu0 0
  %132 = vmatprep.subr.bf16.mxu0 0
  %133 = vmatpush1.bf16.msra.mxu0 0
  %134 = vmatprep.mubr.bf16.mxu0 0
  %135 = vmatmul.mubr.bf16.gmra.mrb[0].mxu0 %v50
  %v136 = vpop.f32.mrb[0].mxu0
  %v137 = vadd.f32 %v40, %v136
  %v138 = vpop.f32.mrb[0].mxu0
  %v139 = vpop.f32.mrb[0].mxu0
  %v140 = vadd.f32 %v40, %v139
  %v141 = vpop.f32.mrb[0].mxu0
  %142 = vmatprep.mubr.bf16.mxu0 0
  %143 = vmatmul.mubr.bf16.gmra.mrb[0].mxu0 %v51
  %v144 = vpop.f32.mrb[0].mxu0
  %v145 = vadd.f32 %v40, %v144
  %v146 = vpop.f32.mrb[0].mxu0
  %v147 = vpop.f32.mrb[0].mxu0
  %v148 = vadd.f32 %v40, %v147
  %v149 = vpop.f32.mrb[0].mxu0
  %150 = vdwg.mxu0
  %v151 = vpack.c.bf16 %v140, %v137
  %v152 = vpack.c.bf16 %v148, %v145
  %v155 = vunpack.c.l.b16 %v151
  %v156 = vunpack.c.h.b16 %v151
  %v157 = vunpack.c.l.b16 %v152
  %v158 = vunpack.c.h.b16 %v152
  %v159 = vpack.c.b16 %v155, %v155
  %v160 = vpack.c.b16 %v156, %v156
  %v161 = vpack.c.b16 %v157, %v157
  %v162 = vpack.c.b16 %v158, %v158
  %167 = vst [vmem:[%s3] sm:$0xf] %v159
  %168 = vst [vmem:[%s3 + $0x4] sm:$0xf] %v160
  %169 = vst [vmem:[%s3 + $0x8] sm:$0xf] %v161
  %170 = vst [vmem:[%s3 + $0xc] sm:$0xf] %v162
  // Predicated region
  $region14: #{_net_forward.17} parent=0 // pred_check
    _
  $region15: #{_net_forward.17} parent=0 // pred_check_branch
    %172 = sbr.rel (0) target = $region17
  $region16: #{_net_forward.17} parent=0 // pred_region
    _
  $region17: #{_net_forward.17} parent=0 // pred_fallthru
    _
  // Predicated region
  $region18: #{_net_forward.17} parent=0 // pred_check
    _
  $region19: #{_net_forward.17} parent=0 // pred_check_branch
    %174 = sbr.rel (0) target = $region21
  $region20: #{_net_forward.17} parent=0 // pred_region
    _
  $region21: #{_net_forward.17} parent=0 // pred_fallthru
    _

// kernel: _net_forward.16
$region0: #{_net_forward.16}
  #allocation0 [shape = 'u32[]', space=smem, size = 0x4, offset = 0x4, fixed_abs, tag = 'smem constant byte address 0x4 - core index']
  #allocation1 [shape = 'u32[144,128]{1,0:T(1,128)}', space=vmem, size = 0x12000, scoped, tag = 'internal scratch']
  %s0 = inlined_call_operand.vmem [shape: bf16[32,1152], index: 0, kind: input, shape index: {}]
  %s1 = inlined_call_operand.vmem [shape: bf16[1152,128], index: 1, kind: input, shape index: {}]
  %s2 = inlined_call_operand.vmem [shape: f32[1,128], index: 2, kind: input, shape index: {}]
  %s3 = inlined_call_operand.vmem [shape: f32[1,128], index: 3, kind: input, shape index: {}]
  %s4 = inlined_call_operand.vmem [shape: f32[1,128], index: 4, kind: input, shape index: {}]
  %s5 = inlined_call_operand.vmem [shape: bf16[32,128], index: 5, kind: output, shape index: {}]
  %s6 = sld [smem:[#allocation0]]
  $region30: #{_net_forward.16} parent=0
    _
  %s8 = ssub.s32 1, %s6
  %s9 = scalar_select 0, %s8, %s6
  // Predicated region
  $region2: #{_net_forward.16} parent=0 // pred_check
    _
  $region3: #{_net_forward.16} parent=0 // pred_check_branch
    %11 = sbr.rel (0) target = $region5
  $region4: #{_net_forward.16} parent=0 // pred_region
    _
  $region5: #{_net_forward.16} parent=0 // pred_fallthru
    _
  // Predicated region
  $region6: #{_net_forward.16} parent=0 // pred_check
    _
  $region7: #{_net_forward.16} parent=0 // pred_check_branch
    %13 = sbr.rel (0) target = $region9
  $region8: #{_net_forward.16} parent=0 // pred_region
    _
  $region9: #{_net_forward.16} parent=0 // pred_fallthru
    _
  // Predicated region
  $region10: #{_net_forward.16} parent=0 // pred_check
    _
  $region11: #{_net_forward.16} parent=0 // pred_check_branch
    %15 = sbr.rel (0) target = $region13
  $region12: #{_net_forward.16} parent=0 // pred_region
    _
  $region13: #{_net_forward.16} parent=0 // pred_fallthru
    _
  // Predicated region
  $region14: #{_net_forward.16} parent=0 // pred_check
    _
  $region15: #{_net_forward.16} parent=0 // pred_check_branch
    %17 = sbr.rel (0) target = $region17
  $region16: #{_net_forward.16} parent=0 // pred_region
    _
  $region17: #{_net_forward.16} parent=0 // pred_fallthru
    _
  // Predicated region
  $region18: #{_net_forward.16} parent=0 // pred_check
    _
  $region19: #{_net_forward.16} parent=0 // pred_check_branch
    %19 = sbr.rel (0) target = $region21
  $region20: #{_net_forward.16} parent=0 // pred_region
    _
  $region21: #{_net_forward.16} parent=0 // pred_fallthru
    _
  %v21 = vld [vmem:[%s0] sm:$0xff]
  %v22 = vld [vmem:[%s0 + $0x8] sm:$0xff]
  %v23 = vld [vmem:[%s0 + $0x10] sm:$0xff]
  %v24 = vld [vmem:[%s0 + $0x18] sm:$0xff]
  %v25 = vld [vmem:[%s0 + $0x20] sm:$0xf]
  %v26 = vld [vmem:[%s0 + $0x24] sm:$0xff]
  %v27 = vld [vmem:[%s0 + $0x2c] sm:$0xff]
  %v28 = vld [vmem:[%s0 + $0x34] sm:$0xff]
  %v29 = vld [vmem:[%s0 + $0x3c] sm:$0xff]
  %v30 = vld [vmem:[%s0 + $0x44] sm:$0xf]
  %v31 = vld [vmem:[%s0 + $0x48] sm:$0xff]
  %v32 = vld [vmem:[%s0 + $0x50] sm:$0xff]
  %v33 = vld [vmem:[%s0 + $0x58] sm:$0xff]
  %v34 = vld [vmem:[%s0 + $0x60] sm:$0xff]
  %v35 = vld [vmem:[%s0 + $0x68] sm:$0xf]
  %v36 = vld [vmem:[%s0 + $0x6c] sm:$0xff]
  %v37 = vld [vmem:[%s0 + $0x74] sm:$0xff]
  %v38 = vld [vmem:[%s0 + $0x7c] sm:$0xff]
  %v39 = vld [vmem:[%s0 + $0x84] sm:$0xff]
  %v40 = vld [vmem:[%s0 + $0x8c] sm:$0xf]
  %v41 = vld [vmem:[%s1] sm:$0xf]
  %v42 = vld [vmem:[%s1 + $0x4] sm:$0xf]
  %v43 = vld [vmem:[%s1 + $0x8] sm:$0xf]
  %v44 = vld [vmem:[%s1 + $0xc] sm:$0xf]
  %v45 = vld [vmem:[%s1 + $0x10] sm:$0xf]
  %v46 = vld [vmem:[%s1 + $0x14] sm:$0xf]
  %v47 = vld [vmem:[%s1 + $0x18] sm:$0xf]
  %v48 = vld [vmem:[%s1 + $0x1c] sm:$0xf]
  %v49 = vld [vmem:[%s1 + $0x20] sm:$0xf]
  %v50 = vld [vmem:[%s1 + $0x24] sm:$0xf]
  %v51 = vld [vmem:[%s1 + $0x28] sm:$0xf]
  %v52 = vld [vmem:[%s1 + $0x2c] sm:$0xf]
  %v53 = vld [vmem:[%s1 + $0x30] sm:$0xf]
  %v54 = vld [vmem:[%s1 + $0x34] sm:$0xf]
  %v55 = vld [vmem:[%s1 + $0x38] sm:$0xf]
  %v56 = vld [vmem:[%s1 + $0x3c] sm:$0xf]
  %v57 = vld [vmem:[%s1 + $0x40] sm:$0xf]
  %v58 = vld [vmem:[%s1 + $0x44] sm:$0xf]
  %v59 = vld [vmem:[%s1 + $0x48] sm:$0xf]
  %v60 = vld [vmem:[%s1 + $0x4c] sm:$0xf]
  %v61 = vld [vmem:[%s1 + $0x50] sm:$0xf]
  %v62 = vld [vmem:[%s1 + $0x54] sm:$0xf]
  %v63 = vld [vmem:[%s1 + $0x58] sm:$0xf]
  %v64 = vld [vmem:[%s1 + $0x5c] sm:$0xf]
  %v65 = vld [vmem:[%s1 + $0x60] sm:$0xf]
  %v66 = vld [vmem:[%s1 + $0x64] sm:$0xf]
  %v67 = vld [vmem:[%s1 + $0x68] sm:$0xf]
  %v68 = vld [vmem:[%s1 + $0x6c] sm:$0xf]
  %v69 = vld [vmem:[%s1 + $0x70] sm:$0xf]
  %v70 = vld [vmem:[%s1 + $0x74] sm:$0xf]
  %v71 = vld [vmem:[%s1 + $0x78] sm:$0xf]
  %v72 = vld [vmem:[%s1 + $0x7c] sm:$0xf]
  %v73 = vld [vmem:[%s1 + $0x80] sm:$0xf]
  %v74 = vld [vmem:[%s1 + $0x84] sm:$0xf]
  %v75 = vld [vmem:[%s1 + $0x88] sm:$0xf]
  %v76 = vld [vmem:[%s1 + $0x8c] sm:$0xf]
  %v77 = vld [vmem:[%s1 + $0x90] sm:$0xf]
  %v78 = vld [vmem:[%s1 + $0x94] sm:$0xf]
  %v79 = vld [vmem:[%s1 + $0x98] sm:$0xf]
  %v80 = vld [vmem:[%s1 + $0x9c] sm:$0xf]
  %v81 = vld [vmem:[%s1 + $0xa0] sm:$0xf]
  %v82 = vld [vmem:[%s1 + $0xa4] sm:$0xf]
  %v83 = vld [vmem:[%s1 + $0xa8] sm:$0xf]
  %v84 = vld [vmem:[%s1 + $0xac] sm:$0xf]
  %v85 = vld [vmem:[%s1 + $0xb0] sm:$0xf]
  %v86 = vld [vmem:[%s1 + $0xb4] sm:$0xf]
  %v87 = vld [vmem:[%s1 + $0xb8] sm:$0xf]
  %v88 = vld [vmem:[%s1 + $0xbc] sm:$0xf]
  %v89 = vld [vmem:[%s1 + $0xc0] sm:$0xf]
  %v90 = vld [vmem:[%s1 + $0xc4] sm:$0xf]
  %v91 = vld [vmem:[%s1 + $0xc8] sm:$0xf]
  %v92 = vld [vmem:[%s1 + $0xcc] sm:$0xf]
  %v93 = vld [vmem:[%s1 + $0xd0] sm:$0xf]
  %v94 = vld [vmem:[%s1 + $0xd4] sm:$0xf]
  %v95 = vld [vmem:[%s1 + $0xd8] sm:$0xf]
  %v96 = vld [vmem:[%s1 + $0xdc] sm:$0xf]
  %v97 = vld [vmem:[%s1 + $0xe0] sm:$0xf]
  %v98 = vld [vmem:[%s1 + $0xe4] sm:$0xf]
  %v99 = vld [vmem:[%s1 + $0xe8] sm:$0xf]
  %v100 = vld [vmem:[%s1 + $0xec] sm:$0xf]
  %v101 = vld [vmem:[%s1 + $0xf0] sm:$0xf]
  %v102 = vld [vmem:[%s1 + $0xf4] sm:$0xf]
  %v103 = vld [vmem:[%s1 + $0xf8] sm:$0xf]
  %v104 = vld [vmem:[%s1 + $0xfc] sm:$0xf]
  %v105 = vld [vmem:[%s1 + $0x100] sm:$0xf]
  %v106 = vld [vmem:[%s1 + $0x104] sm:$0xf]
  %v107 = vld [vmem:[%s1 + $0x108] sm:$0xf]
  %v108 = vld [vmem:[%s1 + $0x10c] sm:$0xf]
  %v109 = vld [vmem:[%s1 + $0x110] sm:$0xf]
  %v110 = vld [vmem:[%s1 + $0x114] sm:$0xf]
  %v111 = vld [vmem:[%s1 + $0x118] sm:$0xf]
  %v112 = vld [vmem:[%s1 + $0x11c] sm:$0xf]
  %v113 = vld [vmem:[%s1 + $0x120] sm:$0xf]
  %v114 = vld [vmem:[%s1 + $0x124] sm:$0xf]
  %v115 = vld [vmem:[%s1 + $0x128] sm:$0xf]
  %v116 = vld [vmem:[%s1 + $0x12c] sm:$0xf]
  %v117 = vld [vmem:[%s1 + $0x130] sm:$0xf]
  %v118 = vld [vmem:[%s1 + $0x134] sm:$0xf]
  %v119 = vld [vmem:[%s1 + $0x138] sm:$0xf]
  %v120 = vld [vmem:[%s1 + $0x13c] sm:$0xf]
  %v121 = vld [vmem:[%s1 + $0x140] sm:$0xf]
  %v122 = vld [vmem:[%s1 + $0x144] sm:$0xf]
  %v123 = vld [vmem:[%s1 + $0x148] sm:$0xf]
  %v124 = vld [vmem:[%s1 + $0x14c] sm:$0xf]
  %v125 = vld [vmem:[%s1 + $0x150] sm:$0xf]
  %v126 = vld [vmem:[%s1 + $0x154] sm:$0xf]
  %v127 = vld [vmem:[%s1 + $0x158] sm:$0xf]
  %v128 = vld [vmem:[%s1 + $0x15c] sm:$0xf]
  %v129 = vld [vmem:[%s1 + $0x160] sm:$0xf]
  %v130 = vld [vmem:[%s1 + $0x164] sm:$0xf]
  %v131 = vld [vmem:[%s1 + $0x168] sm:$0xf]
  %v132 = vld [vmem:[%s1 + $0x16c] sm:$0xf]
  %v133 = vld [vmem:[%s1 + $0x170] sm:$0xf]
  %v134 = vld [vmem:[%s1 + $0x174] sm:$0xf]
  %v135 = vld [vmem:[%s1 + $0x178] sm:$0xf]
  %v136 = vld [vmem:[%s1 + $0x17c] sm:$0xf]
  %v137 = vld [vmem:[%s1 + $0x180] sm:$0xf]
  %v138 = vld [vmem:[%s1 + $0x184] sm:$0xf]
  %v139 = vld [vmem:[%s1 + $0x188] sm:$0xf]
  %v140 = vld [vmem:[%s1 + $0x18c] sm:$0xf]
  %v141 = vld [vmem:[%s1 + $0x190] sm:$0xf]
  %v142 = vld [vmem:[%s1 + $0x194] sm:$0xf]
  %v143 = vld [vmem:[%s1 + $0x198] sm:$0xf]
  %v144 = vld [vmem:[%s1 + $0x19c] sm:$0xf]
  %v145 = vld [vmem:[%s1 + $0x1a0] sm:$0xf]
  %v146 = vld [vmem:[%s1 + $0x1a4] sm:$0xf]
  %v147 = vld [vmem:[%s1 + $0x1a8] sm:$0xf]
  %v148 = vld [vmem:[%s1 + $0x1ac] sm:$0xf]
  %v149 = vld [vmem:[%s1 + $0x1b0] sm:$0xf]
  %v150 = vld [vmem:[%s1 + $0x1b4] sm:$0xf]
  %v151 = vld [vmem:[%s1 + $0x1b8] sm:$0xf]
  %v152 = vld [vmem:[%s1 + $0x1bc] sm:$0xf]
  %v153 = vld [vmem:[%s1 + $0x1c0] sm:$0xf]
  %v154 = vld [vmem:[%s1 + $0x1c4] sm:$0xf]
  %v155 = vld [vmem:[%s1 + $0x1c8] sm:$0xf]
  %v156 = vld [vmem:[%s1 + $0x1cc] sm:$0xf]
  %v157 = vld [vmem:[%s1 + $0x1d0] sm:$0xf]
  %v158 = vld [vmem:[%s1 + $0x1d4] sm:$0xf]
  %v159 = vld [vmem:[%s1 + $0x1d8] sm:$0xf]
  %v160 = vld [vmem:[%s1 + $0x1dc] sm:$0xf]
  %v161 = vld [vmem:[%s1 + $0x1e0] sm:$0xf]
  %v162 = vld [vmem:[%s1 + $0x1e4] sm:$0xf]
  %v163 = vld [vmem:[%s1 + $0x1e8] sm:$0xf]
  %v164 = vld [vmem:[%s1 + $0x1ec] sm:$0xf]
  %v165 = vld [vmem:[%s1 + $0x1f0] sm:$0xf]
  %v166 = vld [vmem:[%s1 + $0x1f4] sm:$0xf]
  %v167 = vld [vmem:[%s1 + $0x1f8] sm:$0xf]
  %v168 = vld [vmem:[%s1 + $0x1fc] sm:$0xf]
  %v169 = vld [vmem:[%s1 + $0x200] sm:$0xf]
  %v170 = vld [vmem:[%s1 + $0x204] sm:$0xf]
  %v171 = vld [vmem:[%s1 + $0x208] sm:$0xf]
  %v172 = vld [vmem:[%s1 + $0x20c] sm:$0xf]
  %v173 = vld [vmem:[%s1 + $0x210] sm:$0xf]
  %v174 = vld [vmem:[%s1 + $0x214] sm:$0xf]
  %v175 = vld [vmem:[%s1 + $0x218] sm:$0xf]
  %v176 = vld [vmem:[%s1 + $0x21c] sm:$0xf]
  %v177 = vld [vmem:[%s1 + $0x220] sm:$0xf]
  %v178 = vld [vmem:[%s1 + $0x224] sm:$0xf]
  %v179 = vld [vmem:[%s1 + $0x228] sm:$0xf]
  %v180 = vld [vmem:[%s1 + $0x22c] sm:$0xf]
  %v181 = vld [vmem:[%s1 + $0x230] sm:$0xf]
  %v182 = vld [vmem:[%s1 + $0x234] sm:$0xf]
  %v183 = vld [vmem:[%s1 + $0x238] sm:$0xf]
  %v184 = vld [vmem:[%s1 + $0x23c] sm:$0xf]
  %v185 = vld [vmem:[%s2] sm:$0x1]
  %v187 = vlaneseq
  %v188 = vshrl.u32 %v187, 7
  %v189 = vsub.s32 0, %v188
  %v190 = vrot.slane %v185, %v189
  %v212 = vunpack.c.l.b16 %v21
  %v213 = vunpack.c.h.b16 %v21
  %v214 = vunpack.c.l.b16 %v22
  %v215 = vunpack.c.h.b16 %v22
  %v216 = vunpack.c.l.b16 %v23
  %v217 = vunpack.c.h.b16 %v23
  %v218 = vunpack.c.l.b16 %v24
  %v219 = vunpack.c.h.b16 %v24
  %v220 = vunpack.c.l.b16 %v25
  %v221 = vunpack.c.l.b16 %v26
  %v222 = vunpack.c.h.b16 %v26
  %v223 = vunpack.c.l.b16 %v27
  %v224 = vunpack.c.h.b16 %v27
  %v225 = vunpack.c.l.b16 %v28
  %v226 = vunpack.c.h.b16 %v28
  %v227 = vunpack.c.l.b16 %v29
  %v228 = vunpack.c.h.b16 %v29
  %v229 = vunpack.c.l.b16 %v30
  %v230 = vunpack.c.l.b16 %v31
  %v231 = vunpack.c.h.b16 %v31
  %v232 = vunpack.c.l.b16 %v32
  %v233 = vunpack.c.h.b16 %v32
  %v234 = vunpack.c.l.b16 %v33
  %v235 = vunpack.c.h.b16 %v33
  %v236 = vunpack.c.l.b16 %v34
  %v237 = vunpack.c.h.b16 %v34
  %v238 = vunpack.c.l.b16 %v35
  %v239 = vunpack.c.l.b16 %v36
  %v240 = vunpack.c.h.b16 %v36
  %v241 = vunpack.c.l.b16 %v37
  %v242 = vunpack.c.h.b16 %v37
  %v243 = vunpack.c.l.b16 %v38
  %v244 = vunpack.c.h.b16 %v38
  %v245 = vunpack.c.l.b16 %v39
  %v246 = vunpack.c.h.b16 %v39
  %v247 = vunpack.c.l.b16 %v40
  %v248 = vpack.c.b16 %v221, %v212
  %v249 = vpack.c.b16 %v222, %v213
  %v250 = vpack.c.b16 %v223, %v214
  %v251 = vpack.c.b16 %v224, %v215
  %v252 = vpack.c.b16 %v225, %v216
  %v253 = vpack.c.b16 %v226, %v217
  %v254 = vpack.c.b16 %v227, %v218
  %v255 = vpack.c.b16 %v228, %v219
  %v256 = vpack.c.b16 %v229, %v220
  %v257 = vpack.c.b16 %v239, %v230
  %v258 = vpack.c.b16 %v240, %v231
  %v259 = vpack.c.b16 %v241, %v232
  %v260 = vpack.c.b16 %v242, %v233
  %v261 = vpack.c.b16 %v243, %v234
  %v262 = vpack.c.b16 %v244, %v235
  %v263 = vpack.c.b16 %v245, %v236
  %v264 = vpack.c.b16 %v246, %v237
  %v265 = vpack.c.b16 %v247, %v238
  %v428 = vunpack.c.l.b16 %v41
  %v429 = vunpack.c.l.b16 %v42
  %v430 = vunpack.c.l.b16 %v43
  %v431 = vunpack.c.l.b16 %v44
  %v432 = vunpack.c.l.b16 %v45
  %v433 = vunpack.c.l.b16 %v46
  %v434 = vunpack.c.l.b16 %v47
  %v435 = vunpack.c.l.b16 %v48
  %v436 = vunpack.c.l.b16 %v49
  %v437 = vunpack.c.l.b16 %v50
  %v438 = vunpack.c.l.b16 %v51
  %v439 = vunpack.c.l.b16 %v52
  %v440 = vunpack.c.l.b16 %v53
  %v441 = vunpack.c.l.b16 %v54
  %v442 = vunpack.c.l.b16 %v55
  %v443 = vunpack.c.l.b16 %v56
  %v444 = vunpack.c.l.b16 %v57
  %v445 = vunpack.c.l.b16 %v58
  %v446 = vunpack.c.l.b16 %v59
  %v447 = vunpack.c.l.b16 %v60
  %v448 = vunpack.c.l.b16 %v61
  %v449 = vunpack.c.l.b16 %v62
  %v450 = vunpack.c.l.b16 %v63
  %v451 = vunpack.c.l.b16 %v64
  %v452 = vunpack.c.l.b16 %v65
  %v453 = vunpack.c.l.b16 %v66
  %v454 = vunpack.c.l.b16 %v67
  %v455 = vunpack.c.l.b16 %v68
  %v456 = vunpack.c.l.b16 %v69
  %v457 = vunpack.c.l.b16 %v70
  %v458 = vunpack.c.l.b16 %v71
  %v459 = vunpack.c.l.b16 %v72
  %v460 = vunpack.c.l.b16 %v73
  %v461 = vunpack.c.l.b16 %v74
  %v462 = vunpack.c.l.b16 %v75
  %v463 = vunpack.c.l.b16 %v76
  %v464 = vunpack.c.l.b16 %v77
  %v465 = vunpack.c.l.b16 %v78
  %v466 = vunpack.c.l.b16 %v79
  %v467 = vunpack.c.l.b16 %v80
  %v468 = vunpack.c.l.b16 %v81
  %v469 = vunpack.c.l.b16 %v82
  %v470 = vunpack.c.l.b16 %v83
  %v471 = vunpack.c.l.b16 %v84
  %v472 = vunpack.c.l.b16 %v85
  %v473 = vunpack.c.l.b16 %v86
  %v474 = vunpack.c.l.b16 %v87
  %v475 = vunpack.c.l.b16 %v88
  %v476 = vunpack.c.l.b16 %v89
  %v477 = vunpack.c.l.b16 %v90
  %v478 = vunpack.c.l.b16 %v91
  %v479 = vunpack.c.l.b16 %v92
  %v480 = vunpack.c.l.b16 %v93
  %v481 = vunpack.c.l.b16 %v94
  %v482 = vunpack.c.l.b16 %v95
  %v483 = vunpack.c.l.b16 %v96
  %v484 = vunpack.c.l.b16 %v97
  %v485 = vunpack.c.l.b16 %v98
  %v486 = vunpack.c.l.b16 %v99
  %v487 = vunpack.c.l.b16 %v100
  %v488 = vunpack.c.l.b16 %v101
  %v489 = vunpack.c.l.b16 %v102
  %v490 = vunpack.c.l.b16 %v103
  %v491 = vunpack.c.l.b16 %v104
  %v492 = vunpack.c.l.b16 %v105
  %v493 = vunpack.c.l.b16 %v106
  %v494 = vunpack.c.l.b16 %v107
  %v495 = vunpack.c.l.b16 %v108
  %v496 = vunpack.c.l.b16 %v109
  %v497 = vunpack.c.l.b16 %v110
  %v498 = vunpack.c.l.b16 %v111
  %v499 = vunpack.c.l.b16 %v112
  %v500 = vunpack.c.l.b16 %v113
  %v501 = vunpack.c.l.b16 %v114
  %v502 = vunpack.c.l.b16 %v115
  %v503 = vunpack.c.l.b16 %v116
  %v504 = vunpack.c.l.b16 %v117
  %v505 = vunpack.c.l.b16 %v118
  %v506 = vunpack.c.l.b16 %v119
  %v507 = vunpack.c.l.b16 %v120
  %v508 = vunpack.c.l.b16 %v121
  %v509 = vunpack.c.l.b16 %v122
  %v510 = vunpack.c.l.b16 %v123
  %v511 = vunpack.c.l.b16 %v124
  %v512 = vunpack.c.l.b16 %v125
  %v513 = vunpack.c.l.b16 %v126
  %v514 = vunpack.c.l.b16 %v127
  %v515 = vunpack.c.l.b16 %v128
  %v516 = vunpack.c.l.b16 %v129
  %v517 = vunpack.c.l.b16 %v130
  %v518 = vunpack.c.l.b16 %v131
  %v519 = vunpack.c.l.b16 %v132
  %v520 = vunpack.c.l.b16 %v133
  %v521 = vunpack.c.l.b16 %v134
  %v522 = vunpack.c.l.b16 %v135
  %v523 = vunpack.c.l.b16 %v136
  %v524 = vunpack.c.l.b16 %v137
  %v525 = vunpack.c.l.b16 %v138
  %v526 = vunpack.c.l.b16 %v139
  %v527 = vunpack.c.l.b16 %v140
  %v528 = vunpack.c.l.b16 %v141
  %v529 = vunpack.c.l.b16 %v142
  %v530 = vunpack.c.l.b16 %v143
  %v531 = vunpack.c.l.b16 %v144
  %v532 = vunpack.c.l.b16 %v145
  %v533 = vunpack.c.l.b16 %v146
  %v534 = vunpack.c.l.b16 %v147
  %v535 = vunpack.c.l.b16 %v148
  %v536 = vunpack.c.l.b16 %v149
  %v537 = vunpack.c.l.b16 %v150
  %v538 = vunpack.c.l.b16 %v151
  %v539 = vunpack.c.l.b16 %v152
  %v540 = vunpack.c.l.b16 %v153
  %v541 = vunpack.c.l.b16 %v154
  %v542 = vunpack.c.l.b16 %v155
  %v543 = vunpack.c.l.b16 %v156
  %v544 = vunpack.c.l.b16 %v157
  %v545 = vunpack.c.l.b16 %v158
  %v546 = vunpack.c.l.b16 %v159
  %v547 = vunpack.c.l.b16 %v160
  %v548 = vunpack.c.l.b16 %v161
  %v549 = vunpack.c.l.b16 %v162
  %v550 = vunpack.c.l.b16 %v163
  %v551 = vunpack.c.l.b16 %v164
  %v552 = vunpack.c.l.b16 %v165
  %v553 = vunpack.c.l.b16 %v166
  %v554 = vunpack.c.l.b16 %v167
  %v555 = vunpack.c.l.b16 %v168
  %v556 = vunpack.c.l.b16 %v169
  %v557 = vunpack.c.l.b16 %v170
  %v558 = vunpack.c.l.b16 %v171
  %v559 = vunpack.c.l.b16 %v172
  %v560 = vunpack.c.l.b16 %v173
  %v561 = vunpack.c.l.b16 %v174
  %v562 = vunpack.c.l.b16 %v175
  %v563 = vunpack.c.l.b16 %v176
  %v564 = vunpack.c.l.b16 %v177
  %v565 = vunpack.c.l.b16 %v178
  %v566 = vunpack.c.l.b16 %v179
  %v567 = vunpack.c.l.b16 %v180
  %v568 = vunpack.c.l.b16 %v181
  %v569 = vunpack.c.l.b16 %v182
  %v570 = vunpack.c.l.b16 %v183
  %v571 = vunpack.c.l.b16 %v184
  %v572 = vpack.c.b16 %v429, %v428
  %v573 = vpack.c.b16 %v431, %v430
  %v574 = vpack.c.b16 %v433, %v432
  %v575 = vpack.c.b16 %v435, %v434
  %v576 = vpack.c.b16 %v437, %v436
  %v577 = vpack.c.b16 %v439, %v438
  %v578 = vpack.c.b16 %v441, %v440
  %v579 = vpack.c.b16 %v443, %v442
  %v580 = vpack.c.b16 %v445, %v444
  %v581 = vpack.c.b16 %v447, %v446
  %v582 = vpack.c.b16 %v449, %v448
  %v583 = vpack.c.b16 %v451, %v450
  %v584 = vpack.c.b16 %v453, %v452
  %v585 = vpack.c.b16 %v455, %v454
  %v586 = vpack.c.b16 %v457, %v456
  %v587 = vpack.c.b16 %v459, %v458
  %v588 = vpack.c.b16 %v461, %v460
  %v589 = vpack.c.b16 %v463, %v462
  %v590 = vpack.c.b16 %v465, %v464
  %v591 = vpack.c.b16 %v467, %v466
  %v592 = vpack.c.b16 %v469, %v468
  %v593 = vpack.c.b16 %v471, %v470
  %v594 = vpack.c.b16 %v473, %v472
  %v595 = vpack.c.b16 %v475, %v474
  %v596 = vpack.c.b16 %v477, %v476
  %v597 = vpack.c.b16 %v479, %v478
  %v598 = vpack.c.b16 %v481, %v480
  %v599 = vpack.c.b16 %v483, %v482
  %v600 = vpack.c.b16 %v485, %v484
  %v601 = vpack.c.b16 %v487, %v486
  %v602 = vpack.c.b16 %v489, %v488
  %v603 = vpack.c.b16 %v491, %v490
  %v604 = vpack.c.b16 %v493, %v492
  %v605 = vpack.c.b16 %v495, %v494
  %v606 = vpack.c.b16 %v497, %v496
  %v607 = vpack.c.b16 %v499, %v498
  %v608 = vpack.c.b16 %v501, %v500
  %v609 = vpack.c.b16 %v503, %v502
  %v610 = vpack.c.b16 %v505, %v504
  %v611 = vpack.c.b16 %v507, %v506
  %v612 = vpack.c.b16 %v509, %v508
  %v613 = vpack.c.b16 %v511, %v510
  %v614 = vpack.c.b16 %v513, %v512
  %v615 = vpack.c.b16 %v515, %v514
  %v616 = vpack.c.b16 %v517, %v516
  %v617 = vpack.c.b16 %v519, %v518
  %v618 = vpack.c.b16 %v521, %v520
  %v619 = vpack.c.b16 %v523, %v522
  %v620 = vpack.c.b16 %v525, %v524
  %v621 = vpack.c.b16 %v527, %v526
  %v622 = vpack.c.b16 %v529, %v528
  %v623 = vpack.c.b16 %v531, %v530
  %v624 = vpack.c.b16 %v533, %v532
  %v625 = vpack.c.b16 %v535, %v534
  %v626 = vpack.c.b16 %v537, %v536
  %v627 = vpack.c.b16 %v539, %v538
  %v628 = vpack.c.b16 %v541, %v540
  %v629 = vpack.c.b16 %v543, %v542
  %v630 = vpack.c.b16 %v545, %v544
  %v631 = vpack.c.b16 %v547, %v546
  %v632 = vpack.c.b16 %v549, %v548
  %v633 = vpack.c.b16 %v551, %v550
  %v634 = vpack.c.b16 %v553, %v552
  %v635 = vpack.c.b16 %v555, %v554
  %v636 = vpack.c.b16 %v557, %v556
  %v637 = vpack.c.b16 %v559, %v558
  %v638 = vpack.c.b16 %v561, %v560
  %v639 = vpack.c.b16 %v563, %v562
  %v640 = vpack.c.b16 %v565, %v564
  %v641 = vpack.c.b16 %v567, %v566
  %v642 = vpack.c.b16 %v569, %v568
  %v643 = vpack.c.b16 %v571, %v570
  %716 = vmatprep.subr.bf16.mxu0 0
  %717 = vmatpush1.bf16.msra.mxu0 %v572
  %718 = vmatprep.subr.bf16.mxu0 0
  %719 = vmatpush1.bf16.msra.mxu0 %v573
  %720 = vmatprep.subr.bf16.mxu0 0
  %721 = vmatpush1.bf16.msra.mxu0 %v574
  %722 = vmatprep.subr.bf16.mxu0 0
  %723 = vmatpush1.bf16.msra.mxu0 %v575
  %724 = vmatprep.subr.bf16.mxu0 0
  %725 = vmatpush1.bf16.msra.mxu0 %v576
  %726 = vmatprep.subr.bf16.mxu0 0
  %727 = vmatpush1.bf16.msra.mxu0 %v577
  %728 = vmatprep.subr.bf16.mxu0 0
  %729 = vmatpush1.bf16.msra.mxu0 %v578
  %730 = vmatprep.subr.bf16.mxu0 0
  %731 = vmatpush1.bf16.msra.mxu0 %v579
  %732 = vmatprep.subr.bf16.mxu0 0
  %733 = vmatpush1.bf16.msra.mxu0 %v580
  %734 = vmatprep.subr.bf16.mxu0 0
  %735 = vmatpush1.bf16.msra.mxu0 %v581
  %736 = vmatprep.subr.bf16.mxu0 0
  %737 = vmatpush1.bf16.msra.mxu0 %v582
  %738 = vmatprep.subr.bf16.mxu0 0
  %739 = vmatpush1.bf16.msra.mxu0 %v583
  %740 = vmatprep.subr.bf16.mxu0 0
  %741 = vmatpush1.bf16.msra.mxu0 %v584
  %742 = vmatprep.subr.bf16.mxu0 0
  %743 = vmatpush1.bf16.msra.mxu0 %v585
  %744 = vmatprep.subr.bf16.mxu0 0
  %745 = vmatpush1.bf16.msra.mxu0 %v586
  %746 = vmatprep.subr.bf16.mxu0 0
  %747 = vmatpush1.bf16.msra.mxu0 %v587
  %748 = vmatprep.mubr.bf16.mxu0 %v249
  %749 = vmatmul.mubr.bf16.gmra.mrb[0].mxu0 %v248
  %v750 = vpop.f32.mrb[0].mxu0
  %v751 = vadd.f32 %v190, %v750
  %v752 = vpop.f32.mrb[0].mxu0
  %v753 = vpop.f32.mrb[0].mxu0
  %v754 = vadd.f32 %v190, %v753
  %v755 = vpop.f32.mrb[0].mxu0
  %756 = vmatprep.mubr.bf16.mxu0 %v258
  %757 = vmatmul.mubr.bf16.gmra.mrb[0].mxu0 %v257
  %v758 = vpop.f32.mrb[0].mxu0
  %v759 = vadd.f32 %v190, %v758
  %v760 = vpop.f32.mrb[0].mxu0
  %v761 = vpop.f32.mrb[0].mxu0
  %v762 = vadd.f32 %v190, %v761
  %v763 = vpop.f32.mrb[0].mxu0
  %764 = vdwg.mxu0
  %765 = vmatprep.subr.bf16.mxu0 0
  %766 = vmatpush1.bf16.msra.mxu0 %v588
  %767 = vmatprep.subr.bf16.mxu0 0
  %768 = vmatpush1.bf16.msra.mxu0 %v589
  %769 = vmatprep.subr.bf16.mxu0 0
  %770 = vmatpush1.bf16.msra.mxu0 %v590
  %771 = vmatprep.subr.bf16.mxu0 0
  %772 = vmatpush1.bf16.msra.mxu0 %v591
  %773 = vmatprep.subr.bf16.mxu0 0
  %774 = vmatpush1.bf16.msra.mxu0 %v592
  %775 = vmatprep.subr.bf16.mxu0 0
  %776 = vmatpush1.bf16.msra.mxu0 %v593
  %777 = vmatprep.subr.bf16.mxu0 0
  %778 = vmatpush1.bf16.msra.mxu0 %v594
  %779 = vmatprep.subr.bf16.mxu0 0
  %780 = vmatpush1.bf16.msra.mxu0 %v595
  %781 = vmatprep.subr.bf16.mxu0 0
  %782 = vmatpush1.bf16.msra.mxu0 %v596
  %783 = vmatprep.subr.bf16.mxu0 0
  %784 = vmatpush1.bf16.msra.mxu0 %v597
  %785 = vmatprep.subr.bf16.mxu0 0
  %786 = vmatpush1.bf16.msra.mxu0 %v598
  %787 = vmatprep.subr.bf16.mxu0 0
  %788 = vmatpush1.bf16.msra.mxu0 %v599
  %789 = vmatprep.subr.bf16.mxu0 0
  %790 = vmatpush1.bf16.msra.mxu0 %v600
  %791 = vmatprep.subr.bf16.mxu0 0
  %792 = vmatpush1.bf16.msra.mxu0 %v601
  %793 = vmatprep.subr.bf16.mxu0 0
  %794 = vmatpush1.bf16.msra.mxu0 %v602
  %795 = vmatprep.subr.bf16.mxu0 0
  %796 = vmatpush1.bf16.msra.mxu0 %v603
  %797 = vmatprep.mubr.bf16.mxu0 %v251
  %798 = vmatmul.mubr.bf16.gmra.mrb[0].mxu0 %v250
  %v799 = vpop.f32.mrb[0].mxu0
  %v800 = vadd.f32 %v751, %v799
  %v801 = vpop.f32.mrb[0].mxu0
  %v802 = vpop.f32.mrb[0].mxu0
  %v803 = vadd.f32 %v754, %v802
  %v804 = vpop.f32.mrb[0].mxu0
  %805 = vmatprep.mubr.bf16.mxu0 %v260
  %806 = vmatmul.mubr.bf16.gmra.mrb[0].mxu0 %v259
  %v807 = vpop.f32.mrb[0].mxu0
  %v808 = vadd.f32 %v759, %v807
  %v809 = vpop.f32.mrb[0].mxu0
  %v810 = vpop.f32.mrb[0].mxu0
  %v811 = vadd.f32 %v762, %v810
  %v812 = vpop.f32.mrb[0].mxu0
  %813 = vdwg.mxu0
  %814 = vmatprep.subr.bf16.mxu0 0
  %815 = vmatpush1.bf16.msra.mxu0 %v604
  %816 = vmatprep.subr.bf16.mxu0 0
  %817 = vmatpush1.bf16.msra.mxu0 %v605
  %818 = vmatprep.subr.bf16.mxu0 0
  %819 = vmatpush1.bf16.msra.mxu0 %v606
  %820 = vmatprep.subr.bf16.mxu0 0
  %821 = vmatpush1.bf16.msra.mxu0 %v607
  %822 = vmatprep.subr.bf16.mxu0 0
  %823 = vmatpush1.bf16.msra.mxu0 %v608
  %824 = vmatprep.subr.bf16.mxu0 0
  %825 = vmatpush1.bf16.msra.mxu0 %v609
  %826 = vmatprep.subr.bf16.mxu0 0
  %827 = vmatpush1.bf16.msra.mxu0 %v610
  %828 = vmatprep.subr.bf16.mxu0 0
  %829 = vmatpush1.bf16.msra.mxu0 %v611
  %830 = vmatprep.subr.bf16.mxu0 0
  %831 = vmatpush1.bf16.msra.mxu0 %v612
  %832 = vmatprep.subr.bf16.mxu0 0
  %833 = vmatpush1.bf16.msra.mxu0 %v613
  %834 = vmatprep.subr.bf16.mxu0 0
  %835 = vmatpush1.bf16.msra.mxu0 %v614
  %836 = vmatprep.subr.bf16.mxu0 0
  %837 = vmatpush1.bf16.msra.mxu0 %v615
  %838 = vmatprep.subr.bf16.mxu0 0
  %839 = vmatpush1.bf16.msra.mxu0 %v616
  %840 = vmatprep.subr.bf16.mxu0 0
  %841 = vmatpush1.bf16.msra.mxu0 %v617
  %842 = vmatprep.subr.bf16.mxu0 0
  %843 = vmatpush1.bf16.msra.mxu0 %v618
  %844 = vmatprep.subr.bf16.mxu0 0
  %845 = vmatpush1.bf16.msra.mxu0 %v619
  %846 = vmatprep.mubr.bf16.mxu0 %v253
  %847 = vmatmul.mubr.bf16.gmra.mrb[0].mxu0 %v252
  %v848 = vpop.f32.mrb[0].mxu0
  %v849 = vadd.f32 %v800, %v848
  %v850 = vpop.f32.mrb[0].mxu0
  %v851 = vpop.f32.mrb[0].mxu0
  %v852 = vadd.f32 %v803, %v851
  %v853 = vpop.f32.mrb[0].mxu0
  %854 = vmatprep.mubr.bf16.mxu0 %v262
  %855 = vmatmul.mubr.bf16.gmra.mrb[0].mxu0 %v261
  %v856 = vpop.f32.mrb[0].mxu0
  %v857 = vadd.f32 %v808, %v856
  %v858 = vpop.f32.mrb[0].mxu0
  %v859 = vpop.f32.mrb[0].mxu0
  %v860 = vadd.f32 %v811, %v859
  %v861 = vpop.f32.mrb[0].mxu0
  %862 = vdwg.mxu0
  %863 = vmatprep.subr.bf16.mxu0 0
  %864 = vmatpush1.bf16.msra.mxu0 %v620
  %865 = vmatprep.subr.bf16.mxu0 0
  %866 = vmatpush1.bf16.msra.mxu0 %v621
  %867 = vmatprep.subr.bf16.mxu0 0
  %868 = vmatpush1.bf16.msra.mxu0 %v622
  %869 = vmatprep.subr.bf16.mxu0 0
  %870 = vmatpush1.bf16.msra.mxu0 %v623
  %871 = vmatprep.subr.bf16.mxu0 0
  %872 = vmatpush1.bf16.msra.mxu0 %v624
  %873 = vmatprep.subr.bf16.mxu0 0
  %874 = vmatpush1.bf16.msra.mxu0 %v625
  %875 = vmatprep.subr.bf16.mxu0 0
  %876 = vmatpush1.bf16.msra.mxu0 %v626
  %877 = vmatprep.subr.bf16.mxu0 0
  %878 = vmatpush1.bf16.msra.mxu0 %v627
  %879 = vmatprep.subr.bf16.mxu0 0
  %880 = vmatpush1.bf16.msra.mxu0 %v628
  %881 = vmatprep.subr.bf16.mxu0 0
  %882 = vmatpush1.bf16.msra.mxu0 %v629
  %883 = vmatprep.subr.bf16.mxu0 0
  %884 = vmatpush1.bf16.msra.mxu0 %v630
  %885 = vmatprep.subr.bf16.mxu0 0
  %886 = vmatpush1.bf16.msra.mxu0 %v631
  %887 = vmatprep.subr.bf16.mxu0 0
  %888 = vmatpush1.bf16.msra.mxu0 %v632
  %889 = vmatprep.subr.bf16.mxu0 0
  %890 = vmatpush1.bf16.msra.mxu0 %v633
  %891 = vmatprep.subr.bf16.mxu0 0
  %892 = vmatpush1.bf16.msra.mxu0 %v634
  %893 = vmatprep.subr.bf16.mxu0 0
  %894 = vmatpush1.bf16.msra.mxu0 %v635
  %895 = vmatprep.mubr.bf16.mxu0 %v255
  %896 = vmatmul.mubr.bf16.gmra.mrb[0].mxu0 %v254
  %v897 = vpop.f32.mrb[0].mxu0
  %v898 = vadd.f32 %v849, %v897
  %v899 = vpop.f32.mrb[0].mxu0
  %v900 = vpop.f32.mrb[0].mxu0
  %v901 = vadd.f32 %v852, %v900
  %v902 = vpop.f32.mrb[0].mxu0
  %903 = vmatprep.mubr.bf16.mxu0 %v264
  %904 = vmatmul.mubr.bf16.gmra.mrb[0].mxu0 %v263
  %v905 = vpop.f32.mrb[0].mxu0
  %v906 = vadd.f32 %v857, %v905
  %v907 = vpop.f32.mrb[0].mxu0
  %v908 = vpop.f32.mrb[0].mxu0
  %v909 = vadd.f32 %v860, %v908
  %v910 = vpop.f32.mrb[0].mxu0
  %911 = vdwg.mxu0
  %912 = vmatprep.subr.bf16.mxu0 0
  %913 = vmatpush1.bf16.msra.mxu0 %v636
  %914 = vmatprep.subr.bf16.mxu0 0
  %915 = vmatpush1.bf16.msra.mxu0 %v637
  %916 = vmatprep.subr.bf16.mxu0 0
  %917 = vmatpush1.bf16.msra.mxu0 %v638
  %918 = vmatprep.subr.bf16.mxu0 0
  %919 = vmatpush1.bf16.msra.mxu0 %v639
  %920 = vmatprep.subr.bf16.mxu0 0
  %921 = vmatpush1.bf16.msra.mxu0 %v640
  %922 = vmatprep.subr.bf16.mxu0 0
  %923 = vmatpush1.bf16.msra.mxu0 %v641
  %924 = vmatprep.subr.bf16.mxu0 0
  %925 = vmatpush1.bf16.msra.mxu0 %v642
  %926 = vmatprep.subr.bf16.mxu0 0
  %927 = vmatpush1.bf16.msra.mxu0 %v643
  %928 = vmatprep.subr.bf16.mxu0 0
  %929 = vmatpush1.bf16.msra.mxu0 0
  %930 = vmatprep.subr.bf16.mxu0 0
  %931 = vmatpush1.bf16.msra.mxu0 0
  %932 = vmatprep.subr.bf16.mxu0 0
  %933 = vmatpush1.bf16.msra.mxu0 0
  %934 = vmatprep.subr.bf16.mxu0 0
  %935 = vmatpush1.bf16.msra.mxu0 0
  %936 = vmatprep.subr.bf16.mxu0 0
  %937 = vmatpush1.bf16.msra.mxu0 0
  %938 = vmatprep.subr.bf16.mxu0 0
  %939 = vmatpush1.bf16.msra.mxu0 0
  %940 = vmatprep.subr.bf16.mxu0 0
  %941 = vmatpush1.bf16.msra.mxu0 0
  %942 = vmatprep.subr.bf16.mxu0 0
  %943 = vmatpush1.bf16.msra.mxu0 0
  %944 = vmatprep.mubr.bf16.mxu0 0
  %945 = vmatmul.mubr.bf16.gmra.mrb[0].mxu0 %v256
  %v946 = vpop.f32.mrb[0].mxu0
  %v947 = vadd.f32 %v898, %v946
  %v948 = vpop.f32.mrb[0].mxu0
  %v949 = vpop.f32.mrb[0].mxu0
  %v950 = vadd.f32 %v901, %v949
  %v951 = vpop.f32.mrb[0].mxu0
  %952 = vmatprep.mubr.bf16.mxu0 0
  %953 = vmatmul.mubr.bf16.gmra.mrb[0].mxu0 %v265
  %v954 = vpop.f32.mrb[0].mxu0
  %v955 = vadd.f32 %v906, %v954
  %v956 = vpop.f32.mrb[0].mxu0
  %v957 = vpop.f32.mrb[0].mxu0
  %v958 = vadd.f32 %v909, %v957
  %v959 = vpop.f32.mrb[0].mxu0
  %960 = vdwg.mxu0
  %v961 = vmax.f32 %v947, 0.0
  %v962 = vmax.f32 %v950, 0.0
  %v963 = vmax.f32 %v955, 0.0
  %v964 = vmax.f32 %v958, 0.0
  %v965 = vlaneseq
  %v966 = vshrl.u32 %v965, 7
  %v967 = vadd.s32 %v966, 8
  %v968 = vadd.s32 %v966, 16
  %v969 = vadd.s32 %v966, 24
  %vm970 = vcmp.lt.s32.totalorder %v966, 32
  %vm971 = vcmp.lt.s32.totalorder %v967, 32
  %vm972 = vcmp.lt.s32.totalorder %v968, 32
  %vm973 = vcmp.lt.s32.totalorder %v969, 32
  %v974 = vsel %vm970, %v961, 0.0
  %v975 = vsel %vm971, %v962, 0.0
  %v976 = vsel %vm972, %v963, 0.0
  %v977 = vsel %vm973, %v964, 0.0
  %v978 = vadd.f32 %v974, %v975
  %v979 = vadd.f32 %v978, %v976
  %v980 = vadd.f32 %v979, %v977
  %v981 = vrot.slane %v980, 4
  %v982 = vadd.f32 %v980, %v981
  %v983 = vrot.slane %v982, 2
  %v984 = vadd.f32 %v982, %v983
  %v985 = vrot.slane %v984, 1
  %v986 = vadd.f32 %v984, %v985
  %v987 = vmul.f32 %v986, 0.03125
  %v988 = vmul.f32 %v974, %v974
  %v989 = vmul.f32 %v975, %v975
  %v990 = vmul.f32 %v976, %v976
  %v991 = vmul.f32 %v977, %v977
  %v992 = vadd.f32 %v988, %v989
  %v993 = vadd.f32 %v992, %v990
  %v994 = vadd.f32 %v993, %v991
  %v995 = vrot.slane %v994, 4
  %v996 = vadd.f32 %v994, %v995
  %v997 = vrot.slane %v996, 2
  %v998 = vadd.f32 %v996, %v997
  %v999 = vrot.slane %v998, 1
  %v1000 = vadd.f32 %v998, %v999
  %v1001 = vmul.f32 %v1000, 0.03125
  %v1002 = vmul.f32 %v987, %v987
  %v1003 = vsub.f32 %v1001, %v1002
  %v1004 = vmax.f32 %v1003, 0.0
  %v1005 = vld [vmem:[%s3] sm:$0x1]
  %v1006 = vadd.f32 %v1004, 1e-05
  %v1007 = vrsqrt.pop %v1006
  %v1008 = vmul.f32 %v1005, %v1007
  %v1009 = vld [vmem:[%s4] sm:$0x1]
  %v1010 = vmul.f32 %v987, %v1008
  %v1011 = vsub.f32 %v1009, %v1010
  %v1013 = vlaneseq
  %v1014 = vshrl.u32 %v1013, 7
  %v1015 = vsub.s32 0, %v1014
  %v1016 = vrot.slane %v1008, %v1015
  %v1018 = vmul.f32 %v961, %v1016
  %v1019 = vmul.f32 %v962, %v1016
  %v1020 = vmul.f32 %v963, %v1016
  %v1021 = vmul.f32 %v964, %v1016
  %v1023 = vlaneseq
  %v1024 = vshrl.u32 %v1023, 7
  %v1025 = vsub.s32 0, %v1024
  %v1026 = vrot.slane %v1011, %v1025
  %v1028 = vadd.f32 %v1018, %v1026
  %v1029 = vadd.f32 %v1019, %v1026
  %v1030 = vadd.f32 %v1020, %v1026
  %v1031 = vadd.f32 %v1021, %v1026
  %v1032 = vpack.c.bf16 %v1029, %v1028
  %v1033 = vpack.c.bf16 %v1031, %v1030
  %v1036 = vunpack.c.l.b16 %v1032
  %v1037 = vunpack.c.h.b16 %v1032
  %v1038 = vunpack.c.l.b16 %v1033
  %v1039 = vunpack.c.h.b16 %v1033
  %v1040 = vpack.c.b16 %v1036, %v1036
  %v1041 = vpack.c.b16 %v1037, %v1037
  %v1042 = vpack.c.b16 %v1038, %v1038
  %v1043 = vpack.c.b16 %v1039, %v1039
  %1048 = vst [vmem:[%s5] sm:$0xf] %v1040
  %1049 = vst [vmem:[%s5 + $0x4] sm:$0xf] %v1041
  %1050 = vst [vmem:[%s5 + $0x8] sm:$0xf] %v1042
  %1051 = vst [vmem:[%s5 + $0xc] sm:$0xf] %v1043
  // Predicated region
  $region22: #{_net_forward.16} parent=0 // pred_check
    _
  $region23: #{_net_forward.16} parent=0 // pred_check_branch
    %1053 = sbr.rel (0) target = $region25
  $region24: #{_net_forward.16} parent=0 // pred_region
    _
  $region25: #{_net_forward.16} parent=0 // pred_fallthru
    _
  // Predicated region
  $region26: #{_net_forward.16} parent=0 // pred_check
    _
  $region27: #{_net_forward.16} parent=0 // pred_check_branch
    %1055 = sbr.rel (0) target = $region29
  $region28: #{_net_forward.16} parent=0 // pred_region
    _
  $region29: #{_net_forward.16} parent=0 // pred_fallthru
    _

// kernel: _net_forward.19
$region0: #{_net_forward.19}
  #allocation0 [shape = 'u32[]', space=smem, size = 0x4, offset = 0x4, fixed_abs, tag = 'smem constant byte address 0x4 - core index']
  #allocation1 [shape = 'u32[144,128]{1,0:T(1,128)}', space=vmem, size = 0x12000, scoped, tag = 'internal scratch']
  %s0 = inlined_call_operand.vmem [shape: bf16[2,16,128], index: 0, kind: input, shape index: {}]
  %s1 = inlined_call_operand.vmem [shape: bf16[128,128], index: 1, kind: input, shape index: {}]
  %s2 = inlined_call_operand.vmem [shape: f32[1,128], index: 2, kind: input, shape index: {}]
  %s3 = inlined_call_operand.hbm [shape: f32[2,128], index: 3, kind: output, shape index: {}]
  %s4 = sld [smem:[#allocation0]]
  $region22: #{_net_forward.19} parent=0
    _
  %s6 = ssub.s32 1, %s4
  %s7 = scalar_select 0, %s6, %s4
  $region1: #{_net_forward.19} parent=0
    #allocation2 [shape = 'u8[1024]{0}', space=vmem, size = 0x400, scoped, tag = 'output window, operand 0, single buffered']
    #allocation3 [shape = 's32[1]{0}', space=sflag, size = 0x4, scoped, tag = 'scoped memory for _net_forward.19']
    %8 = vsyncpa [#allocation3], 0
    // Predicated region
    $region2: #{_net_forward.19} parent=1 // pred_check
      _
    $region3: #{_net_forward.19} parent=1 // pred_check_branch
      %10 = sbr.rel (0) target = $region5
    $region4: #{_net_forward.19} parent=1 // pred_region
      _
    $region5: #{_net_forward.19} parent=1 // pred_fallthru
      _
    // Predicated region
    $region6: #{_net_forward.19} parent=1 // pred_check
      _
    $region7: #{_net_forward.19} parent=1 // pred_check_branch
      %12 = sbr.rel (0) target = $region9
    $region8: #{_net_forward.19} parent=1 // pred_region
      _
    $region9: #{_net_forward.19} parent=1 // pred_fallthru
      _
    // Predicated region
    $region10: #{_net_forward.19} parent=1 // pred_check
      _
    $region11: #{_net_forward.19} parent=1 // pred_check_branch
      %14 = sbr.rel (0) target = $region13
    $region12: #{_net_forward.19} parent=1 // pred_region
      _
    $region13: #{_net_forward.19} parent=1 // pred_fallthru
      _
    %v16 = vld [vmem:[%s0] sm:$0xf]
    %v17 = vld [vmem:[%s0 + $0x4] sm:$0xf]
    %v18 = vld [vmem:[%s0 + $0x8] sm:$0xf]
    %v19 = vld [vmem:[%s0 + $0xc] sm:$0xf]
    %v20 = vunpack.c.l.bf16 %v16
    %v21 = vunpack.c.l.bf16 %v17
    %v22 = vunpack.c.l.bf16 %v18
    %v23 = vunpack.c.l.bf16 %v19
    %v24 = vadd.f32 %v20, %v21
    %v25 = vrot.slane %v24, 4
    %v26 = vadd.f32 %v24, %v25
    %v27 = vrot.slane %v26, 2
    %v28 = vadd.f32 %v26, %v27
    %v29 = vrot.slane %v28, 1
    %v30 = vadd.f32 %v28, %v29
    %v31 = vadd.f32 %v22, %v23
    %v32 = vrot.slane %v31, 4
    %v33 = vadd.f32 %v31, %v32
    %v34 = vrot.slane %v33, 2
    %v35 = vadd.f32 %v33, %v34
    %v36 = vrot.slane %v35, 1
    %v37 = vadd.f32 %v35, %v36
    %v38 = vrcp.pop 16.0
    %v39 = vmul.f32 %v30, %v38
    %v40 = vmul.f32 %v37, %v38
    %v41 = vpack.c.bf16 %v39, %v39
    %v42 = vpack.c.bf16 %v40, %v40
    %v43 = vld [vmem:[%s1] sm:$0xf]
    %v44 = vld [vmem:[%s1 + $0x4] sm:$0xf]
    %v45 = vld [vmem:[%s1 + $0x8] sm:$0xf]
    %v46 = vld [vmem:[%s1 + $0xc] sm:$0xf]
    %v47 = vld [vmem:[%s1 + $0x10] sm:$0xf]
    %v48 = vld [vmem:[%s1 + $0x14] sm:$0xf]
    %v49 = vld [vmem:[%s1 + $0x18] sm:$0xf]
    %v50 = vld [vmem:[%s1 + $0x1c] sm:$0xf]
    %v51 = vld [vmem:[%s1 + $0x20] sm:$0xf]
    %v52 = vld [vmem:[%s1 + $0x24] sm:$0xf]
    %v53 = vld [vmem:[%s1 + $0x28] sm:$0xf]
    %v54 = vld [vmem:[%s1 + $0x2c] sm:$0xf]
    %v55 = vld [vmem:[%s1 + $0x30] sm:$0xf]
    %v56 = vld [vmem:[%s1 + $0x34] sm:$0xf]
    %v57 = vld [vmem:[%s1 + $0x38] sm:$0xf]
    %v58 = vld [vmem:[%s1 + $0x3c] sm:$0xf]
    %v59 = vld [vmem:[%s2] sm:$0x1]
    %v61 = vlaneseq
    %v62 = vshrl.u32 %v61, 7
    %v63 = vsub.s32 0, %v62
    %v64 = vrot.slane %v59, %v63
    %v68 = vunpack.c.l.b16 %v41
    %v69 = vunpack.c.l.b16 %v42
    %vm70 = vcmask 1041409
    %v71 = vsel %vm70, %v69, %v68
    %v72 = vpack.c.b16 %v71, %v71
    %v90 = vunpack.c.l.b16 %v43
    %v91 = vunpack.c.l.b16 %v44
    %v92 = vunpack.c.l.b16 %v45
    %v93 = vunpack.c.l.b16 %v46
    %v94 = vunpack.c.l.b16 %v47
    %v95 = vunpack.c.l.b16 %v48
    %v96 = vunpack.c.l.b16 %v49
    %v97 = vunpack.c.l.b16 %v50
    %v98 = vunpack.c.l.b16 %v51
    %v99 = vunpack.c.l.b16 %v52
    %v100 = vunpack.c.l.b16 %v53
    %v101 = vunpack.c.l.b16 %v54
    %v102 = vunpack.c.l.b16 %v55
    %v103 = vunpack.c.l.b16 %v56
    %v104 = vunpack.c.l.b16 %v57
    %v105 = vunpack.c.l.b16 %v58
    %v106 = vpack.c.b16 %v91, %v90
    %v107 = vpack.c.b16 %v93, %v92
    %v108 = vpack.c.b16 %v95, %v94
    %v109 = vpack.c.b16 %v97, %v96
    %v110 = vpack.c.b16 %v99, %v98
    %v111 = vpack.c.b16 %v101, %v100
    %v112 = vpack.c.b16 %v103, %v102
    %v113 = vpack.c.b16 %v105, %v104
    %122 = vmatprep.subr.bf16.mxu0 0
    %123 = vmatpush1.bf16.msra.mxu0 %v106
    %124 = vmatprep.subr.bf16.mxu0 0
    %125 = vmatpush1.bf16.msra.mxu0 %v107
    %126 = vmatprep.subr.bf16.mxu0 0
    %127 = vmatpush1.bf16.msra.mxu0 %v108
    %128 = vmatprep.subr.bf16.mxu0 0
    %129 = vmatpush1.bf16.msra.mxu0 %v109
    %130 = vmatprep.subr.bf16.mxu0 0
    %131 = vmatpush1.bf16.msra.mxu0 %v110
    %132 = vmatprep.subr.bf16.mxu0 0
    %133 = vmatpush1.bf16.msra.mxu0 %v111
    %134 = vmatprep.subr.bf16.mxu0 0
    %135 = vmatpush1.bf16.msra.mxu0 %v112
    %136 = vmatprep.subr.bf16.mxu0 0
    %137 = vmatpush1.bf16.msra.mxu0 %v113
    %138 = vmatprep.subr.bf16.mxu0 0
    %139 = vmatpush1.bf16.msra.mxu0 0
    %140 = vmatprep.subr.bf16.mxu0 0
    %141 = vmatpush1.bf16.msra.mxu0 0
    %142 = vmatprep.subr.bf16.mxu0 0
    %143 = vmatpush1.bf16.msra.mxu0 0
    %144 = vmatprep.subr.bf16.mxu0 0
    %145 = vmatpush1.bf16.msra.mxu0 0
    %146 = vmatprep.subr.bf16.mxu0 0
    %147 = vmatpush1.bf16.msra.mxu0 0
    %148 = vmatprep.subr.bf16.mxu0 0
    %149 = vmatpush1.bf16.msra.mxu0 0
    %150 = vmatprep.subr.bf16.mxu0 0
    %151 = vmatpush1.bf16.msra.mxu0 0
    %152 = vmatprep.subr.bf16.mxu0 0
    %153 = vmatpush1.bf16.msra.mxu0 0
    %154 = vmatprep.mubr.bf16.mxu0 0
    %155 = vmatmul.mubr.bf16.gmra.mrb[0].mxu0 %v72
    %v156 = vpop.f32.mrb[0].mxu0
    %v157 = vadd.f32 %v64, %v156
    %v158 = vpop.f32.mrb[0].mxu0
    %v159 = vpop.f32.mrb[0].mxu0
    %v160 = vpop.f32.mrb[0].mxu0
    %161 = vdwg.mxu0
    %162 = vst [vmem:[#allocation2] sm:$0x3] %v157
    // Predicated region
    $region14: #{_net_forward.19} parent=1 // pred_check
      _
    $region15: #{_net_forward.19} parent=1 // pred_check_branch
      %164 = sbr.rel (0) target = $region17
    $region16: #{_net_forward.19} parent=1 // pred_region
      %s166 = ssub.s32 32, 32
      %167 = vsyncadd [#allocation3], %s166
      %s169 = sshll.u32 [#allocation2], 4
      %s170 = int_to_ptr.vmem [resolvable:$true] %s169
      %172 = dma.vmem_to_hbm [thread:$0]  %s170, 32, %s3, [#allocation3]
    $region17: #{_net_forward.19} parent=1 // pred_fallthru
      _
    // Predicated region
    $region18: #{_net_forward.19} parent=1 // pred_check
      _
    $region19: #{_net_forward.19} parent=1 // pred_check_branch
      %174 = sbr.rel (0) target = $region21
    $region20: #{_net_forward.19} parent=1 // pred_region
      %175 = dma.done [#allocation3], 32
    $region21: #{_net_forward.19} parent=1 // pred_fallthru
      _
    %176 = vsyncpa [#allocation3], 1

// kernel: _net_forward.18
$region0: #{_net_forward.18}
  #allocation0 [shape = 'u32[]', space=smem, size = 0x4, offset = 0x4, fixed_abs, tag = 'smem constant byte address 0x4 - core index']
  #allocation1 [shape = 'u32[144,128]{1,0:T(1,128)}', space=vmem, size = 0x12000, scoped, tag = 'internal scratch']
  %s0 = inlined_call_operand.vmem [shape: bf16[32,384], index: 0, kind: input, shape index: {}]
  %s1 = inlined_call_operand.vmem [shape: bf16[384,128], index: 1, kind: input, shape index: {}]
  %s2 = inlined_call_operand.vmem [shape: f32[1,128], index: 2, kind: input, shape index: {}]
  %s3 = inlined_call_operand.vmem [shape: f32[1,128], index: 3, kind: input, shape index: {}]
  %s4 = inlined_call_operand.vmem [shape: f32[1,128], index: 4, kind: input, shape index: {}]
  %s5 = inlined_call_operand.vmem [shape: bf16[32,128], index: 5, kind: output, shape index: {}]
  %s6 = sld [smem:[#allocation0]]
  $region30: #{_net_forward.18} parent=0
    _
  %s8 = ssub.s32 1, %s6
  %s9 = scalar_select 0, %s8, %s6
  // Predicated region
  $region2: #{_net_forward.18} parent=0 // pred_check
    _
  $region3: #{_net_forward.18} parent=0 // pred_check_branch
    %11 = sbr.rel (0) target = $region5
  $region4: #{_net_forward.18} parent=0 // pred_region
    _
  $region5: #{_net_forward.18} parent=0 // pred_fallthru
    _
  // Predicated region
  $region6: #{_net_forward.18} parent=0 // pred_check
    _
  $region7: #{_net_forward.18} parent=0 // pred_check_branch
    %13 = sbr.rel (0) target = $region9
  $region8: #{_net_forward.18} parent=0 // pred_region
    _
  $region9: #{_net_forward.18} parent=0 // pred_fallthru
    _
  // Predicated region
  $region10: #{_net_forward.18} parent=0 // pred_check
    _
  $region11: #{_net_forward.18} parent=0 // pred_check_branch
    %15 = sbr.rel (0) target = $region13
  $region12: #{_net_forward.18} parent=0 // pred_region
    _
  $region13: #{_net_forward.18} parent=0 // pred_fallthru
    _
  // Predicated region
  $region14: #{_net_forward.18} parent=0 // pred_check
    _
  $region15: #{_net_forward.18} parent=0 // pred_check_branch
    %17 = sbr.rel (0) target = $region17
  $region16: #{_net_forward.18} parent=0 // pred_region
    _
  $region17: #{_net_forward.18} parent=0 // pred_fallthru
    _
  // Predicated region
  $region18: #{_net_forward.18} parent=0 // pred_check
    _
  $region19: #{_net_forward.18} parent=0 // pred_check_branch
    %19 = sbr.rel (0) target = $region21
  $region20: #{_net_forward.18} parent=0 // pred_region
    _
  $region21: #{_net_forward.18} parent=0 // pred_fallthru
    _
  %v21 = vld [vmem:[%s0] sm:$0xff]
  %v22 = vld [vmem:[%s0 + $0x8] sm:$0xf]
  %v23 = vld [vmem:[%s0 + $0xc] sm:$0xff]
  %v24 = vld [vmem:[%s0 + $0x14] sm:$0xf]
  %v25 = vld [vmem:[%s0 + $0x18] sm:$0xff]
  %v26 = vld [vmem:[%s0 + $0x20] sm:$0xf]
  %v27 = vld [vmem:[%s0 + $0x24] sm:$0xff]
  %v28 = vld [vmem:[%s0 + $0x2c] sm:$0xf]
  %v29 = vld [vmem:[%s1] sm:$0xf]
  %v30 = vld [vmem:[%s1 + $0x4] sm:$0xf]
  %v31 = vld [vmem:[%s1 + $0x8] sm:$0xf]
  %v32 = vld [vmem:[%s1 + $0xc] sm:$0xf]
  %v33 = vld [vmem:[%s1 + $0x10] sm:$0xf]
  %v34 = vld [vmem:[%s1 + $0x14] sm:$0xf]
  %v35 = vld [vmem:[%s1 + $0x18] sm:$0xf]
  %v36 = vld [vmem:[%s1 + $0x1c] sm:$0xf]
  %v37 = vld [vmem:[%s1 + $0x20] sm:$0xf]
  %v38 = vld [vmem:[%s1 + $0x24] sm:$0xf]
  %v39 = vld [vmem:[%s1 + $0x28] sm:$0xf]
  %v40 = vld [vmem:[%s1 + $0x2c] sm:$0xf]
  %v41 = vld [vmem:[%s1 + $0x30] sm:$0xf]
  %v42 = vld [vmem:[%s1 + $0x34] sm:$0xf]
  %v43 = vld [vmem:[%s1 + $0x38] sm:$0xf]
  %v44 = vld [vmem:[%s1 + $0x3c] sm:$0xf]
  %v45 = vld [vmem:[%s1 + $0x40] sm:$0xf]
  %v46 = vld [vmem:[%s1 + $0x44] sm:$0xf]
  %v47 = vld [vmem:[%s1 + $0x48] sm:$0xf]
  %v48 = vld [vmem:[%s1 + $0x4c] sm:$0xf]
  %v49 = vld [vmem:[%s1 + $0x50] sm:$0xf]
  %v50 = vld [vmem:[%s1 + $0x54] sm:$0xf]
  %v51 = vld [vmem:[%s1 + $0x58] sm:$0xf]
  %v52 = vld [vmem:[%s1 + $0x5c] sm:$0xf]
  %v53 = vld [vmem:[%s1 + $0x60] sm:$0xf]
  %v54 = vld [vmem:[%s1 + $0x64] sm:$0xf]
  %v55 = vld [vmem:[%s1 + $0x68] sm:$0xf]
  %v56 = vld [vmem:[%s1 + $0x6c] sm:$0xf]
  %v57 = vld [vmem:[%s1 + $0x70] sm:$0xf]
  %v58 = vld [vmem:[%s1 + $0x74] sm:$0xf]
  %v59 = vld [vmem:[%s1 + $0x78] sm:$0xf]
  %v60 = vld [vmem:[%s1 + $0x7c] sm:$0xf]
  %v61 = vld [vmem:[%s1 + $0x80] sm:$0xf]
  %v62 = vld [vmem:[%s1 + $0x84] sm:$0xf]
  %v63 = vld [vmem:[%s1 + $0x88] sm:$0xf]
  %v64 = vld [vmem:[%s1 + $0x8c] sm:$0xf]
  %v65 = vld [vmem:[%s1 + $0x90] sm:$0xf]
  %v66 = vld [vmem:[%s1 + $0x94] sm:$0xf]
  %v67 = vld [vmem:[%s1 + $0x98] sm:$0xf]
  %v68 = vld [vmem:[%s1 + $0x9c] sm:$0xf]
  %v69 = vld [vmem:[%s1 + $0xa0] sm:$0xf]
  %v70 = vld [vmem:[%s1 + $0xa4] sm:$0xf]
  %v71 = vld [vmem:[%s1 + $0xa8] sm:$0xf]
  %v72 = vld [vmem:[%s1 + $0xac] sm:$0xf]
  %v73 = vld [vmem:[%s1 + $0xb0] sm:$0xf]
  %v74 = vld [vmem:[%s1 + $0xb4] sm:$0xf]
  %v75 = vld [vmem:[%s1 + $0xb8] sm:$0xf]
  %v76 = vld [vmem:[%s1 + $0xbc] sm:$0xf]
  %v77 = vld [vmem:[%s2] sm:$0x1]
  %v79 = vlaneseq
  %v80 = vshrl.u32 %v79, 7
  %v81 = vsub.s32 0, %v80
  %v82 = vrot.slane %v77, %v81
  %v92 = vunpack.c.l.b16 %v21
  %v93 = vunpack.c.h.b16 %v21
  %v94 = vunpack.c.l.b16 %v22
  %v95 = vunpack.c.l.b16 %v23
  %v96 = vunpack.c.h.b16 %v23
  %v97 = vunpack.c.l.b16 %v24
  %v98 = vunpack.c.l.b16 %v25
  %v99 = vunpack.c.h.b16 %v25
  %v100 = vunpack.c.l.b16 %v26
  %v101 = vunpack.c.l.b16 %v27
  %v102 = vunpack.c.h.b16 %v27
  %v103 = vunpack.c.l.b16 %v28
  %v104 = vpack.c.b16 %v95, %v92
  %v105 = vpack.c.b16 %v96, %v93
  %v106 = vpack.c.b16 %v97, %v94
  %v107 = vpack.c.b16 %v101, %v98
  %v108 = vpack.c.b16 %v102, %v99
  %v109 = vpack.c.b16 %v103, %v100
  %v164 = vunpack.c.l.b16 %v29
  %v165 = vunpack.c.l.b16 %v30
  %v166 = vunpack.c.l.b16 %v31
  %v167 = vunpack.c.l.b16 %v32
  %v168 = vunpack.c.l.b16 %v33
  %v169 = vunpack.c.l.b16 %v34
  %v170 = vunpack.c.l.b16 %v35
  %v171 = vunpack.c.l.b16 %v36
  %v172 = vunpack.c.l.b16 %v37
  %v173 = vunpack.c.l.b16 %v38
  %v174 = vunpack.c.l.b16 %v39
  %v175 = vunpack.c.l.b16 %v40
  %v176 = vunpack.c.l.b16 %v41
  %v177 = vunpack.c.l.b16 %v42
  %v178 = vunpack.c.l.b16 %v43
  %v179 = vunpack.c.l.b16 %v44
  %v180 = vunpack.c.l.b16 %v45
  %v181 = vunpack.c.l.b16 %v46
  %v182 = vunpack.c.l.b16 %v47
  %v183 = vunpack.c.l.b16 %v48
  %v184 = vunpack.c.l.b16 %v49
  %v185 = vunpack.c.l.b16 %v50
  %v186 = vunpack.c.l.b16 %v51
  %v187 = vunpack.c.l.b16 %v52
  %v188 = vunpack.c.l.b16 %v53
  %v189 = vunpack.c.l.b16 %v54
  %v190 = vunpack.c.l.b16 %v55
  %v191 = vunpack.c.l.b16 %v56
  %v192 = vunpack.c.l.b16 %v57
  %v193 = vunpack.c.l.b16 %v58
  %v194 = vunpack.c.l.b16 %v59
  %v195 = vunpack.c.l.b16 %v60
  %v196 = vunpack.c.l.b16 %v61
  %v197 = vunpack.c.l.b16 %v62
  %v198 = vunpack.c.l.b16 %v63
  %v199 = vunpack.c.l.b16 %v64
  %v200 = vunpack.c.l.b16 %v65
  %v201 = vunpack.c.l.b16 %v66
  %v202 = vunpack.c.l.b16 %v67
  %v203 = vunpack.c.l.b16 %v68
  %v204 = vunpack.c.l.b16 %v69
  %v205 = vunpack.c.l.b16 %v70
  %v206 = vunpack.c.l.b16 %v71
  %v207 = vunpack.c.l.b16 %v72
  %v208 = vunpack.c.l.b16 %v73
  %v209 = vunpack.c.l.b16 %v74
  %v210 = vunpack.c.l.b16 %v75
  %v211 = vunpack.c.l.b16 %v76
  %v212 = vpack.c.b16 %v165, %v164
  %v213 = vpack.c.b16 %v167, %v166
  %v214 = vpack.c.b16 %v169, %v168
  %v215 = vpack.c.b16 %v171, %v170
  %v216 = vpack.c.b16 %v173, %v172
  %v217 = vpack.c.b16 %v175, %v174
  %v218 = vpack.c.b16 %v177, %v176
  %v219 = vpack.c.b16 %v179, %v178
  %v220 = vpack.c.b16 %v181, %v180
  %v221 = vpack.c.b16 %v183, %v182
  %v222 = vpack.c.b16 %v185, %v184
  %v223 = vpack.c.b16 %v187, %v186
  %v224 = vpack.c.b16 %v189, %v188
  %v225 = vpack.c.b16 %v191, %v190
  %v226 = vpack.c.b16 %v193, %v192
  %v227 = vpack.c.b16 %v195, %v194
  %v228 = vpack.c.b16 %v197, %v196
  %v229 = vpack.c.b16 %v199, %v198
  %v230 = vpack.c.b16 %v201, %v200
  %v231 = vpack.c.b16 %v203, %v202
  %v232 = vpack.c.b16 %v205, %v204
  %v233 = vpack.c.b16 %v207, %v206
  %v234 = vpack.c.b16 %v209, %v208
  %v235 = vpack.c.b16 %v211, %v210
  %260 = vmatprep.subr.bf16.mxu0 0
  %261 = vmatpush1.bf16.msra.mxu0 %v212
  %262 = vmatprep.subr.bf16.mxu0 0
  %263 = vmatpush1.bf16.msra.mxu0 %v213
  %264 = vmatprep.subr.bf16.mxu0 0
  %265 = vmatpush1.bf16.msra.mxu0 %v214
  %266 = vmatprep.subr.bf16.mxu0 0
  %267 = vmatpush1.bf16.msra.mxu0 %v215
  %268 = vmatprep.subr.bf16.mxu0 0
  %269 = vmatpush1.bf16.msra.mxu0 %v216
  %270 = vmatprep.subr.bf16.mxu0 0
  %271 = vmatpush1.bf16.msra.mxu0 %v217
  %272 = vmatprep.subr.bf16.mxu0 0
  %273 = vmatpush1.bf16.msra.mxu0 %v218
  %274 = vmatprep.subr.bf16.mxu0 0
  %275 = vmatpush1.bf16.msra.mxu0 %v219
  %276 = vmatprep.subr.bf16.mxu0 0
  %277 = vmatpush1.bf16.msra.mxu0 %v220
  %278 = vmatprep.subr.bf16.mxu0 0
  %279 = vmatpush1.bf16.msra.mxu0 %v221
  %280 = vmatprep.subr.bf16.mxu0 0
  %281 = vmatpush1.bf16.msra.mxu0 %v222
  %282 = vmatprep.subr.bf16.mxu0 0
  %283 = vmatpush1.bf16.msra.mxu0 %v223
  %284 = vmatprep.subr.bf16.mxu0 0
  %285 = vmatpush1.bf16.msra.mxu0 %v224
  %286 = vmatprep.subr.bf16.mxu0 0
  %287 = vmatpush1.bf16.msra.mxu0 %v225
  %288 = vmatprep.subr.bf16.mxu0 0
  %289 = vmatpush1.bf16.msra.mxu0 %v226
  %290 = vmatprep.subr.bf16.mxu0 0
  %291 = vmatpush1.bf16.msra.mxu0 %v227
  %292 = vmatprep.mubr.bf16.mxu0 %v105
  %293 = vmatmul.mubr.bf16.gmra.mrb[0].mxu0 %v104
  %v294 = vpop.f32.mrb[0].mxu0
  %v295 = vadd.f32 %v82, %v294
  %v296 = vpop.f32.mrb[0].mxu0
  %v297 = vpop.f32.mrb[0].mxu0
  %v298 = vadd.f32 %v82, %v297
  %v299 = vpop.f32.mrb[0].mxu0
  %300 = vmatprep.mubr.bf16.mxu0 %v108
  %301 = vmatmul.mubr.bf16.gmra.mrb[0].mxu0 %v107
  %v302 = vpop.f32.mrb[0].mxu0
  %v303 = vadd.f32 %v82, %v302
  %v304 = vpop.f32.mrb[0].mxu0
  %v305 = vpop.f32.mrb[0].mxu0
  %v306 = vadd.f32 %v82, %v305
  %v307 = vpop.f32.mrb[0].mxu0
  %308 = vdwg.mxu0
  %309 = vmatprep.subr.bf16.mxu0 0
  %310 = vmatpush1.bf16.msra.mxu0 %v228
  %311 = vmatprep.subr.bf16.mxu0 0
  %312 = vmatpush1.bf16.msra.mxu0 %v229
  %313 = vmatprep.subr.bf16.mxu0 0
  %314 = vmatpush1.bf16.msra.mxu0 %v230
  %315 = vmatprep.subr.bf16.mxu0 0
  %316 = vmatpush1.bf16.msra.mxu0 %v231
  %317 = vmatprep.subr.bf16.mxu0 0
  %318 = vmatpush1.bf16.msra.mxu0 %v232
  %319 = vmatprep.subr.bf16.mxu0 0
  %320 = vmatpush1.bf16.msra.mxu0 %v233
  %321 = vmatprep.subr.bf16.mxu0 0
  %322 = vmatpush1.bf16.msra.mxu0 %v234
  %323 = vmatprep.subr.bf16.mxu0 0
  %324 = vmatpush1.bf16.msra.mxu0 %v235
  %325 = vmatprep.subr.bf16.mxu0 0
  %326 = vmatpush1.bf16.msra.mxu0 0
  %327 = vmatprep.subr.bf16.mxu0 0
  %328 = vmatpush1.bf16.msra.mxu0 0
  %329 = vmatprep.subr.bf16.mxu0 0
  %330 = vmatpush1.bf16.msra.mxu0 0
  %331 = vmatprep.subr.bf16.mxu0 0
  %332 = vmatpush1.bf16.msra.mxu0 0
  %333 = vmatprep.subr.bf16.mxu0 0
  %334 = vmatpush1.bf16.msra.mxu0 0
  %335 = vmatprep.subr.bf16.mxu0 0
  %336 = vmatpush1.bf16.msra.mxu0 0
  %337 = vmatprep.subr.bf16.mxu0 0
  %338 = vmatpush1.bf16.msra.mxu0 0
  %339 = vmatprep.subr.bf16.mxu0 0
  %340 = vmatpush1.bf16.msra.mxu0 0
  %341 = vmatprep.mubr.bf16.mxu0 0
  %342 = vmatmul.mubr.bf16.gmra.mrb[0].mxu0 %v106
  %v343 = vpop.f32.mrb[0].mxu0
  %v344 = vadd.f32 %v295, %v343
  %v345 = vpop.f32.mrb[0].mxu0
  %v346 = vpop.f32.mrb[0].mxu0
  %v347 = vadd.f32 %v298, %v346
  %v348 = vpop.f32.mrb[0].mxu0
  %349 = vmatprep.mubr.bf16.mxu0 0
  %350 = vmatmul.mubr.bf16.gmra.mrb[0].mxu0 %v109
  %v351 = vpop.f32.mrb[0].mxu0
  %v352 = vadd.f32 %v303, %v351
  %v353 = vpop.f32.mrb[0].mxu0
  %v354 = vpop.f32.mrb[0].mxu0
  %v355 = vadd.f32 %v306, %v354
  %v356 = vpop.f32.mrb[0].mxu0
  %357 = vdwg.mxu0
  %v358 = vmax.f32 %v344, 0.0
  %v359 = vmax.f32 %v347, 0.0
  %v360 = vmax.f32 %v352, 0.0
  %v361 = vmax.f32 %v355, 0.0
  %v362 = vlaneseq
  %v363 = vshrl.u32 %v362, 7
  %v364 = vadd.s32 %v363, 8
  %v365 = vadd.s32 %v363, 16
  %v366 = vadd.s32 %v363, 24
  %vm367 = vcmp.lt.s32.totalorder %v363, 32
  %vm368 = vcmp.lt.s32.totalorder %v364, 32
  %vm369 = vcmp.lt.s32.totalorder %v365, 32
  %vm370 = vcmp.lt.s32.totalorder %v366, 32
  %v371 = vsel %vm367, %v358, 0.0
  %v372 = vsel %vm368, %v359, 0.0
  %v373 = vsel %vm369, %v360, 0.0
  %v374 = vsel %vm370, %v361, 0.0
  %v375 = vadd.f32 %v371, %v372
  %v376 = vadd.f32 %v375, %v373
  %v377 = vadd.f32 %v376, %v374
  %v378 = vrot.slane %v377, 4
  %v379 = vadd.f32 %v377, %v378
  %v380 = vrot.slane %v379, 2
  %v381 = vadd.f32 %v379, %v380
  %v382 = vrot.slane %v381, 1
  %v383 = vadd.f32 %v381, %v382
  %v384 = vmul.f32 %v383, 0.03125
  %v385 = vmul.f32 %v371, %v371
  %v386 = vmul.f32 %v372, %v372
  %v387 = vmul.f32 %v373, %v373
  %v388 = vmul.f32 %v374, %v374
  %v389 = vadd.f32 %v385, %v386
  %v390 = vadd.f32 %v389, %v387
  %v391 = vadd.f32 %v390, %v388
  %v392 = vrot.slane %v391, 4
  %v393 = vadd.f32 %v391, %v392
  %v394 = vrot.slane %v393, 2
  %v395 = vadd.f32 %v393, %v394
  %v396 = vrot.slane %v395, 1
  %v397 = vadd.f32 %v395, %v396
  %v398 = vmul.f32 %v397, 0.03125
  %v399 = vmul.f32 %v384, %v384
  %v400 = vsub.f32 %v398, %v399
  %v401 = vmax.f32 %v400, 0.0
  %v402 = vld [vmem:[%s3] sm:$0x1]
  %v403 = vadd.f32 %v401, 1e-05
  %v404 = vrsqrt.pop %v403
  %v405 = vmul.f32 %v402, %v404
  %v406 = vld [vmem:[%s4] sm:$0x1]
  %v407 = vmul.f32 %v384, %v405
  %v408 = vsub.f32 %v406, %v407
  %v410 = vlaneseq
  %v411 = vshrl.u32 %v410, 7
  %v412 = vsub.s32 0, %v411
  %v413 = vrot.slane %v405, %v412
  %v415 = vmul.f32 %v358, %v413
  %v416 = vmul.f32 %v359, %v413
  %v417 = vmul.f32 %v360, %v413
  %v418 = vmul.f32 %v361, %v413
  %v420 = vlaneseq
  %v421 = vshrl.u32 %v420, 7
  %v422 = vsub.s32 0, %v421
  %v423 = vrot.slane %v408, %v422
  %v425 = vadd.f32 %v415, %v423
  %v426 = vadd.f32 %v416, %v423
  %v427 = vadd.f32 %v417, %v423
  %v428 = vadd.f32 %v418, %v423
  %v429 = vpack.c.bf16 %v426, %v425
  %v430 = vpack.c.bf16 %v428, %v427
  %v433 = vunpack.c.l.b16 %v429
  %v434 = vunpack.c.h.b16 %v429
  %v435 = vunpack.c.l.b16 %v430
  %v436 = vunpack.c.h.b16 %v430
  %v437 = vpack.c.b16 %v433, %v433
  %v438 = vpack.c.b16 %v434, %v434
  %v439 = vpack.c.b16 %v435, %v435
  %v440 = vpack.c.b16 %v436, %v436
  %445 = vst [vmem:[%s5] sm:$0xf] %v437
  %446 = vst [vmem:[%s5 + $0x4] sm:$0xf] %v438
  %447 = vst [vmem:[%s5 + $0x8] sm:$0xf] %v439
  %448 = vst [vmem:[%s5 + $0xc] sm:$0xf] %v440
  // Predicated region
  $region22: #{_net_forward.18} parent=0 // pred_check
    _
  $region23: #{_net_forward.18} parent=0 // pred_check_branch
    %450 = sbr.rel (0) target = $region25
  $region24: #{_net_forward.18} parent=0 // pred_region
    _
  $region25: #{_net_forward.18} parent=0 // pred_fallthru
    _
  // Predicated region
  $region26: #{_net_forward.18} parent=0 // pred_check
    _
  $region27: #{_net_forward.18} parent=0 // pred_check_branch
    %452 = sbr.rel (0) target = $region29
  $region28: #{_net_forward.18} parent=0 // pred_region
    _
  $region29: #{_net_forward.18} parent=0 // pred_fallthru
    _

</llo_original>
